<compile_context>
chip_gen: v7x
topology: tpu7x:2x2x1
jax: 0.10.0
libtpu: 0.0.40
codegen_flags: <defaults>
</compile_context>

<pallas_src>
import functools

import jax
import jax.numpy as jnp
from jax.experimental import pallas as pl
from jax.experimental.pallas import tpu as pltpu

C_HALF = 256   # channels of each modality
C_IN = 512     # channels after concat
C_OUT = 256    # conv output channels
LEVELS = ["p2", "p3", "p4", "p5", "p6", "p7"]

# Levels with hw below this use a plain XLA einsum: per-call overhead
# (~0.35 us/step + launch) and sub-128 output lanes (masked vst) dominate.
_PALLAS_MIN_HW = 2048


@functools.lru_cache(maxsize=None)
def _tpu_budgets():
    """(per-input tile bytes, vmem_limit_bytes), gated on VMEM capacity.

    128 MiB-VMEM parts (v5e/v6e): 8 MiB tiles, 96 MiB scoped limit.
    64 MiB-VMEM parts (v7x) / unknown: 4 MiB tiles, 48 MiB scoped limit.
    """
    vmem = None
    try:
        vmem = pltpu.get_tpu_info().vmem_capacity_bytes
    except Exception:
        try:
            kind = jax.devices()[0].device_kind.lower()
            vmem = 64 * 1024 * 1024 if "v7" in kind else 128 * 1024 * 1024
        except Exception:
            vmem = None
    if vmem is not None and vmem >= 100 * 1024 * 1024:
        return 8 * 1024 * 1024, 96 * 1024 * 1024
    return 4 * 1024 * 1024, 48 * 1024 * 1024


def _pick_tile_hw(hw, itemsize, max_tile_bytes):
    # Largest lane tile under the per-buffer budget that satisfies the (8, 128)
    # block rule: a multiple of 128, or the full extent.
    max_tile = max(128, max_tile_bytes // (C_HALF * itemsize))
    if hw <= max_tile:
        return hw               # full-extent block: always a legal block shape
    return max_tile             # multiple of 128; last partial block is masked


def _concat_conv1x1_kernel(xc_ref, xd_ref, w_ref, b_ref, o_ref):
    # out = W @ concat(xc, xd) + b  ==  W[:, :256] @ xc + W[:, 256:] @ xd + b.
    # The in-kernel static slices sit on a 256-lane boundary -> no re-layout.
    # Padded lanes of a partial last spatial block only enter the matmul RHS
    # (reduction is over channels/sublanes); the output writeback is masked.
    acc = jnp.dot(w_ref[:, :C_HALF], xc_ref[0], preferred_element_type=jnp.float32)
    acc += jnp.dot(w_ref[:, C_HALF:], xd_ref[0], preferred_element_type=jnp.float32)
    o_ref[0] = (acc + b_ref[...]).astype(o_ref.dtype)


@functools.partial(jax.jit, static_argnames=("max_tile_bytes",))
def _concat_conv1x1_pallas(x_color, x_depth, weight, bias, *, max_tile_bytes=None):
    """Pallas path: 1x1 conv over the channel-concat, native NCHW.

    x_color, x_depth: (N, 256, H, W).  weight: (256, 512) f32.  bias: (256,) f32.
    Output dtype follows the activation dtype (bf16 activations -> bf16 matmul
    operands with f32 accumulation; f32 activations keep f32 math).
    """
    n, c, h, w_sp = x_color.shape
    assert c == C_HALF and x_depth.shape == x_color.shape
    hw = h * w_sp
    dtype = x_color.dtype

    tile_bytes, vmem_limit = _tpu_budgets()
    if max_tile_bytes is not None:
        tile_bytes = max_tile_bytes

    # Free reshapes (trailing dims contiguous): no transpose, no extra HBM pass.
    xc = x_color.reshape(n, C_HALF, hw)
    xd = x_depth.reshape(n, C_HALF, hw)
    w2d = weight.astype(dtype)                        # (256_out, 512_in), one stream
    b2d = bias.reshape(C_OUT, 1).astype(jnp.float32)  # broadcast along lanes

    t_hw = _pick_tile_hw(hw, jnp.dtype(dtype).itemsize, tile_bytes)
    grid = (n, pl.cdiv(hw, t_hw))

    out_flat = pl.pallas_call(
        _concat_conv1x1_kernel,
        out_shape=jax.ShapeDtypeStruct((n, C_OUT, hw), dtype),
        grid_spec=pltpu.PrefetchScalarGridSpec(
            num_scalar_prefetch=0,
            grid=grid,
            in_specs=[
                pl.BlockSpec((1, C_HALF, t_hw), lambda ni, si: (ni, 0, si)),
                pl.BlockSpec((1, C_HALF, t_hw), lambda ni, si: (ni, 0, si)),
                pl.BlockSpec((C_OUT, C_IN), lambda ni, si: (0, 0)),
                pl.BlockSpec((C_OUT, 1), lambda ni, si: (0, 0)),
            ],
            out_specs=pl.BlockSpec((1, C_OUT, t_hw), lambda ni, si: (ni, 0, si)),
        ),
        compiler_params=pltpu.CompilerParams(
            dimension_semantics=("parallel", "parallel"),
            vmem_limit_bytes=vmem_limit,
        ),
    )(xc, xd, w2d, b2d)

    return out_flat.reshape(n, C_OUT, h, w_sp)


@jax.jit
def _concat_conv1x1_xla(x_color, x_depth, weight, bias):
    # Small-level fallback: let XLA fuse the tiny matmuls (no launch overhead,
    # no sub-128-lane masked stores).  Concat stays virtual here too.
    wc = weight[:, :C_HALF]
    wd = weight[:, C_HALF:]
    y = (jnp.einsum("nchw,oc->nohw", x_color, wc, preferred_element_type=jnp.float32)
         + jnp.einsum("nchw,oc->nohw", x_depth, wd, preferred_element_type=jnp.float32)
         + bias[None, :, None, None])
    return y.astype(x_color.dtype)


def concat_conv1x1(x_color, x_depth, weight, bias):
    n, c, h, w_sp = x_color.shape
    if h * w_sp < _PALLAS_MIN_HW:
        return _concat_conv1x1_xla(x_color, x_depth, weight, bias)
    return _concat_conv1x1_pallas(x_color, x_depth, weight, bias)


def init_params(key):
    """Deterministic init mirroring the PyTorch __init__:
       weight ~ N(0, 0.01), bias = -2.19, one (256, 512) conv per level."""
    params = []
    for _ in LEVELS:
        key, sub = jax.random.split(key)
        w = 0.01 * jax.random.normal(sub, (C_OUT, C_IN), dtype=jnp.float32)
        b = jnp.full((C_OUT,), -2.19, dtype=jnp.float32)
        params.append((w, b))
    return params


def concat_modality_forward(color_feat, depth_feat, params):
    res = {}
    for i, k in enumerate(color_feat.keys()):
        w, b = params[i]
        res[k] = concat_conv1x1(color_feat[k], depth_feat[k], w, b)
    return res


def _reference_forward(color_feat, depth_feat, params):
    # Pure-JAX reference (1x1 conv == matmul over channel axis, NCHW).
    res = {}
    for i, k in enumerate(color_feat.keys()):
        w, b = params[i]
        x = jnp.concatenate([color_feat[k], depth_feat[k]], axis=1)  # (N, 512, H, W)
        y = jnp.einsum("nchw,oc->nohw", x, w) + b[None, :, None, None]
        res[k] = y
    return res


if __name__ == "__main__":
    key = jax.random.PRNGKey(0)
    params = init_params(key)

    batch = 2
    # FPN-style sizes: p2 is large enough (hw=2304 >= 2048) to take the Pallas
    # path; the smaller levels exercise the fused-XLA fallback.
    spatial = {"p2": 48, "p3": 16, "p4": 8, "p5": 8, "p6": 4, "p7": 4}

    color_feat, depth_feat = {}, {}
    for k in LEVELS:
        key, kc, kd = jax.random.split(key, 3)
        s = spatial[k]
        color_feat[k] = jax.random.normal(kc, (batch, C_HALF, s, s), dtype=jnp.float32)
        depth_feat[k] = jax.random.normal(kd, (batch, C_HALF, s, s), dtype=jnp.float32)

    ref = _reference_forward(color_feat, depth_feat, params)

    # 1) Full forward (Pallas for p2, XLA fallback for the tiny levels).
    out = concat_modality_forward(color_feat, depth_feat, params)
    out = jax.tree_util.tree_map(jax.block_until_ready, out)
    for k in LEVELS:
        assert out[k].shape == (batch, C_OUT, spatial[k], spatial[k])
        if not jnp.allclose(out[k], ref[k], atol=1e-3, rtol=1e-3):
            raise AssertionError(f"f32 mismatch at level {k}")

    w0, b0 = params[0]

    # 2) Tiled Pallas path: force a small tile (t_hw=512) so hw=2304 -> 5 spatial
    #    blocks including a masked partial last block.
    out_tiled = _concat_conv1x1_pallas(
        color_feat["p2"], depth_feat["p2"], w0, b0, max_tile_bytes=512 * 1024)
    jax.block_until_ready(out_tiled)
    if not jnp.allclose(out_tiled, ref["p2"], atol=1e-3, rtol=1e-3):
        raise AssertionError("tiled-path mismatch at level p2")

    # 3) bf16 activation path (bandwidth/MXU-optimized; f32 accumulate).
    out_bf16 = _concat_conv1x1_pallas(
        color_feat["p2"].astype(jnp.bfloat16),
        depth_feat["p2"].astype(jnp.bfloat16), w0, b0)
    jax.block_until_ready(out_bf16)
    if not jnp.allclose(out_bf16.astype(jnp.float32), ref["p2"], atol=5e-2, rtol=5e-2):
        raise AssertionError("bf16 mismatch at level p2")

    print("KERNEL_OK")
</pallas_src>

<mosaic_0001>
module attributes {stable_mosaic.version = 11 : i64} {
  func.func @_concat_conv1x1_kernel(%arg0: i32, %arg1: i32, %arg2: memref<1x256x2304xf32, #tpu.memory_space<vmem>>, %arg3: memref<1x256x2304xf32, #tpu.memory_space<vmem>>, %arg4: memref<256x512xf32, #tpu.memory_space<vmem>>, %arg5: memref<256x1xf32, #tpu.memory_space<vmem>>, %arg6: memref<1x256x2304xf32, #tpu.memory_space<vmem>>) attributes {dimension_semantics = [#tpu.dimension_semantics<parallel>, #tpu.dimension_semantics<parallel>], iteration_bounds = array<i64: 2, 1>, scalar_prefetch = 0 : i64, scratch_operands = 0 : i64, tpu.core_type = #tpu.core_type<tc>, window_params = [{transform_indices = @transform_0, window_bounds = array<i64: 1, 256, 2304>}, {transform_indices = @transform_1, window_bounds = array<i64: 1, 256, 2304>}, {pipeline_mode = #tpu.pipeline_mode<synchronous>, transform_indices = @transform_2, window_bounds = array<i64: 256, 512>}, {pipeline_mode = #tpu.pipeline_mode<synchronous>, transform_indices = @transform_3, window_bounds = array<i64: 256, 1>}, {transform_indices = @transform_4, window_bounds = array<i64: 1, 256, 2304>}]} {
    %c0 = arith.constant 0 : index
    %c0_0 = arith.constant 0 : index
    %0 = vector.load %arg4[%c0, %c0_0] : memref<256x512xf32, #tpu.memory_space<vmem>>, vector<256x256xf32>
    %c0_1 = arith.constant 0 : index
    %c0_2 = arith.constant 0 : index
    %c0_3 = arith.constant 0 : index
    %1 = vector.load %arg2[%c0_1, %c0_2, %c0_3] : memref<1x256x2304xf32, #tpu.memory_space<vmem>>, vector<1x256x2304xf32>
    %2 = vector.shape_cast %1 : vector<1x256x2304xf32> to vector<256x2304xf32>
    %cst = arith.constant dense<0.000000e+00> : vector<256x2304xf32>
    %3 = tpu.matmul %0, %2, %cst {dimension_numbers = #tpu.dot_dimension_numbers<[1], [0], [0], [1], [0, 0, 1, 1], [], []>} : vector<256x256xf32>, vector<256x2304xf32>, vector<256x2304xf32> -> vector<256x2304xf32>
    %c0_4 = arith.constant 0 : index
    %c256 = arith.constant 256 : index
    %4 = vector.load %arg4[%c0_4, %c256] : memref<256x512xf32, #tpu.memory_space<vmem>>, vector<256x256xf32>
    %c0_5 = arith.constant 0 : index
    %c0_6 = arith.constant 0 : index
    %c0_7 = arith.constant 0 : index
    %5 = vector.load %arg3[%c0_5, %c0_6, %c0_7] : memref<1x256x2304xf32, #tpu.memory_space<vmem>>, vector<1x256x2304xf32>
    %6 = vector.shape_cast %5 : vector<1x256x2304xf32> to vector<256x2304xf32>
    %cst_8 = arith.constant dense<0.000000e+00> : vector<256x2304xf32>
    %7 = tpu.matmul %4, %6, %cst_8 {dimension_numbers = #tpu.dot_dimension_numbers<[1], [0], [0], [1], [0, 0, 1, 1], [], []>} : vector<256x256xf32>, vector<256x2304xf32>, vector<256x2304xf32> -> vector<256x2304xf32>
    %8 = arith.addf %3, %7 : vector<256x2304xf32>
    %c0_9 = arith.constant 0 : index
    %c0_10 = arith.constant 0 : index
    %9 = vector.load %arg5[%c0_9, %c0_10] : memref<256x1xf32, #tpu.memory_space<vmem>>, vector<256x1xf32>
    %10 = vector.broadcast %9 : vector<256x1xf32> to vector<256x2304xf32>
    %11 = arith.addf %8, %10 : vector<256x2304xf32>
    %c0_11 = arith.constant 0 : index
    %c0_12 = arith.constant 0 : index
    %c0_13 = arith.constant 0 : index
    %12 = vector.load %arg6[%c0_11, %c0_12, %c0_13] : memref<1x256x2304xf32, #tpu.memory_space<vmem>>, vector<1x256x2304xf32>
    %13 = vector.shape_cast %12 : vector<1x256x2304xf32> to vector<256x2304xf32>
    %14 = vector.shape_cast %11 : vector<256x2304xf32> to vector<1x256x2304xf32>
    tpu.vector_store %arg6[%c0_11, %c0_12, %c0_13], %14 {strides = array<i32>} : memref<1x256x2304xf32, #tpu.memory_space<vmem>>, vector<1x256x2304xf32>,
    return
  }
  func.func @transform_0(%arg0: i32, %arg1: i32) -> (i32, i32, i32) {
    %c0_i32 = arith.constant 0 : i32
    %c0_i32_0 = arith.constant 0 : i32
    return %arg0, %c0_i32, %arg1 : i32, i32, i32
  }
  func.func @transform_1(%arg0: i32, %arg1: i32) -> (i32, i32, i32) {
    %c0_i32 = arith.constant 0 : i32
    %c0_i32_0 = arith.constant 0 : i32
    return %arg0, %c0_i32, %arg1 : i32, i32, i32
  }
  func.func @transform_2(%arg0: i32, %arg1: i32) -> (i32, i32) {
    %c0_i32 = arith.constant 0 : i32
    %c0_i32_0 = arith.constant 0 : i32
    %c0_i32_1 = arith.constant 0 : i32
    return %c0_i32, %c0_i32_0 : i32, i32
  }
  func.func @transform_3(%arg0: i32, %arg1: i32) -> (i32, i32) {
    %c0_i32 = arith.constant 0 : i32
    %c0_i32_0 = arith.constant 0 : i32
    %c0_i32_1 = arith.constant 0 : i32
    return %c0_i32, %c0_i32_0 : i32, i32
  }
  func.func @transform_4(%arg0: i32, %arg1: i32) -> (i32, i32, i32) {
    %c0_i32 = arith.constant 0 : i32
    %c0_i32_0 = arith.constant 0 : i32
    return %arg0, %c0_i32, %arg1 : i32, i32, i32
  }
}

</mosaic_0001>

<llo_original>
// kernel: _concat_conv1x1_pallas.1
$region0: #{_concat_conv1x1_pallas.1}
  #allocation0 [shape = 'u32[]', space=smem, size = 0x4, offset = 0x4, fixed_abs, tag = 'smem constant byte address 0x4 - core index']
  #allocation1 [shape = 'u32[144,128]{1,0:T(1,128)}', space=vmem, size = 0x12000, scoped, tag = 'internal scratch']
  %s0 = inlined_call_operand.hbm [shape: f32[2,256,2304], index: 0, kind: input, shape index: {}]
  %s1 = inlined_call_operand.hbm [shape: f32[2,256,2304], index: 1, kind: input, shape index: {}]
  %s2 = inlined_call_operand.hbm [shape: f32[256,512], index: 2, kind: input, shape index: {}]
  %s3 = inlined_call_operand.hbm [shape: f32[256,1], index: 3, kind: input, shape index: {}]
  %s4 = inlined_call_operand.hbm [shape: f32[2,256,2304], index: 4, kind: output, shape index: {}]
  %s5 = sld [smem:[#allocation0]]
  $region65: #{_concat_conv1x1_pallas.1} parent=0
    _
  %s7 = ssub.s32 1, %s5
  %s8 = scalar_select 0, %s7, %s5
  $region1: #{_concat_conv1x1_pallas.1} parent=0
    #allocation2 [shape = 'u8[4718592]{0}', space=vmem, size = 0x480000, scoped, tag = 'input window, operand 0']
    #allocation3 [shape = 's32[2]{0}', space=sflag, size = 0x8, scoped, tag = 'scoped memory for _concat_conv1x1_pallas.1']
    #allocation4 [shape = 's32[2]{0}', space=sflag, size = 0x8, scoped, tag = 'scoped memory for _concat_conv1x1_pallas.1']
    #allocation5 [shape = 'u8[4718592]{0}', space=vmem, size = 0x480000, scoped, tag = 'input window, operand 1']
    #allocation6 [shape = 's32[2]{0}', space=sflag, size = 0x8, scoped, tag = 'scoped memory for _concat_conv1x1_pallas.1']
    #allocation7 [shape = 'u8[524288]{0}', space=vmem, size = 0x80000, scoped, tag = 'input window, operand 2, single buffered']
    #allocation8 [shape = 'u8[131072]{0}', space=vmem, size = 0x20000, scoped, tag = 'input window, operand 3, single buffered']
    #allocation9 [shape = 's32[1]{0}', space=sflag, size = 0x4, scoped, tag = 'scoped memory for _concat_conv1x1_pallas.1']
    #allocation10 [shape = 'u8[4718592]{0}', space=vmem, size = 0x480000, scoped, tag = 'output window, operand 0']
    %9 = vsyncpa [#allocation3], 0
    %s10 = scalar_lea.sflag [#allocation3], 1
    %11 = vsyncpa %s10, 0
    %12 = vsyncpa [#allocation6], 0
    %s13 = scalar_lea.sflag [#allocation6], 1
    %14 = vsyncpa %s13, 0
    %15 = vsyncpa [#allocation9], 0
    %16 = vsyncpa [#allocation4], 0
    %s17 = scalar_lea.sflag [#allocation4], 1
    %18 = vsyncpa %s17, 0
    loop: start=0, step=1, limit=4
    $region2: #{_concat_conv1x1_pallas.1} parent=1 // loop_pre_header
      _
    $region3: #{_concat_conv1x1_pallas.1} parent=1 // loop_header
      %s20 = sphi 0, %s24
      %p21 = scmp.ge.s32.totalorder %s20, 4
      %s27 = sphi 0, %s39
      %s28 = sphi 0, %s35
      %s29 = sphi 0, %s27
      %s30 = sphi 0, %s28
      %s31 = sphi 0, %s29
      %s32 = sphi 0, %s30
      %s44 = sphi 0, %s46
      %s47 = sphi 0, %s44
      %s48 = sphi 0, %s47
      %s64 = sphi 0, %s48
      %s72 = sphi 0, %s74
      %s75 = sphi 0, %s72
      %s76 = sphi 0, %s75
      %s92 = sphi 0, %s76
      %s96 = sphi 0, %s96
      %s98 = sphi 0, %s96
      %s99 = sphi 0, %s98
      %s113 = sphi 0, %s99
      %s117 = sphi 0, %s117
      %s119 = sphi 0, %s117
      %s120 = sphi 0, %s119
      %s134 = sphi 0, %s120
      %s142 = sphi 0, %s144
      %s145 = sphi 0, %s142
      %s146 = sphi 0, %s145
      %s162 = sphi 0, %s146
    $region4: #{_concat_conv1x1_pallas.1} parent=1 // loop_header_branch
      %23 = sbr.rel (%p21) target = $region8
    $region5: #{_concat_conv1x1_pallas.1} parent=1 // loop_body
      %s25 = ssub.s32 %s20, 1
      %s26 = ssub.s32 %s20, 2
      %s33 = sadd.s32 1, %s28
      %p34 = scmp.ge.s32.totalorder %s33, 1
      %s35 = scalar_select %p34, 0, %s33
      %s36 = sadd.s32 1, %s27
      %s37 = scalar_select %p34, %s36, %s27
      %p38 = scmp.ge.s32.totalorder %s37, 2
      %s39 = scalar_select %p38, 0, %s37
      %s40 = ssub.s32 %s27, %s39
      %s41 = ssub.s32 %s28, %s35
      %s42 = sor.u32 %s40, %s41
      %p43 = scmp.eq.s32.totalorder %s42, 0
      %s45 = sadd.s32 %s44, 1
      %s46 = scalar_select %p43, %s44, %s45
      %p49 = pneg %p43
      %p50 = scmp.eq.s32.totalorder %s20, 1
      %p51 = por %p49, %p50
      %p52 = scmp.ne.s32.totalorder %s44, %s47
      %p53 = scmp.eq.s32.totalorder %s20, 0
      %p54 = por %p52, %p53
      %p55 = scmp.ne.s32.totalorder %s44, %s47
      %p56 = scmp.eq.s32.totalorder %s25, 1
      %p57 = por %p55, %p56
      %p58 = scmp.ne.s32.totalorder %s47, %s48
      %p59 = scmp.eq.s32.totalorder %s25, 0
      %p60 = por %p58, %p59
      %p61 = scmp.ne.s32.totalorder %s47, %s48
      %p62 = scmp.eq.s32.totalorder %s26, 1
      %p63 = por %p61, %p62
      %p65 = scmp.ne.s32.totalorder %s48, %s64
      %p66 = scmp.eq.s32.totalorder %s26, 0
      %p67 = por %p65, %p66
      %s68 = ssub.s32 %s27, %s39
      %s69 = ssub.s32 %s28, %s35
      %s70 = sor.u32 %s68, %s69
      %p71 = scmp.eq.s32.totalorder %s70, 0
      %s73 = sadd.s32 %s72, 1
      %s74 = scalar_select %p71, %s72, %s73
      %p77 = pneg %p71
      %p78 = scmp.eq.s32.totalorder %s20, 1
      %p79 = por %p77, %p78
      %p80 = scmp.ne.s32.totalorder %s72, %s75
      %p81 = scmp.eq.s32.totalorder %s20, 0
      %p82 = por %p80, %p81
      %p83 = scmp.ne.s32.totalorder %s72, %s75
      %p84 = scmp.eq.s32.totalorder %s25, 1
      %p85 = por %p83, %p84
      %p86 = scmp.ne.s32.totalorder %s75, %s76
      %p87 = scmp.eq.s32.totalorder %s25, 0
      %p88 = por %p86, %p87
      %p89 = scmp.ne.s32.totalorder %s75, %s76
      %p90 = scmp.eq.s32.totalorder %s26, 1
      %p91 = por %p89, %p90
      %p93 = scmp.ne.s32.totalorder %s76, %s92
      %p94 = scmp.eq.s32.totalorder %s26, 0
      %p95 = por %p93, %p94
      %s97 = sadd.s32 %s96, 1
      %p100 = scmp.eq.s32.totalorder %s20, 1
      %p101 = scmp.ne.s32.totalorder %s96, %s98
      %p102 = scmp.eq.s32.totalorder %s20, 0
      %p103 = por %p101, %p102
      %p104 = scmp.ne.s32.totalorder %s96, %s98
      %p105 = scmp.eq.s32.totalorder %s25, 1
      %p106 = por %p104, %p105
      %p107 = scmp.ne.s32.totalorder %s98, %s99
      %p108 = scmp.eq.s32.totalorder %s25, 0
      %p109 = por %p107, %p108
      %p110 = scmp.ne.s32.totalorder %s98, %s99
      %p111 = scmp.eq.s32.totalorder %s26, 1
      %p112 = por %p110, %p111
      %p114 = scmp.ne.s32.totalorder %s99, %s113
      %p115 = scmp.eq.s32.totalorder %s26, 0
      %p116 = por %p114, %p115
      %s118 = sadd.s32 %s117, 1
      %p121 = scmp.eq.s32.totalorder %s20, 1
      %p122 = scmp.ne.s32.totalorder %s117, %s119
      %p123 = scmp.eq.s32.totalorder %s20, 0
      %p124 = por %p122, %p123
      %p125 = scmp.ne.s32.totalorder %s117, %s119
      %p126 = scmp.eq.s32.totalorder %s25, 1
      %p127 = por %p125, %p126
      %p128 = scmp.ne.s32.totalorder %s119, %s120
      %p129 = scmp.eq.s32.totalorder %s25, 0
      %p130 = por %p128, %p129
      %p131 = scmp.ne.s32.totalorder %s119, %s120
      %p132 = scmp.eq.s32.totalorder %s26, 1
      %p133 = por %p131, %p132
      %p135 = scmp.ne.s32.totalorder %s120, %s134
      %p136 = scmp.eq.s32.totalorder %s26, 0
      %p137 = por %p135, %p136
      %s138 = ssub.s32 %s27, %s39
      %s139 = ssub.s32 %s28, %s35
      %s140 = sor.u32 %s138, %s139
      %p141 = scmp.eq.s32.totalorder %s140, 0
      %s143 = sadd.s32 %s142, 1
      %s144 = scalar_select %p141, %s142, %s143
      %p147 = pneg %p141
      %p148 = scmp.eq.s32.totalorder %s20, 1
      %p149 = por %p147, %p148
      %p150 = scmp.ne.s32.totalorder %s142, %s145
      %p151 = scmp.eq.s32.totalorder %s20, 0
      %p152 = por %p150, %p151
      %p153 = scmp.ne.s32.totalorder %s142, %s145
      %p154 = scmp.eq.s32.totalorder %s25, 1
      %p155 = por %p153, %p154
      %p156 = scmp.ne.s32.totalorder %s145, %s146
      %p157 = scmp.eq.s32.totalorder %s25, 0
      %p158 = por %p156, %p157
      %p159 = scmp.ne.s32.totalorder %s145, %s146
      %p160 = scmp.eq.s32.totalorder %s26, 1
      %p161 = por %p159, %p160
      %p163 = scmp.ne.s32.totalorder %s146, %s162
      %p164 = scmp.eq.s32.totalorder %s26, 0
      %p165 = por %p163, %p164
      %p166 = scmp.le.s32.totalorder 1, %s20
      %p167 = scmp.lt.s32.totalorder %s20, 3
      %p168 = pnand %p166, %p167
      %p169 = pneg %p168
      // Predicated region
      $region9: #{_concat_conv1x1_pallas.1} parent=5 // pred_check
        _
      $region10: #{_concat_conv1x1_pallas.1} parent=5 // pred_check_branch
        %171 = sbr.rel (%p168) target = $region12
      $region11: #{_concat_conv1x1_pallas.1} parent=5 // pred_region
        %s172 = ssub.s32 %s20, 1
        // Predicated region
        $region13: #{_concat_conv1x1_pallas.1} parent=11 // pred_check
          %p173 = pneg %p109
        $region14: #{_concat_conv1x1_pallas.1} parent=11 // pred_check_branch
          %175 = sbr.rel (%p173) target = $region16
        $region15: #{_concat_conv1x1_pallas.1} parent=11 // pred_region
          %s177 = ssub.s32 16384, 16384
          %178 = vsyncadd [#allocation6], %s177
          %s179 = sshll.u32 [#allocation7], 4
          %s180 = int_to_ptr.vmem [resolvable:$true] %s179
          %185 = dma.hbm_to_vmem [thread:$0]  %s2, 16384, %s180, [#allocation6], 512, 512, 32
        $region16: #{_concat_conv1x1_pallas.1} parent=11 // pred_fallthru
          _
        // Predicated region
        $region17: #{_concat_conv1x1_pallas.1} parent=11 // pred_check
          %p186 = pneg %p130
        $region18: #{_concat_conv1x1_pallas.1} parent=11 // pred_check_branch
          %188 = sbr.rel (%p186) target = $region20
        $region19: #{_concat_conv1x1_pallas.1} parent=11 // pred_region
          %s190 = ssub.s32 4096, 4096
          %191 = vsyncadd [#allocation9], %s190
          %s192 = sshll.u32 [#allocation8], 4
          %s193 = int_to_ptr.vmem [resolvable:$true] %s192
          %198 = dma.hbm_to_vmem [thread:$0]  %s3, 4096, %s193, [#allocation9], 128, 128, 8
        $region20: #{_concat_conv1x1_pallas.1} parent=11 // pred_fallthru
          _
      $region12: #{_concat_conv1x1_pallas.1} parent=5 // pred_fallthru
        _
      %p199 = scmp.lt.s32.totalorder %s20, 2
      // Predicated region
      $region21: #{_concat_conv1x1_pallas.1} parent=5 // pred_check
        %p200 = pneg %p199
      $region22: #{_concat_conv1x1_pallas.1} parent=5 // pred_check_branch
        %202 = sbr.rel (%p200) target = $region24
      $region23: #{_concat_conv1x1_pallas.1} parent=5 // pred_region
        // Predicated region
        $region25: #{_concat_conv1x1_pallas.1} parent=23 // pred_check
          %p203 = pneg %p54
        $region26: #{_concat_conv1x1_pallas.1} parent=23 // pred_check_branch
          %205 = sbr.rel (%p203) target = $region28
        $region27: #{_concat_conv1x1_pallas.1} parent=23 // pred_region
          %s206 = sand.u32 %s44, 1
          %s207 = scalar_lea.sflag [#allocation3], %s206
          %s208 = sand.u32 %s44, 1
          %s209 = smul.addr %s208, 4608
          %s210 = scalar_lea.vmem [#allocation2], %s209
          %s211 = smul.u32 18, %s28
          %s213 = ssub.s32 73728, 73728
          %214 = vsyncadd %s207, %s213
          %s215 = smul.addr %s27, 576
          %s216 = sadd.s32 %s211, %s215
          %s217 = smul.addr %s216, 128
          %s218 = scalar_lea.hbm %s0, %s217
          %s219 = sshll.u32 %s210, 4
          %s220 = int_to_ptr.vmem [resolvable:$true] %s219
          %225 = dma.hbm_to_vmem [thread:$0]  %s218, 73728, %s220, %s207, 2304, 2304, 144
        $region28: #{_concat_conv1x1_pallas.1} parent=23 // pred_fallthru
          _
        // Predicated region
        $region29: #{_concat_conv1x1_pallas.1} parent=23 // pred_check
          %p226 = pneg %p82
        $region30: #{_concat_conv1x1_pallas.1} parent=23 // pred_check_branch
          %228 = sbr.rel (%p226) target = $region32
        $region31: #{_concat_conv1x1_pallas.1} parent=23 // pred_region
          %s229 = sand.u32 %s20, 1
          %s230 = scalar_lea.sflag [#allocation6], %s229
          %s231 = sand.u32 %s72, 1
          %s232 = smul.addr %s231, 4608
          %s233 = scalar_lea.vmem [#allocation5], %s232
          %s234 = smul.u32 18, %s28
          %s236 = ssub.s32 73728, 73728
          %237 = vsyncadd %s230, %s236
          %s238 = smul.addr %s27, 576
          %s239 = sadd.s32 %s234, %s238
          %s240 = smul.addr %s239, 128
          %s241 = scalar_lea.hbm %s1, %s240
          %s242 = sshll.u32 %s233, 4
          %s243 = int_to_ptr.vmem [resolvable:$true] %s242
          %248 = dma.hbm_to_vmem [thread:$0]  %s241, 73728, %s243, %s230, 2304, 2304, 144
        $region32: #{_concat_conv1x1_pallas.1} parent=23 // pred_fallthru
          _
      $region24: #{_concat_conv1x1_pallas.1} parent=5 // pred_fallthru
        _
      %p249 = scmp.le.s32.totalorder 1, %s20
      %p250 = scmp.lt.s32.totalorder %s20, 3
      %p251 = pnand %p249, %p250
      %p252 = pneg %p251
      // Predicated region
      $region33: #{_concat_conv1x1_pallas.1} parent=5 // pred_check
        _
      $region34: #{_concat_conv1x1_pallas.1} parent=5 // pred_check_branch
        %254 = sbr.rel (%p251) target = $region36
      $region35: #{_concat_conv1x1_pallas.1} parent=5 // pred_region
        %s255 = ssub.s32 %s20, 1
        %s256 = sand.u32 %s47, 1
        %s257 = scalar_lea.sflag [#allocation3], %s256
        %s258 = sand.u32 %s47, 1
        %s259 = smul.addr %s258, 4608
        %s260 = scalar_lea.vmem [#allocation2], %s259
        // Predicated region
        $region37: #{_concat_conv1x1_pallas.1} parent=35 // pred_check
          %p261 = pneg %p60
        $region38: #{_concat_conv1x1_pallas.1} parent=35 // pred_check_branch
          %263 = sbr.rel (%p261) target = $region40
        $region39: #{_concat_conv1x1_pallas.1} parent=35 // pred_region
          %264 = dma.done %s257, 73728
        $region40: #{_concat_conv1x1_pallas.1} parent=35 // pred_fallthru
          _
        %s265 = sand.u32 %s25, 1
        %s266 = scalar_lea.sflag [#allocation6], %s265
        %s267 = sand.u32 %s75, 1
        %s268 = smul.addr %s267, 4608
        %s269 = scalar_lea.vmem [#allocation5], %s268
        // Predicated region
        $region41: #{_concat_conv1x1_pallas.1} parent=35 // pred_check
          %p270 = pneg %p88
        $region42: #{_concat_conv1x1_pallas.1} parent=35 // pred_check_branch
          %272 = sbr.rel (%p270) target = $region44
        $region43: #{_concat_conv1x1_pallas.1} parent=35 // pred_region
          %273 = dma.done %s266, 73728
        $region44: #{_concat_conv1x1_pallas.1} parent=35 // pred_fallthru
          _
        // Predicated region
        $region45: #{_concat_conv1x1_pallas.1} parent=35 // pred_check
          %p274 = pneg %p109
        $region46: #{_concat_conv1x1_pallas.1} parent=35 // pred_check_branch
          %276 = sbr.rel (%p274) target = $region48
        $region47: #{_concat_conv1x1_pallas.1} parent=35 // pred_region
          %277 = dma.done [#allocation6], 16384
        $region48: #{_concat_conv1x1_pallas.1} parent=35 // pred_fallthru
          _
        // Predicated region
        $region49: #{_concat_conv1x1_pallas.1} parent=35 // pred_check
          %p278 = pneg %p130
        $region50: #{_concat_conv1x1_pallas.1} parent=35 // pred_check_branch
          %280 = sbr.rel (%p278) target = $region52
        $region51: #{_concat_conv1x1_pallas.1} parent=35 // pred_region
          %281 = dma.done [#allocation9], 4096
        $region52: #{_concat_conv1x1_pallas.1} parent=35 // pred_fallthru
          _
        %s282 = sand.u32 %s47, 1
        %s283 = scalar_lea.sflag [#allocation3], %s282
        %s284 = sand.u32 %s47, 1
        %s285 = smul.addr %s284, 4608
        %s286 = scalar_lea.vmem [#allocation2], %s285
        %p287 = pneg %p60
        %p288 = pneg %p57
        %s289 = sand.u32 %s25, 1
        %s290 = scalar_lea.sflag [#allocation6], %s289
        %s291 = sand.u32 %s75, 1
        %s292 = smul.addr %s291, 4608
        %s293 = scalar_lea.vmem [#allocation5], %s292
        %p294 = pneg %p88
        %p295 = pneg %p85
        %p296 = pneg %p109
        %p297 = pneg %p106
        %p298 = pneg %p130
        %p299 = pneg %p127
        %p300 = pneg %p158
        %p301 = pneg %p155
        %s302 = sand.u32 %s145, 1
        %s303 = scalar_lea.sflag [#allocation4], %s302
        %s304 = sand.u32 %s145, 1
        %s305 = smul.addr %s304, 4608
        %s306 = scalar_lea.vmem [#allocation10], %s305
        %s307 = smul.u32 18, %s30
        %s308 = smul.u32 18, %s30
        %s309 = smul.u32 18, %s30
        %v310 = vld [vmem:[#allocation7] sm:$0xff]
        %v311 = vld [vmem:[#allocation7 + $0x8] sm:$0xff]
        %v312 = vld [vmem:[#allocation7 + $0x20] sm:$0xff]
        %v313 = vld [vmem:[#allocation7 + $0x28] sm:$0xff]
        %v314 = vld [vmem:[#allocation7 + $0x40] sm:$0xff]
        %v315 = vld [vmem:[#allocation7 + $0x48] sm:$0xff]
        %v316 = vld [vmem:[#allocation7 + $0x60] sm:$0xff]
        %v317 = vld [vmem:[#allocation7 + $0x68] sm:$0xff]
        %v318 = vld [vmem:[#allocation7 + $0x80] sm:$0xff]
        %v319 = vld [vmem:[#allocation7 + $0x88] sm:$0xff]
        %v320 = vld [vmem:[#allocation7 + $0xa0] sm:$0xff]
        %v321 = vld [vmem:[#allocation7 + $0xa8] sm:$0xff]
        %v322 = vld [vmem:[#allocation7 + $0xc0] sm:$0xff]
        %v323 = vld [vmem:[#allocation7 + $0xc8] sm:$0xff]
        %v324 = vld [vmem:[#allocation7 + $0xe0] sm:$0xff]
        %v325 = vld [vmem:[#allocation7 + $0xe8] sm:$0xff]
        %v326 = vld [vmem:[#allocation7 + $0x100] sm:$0xff]
        %v327 = vld [vmem:[#allocation7 + $0x108] sm:$0xff]
        %v328 = vld [vmem:[#allocation7 + $0x120] sm:$0xff]
        %v329 = vld [vmem:[#allocation7 + $0x128] sm:$0xff]
        %v330 = vld [vmem:[#allocation7 + $0x140] sm:$0xff]
        %v331 = vld [vmem:[#allocation7 + $0x148] sm:$0xff]
        %v332 = vld [vmem:[#allocation7 + $0x160] sm:$0xff]
        %v333 = vld [vmem:[#allocation7 + $0x168] sm:$0xff]
        %v334 = vld [vmem:[#allocation7 + $0x180] sm:$0xff]
        %v335 = vld [vmem:[#allocation7 + $0x188] sm:$0xff]
        %v336 = vld [vmem:[#allocation7 + $0x1a0] sm:$0xff]
        %v337 = vld [vmem:[#allocation7 + $0x1a8] sm:$0xff]
        %v338 = vld [vmem:[#allocation7 + $0x1c0] sm:$0xff]
        %v339 = vld [vmem:[#allocation7 + $0x1c8] sm:$0xff]
        %v340 = vld [vmem:[#allocation7 + $0x1e0] sm:$0xff]
        %v341 = vld [vmem:[#allocation7 + $0x1e8] sm:$0xff]
        %v342 = vld [vmem:[#allocation7 + $0x200] sm:$0xff]
        %v343 = vld [vmem:[#allocation7 + $0x208] sm:$0xff]
        %v344 = vld [vmem:[#allocation7 + $0x220] sm:$0xff]
        %v345 = vld [vmem:[#allocation7 + $0x228] sm:$0xff]
        %v346 = vld [vmem:[#allocation7 + $0x240] sm:$0xff]
        %v347 = vld [vmem:[#allocation7 + $0x248] sm:$0xff]
        %v348 = vld [vmem:[#allocation7 + $0x260] sm:$0xff]
        %v349 = vld [vmem:[#allocation7 + $0x268] sm:$0xff]
        %v350 = vld [vmem:[#allocation7 + $0x280] sm:$0xff]
        %v351 = vld [vmem:[#allocation7 + $0x288] sm:$0xff]
        %v352 = vld [vmem:[#allocation7 + $0x2a0] sm:$0xff]
        %v353 = vld [vmem:[#allocation7 + $0x2a8] sm:$0xff]
        %v354 = vld [vmem:[#allocation7 + $0x2c0] sm:$0xff]
        %v355 = vld [vmem:[#allocation7 + $0x2c8] sm:$0xff]
        %v356 = vld [vmem:[#allocation7 + $0x2e0] sm:$0xff]
        %v357 = vld [vmem:[#allocation7 + $0x2e8] sm:$0xff]
        %v358 = vld [vmem:[#allocation7 + $0x300] sm:$0xff]
        %v359 = vld [vmem:[#allocation7 + $0x308] sm:$0xff]
        %v360 = vld [vmem:[#allocation7 + $0x320] sm:$0xff]
        %v361 = vld [vmem:[#allocation7 + $0x328] sm:$0xff]
        %v362 = vld [vmem:[#allocation7 + $0x340] sm:$0xff]
        %v363 = vld [vmem:[#allocation7 + $0x348] sm:$0xff]
        %v364 = vld [vmem:[#allocation7 + $0x360] sm:$0xff]
        %v365 = vld [vmem:[#allocation7 + $0x368] sm:$0xff]
        %v366 = vld [vmem:[#allocation7 + $0x380] sm:$0xff]
        %v367 = vld [vmem:[#allocation7 + $0x388] sm:$0xff]
        %v368 = vld [vmem:[#allocation7 + $0x3a0] sm:$0xff]
        %v369 = vld [vmem:[#allocation7 + $0x3a8] sm:$0xff]
        %v370 = vld [vmem:[#allocation7 + $0x3c0] sm:$0xff]
        %v371 = vld [vmem:[#allocation7 + $0x3c8] sm:$0xff]
        %v372 = vld [vmem:[#allocation7 + $0x3e0] sm:$0xff]
        %v373 = vld [vmem:[#allocation7 + $0x3e8] sm:$0xff]
        %v374 = vld [vmem:[%s260] sm:$0xff]
        %v375 = vld [vmem:[%s260 + $0x8] sm:$0xff]
        %v376 = vld [vmem:[%s260 + $0x10] sm:$0xff]
        %v377 = vld [vmem:[%s260 + $0x18] sm:$0xff]
        %v378 = vld [vmem:[%s260 + $0x20] sm:$0xff]
        %v379 = vld [vmem:[%s260 + $0x28] sm:$0xff]
        %v380 = vld [vmem:[%s260 + $0x30] sm:$0xff]
        %v381 = vld [vmem:[%s260 + $0x38] sm:$0xff]
        %v382 = vld [vmem:[%s260 + $0x40] sm:$0xff]
        %v383 = vld [vmem:[%s260 + $0x48] sm:$0xff]
        %v384 = vld [vmem:[%s260 + $0x50] sm:$0xff]
        %v385 = vld [vmem:[%s260 + $0x58] sm:$0xff]
        %v386 = vld [vmem:[%s260 + $0x60] sm:$0xff]
        %v387 = vld [vmem:[%s260 + $0x68] sm:$0xff]
        %v388 = vld [vmem:[%s260 + $0x70] sm:$0xff]
        %v389 = vld [vmem:[%s260 + $0x78] sm:$0xff]
        %v390 = vld [vmem:[%s260 + $0x80] sm:$0xff]
        %v391 = vld [vmem:[%s260 + $0x88] sm:$0xff]
        %v392 = vld [vmem:[%s260 + $0x90] sm:$0xff]
        %v393 = vld [vmem:[%s260 + $0x98] sm:$0xff]
        %v394 = vld [vmem:[%s260 + $0xa0] sm:$0xff]
        %v395 = vld [vmem:[%s260 + $0xa8] sm:$0xff]
        %v396 = vld [vmem:[%s260 + $0xb0] sm:$0xff]
        %v397 = vld [vmem:[%s260 + $0xb8] sm:$0xff]
        %v398 = vld [vmem:[%s260 + $0xc0] sm:$0xff]
        %v399 = vld [vmem:[%s260 + $0xc8] sm:$0xff]
        %v400 = vld [vmem:[%s260 + $0xd0] sm:$0xff]
        %v401 = vld [vmem:[%s260 + $0xd8] sm:$0xff]
        %v402 = vld [vmem:[%s260 + $0xe0] sm:$0xff]
        %v403 = vld [vmem:[%s260 + $0xe8] sm:$0xff]
        %v404 = vld [vmem:[%s260 + $0xf0] sm:$0xff]
        %v405 = vld [vmem:[%s260 + $0xf8] sm:$0xff]
        %v406 = vld [vmem:[%s260 + $0x100] sm:$0xff]
        %v407 = vld [vmem:[%s260 + $0x108] sm:$0xff]
        %v408 = vld [vmem:[%s260 + $0x110] sm:$0xff]
        %v409 = vld [vmem:[%s260 + $0x118] sm:$0xff]
        %v410 = vld [vmem:[%s260 + $0x120] sm:$0xff]
        %v411 = vld [vmem:[%s260 + $0x128] sm:$0xff]
        %v412 = vld [vmem:[%s260 + $0x130] sm:$0xff]
        %v413 = vld [vmem:[%s260 + $0x138] sm:$0xff]
        %v414 = vld [vmem:[%s260 + $0x140] sm:$0xff]
        %v415 = vld [vmem:[%s260 + $0x148] sm:$0xff]
        %v416 = vld [vmem:[%s260 + $0x150] sm:$0xff]
        %v417 = vld [vmem:[%s260 + $0x158] sm:$0xff]
        %v418 = vld [vmem:[%s260 + $0x160] sm:$0xff]
        %v419 = vld [vmem:[%s260 + $0x168] sm:$0xff]
        %v420 = vld [vmem:[%s260 + $0x170] sm:$0xff]
        %v421 = vld [vmem:[%s260 + $0x178] sm:$0xff]
        %v422 = vld [vmem:[%s260 + $0x180] sm:$0xff]
        %v423 = vld [vmem:[%s260 + $0x188] sm:$0xff]
        %v424 = vld [vmem:[%s260 + $0x190] sm:$0xff]
        %v425 = vld [vmem:[%s260 + $0x198] sm:$0xff]
        %v426 = vld [vmem:[%s260 + $0x1a0] sm:$0xff]
        %v427 = vld [vmem:[%s260 + $0x1a8] sm:$0xff]
        %v428 = vld [vmem:[%s260 + $0x1b0] sm:$0xff]
        %v429 = vld [vmem:[%s260 + $0x1b8] sm:$0xff]
        %v430 = vld [vmem:[%s260 + $0x1c0] sm:$0xff]
        %v431 = vld [vmem:[%s260 + $0x1c8] sm:$0xff]
        %v432 = vld [vmem:[%s260 + $0x1d0] sm:$0xff]
        %v433 = vld [vmem:[%s260 + $0x1d8] sm:$0xff]
        %v434 = vld [vmem:[%s260 + $0x1e0] sm:$0xff]
        %v435 = vld [vmem:[%s260 + $0x1e8] sm:$0xff]
        %v436 = vld [vmem:[%s260 + $0x1f0] sm:$0xff]
        %v437 = vld [vmem:[%s260 + $0x1f8] sm:$0xff]
        %v438 = vld [vmem:[%s260 + $0x200] sm:$0xff]
        %v439 = vld [vmem:[%s260 + $0x208] sm:$0xff]
        %v440 = vld [vmem:[%s260 + $0x210] sm:$0xff]
        %v441 = vld [vmem:[%s260 + $0x218] sm:$0xff]
        %v442 = vld [vmem:[%s260 + $0x220] sm:$0xff]
        %v443 = vld [vmem:[%s260 + $0x228] sm:$0xff]
        %v444 = vld [vmem:[%s260 + $0x230] sm:$0xff]
        %v445 = vld [vmem:[%s260 + $0x238] sm:$0xff]
        %v446 = vld [vmem:[%s260 + $0x240] sm:$0xff]
        %v447 = vld [vmem:[%s260 + $0x248] sm:$0xff]
        %v448 = vld [vmem:[%s260 + $0x250] sm:$0xff]
        %v449 = vld [vmem:[%s260 + $0x258] sm:$0xff]
        %v450 = vld [vmem:[%s260 + $0x260] sm:$0xff]
        %v451 = vld [vmem:[%s260 + $0x268] sm:$0xff]
        %v452 = vld [vmem:[%s260 + $0x270] sm:$0xff]
        %v453 = vld [vmem:[%s260 + $0x278] sm:$0xff]
        %v454 = vld [vmem:[%s260 + $0x280] sm:$0xff]
        %v455 = vld [vmem:[%s260 + $0x288] sm:$0xff]
        %v456 = vld [vmem:[%s260 + $0x290] sm:$0xff]
        %v457 = vld [vmem:[%s260 + $0x298] sm:$0xff]
        %v458 = vld [vmem:[%s260 + $0x2a0] sm:$0xff]
        %v459 = vld [vmem:[%s260 + $0x2a8] sm:$0xff]
        %v460 = vld [vmem:[%s260 + $0x2b0] sm:$0xff]
        %v461 = vld [vmem:[%s260 + $0x2b8] sm:$0xff]
        %v462 = vld [vmem:[%s260 + $0x2c0] sm:$0xff]
        %v463 = vld [vmem:[%s260 + $0x2c8] sm:$0xff]
        %v464 = vld [vmem:[%s260 + $0x2d0] sm:$0xff]
        %v465 = vld [vmem:[%s260 + $0x2d8] sm:$0xff]
        %v466 = vld [vmem:[%s260 + $0x2e0] sm:$0xff]
        %v467 = vld [vmem:[%s260 + $0x2e8] sm:$0xff]
        %v468 = vld [vmem:[%s260 + $0x2f0] sm:$0xff]
        %v469 = vld [vmem:[%s260 + $0x2f8] sm:$0xff]
        %v470 = vld [vmem:[%s260 + $0x300] sm:$0xff]
        %v471 = vld [vmem:[%s260 + $0x308] sm:$0xff]
        %v472 = vld [vmem:[%s260 + $0x310] sm:$0xff]
        %v473 = vld [vmem:[%s260 + $0x318] sm:$0xff]
        %v474 = vld [vmem:[%s260 + $0x320] sm:$0xff]
        %v475 = vld [vmem:[%s260 + $0x328] sm:$0xff]
        %v476 = vld [vmem:[%s260 + $0x330] sm:$0xff]
        %v477 = vld [vmem:[%s260 + $0x338] sm:$0xff]
        %v478 = vld [vmem:[%s260 + $0x340] sm:$0xff]
        %v479 = vld [vmem:[%s260 + $0x348] sm:$0xff]
        %v480 = vld [vmem:[%s260 + $0x350] sm:$0xff]
        %v481 = vld [vmem:[%s260 + $0x358] sm:$0xff]
        %v482 = vld [vmem:[%s260 + $0x360] sm:$0xff]
        %v483 = vld [vmem:[%s260 + $0x368] sm:$0xff]
        %v484 = vld [vmem:[%s260 + $0x370] sm:$0xff]
        %v485 = vld [vmem:[%s260 + $0x378] sm:$0xff]
        %v486 = vld [vmem:[%s260 + $0x380] sm:$0xff]
        %v487 = vld [vmem:[%s260 + $0x388] sm:$0xff]
        %v488 = vld [vmem:[%s260 + $0x390] sm:$0xff]
        %v489 = vld [vmem:[%s260 + $0x398] sm:$0xff]
        %v490 = vld [vmem:[%s260 + $0x3a0] sm:$0xff]
        %v491 = vld [vmem:[%s260 + $0x3a8] sm:$0xff]
        %v492 = vld [vmem:[%s260 + $0x3b0] sm:$0xff]
        %v493 = vld [vmem:[%s260 + $0x3b8] sm:$0xff]
        %v494 = vld [vmem:[%s260 + $0x3c0] sm:$0xff]
        %v495 = vld [vmem:[%s260 + $0x3c8] sm:$0xff]
        %v496 = vld [vmem:[%s260 + $0x3d0] sm:$0xff]
        %v497 = vld [vmem:[%s260 + $0x3d8] sm:$0xff]
        %v498 = vld [vmem:[%s260 + $0x3e0] sm:$0xff]
        %v499 = vld [vmem:[%s260 + $0x3e8] sm:$0xff]
        %v500 = vld [vmem:[%s260 + $0x3f0] sm:$0xff]
        %v501 = vld [vmem:[%s260 + $0x3f8] sm:$0xff]
        %v502 = vld [vmem:[%s260 + $0x400] sm:$0xff]
        %v503 = vld [vmem:[%s260 + $0x408] sm:$0xff]
        %v504 = vld [vmem:[%s260 + $0x410] sm:$0xff]
        %v505 = vld [vmem:[%s260 + $0x418] sm:$0xff]
        %v506 = vld [vmem:[%s260 + $0x420] sm:$0xff]
        %v507 = vld [vmem:[%s260 + $0x428] sm:$0xff]
        %v508 = vld [vmem:[%s260 + $0x430] sm:$0xff]
        %v509 = vld [vmem:[%s260 + $0x438] sm:$0xff]
        %v510 = vld [vmem:[%s260 + $0x440] sm:$0xff]
        %v511 = vld [vmem:[%s260 + $0x448] sm:$0xff]
        %v512 = vld [vmem:[%s260 + $0x450] sm:$0xff]
        %v513 = vld [vmem:[%s260 + $0x458] sm:$0xff]
        %v514 = vld [vmem:[%s260 + $0x460] sm:$0xff]
        %v515 = vld [vmem:[%s260 + $0x468] sm:$0xff]
        %v516 = vld [vmem:[%s260 + $0x470] sm:$0xff]
        %v517 = vld [vmem:[%s260 + $0x478] sm:$0xff]
        %v518 = vld [vmem:[%s260 + $0x480] sm:$0xff]
        %v519 = vld [vmem:[%s260 + $0x488] sm:$0xff]
        %v520 = vld [vmem:[%s260 + $0x490] sm:$0xff]
        %v521 = vld [vmem:[%s260 + $0x498] sm:$0xff]
        %v522 = vld [vmem:[%s260 + $0x4a0] sm:$0xff]
        %v523 = vld [vmem:[%s260 + $0x4a8] sm:$0xff]
        %v524 = vld [vmem:[%s260 + $0x4b0] sm:$0xff]
        %v525 = vld [vmem:[%s260 + $0x4b8] sm:$0xff]
        %v526 = vld [vmem:[%s260 + $0x4c0] sm:$0xff]
        %v527 = vld [vmem:[%s260 + $0x4c8] sm:$0xff]
        %v528 = vld [vmem:[%s260 + $0x4d0] sm:$0xff]
        %v529 = vld [vmem:[%s260 + $0x4d8] sm:$0xff]
        %v530 = vld [vmem:[%s260 + $0x4e0] sm:$0xff]
        %v531 = vld [vmem:[%s260 + $0x4e8] sm:$0xff]
        %v532 = vld [vmem:[%s260 + $0x4f0] sm:$0xff]
        %v533 = vld [vmem:[%s260 + $0x4f8] sm:$0xff]
        %v534 = vld [vmem:[%s260 + $0x500] sm:$0xff]
        %v535 = vld [vmem:[%s260 + $0x508] sm:$0xff]
        %v536 = vld [vmem:[%s260 + $0x510] sm:$0xff]
        %v537 = vld [vmem:[%s260 + $0x518] sm:$0xff]
        %v538 = vld [vmem:[%s260 + $0x520] sm:$0xff]
        %v539 = vld [vmem:[%s260 + $0x528] sm:$0xff]
        %v540 = vld [vmem:[%s260 + $0x530] sm:$0xff]
        %v541 = vld [vmem:[%s260 + $0x538] sm:$0xff]
        %v542 = vld [vmem:[%s260 + $0x540] sm:$0xff]
        %v543 = vld [vmem:[%s260 + $0x548] sm:$0xff]
        %v544 = vld [vmem:[%s260 + $0x550] sm:$0xff]
        %v545 = vld [vmem:[%s260 + $0x558] sm:$0xff]
        %v546 = vld [vmem:[%s260 + $0x560] sm:$0xff]
        %v547 = vld [vmem:[%s260 + $0x568] sm:$0xff]
        %v548 = vld [vmem:[%s260 + $0x570] sm:$0xff]
        %v549 = vld [vmem:[%s260 + $0x578] sm:$0xff]
        %v550 = vld [vmem:[%s260 + $0x580] sm:$0xff]
        %v551 = vld [vmem:[%s260 + $0x588] sm:$0xff]
        %v552 = vld [vmem:[%s260 + $0x590] sm:$0xff]
        %v553 = vld [vmem:[%s260 + $0x598] sm:$0xff]
        %v554 = vld [vmem:[%s260 + $0x5a0] sm:$0xff]
        %v555 = vld [vmem:[%s260 + $0x5a8] sm:$0xff]
        %v556 = vld [vmem:[%s260 + $0x5b0] sm:$0xff]
        %v557 = vld [vmem:[%s260 + $0x5b8] sm:$0xff]
        %v558 = vld [vmem:[%s260 + $0x5c0] sm:$0xff]
        %v559 = vld [vmem:[%s260 + $0x5c8] sm:$0xff]
        %v560 = vld [vmem:[%s260 + $0x5d0] sm:$0xff]
        %v561 = vld [vmem:[%s260 + $0x5d8] sm:$0xff]
        %v562 = vld [vmem:[%s260 + $0x5e0] sm:$0xff]
        %v563 = vld [vmem:[%s260 + $0x5e8] sm:$0xff]
        %v564 = vld [vmem:[%s260 + $0x5f0] sm:$0xff]
        %v565 = vld [vmem:[%s260 + $0x5f8] sm:$0xff]
        %v566 = vld [vmem:[%s260 + $0x600] sm:$0xff]
        %v567 = vld [vmem:[%s260 + $0x608] sm:$0xff]
        %v568 = vld [vmem:[%s260 + $0x610] sm:$0xff]
        %v569 = vld [vmem:[%s260 + $0x618] sm:$0xff]
        %v570 = vld [vmem:[%s260 + $0x620] sm:$0xff]
        %v571 = vld [vmem:[%s260 + $0x628] sm:$0xff]
        %v572 = vld [vmem:[%s260 + $0x630] sm:$0xff]
        %v573 = vld [vmem:[%s260 + $0x638] sm:$0xff]
        %v574 = vld [vmem:[%s260 + $0x640] sm:$0xff]
        %v575 = vld [vmem:[%s260 + $0x648] sm:$0xff]
        %v576 = vld [vmem:[%s260 + $0x650] sm:$0xff]
        %v577 = vld [vmem:[%s260 + $0x658] sm:$0xff]
        %v578 = vld [vmem:[%s260 + $0x660] sm:$0xff]
        %v579 = vld [vmem:[%s260 + $0x668] sm:$0xff]
        %v580 = vld [vmem:[%s260 + $0x670] sm:$0xff]
        %v581 = vld [vmem:[%s260 + $0x678] sm:$0xff]
        %v582 = vld [vmem:[%s260 + $0x680] sm:$0xff]
        %v583 = vld [vmem:[%s260 + $0x688] sm:$0xff]
        %v584 = vld [vmem:[%s260 + $0x690] sm:$0xff]
        %v585 = vld [vmem:[%s260 + $0x698] sm:$0xff]
        %v586 = vld [vmem:[%s260 + $0x6a0] sm:$0xff]
        %v587 = vld [vmem:[%s260 + $0x6a8] sm:$0xff]
        %v588 = vld [vmem:[%s260 + $0x6b0] sm:$0xff]
        %v589 = vld [vmem:[%s260 + $0x6b8] sm:$0xff]
        %v590 = vld [vmem:[%s260 + $0x6c0] sm:$0xff]
        %v591 = vld [vmem:[%s260 + $0x6c8] sm:$0xff]
        %v592 = vld [vmem:[%s260 + $0x6d0] sm:$0xff]
        %v593 = vld [vmem:[%s260 + $0x6d8] sm:$0xff]
        %v594 = vld [vmem:[%s260 + $0x6e0] sm:$0xff]
        %v595 = vld [vmem:[%s260 + $0x6e8] sm:$0xff]
        %v596 = vld [vmem:[%s260 + $0x6f0] sm:$0xff]
        %v597 = vld [vmem:[%s260 + $0x6f8] sm:$0xff]
        %v598 = vld [vmem:[%s260 + $0x700] sm:$0xff]
        %v599 = vld [vmem:[%s260 + $0x708] sm:$0xff]
        %v600 = vld [vmem:[%s260 + $0x710] sm:$0xff]
        %v601 = vld [vmem:[%s260 + $0x718] sm:$0xff]
        %v602 = vld [vmem:[%s260 + $0x720] sm:$0xff]
        %v603 = vld [vmem:[%s260 + $0x728] sm:$0xff]
        %v604 = vld [vmem:[%s260 + $0x730] sm:$0xff]
        %v605 = vld [vmem:[%s260 + $0x738] sm:$0xff]
        %v606 = vld [vmem:[%s260 + $0x740] sm:$0xff]
        %v607 = vld [vmem:[%s260 + $0x748] sm:$0xff]
        %v608 = vld [vmem:[%s260 + $0x750] sm:$0xff]
        %v609 = vld [vmem:[%s260 + $0x758] sm:$0xff]
        %v610 = vld [vmem:[%s260 + $0x760] sm:$0xff]
        %v611 = vld [vmem:[%s260 + $0x768] sm:$0xff]
        %v612 = vld [vmem:[%s260 + $0x770] sm:$0xff]
        %v613 = vld [vmem:[%s260 + $0x778] sm:$0xff]
        %v614 = vld [vmem:[%s260 + $0x780] sm:$0xff]
        %v615 = vld [vmem:[%s260 + $0x788] sm:$0xff]
        %v616 = vld [vmem:[%s260 + $0x790] sm:$0xff]
        %v617 = vld [vmem:[%s260 + $0x798] sm:$0xff]
        %v618 = vld [vmem:[%s260 + $0x7a0] sm:$0xff]
        %v619 = vld [vmem:[%s260 + $0x7a8] sm:$0xff]
        %v620 = vld [vmem:[%s260 + $0x7b0] sm:$0xff]
        %v621 = vld [vmem:[%s260 + $0x7b8] sm:$0xff]
        %v622 = vld [vmem:[%s260 + $0x7c0] sm:$0xff]
        %v623 = vld [vmem:[%s260 + $0x7c8] sm:$0xff]
        %v624 = vld [vmem:[%s260 + $0x7d0] sm:$0xff]
        %v625 = vld [vmem:[%s260 + $0x7d8] sm:$0xff]
        %v626 = vld [vmem:[%s260 + $0x7e0] sm:$0xff]
        %v627 = vld [vmem:[%s260 + $0x7e8] sm:$0xff]
        %v628 = vld [vmem:[%s260 + $0x7f0] sm:$0xff]
        %v629 = vld [vmem:[%s260 + $0x7f8] sm:$0xff]
        %v630 = vld [vmem:[%s260 + $0x800] sm:$0xff]
        %v631 = vld [vmem:[%s260 + $0x808] sm:$0xff]
        %v632 = vld [vmem:[%s260 + $0x810] sm:$0xff]
        %v633 = vld [vmem:[%s260 + $0x818] sm:$0xff]
        %v634 = vld [vmem:[%s260 + $0x820] sm:$0xff]
        %v635 = vld [vmem:[%s260 + $0x828] sm:$0xff]
        %v636 = vld [vmem:[%s260 + $0x830] sm:$0xff]
        %v637 = vld [vmem:[%s260 + $0x838] sm:$0xff]
        %v638 = vld [vmem:[%s260 + $0x840] sm:$0xff]
        %v639 = vld [vmem:[%s260 + $0x848] sm:$0xff]
        %v640 = vld [vmem:[%s260 + $0x850] sm:$0xff]
        %v641 = vld [vmem:[%s260 + $0x858] sm:$0xff]
        %v642 = vld [vmem:[%s260 + $0x860] sm:$0xff]
        %v643 = vld [vmem:[%s260 + $0x868] sm:$0xff]
        %v644 = vld [vmem:[%s260 + $0x870] sm:$0xff]
        %v645 = vld [vmem:[%s260 + $0x878] sm:$0xff]
        %v646 = vld [vmem:[%s260 + $0x880] sm:$0xff]
        %v647 = vld [vmem:[%s260 + $0x888] sm:$0xff]
        %v648 = vld [vmem:[%s260 + $0x890] sm:$0xff]
        %v649 = vld [vmem:[%s260 + $0x898] sm:$0xff]
        %v650 = vld [vmem:[%s260 + $0x8a0] sm:$0xff]
        %v651 = vld [vmem:[%s260 + $0x8a8] sm:$0xff]
        %v652 = vld [vmem:[%s260 + $0x8b0] sm:$0xff]
        %v653 = vld [vmem:[%s260 + $0x8b8] sm:$0xff]
        %v654 = vld [vmem:[%s260 + $0x8c0] sm:$0xff]
        %v655 = vld [vmem:[%s260 + $0x8c8] sm:$0xff]
        %v656 = vld [vmem:[%s260 + $0x8d0] sm:$0xff]
        %v657 = vld [vmem:[%s260 + $0x8d8] sm:$0xff]
        %v658 = vld [vmem:[%s260 + $0x8e0] sm:$0xff]
        %v659 = vld [vmem:[%s260 + $0x8e8] sm:$0xff]
        %v660 = vld [vmem:[%s260 + $0x8f0] sm:$0xff]
        %v661 = vld [vmem:[%s260 + $0x8f8] sm:$0xff]
        %v662 = vld [vmem:[%s260 + $0x900] sm:$0xff]
        %v663 = vld [vmem:[%s260 + $0x908] sm:$0xff]
        %v664 = vld [vmem:[%s260 + $0x910] sm:$0xff]
        %v665 = vld [vmem:[%s260 + $0x918] sm:$0xff]
        %v666 = vld [vmem:[%s260 + $0x920] sm:$0xff]
        %v667 = vld [vmem:[%s260 + $0x928] sm:$0xff]
        %v668 = vld [vmem:[%s260 + $0x930] sm:$0xff]
        %v669 = vld [vmem:[%s260 + $0x938] sm:$0xff]
        %v670 = vld [vmem:[%s260 + $0x940] sm:$0xff]
        %v671 = vld [vmem:[%s260 + $0x948] sm:$0xff]
        %v672 = vld [vmem:[%s260 + $0x950] sm:$0xff]
        %v673 = vld [vmem:[%s260 + $0x958] sm:$0xff]
        %v674 = vld [vmem:[%s260 + $0x960] sm:$0xff]
        %v675 = vld [vmem:[%s260 + $0x968] sm:$0xff]
        %v676 = vld [vmem:[%s260 + $0x970] sm:$0xff]
        %v677 = vld [vmem:[%s260 + $0x978] sm:$0xff]
        %v678 = vld [vmem:[%s260 + $0x980] sm:$0xff]
        %v679 = vld [vmem:[%s260 + $0x988] sm:$0xff]
        %v680 = vld [vmem:[%s260 + $0x990] sm:$0xff]
        %v681 = vld [vmem:[%s260 + $0x998] sm:$0xff]
        %v682 = vld [vmem:[%s260 + $0x9a0] sm:$0xff]
        %v683 = vld [vmem:[%s260 + $0x9a8] sm:$0xff]
        %v684 = vld [vmem:[%s260 + $0x9b0] sm:$0xff]
        %v685 = vld [vmem:[%s260 + $0x9b8] sm:$0xff]
        %v686 = vld [vmem:[%s260 + $0x9c0] sm:$0xff]
        %v687 = vld [vmem:[%s260 + $0x9c8] sm:$0xff]
        %v688 = vld [vmem:[%s260 + $0x9d0] sm:$0xff]
        %v689 = vld [vmem:[%s260 + $0x9d8] sm:$0xff]
        %v690 = vld [vmem:[%s260 + $0x9e0] sm:$0xff]
        %v691 = vld [vmem:[%s260 + $0x9e8] sm:$0xff]
        %v692 = vld [vmem:[%s260 + $0x9f0] sm:$0xff]
        %v693 = vld [vmem:[%s260 + $0x9f8] sm:$0xff]
        %v694 = vld [vmem:[%s260 + $0xa00] sm:$0xff]
        %v695 = vld [vmem:[%s260 + $0xa08] sm:$0xff]
        %v696 = vld [vmem:[%s260 + $0xa10] sm:$0xff]
        %v697 = vld [vmem:[%s260 + $0xa18] sm:$0xff]
        %v698 = vld [vmem:[%s260 + $0xa20] sm:$0xff]
        %v699 = vld [vmem:[%s260 + $0xa28] sm:$0xff]
        %v700 = vld [vmem:[%s260 + $0xa30] sm:$0xff]
        %v701 = vld [vmem:[%s260 + $0xa38] sm:$0xff]
        %v702 = vld [vmem:[%s260 + $0xa40] sm:$0xff]
        %v703 = vld [vmem:[%s260 + $0xa48] sm:$0xff]
        %v704 = vld [vmem:[%s260 + $0xa50] sm:$0xff]
        %v705 = vld [vmem:[%s260 + $0xa58] sm:$0xff]
        %v706 = vld [vmem:[%s260 + $0xa60] sm:$0xff]
        %v707 = vld [vmem:[%s260 + $0xa68] sm:$0xff]
        %v708 = vld [vmem:[%s260 + $0xa70] sm:$0xff]
        %v709 = vld [vmem:[%s260 + $0xa78] sm:$0xff]
        %v710 = vld [vmem:[%s260 + $0xa80] sm:$0xff]
        %v711 = vld [vmem:[%s260 + $0xa88] sm:$0xff]
        %v712 = vld [vmem:[%s260 + $0xa90] sm:$0xff]
        %v713 = vld [vmem:[%s260 + $0xa98] sm:$0xff]
        %v714 = vld [vmem:[%s260 + $0xaa0] sm:$0xff]
        %v715 = vld [vmem:[%s260 + $0xaa8] sm:$0xff]
        %v716 = vld [vmem:[%s260 + $0xab0] sm:$0xff]
        %v717 = vld [vmem:[%s260 + $0xab8] sm:$0xff]
        %v718 = vld [vmem:[%s260 + $0xac0] sm:$0xff]
        %v719 = vld [vmem:[%s260 + $0xac8] sm:$0xff]
        %v720 = vld [vmem:[%s260 + $0xad0] sm:$0xff]
        %v721 = vld [vmem:[%s260 + $0xad8] sm:$0xff]
        %v722 = vld [vmem:[%s260 + $0xae0] sm:$0xff]
        %v723 = vld [vmem:[%s260 + $0xae8] sm:$0xff]
        %v724 = vld [vmem:[%s260 + $0xaf0] sm:$0xff]
        %v725 = vld [vmem:[%s260 + $0xaf8] sm:$0xff]
        %v726 = vld [vmem:[%s260 + $0xb00] sm:$0xff]
        %v727 = vld [vmem:[%s260 + $0xb08] sm:$0xff]
        %v728 = vld [vmem:[%s260 + $0xb10] sm:$0xff]
        %v729 = vld [vmem:[%s260 + $0xb18] sm:$0xff]
        %v730 = vld [vmem:[%s260 + $0xb20] sm:$0xff]
        %v731 = vld [vmem:[%s260 + $0xb28] sm:$0xff]
        %v732 = vld [vmem:[%s260 + $0xb30] sm:$0xff]
        %v733 = vld [vmem:[%s260 + $0xb38] sm:$0xff]
        %v734 = vld [vmem:[%s260 + $0xb40] sm:$0xff]
        %v735 = vld [vmem:[%s260 + $0xb48] sm:$0xff]
        %v736 = vld [vmem:[%s260 + $0xb50] sm:$0xff]
        %v737 = vld [vmem:[%s260 + $0xb58] sm:$0xff]
        %v738 = vld [vmem:[%s260 + $0xb60] sm:$0xff]
        %v739 = vld [vmem:[%s260 + $0xb68] sm:$0xff]
        %v740 = vld [vmem:[%s260 + $0xb70] sm:$0xff]
        %v741 = vld [vmem:[%s260 + $0xb78] sm:$0xff]
        %v742 = vld [vmem:[%s260 + $0xb80] sm:$0xff]
        %v743 = vld [vmem:[%s260 + $0xb88] sm:$0xff]
        %v744 = vld [vmem:[%s260 + $0xb90] sm:$0xff]
        %v745 = vld [vmem:[%s260 + $0xb98] sm:$0xff]
        %v746 = vld [vmem:[%s260 + $0xba0] sm:$0xff]
        %v747 = vld [vmem:[%s260 + $0xba8] sm:$0xff]
        %v748 = vld [vmem:[%s260 + $0xbb0] sm:$0xff]
        %v749 = vld [vmem:[%s260 + $0xbb8] sm:$0xff]
        %v750 = vld [vmem:[%s260 + $0xbc0] sm:$0xff]
        %v751 = vld [vmem:[%s260 + $0xbc8] sm:$0xff]
        %v752 = vld [vmem:[%s260 + $0xbd0] sm:$0xff]
        %v753 = vld [vmem:[%s260 + $0xbd8] sm:$0xff]
        %v754 = vld [vmem:[%s260 + $0xbe0] sm:$0xff]
        %v755 = vld [vmem:[%s260 + $0xbe8] sm:$0xff]
        %v756 = vld [vmem:[%s260 + $0xbf0] sm:$0xff]
        %v757 = vld [vmem:[%s260 + $0xbf8] sm:$0xff]
        %v758 = vld [vmem:[%s260 + $0xc00] sm:$0xff]
        %v759 = vld [vmem:[%s260 + $0xc08] sm:$0xff]
        %v760 = vld [vmem:[%s260 + $0xc10] sm:$0xff]
        %v761 = vld [vmem:[%s260 + $0xc18] sm:$0xff]
        %v762 = vld [vmem:[%s260 + $0xc20] sm:$0xff]
        %v763 = vld [vmem:[%s260 + $0xc28] sm:$0xff]
        %v764 = vld [vmem:[%s260 + $0xc30] sm:$0xff]
        %v765 = vld [vmem:[%s260 + $0xc38] sm:$0xff]
        %v766 = vld [vmem:[%s260 + $0xc40] sm:$0xff]
        %v767 = vld [vmem:[%s260 + $0xc48] sm:$0xff]
        %v768 = vld [vmem:[%s260 + $0xc50] sm:$0xff]
        %v769 = vld [vmem:[%s260 + $0xc58] sm:$0xff]
        %v770 = vld [vmem:[%s260 + $0xc60] sm:$0xff]
        %v771 = vld [vmem:[%s260 + $0xc68] sm:$0xff]
        %v772 = vld [vmem:[%s260 + $0xc70] sm:$0xff]
        %v773 = vld [vmem:[%s260 + $0xc78] sm:$0xff]
        %v774 = vld [vmem:[%s260 + $0xc80] sm:$0xff]
        %v775 = vld [vmem:[%s260 + $0xc88] sm:$0xff]
        %v776 = vld [vmem:[%s260 + $0xc90] sm:$0xff]
        %v777 = vld [vmem:[%s260 + $0xc98] sm:$0xff]
        %v778 = vld [vmem:[%s260 + $0xca0] sm:$0xff]
        %v779 = vld [vmem:[%s260 + $0xca8] sm:$0xff]
        %v780 = vld [vmem:[%s260 + $0xcb0] sm:$0xff]
        %v781 = vld [vmem:[%s260 + $0xcb8] sm:$0xff]
        %v782 = vld [vmem:[%s260 + $0xcc0] sm:$0xff]
        %v783 = vld [vmem:[%s260 + $0xcc8] sm:$0xff]
        %v784 = vld [vmem:[%s260 + $0xcd0] sm:$0xff]
        %v785 = vld [vmem:[%s260 + $0xcd8] sm:$0xff]
        %v786 = vld [vmem:[%s260 + $0xce0] sm:$0xff]
        %v787 = vld [vmem:[%s260 + $0xce8] sm:$0xff]
        %v788 = vld [vmem:[%s260 + $0xcf0] sm:$0xff]
        %v789 = vld [vmem:[%s260 + $0xcf8] sm:$0xff]
        %v790 = vld [vmem:[%s260 + $0xd00] sm:$0xff]
        %v791 = vld [vmem:[%s260 + $0xd08] sm:$0xff]
        %v792 = vld [vmem:[%s260 + $0xd10] sm:$0xff]
        %v793 = vld [vmem:[%s260 + $0xd18] sm:$0xff]
        %v794 = vld [vmem:[%s260 + $0xd20] sm:$0xff]
        %v795 = vld [vmem:[%s260 + $0xd28] sm:$0xff]
        %v796 = vld [vmem:[%s260 + $0xd30] sm:$0xff]
        %v797 = vld [vmem:[%s260 + $0xd38] sm:$0xff]
        %v798 = vld [vmem:[%s260 + $0xd40] sm:$0xff]
        %v799 = vld [vmem:[%s260 + $0xd48] sm:$0xff]
        %v800 = vld [vmem:[%s260 + $0xd50] sm:$0xff]
        %v801 = vld [vmem:[%s260 + $0xd58] sm:$0xff]
        %v802 = vld [vmem:[%s260 + $0xd60] sm:$0xff]
        %v803 = vld [vmem:[%s260 + $0xd68] sm:$0xff]
        %v804 = vld [vmem:[%s260 + $0xd70] sm:$0xff]
        %v805 = vld [vmem:[%s260 + $0xd78] sm:$0xff]
        %v806 = vld [vmem:[%s260 + $0xd80] sm:$0xff]
        %v807 = vld [vmem:[%s260 + $0xd88] sm:$0xff]
        %v808 = vld [vmem:[%s260 + $0xd90] sm:$0xff]
        %v809 = vld [vmem:[%s260 + $0xd98] sm:$0xff]
        %v810 = vld [vmem:[%s260 + $0xda0] sm:$0xff]
        %v811 = vld [vmem:[%s260 + $0xda8] sm:$0xff]
        %v812 = vld [vmem:[%s260 + $0xdb0] sm:$0xff]
        %v813 = vld [vmem:[%s260 + $0xdb8] sm:$0xff]
        %v814 = vld [vmem:[%s260 + $0xdc0] sm:$0xff]
        %v815 = vld [vmem:[%s260 + $0xdc8] sm:$0xff]
        %v816 = vld [vmem:[%s260 + $0xdd0] sm:$0xff]
        %v817 = vld [vmem:[%s260 + $0xdd8] sm:$0xff]
        %v818 = vld [vmem:[%s260 + $0xde0] sm:$0xff]
        %v819 = vld [vmem:[%s260 + $0xde8] sm:$0xff]
        %v820 = vld [vmem:[%s260 + $0xdf0] sm:$0xff]
        %v821 = vld [vmem:[%s260 + $0xdf8] sm:$0xff]
        %v822 = vld [vmem:[%s260 + $0xe00] sm:$0xff]
        %v823 = vld [vmem:[%s260 + $0xe08] sm:$0xff]
        %v824 = vld [vmem:[%s260 + $0xe10] sm:$0xff]
        %v825 = vld [vmem:[%s260 + $0xe18] sm:$0xff]
        %v826 = vld [vmem:[%s260 + $0xe20] sm:$0xff]
        %v827 = vld [vmem:[%s260 + $0xe28] sm:$0xff]
        %v828 = vld [vmem:[%s260 + $0xe30] sm:$0xff]
        %v829 = vld [vmem:[%s260 + $0xe38] sm:$0xff]
        %v830 = vld [vmem:[%s260 + $0xe40] sm:$0xff]
        %v831 = vld [vmem:[%s260 + $0xe48] sm:$0xff]
        %v832 = vld [vmem:[%s260 + $0xe50] sm:$0xff]
        %v833 = vld [vmem:[%s260 + $0xe58] sm:$0xff]
        %v834 = vld [vmem:[%s260 + $0xe60] sm:$0xff]
        %v835 = vld [vmem:[%s260 + $0xe68] sm:$0xff]
        %v836 = vld [vmem:[%s260 + $0xe70] sm:$0xff]
        %v837 = vld [vmem:[%s260 + $0xe78] sm:$0xff]
        %v838 = vld [vmem:[%s260 + $0xe80] sm:$0xff]
        %v839 = vld [vmem:[%s260 + $0xe88] sm:$0xff]
        %v840 = vld [vmem:[%s260 + $0xe90] sm:$0xff]
        %v841 = vld [vmem:[%s260 + $0xe98] sm:$0xff]
        %v842 = vld [vmem:[%s260 + $0xea0] sm:$0xff]
        %v843 = vld [vmem:[%s260 + $0xea8] sm:$0xff]
        %v844 = vld [vmem:[%s260 + $0xeb0] sm:$0xff]
        %v845 = vld [vmem:[%s260 + $0xeb8] sm:$0xff]
        %v846 = vld [vmem:[%s260 + $0xec0] sm:$0xff]
        %v847 = vld [vmem:[%s260 + $0xec8] sm:$0xff]
        %v848 = vld [vmem:[%s260 + $0xed0] sm:$0xff]
        %v849 = vld [vmem:[%s260 + $0xed8] sm:$0xff]
        %v850 = vld [vmem:[%s260 + $0xee0] sm:$0xff]
        %v851 = vld [vmem:[%s260 + $0xee8] sm:$0xff]
        %v852 = vld [vmem:[%s260 + $0xef0] sm:$0xff]
        %v853 = vld [vmem:[%s260 + $0xef8] sm:$0xff]
        %v854 = vld [vmem:[%s260 + $0xf00] sm:$0xff]
        %v855 = vld [vmem:[%s260 + $0xf08] sm:$0xff]
        %v856 = vld [vmem:[%s260 + $0xf10] sm:$0xff]
        %v857 = vld [vmem:[%s260 + $0xf18] sm:$0xff]
        %v858 = vld [vmem:[%s260 + $0xf20] sm:$0xff]
        %v859 = vld [vmem:[%s260 + $0xf28] sm:$0xff]
        %v860 = vld [vmem:[%s260 + $0xf30] sm:$0xff]
        %v861 = vld [vmem:[%s260 + $0xf38] sm:$0xff]
        %v862 = vld [vmem:[%s260 + $0xf40] sm:$0xff]
        %v863 = vld [vmem:[%s260 + $0xf48] sm:$0xff]
        %v864 = vld [vmem:[%s260 + $0xf50] sm:$0xff]
        %v865 = vld [vmem:[%s260 + $0xf58] sm:$0xff]
        %v866 = vld [vmem:[%s260 + $0xf60] sm:$0xff]
        %v867 = vld [vmem:[%s260 + $0xf68] sm:$0xff]
        %v868 = vld [vmem:[%s260 + $0xf70] sm:$0xff]
        %v869 = vld [vmem:[%s260 + $0xf78] sm:$0xff]
        %v870 = vld [vmem:[%s260 + $0xf80] sm:$0xff]
        %v871 = vld [vmem:[%s260 + $0xf88] sm:$0xff]
        %v872 = vld [vmem:[%s260 + $0xf90] sm:$0xff]
        %v873 = vld [vmem:[%s260 + $0xf98] sm:$0xff]
        %v874 = vld [vmem:[%s260 + $0xfa0] sm:$0xff]
        %v875 = vld [vmem:[%s260 + $0xfa8] sm:$0xff]
        %v876 = vld [vmem:[%s260 + $0xfb0] sm:$0xff]
        %v877 = vld [vmem:[%s260 + $0xfb8] sm:$0xff]
        %v878 = vld [vmem:[%s260 + $0xfc0] sm:$0xff]
        %v879 = vld [vmem:[%s260 + $0xfc8] sm:$0xff]
        %v880 = vld [vmem:[%s260 + $0xfd0] sm:$0xff]
        %v881 = vld [vmem:[%s260 + $0xfd8] sm:$0xff]
        %v882 = vld [vmem:[%s260 + $0xfe0] sm:$0xff]
        %v883 = vld [vmem:[%s260 + $0xfe8] sm:$0xff]
        %v884 = vld [vmem:[%s260 + $0xff0] sm:$0xff]
        %v885 = vld [vmem:[%s260 + $0xff8] sm:$0xff]
        %v886 = vld [vmem:[%s260 + $0x1000] sm:$0xff]
        %v887 = vld [vmem:[%s260 + $0x1008] sm:$0xff]
        %v888 = vld [vmem:[%s260 + $0x1010] sm:$0xff]
        %v889 = vld [vmem:[%s260 + $0x1018] sm:$0xff]
        %v890 = vld [vmem:[%s260 + $0x1020] sm:$0xff]
        %v891 = vld [vmem:[%s260 + $0x1028] sm:$0xff]
        %v892 = vld [vmem:[%s260 + $0x1030] sm:$0xff]
        %v893 = vld [vmem:[%s260 + $0x1038] sm:$0xff]
        %v894 = vld [vmem:[%s260 + $0x1040] sm:$0xff]
        %v895 = vld [vmem:[%s260 + $0x1048] sm:$0xff]
        %v896 = vld [vmem:[%s260 + $0x1050] sm:$0xff]
        %v897 = vld [vmem:[%s260 + $0x1058] sm:$0xff]
        %v898 = vld [vmem:[%s260 + $0x1060] sm:$0xff]
        %v899 = vld [vmem:[%s260 + $0x1068] sm:$0xff]
        %v900 = vld [vmem:[%s260 + $0x1070] sm:$0xff]
        %v901 = vld [vmem:[%s260 + $0x1078] sm:$0xff]
        %v902 = vld [vmem:[%s260 + $0x1080] sm:$0xff]
        %v903 = vld [vmem:[%s260 + $0x1088] sm:$0xff]
        %v904 = vld [vmem:[%s260 + $0x1090] sm:$0xff]
        %v905 = vld [vmem:[%s260 + $0x1098] sm:$0xff]
        %v906 = vld [vmem:[%s260 + $0x10a0] sm:$0xff]
        %v907 = vld [vmem:[%s260 + $0x10a8] sm:$0xff]
        %v908 = vld [vmem:[%s260 + $0x10b0] sm:$0xff]
        %v909 = vld [vmem:[%s260 + $0x10b8] sm:$0xff]
        %v910 = vld [vmem:[%s260 + $0x10c0] sm:$0xff]
        %v911 = vld [vmem:[%s260 + $0x10c8] sm:$0xff]
        %v912 = vld [vmem:[%s260 + $0x10d0] sm:$0xff]
        %v913 = vld [vmem:[%s260 + $0x10d8] sm:$0xff]
        %v914 = vld [vmem:[%s260 + $0x10e0] sm:$0xff]
        %v915 = vld [vmem:[%s260 + $0x10e8] sm:$0xff]
        %v916 = vld [vmem:[%s260 + $0x10f0] sm:$0xff]
        %v917 = vld [vmem:[%s260 + $0x10f8] sm:$0xff]
        %v918 = vld [vmem:[%s260 + $0x1100] sm:$0xff]
        %v919 = vld [vmem:[%s260 + $0x1108] sm:$0xff]
        %v920 = vld [vmem:[%s260 + $0x1110] sm:$0xff]
        %v921 = vld [vmem:[%s260 + $0x1118] sm:$0xff]
        %v922 = vld [vmem:[%s260 + $0x1120] sm:$0xff]
        %v923 = vld [vmem:[%s260 + $0x1128] sm:$0xff]
        %v924 = vld [vmem:[%s260 + $0x1130] sm:$0xff]
        %v925 = vld [vmem:[%s260 + $0x1138] sm:$0xff]
        %v926 = vld [vmem:[%s260 + $0x1140] sm:$0xff]
        %v927 = vld [vmem:[%s260 + $0x1148] sm:$0xff]
        %v928 = vld [vmem:[%s260 + $0x1150] sm:$0xff]
        %v929 = vld [vmem:[%s260 + $0x1158] sm:$0xff]
        %v930 = vld [vmem:[%s260 + $0x1160] sm:$0xff]
        %v931 = vld [vmem:[%s260 + $0x1168] sm:$0xff]
        %v932 = vld [vmem:[%s260 + $0x1170] sm:$0xff]
        %v933 = vld [vmem:[%s260 + $0x1178] sm:$0xff]
        %v934 = vld [vmem:[%s260 + $0x1180] sm:$0xff]
        %v935 = vld [vmem:[%s260 + $0x1188] sm:$0xff]
        %v936 = vld [vmem:[%s260 + $0x1190] sm:$0xff]
        %v937 = vld [vmem:[%s260 + $0x1198] sm:$0xff]
        %v938 = vld [vmem:[%s260 + $0x11a0] sm:$0xff]
        %v939 = vld [vmem:[%s260 + $0x11a8] sm:$0xff]
        %v940 = vld [vmem:[%s260 + $0x11b0] sm:$0xff]
        %v941 = vld [vmem:[%s260 + $0x11b8] sm:$0xff]
        %v942 = vld [vmem:[%s260 + $0x11c0] sm:$0xff]
        %v943 = vld [vmem:[%s260 + $0x11c8] sm:$0xff]
        %v944 = vld [vmem:[%s260 + $0x11d0] sm:$0xff]
        %v945 = vld [vmem:[%s260 + $0x11d8] sm:$0xff]
        %v946 = vld [vmem:[%s260 + $0x11e0] sm:$0xff]
        %v947 = vld [vmem:[%s260 + $0x11e8] sm:$0xff]
        %v948 = vld [vmem:[%s260 + $0x11f0] sm:$0xff]
        %v949 = vld [vmem:[%s260 + $0x11f8] sm:$0xff]
        %v950 = vld [vmem:[#allocation7 + $0x10] sm:$0xff]
        %v951 = vld [vmem:[#allocation7 + $0x18] sm:$0xff]
        %v952 = vld [vmem:[#allocation7 + $0x30] sm:$0xff]
        %v953 = vld [vmem:[#allocation7 + $0x38] sm:$0xff]
        %v954 = vld [vmem:[#allocation7 + $0x50] sm:$0xff]
        %v955 = vld [vmem:[#allocation7 + $0x58] sm:$0xff]
        %v956 = vld [vmem:[#allocation7 + $0x70] sm:$0xff]
        %v957 = vld [vmem:[#allocation7 + $0x78] sm:$0xff]
        %v958 = vld [vmem:[#allocation7 + $0x90] sm:$0xff]
        %v959 = vld [vmem:[#allocation7 + $0x98] sm:$0xff]
        %v960 = vld [vmem:[#allocation7 + $0xb0] sm:$0xff]
        %v961 = vld [vmem:[#allocation7 + $0xb8] sm:$0xff]
        %v962 = vld [vmem:[#allocation7 + $0xd0] sm:$0xff]
        %v963 = vld [vmem:[#allocation7 + $0xd8] sm:$0xff]
        %v964 = vld [vmem:[#allocation7 + $0xf0] sm:$0xff]
        %v965 = vld [vmem:[#allocation7 + $0xf8] sm:$0xff]
        %v966 = vld [vmem:[#allocation7 + $0x110] sm:$0xff]
        %v967 = vld [vmem:[#allocation7 + $0x118] sm:$0xff]
        %v968 = vld [vmem:[#allocation7 + $0x130] sm:$0xff]
        %v969 = vld [vmem:[#allocation7 + $0x138] sm:$0xff]
        %v970 = vld [vmem:[#allocation7 + $0x150] sm:$0xff]
        %v971 = vld [vmem:[#allocation7 + $0x158] sm:$0xff]
        %v972 = vld [vmem:[#allocation7 + $0x170] sm:$0xff]
        %v973 = vld [vmem:[#allocation7 + $0x178] sm:$0xff]
        %v974 = vld [vmem:[#allocation7 + $0x190] sm:$0xff]
        %v975 = vld [vmem:[#allocation7 + $0x198] sm:$0xff]
        %v976 = vld [vmem:[#allocation7 + $0x1b0] sm:$0xff]
        %v977 = vld [vmem:[#allocation7 + $0x1b8] sm:$0xff]
        %v978 = vld [vmem:[#allocation7 + $0x1d0] sm:$0xff]
        %v979 = vld [vmem:[#allocation7 + $0x1d8] sm:$0xff]
        %v980 = vld [vmem:[#allocation7 + $0x1f0] sm:$0xff]
        %v981 = vld [vmem:[#allocation7 + $0x1f8] sm:$0xff]
        %v982 = vld [vmem:[#allocation7 + $0x210] sm:$0xff]
        %v983 = vld [vmem:[#allocation7 + $0x218] sm:$0xff]
        %v984 = vld [vmem:[#allocation7 + $0x230] sm:$0xff]
        %v985 = vld [vmem:[#allocation7 + $0x238] sm:$0xff]
        %v986 = vld [vmem:[#allocation7 + $0x250] sm:$0xff]
        %v987 = vld [vmem:[#allocation7 + $0x258] sm:$0xff]
        %v988 = vld [vmem:[#allocation7 + $0x270] sm:$0xff]
        %v989 = vld [vmem:[#allocation7 + $0x278] sm:$0xff]
        %v990 = vld [vmem:[#allocation7 + $0x290] sm:$0xff]
        %v991 = vld [vmem:[#allocation7 + $0x298] sm:$0xff]
        %v992 = vld [vmem:[#allocation7 + $0x2b0] sm:$0xff]
        %v993 = vld [vmem:[#allocation7 + $0x2b8] sm:$0xff]
        %v994 = vld [vmem:[#allocation7 + $0x2d0] sm:$0xff]
        %v995 = vld [vmem:[#allocation7 + $0x2d8] sm:$0xff]
        %v996 = vld [vmem:[#allocation7 + $0x2f0] sm:$0xff]
        %v997 = vld [vmem:[#allocation7 + $0x2f8] sm:$0xff]
        %v998 = vld [vmem:[#allocation7 + $0x310] sm:$0xff]
        %v999 = vld [vmem:[#allocation7 + $0x318] sm:$0xff]
        %v1000 = vld [vmem:[#allocation7 + $0x330] sm:$0xff]
        %v1001 = vld [vmem:[#allocation7 + $0x338] sm:$0xff]
        %v1002 = vld [vmem:[#allocation7 + $0x350] sm:$0xff]
        %v1003 = vld [vmem:[#allocation7 + $0x358] sm:$0xff]
        %v1004 = vld [vmem:[#allocation7 + $0x370] sm:$0xff]
        %v1005 = vld [vmem:[#allocation7 + $0x378] sm:$0xff]
        %v1006 = vld [vmem:[#allocation7 + $0x390] sm:$0xff]
        %v1007 = vld [vmem:[#allocation7 + $0x398] sm:$0xff]
        %v1008 = vld [vmem:[#allocation7 + $0x3b0] sm:$0xff]
        %v1009 = vld [vmem:[#allocation7 + $0x3b8] sm:$0xff]
        %v1010 = vld [vmem:[#allocation7 + $0x3d0] sm:$0xff]
        %v1011 = vld [vmem:[#allocation7 + $0x3d8] sm:$0xff]
        %v1012 = vld [vmem:[#allocation7 + $0x3f0] sm:$0xff]
        %v1013 = vld [vmem:[#allocation7 + $0x3f8] sm:$0xff]
        %v1014 = vld [vmem:[%s269] sm:$0xff]
        %v1015 = vld [vmem:[%s269 + $0x8] sm:$0xff]
        %v1016 = vld [vmem:[%s269 + $0x10] sm:$0xff]
        %v1017 = vld [vmem:[%s269 + $0x18] sm:$0xff]
        %v1018 = vld [vmem:[%s269 + $0x20] sm:$0xff]
        %v1019 = vld [vmem:[%s269 + $0x28] sm:$0xff]
        %v1020 = vld [vmem:[%s269 + $0x30] sm:$0xff]
        %v1021 = vld [vmem:[%s269 + $0x38] sm:$0xff]
        %v1022 = vld [vmem:[%s269 + $0x40] sm:$0xff]
        %v1023 = vld [vmem:[%s269 + $0x48] sm:$0xff]
        %v1024 = vld [vmem:[%s269 + $0x50] sm:$0xff]
        %v1025 = vld [vmem:[%s269 + $0x58] sm:$0xff]
        %v1026 = vld [vmem:[%s269 + $0x60] sm:$0xff]
        %v1027 = vld [vmem:[%s269 + $0x68] sm:$0xff]
        %v1028 = vld [vmem:[%s269 + $0x70] sm:$0xff]
        %v1029 = vld [vmem:[%s269 + $0x78] sm:$0xff]
        %v1030 = vld [vmem:[%s269 + $0x80] sm:$0xff]
        %v1031 = vld [vmem:[%s269 + $0x88] sm:$0xff]
        %v1032 = vld [vmem:[%s269 + $0x90] sm:$0xff]
        %v1033 = vld [vmem:[%s269 + $0x98] sm:$0xff]
        %v1034 = vld [vmem:[%s269 + $0xa0] sm:$0xff]
        %v1035 = vld [vmem:[%s269 + $0xa8] sm:$0xff]
        %v1036 = vld [vmem:[%s269 + $0xb0] sm:$0xff]
        %v1037 = vld [vmem:[%s269 + $0xb8] sm:$0xff]
        %v1038 = vld [vmem:[%s269 + $0xc0] sm:$0xff]
        %v1039 = vld [vmem:[%s269 + $0xc8] sm:$0xff]
        %v1040 = vld [vmem:[%s269 + $0xd0] sm:$0xff]
        %v1041 = vld [vmem:[%s269 + $0xd8] sm:$0xff]
        %v1042 = vld [vmem:[%s269 + $0xe0] sm:$0xff]
        %v1043 = vld [vmem:[%s269 + $0xe8] sm:$0xff]
        %v1044 = vld [vmem:[%s269 + $0xf0] sm:$0xff]
        %v1045 = vld [vmem:[%s269 + $0xf8] sm:$0xff]
        %v1046 = vld [vmem:[%s269 + $0x100] sm:$0xff]
        %v1047 = vld [vmem:[%s269 + $0x108] sm:$0xff]
        %v1048 = vld [vmem:[%s269 + $0x110] sm:$0xff]
        %v1049 = vld [vmem:[%s269 + $0x118] sm:$0xff]
        %v1050 = vld [vmem:[%s269 + $0x120] sm:$0xff]
        %v1051 = vld [vmem:[%s269 + $0x128] sm:$0xff]
        %v1052 = vld [vmem:[%s269 + $0x130] sm:$0xff]
        %v1053 = vld [vmem:[%s269 + $0x138] sm:$0xff]
        %v1054 = vld [vmem:[%s269 + $0x140] sm:$0xff]
        %v1055 = vld [vmem:[%s269 + $0x148] sm:$0xff]
        %v1056 = vld [vmem:[%s269 + $0x150] sm:$0xff]
        %v1057 = vld [vmem:[%s269 + $0x158] sm:$0xff]
        %v1058 = vld [vmem:[%s269 + $0x160] sm:$0xff]
        %v1059 = vld [vmem:[%s269 + $0x168] sm:$0xff]
        %v1060 = vld [vmem:[%s269 + $0x170] sm:$0xff]
        %v1061 = vld [vmem:[%s269 + $0x178] sm:$0xff]
        %v1062 = vld [vmem:[%s269 + $0x180] sm:$0xff]
        %v1063 = vld [vmem:[%s269 + $0x188] sm:$0xff]
        %v1064 = vld [vmem:[%s269 + $0x190] sm:$0xff]
        %v1065 = vld [vmem:[%s269 + $0x198] sm:$0xff]
        %v1066 = vld [vmem:[%s269 + $0x1a0] sm:$0xff]
        %v1067 = vld [vmem:[%s269 + $0x1a8] sm:$0xff]
        %v1068 = vld [vmem:[%s269 + $0x1b0] sm:$0xff]
        %v1069 = vld [vmem:[%s269 + $0x1b8] sm:$0xff]
        %v1070 = vld [vmem:[%s269 + $0x1c0] sm:$0xff]
        %v1071 = vld [vmem:[%s269 + $0x1c8] sm:$0xff]
        %v1072 = vld [vmem:[%s269 + $0x1d0] sm:$0xff]
        %v1073 = vld [vmem:[%s269 + $0x1d8] sm:$0xff]
        %v1074 = vld [vmem:[%s269 + $0x1e0] sm:$0xff]
        %v1075 = vld [vmem:[%s269 + $0x1e8] sm:$0xff]
        %v1076 = vld [vmem:[%s269 + $0x1f0] sm:$0xff]
        %v1077 = vld [vmem:[%s269 + $0x1f8] sm:$0xff]
        %v1078 = vld [vmem:[%s269 + $0x200] sm:$0xff]
        %v1079 = vld [vmem:[%s269 + $0x208] sm:$0xff]
        %v1080 = vld [vmem:[%s269 + $0x210] sm:$0xff]
        %v1081 = vld [vmem:[%s269 + $0x218] sm:$0xff]
        %v1082 = vld [vmem:[%s269 + $0x220] sm:$0xff]
        %v1083 = vld [vmem:[%s269 + $0x228] sm:$0xff]
        %v1084 = vld [vmem:[%s269 + $0x230] sm:$0xff]
        %v1085 = vld [vmem:[%s269 + $0x238] sm:$0xff]
        %v1086 = vld [vmem:[%s269 + $0x240] sm:$0xff]
        %v1087 = vld [vmem:[%s269 + $0x248] sm:$0xff]
        %v1088 = vld [vmem:[%s269 + $0x250] sm:$0xff]
        %v1089 = vld [vmem:[%s269 + $0x258] sm:$0xff]
        %v1090 = vld [vmem:[%s269 + $0x260] sm:$0xff]
        %v1091 = vld [vmem:[%s269 + $0x268] sm:$0xff]
        %v1092 = vld [vmem:[%s269 + $0x270] sm:$0xff]
        %v1093 = vld [vmem:[%s269 + $0x278] sm:$0xff]
        %v1094 = vld [vmem:[%s269 + $0x280] sm:$0xff]
        %v1095 = vld [vmem:[%s269 + $0x288] sm:$0xff]
        %v1096 = vld [vmem:[%s269 + $0x290] sm:$0xff]
        %v1097 = vld [vmem:[%s269 + $0x298] sm:$0xff]
        %v1098 = vld [vmem:[%s269 + $0x2a0] sm:$0xff]
        %v1099 = vld [vmem:[%s269 + $0x2a8] sm:$0xff]
        %v1100 = vld [vmem:[%s269 + $0x2b0] sm:$0xff]
        %v1101 = vld [vmem:[%s269 + $0x2b8] sm:$0xff]
        %v1102 = vld [vmem:[%s269 + $0x2c0] sm:$0xff]
        %v1103 = vld [vmem:[%s269 + $0x2c8] sm:$0xff]
        %v1104 = vld [vmem:[%s269 + $0x2d0] sm:$0xff]
        %v1105 = vld [vmem:[%s269 + $0x2d8] sm:$0xff]
        %v1106 = vld [vmem:[%s269 + $0x2e0] sm:$0xff]
        %v1107 = vld [vmem:[%s269 + $0x2e8] sm:$0xff]
        %v1108 = vld [vmem:[%s269 + $0x2f0] sm:$0xff]
        %v1109 = vld [vmem:[%s269 + $0x2f8] sm:$0xff]
        %v1110 = vld [vmem:[%s269 + $0x300] sm:$0xff]
        %v1111 = vld [vmem:[%s269 + $0x308] sm:$0xff]
        %v1112 = vld [vmem:[%s269 + $0x310] sm:$0xff]
        %v1113 = vld [vmem:[%s269 + $0x318] sm:$0xff]
        %v1114 = vld [vmem:[%s269 + $0x320] sm:$0xff]
        %v1115 = vld [vmem:[%s269 + $0x328] sm:$0xff]
        %v1116 = vld [vmem:[%s269 + $0x330] sm:$0xff]
        %v1117 = vld [vmem:[%s269 + $0x338] sm:$0xff]
        %v1118 = vld [vmem:[%s269 + $0x340] sm:$0xff]
        %v1119 = vld [vmem:[%s269 + $0x348] sm:$0xff]
        %v1120 = vld [vmem:[%s269 + $0x350] sm:$0xff]
        %v1121 = vld [vmem:[%s269 + $0x358] sm:$0xff]
        %v1122 = vld [vmem:[%s269 + $0x360] sm:$0xff]
        %v1123 = vld [vmem:[%s269 + $0x368] sm:$0xff]
        %v1124 = vld [vmem:[%s269 + $0x370] sm:$0xff]
        %v1125 = vld [vmem:[%s269 + $0x378] sm:$0xff]
        %v1126 = vld [vmem:[%s269 + $0x380] sm:$0xff]
        %v1127 = vld [vmem:[%s269 + $0x388] sm:$0xff]
        %v1128 = vld [vmem:[%s269 + $0x390] sm:$0xff]
        %v1129 = vld [vmem:[%s269 + $0x398] sm:$0xff]
        %v1130 = vld [vmem:[%s269 + $0x3a0] sm:$0xff]
        %v1131 = vld [vmem:[%s269 + $0x3a8] sm:$0xff]
        %v1132 = vld [vmem:[%s269 + $0x3b0] sm:$0xff]
        %v1133 = vld [vmem:[%s269 + $0x3b8] sm:$0xff]
        %v1134 = vld [vmem:[%s269 + $0x3c0] sm:$0xff]
        %v1135 = vld [vmem:[%s269 + $0x3c8] sm:$0xff]
        %v1136 = vld [vmem:[%s269 + $0x3d0] sm:$0xff]
        %v1137 = vld [vmem:[%s269 + $0x3d8] sm:$0xff]
        %v1138 = vld [vmem:[%s269 + $0x3e0] sm:$0xff]
        %v1139 = vld [vmem:[%s269 + $0x3e8] sm:$0xff]
        %v1140 = vld [vmem:[%s269 + $0x3f0] sm:$0xff]
        %v1141 = vld [vmem:[%s269 + $0x3f8] sm:$0xff]
        %v1142 = vld [vmem:[%s269 + $0x400] sm:$0xff]
        %v1143 = vld [vmem:[%s269 + $0x408] sm:$0xff]
        %v1144 = vld [vmem:[%s269 + $0x410] sm:$0xff]
        %v1145 = vld [vmem:[%s269 + $0x418] sm:$0xff]
        %v1146 = vld [vmem:[%s269 + $0x420] sm:$0xff]
        %v1147 = vld [vmem:[%s269 + $0x428] sm:$0xff]
        %v1148 = vld [vmem:[%s269 + $0x430] sm:$0xff]
        %v1149 = vld [vmem:[%s269 + $0x438] sm:$0xff]
        %v1150 = vld [vmem:[%s269 + $0x440] sm:$0xff]
        %v1151 = vld [vmem:[%s269 + $0x448] sm:$0xff]
        %v1152 = vld [vmem:[%s269 + $0x450] sm:$0xff]
        %v1153 = vld [vmem:[%s269 + $0x458] sm:$0xff]
        %v1154 = vld [vmem:[%s269 + $0x460] sm:$0xff]
        %v1155 = vld [vmem:[%s269 + $0x468] sm:$0xff]
        %v1156 = vld [vmem:[%s269 + $0x470] sm:$0xff]
        %v1157 = vld [vmem:[%s269 + $0x478] sm:$0xff]
        %v1158 = vld [vmem:[%s269 + $0x480] sm:$0xff]
        %v1159 = vld [vmem:[%s269 + $0x488] sm:$0xff]
        %v1160 = vld [vmem:[%s269 + $0x490] sm:$0xff]
        %v1161 = vld [vmem:[%s269 + $0x498] sm:$0xff]
        %v1162 = vld [vmem:[%s269 + $0x4a0] sm:$0xff]
        %v1163 = vld [vmem:[%s269 + $0x4a8] sm:$0xff]
        %v1164 = vld [vmem:[%s269 + $0x4b0] sm:$0xff]
        %v1165 = vld [vmem:[%s269 + $0x4b8] sm:$0xff]
        %v1166 = vld [vmem:[%s269 + $0x4c0] sm:$0xff]
        %v1167 = vld [vmem:[%s269 + $0x4c8] sm:$0xff]
        %v1168 = vld [vmem:[%s269 + $0x4d0] sm:$0xff]
        %v1169 = vld [vmem:[%s269 + $0x4d8] sm:$0xff]
        %v1170 = vld [vmem:[%s269 + $0x4e0] sm:$0xff]
        %v1171 = vld [vmem:[%s269 + $0x4e8] sm:$0xff]
        %v1172 = vld [vmem:[%s269 + $0x4f0] sm:$0xff]
        %v1173 = vld [vmem:[%s269 + $0x4f8] sm:$0xff]
        %v1174 = vld [vmem:[%s269 + $0x500] sm:$0xff]
        %v1175 = vld [vmem:[%s269 + $0x508] sm:$0xff]
        %v1176 = vld [vmem:[%s269 + $0x510] sm:$0xff]
        %v1177 = vld [vmem:[%s269 + $0x518] sm:$0xff]
        %v1178 = vld [vmem:[%s269 + $0x520] sm:$0xff]
        %v1179 = vld [vmem:[%s269 + $0x528] sm:$0xff]
        %v1180 = vld [vmem:[%s269 + $0x530] sm:$0xff]
        %v1181 = vld [vmem:[%s269 + $0x538] sm:$0xff]
        %v1182 = vld [vmem:[%s269 + $0x540] sm:$0xff]
        %v1183 = vld [vmem:[%s269 + $0x548] sm:$0xff]
        %v1184 = vld [vmem:[%s269 + $0x550] sm:$0xff]
        %v1185 = vld [vmem:[%s269 + $0x558] sm:$0xff]
        %v1186 = vld [vmem:[%s269 + $0x560] sm:$0xff]
        %v1187 = vld [vmem:[%s269 + $0x568] sm:$0xff]
        %v1188 = vld [vmem:[%s269 + $0x570] sm:$0xff]
        %v1189 = vld [vmem:[%s269 + $0x578] sm:$0xff]
        %v1190 = vld [vmem:[%s269 + $0x580] sm:$0xff]
        %v1191 = vld [vmem:[%s269 + $0x588] sm:$0xff]
        %v1192 = vld [vmem:[%s269 + $0x590] sm:$0xff]
        %v1193 = vld [vmem:[%s269 + $0x598] sm:$0xff]
        %v1194 = vld [vmem:[%s269 + $0x5a0] sm:$0xff]
        %v1195 = vld [vmem:[%s269 + $0x5a8] sm:$0xff]
        %v1196 = vld [vmem:[%s269 + $0x5b0] sm:$0xff]
        %v1197 = vld [vmem:[%s269 + $0x5b8] sm:$0xff]
        %v1198 = vld [vmem:[%s269 + $0x5c0] sm:$0xff]
        %v1199 = vld [vmem:[%s269 + $0x5c8] sm:$0xff]
        %v1200 = vld [vmem:[%s269 + $0x5d0] sm:$0xff]
        %v1201 = vld [vmem:[%s269 + $0x5d8] sm:$0xff]
        %v1202 = vld [vmem:[%s269 + $0x5e0] sm:$0xff]
        %v1203 = vld [vmem:[%s269 + $0x5e8] sm:$0xff]
        %v1204 = vld [vmem:[%s269 + $0x5f0] sm:$0xff]
        %v1205 = vld [vmem:[%s269 + $0x5f8] sm:$0xff]
        %v1206 = vld [vmem:[%s269 + $0x600] sm:$0xff]
        %v1207 = vld [vmem:[%s269 + $0x608] sm:$0xff]
        %v1208 = vld [vmem:[%s269 + $0x610] sm:$0xff]
        %v1209 = vld [vmem:[%s269 + $0x618] sm:$0xff]
        %v1210 = vld [vmem:[%s269 + $0x620] sm:$0xff]
        %v1211 = vld [vmem:[%s269 + $0x628] sm:$0xff]
        %v1212 = vld [vmem:[%s269 + $0x630] sm:$0xff]
        %v1213 = vld [vmem:[%s269 + $0x638] sm:$0xff]
        %v1214 = vld [vmem:[%s269 + $0x640] sm:$0xff]
        %v1215 = vld [vmem:[%s269 + $0x648] sm:$0xff]
        %v1216 = vld [vmem:[%s269 + $0x650] sm:$0xff]
        %v1217 = vld [vmem:[%s269 + $0x658] sm:$0xff]
        %v1218 = vld [vmem:[%s269 + $0x660] sm:$0xff]
        %v1219 = vld [vmem:[%s269 + $0x668] sm:$0xff]
        %v1220 = vld [vmem:[%s269 + $0x670] sm:$0xff]
        %v1221 = vld [vmem:[%s269 + $0x678] sm:$0xff]
        %v1222 = vld [vmem:[%s269 + $0x680] sm:$0xff]
        %v1223 = vld [vmem:[%s269 + $0x688] sm:$0xff]
        %v1224 = vld [vmem:[%s269 + $0x690] sm:$0xff]
        %v1225 = vld [vmem:[%s269 + $0x698] sm:$0xff]
        %v1226 = vld [vmem:[%s269 + $0x6a0] sm:$0xff]
        %v1227 = vld [vmem:[%s269 + $0x6a8] sm:$0xff]
        %v1228 = vld [vmem:[%s269 + $0x6b0] sm:$0xff]
        %v1229 = vld [vmem:[%s269 + $0x6b8] sm:$0xff]
        %v1230 = vld [vmem:[%s269 + $0x6c0] sm:$0xff]
        %v1231 = vld [vmem:[%s269 + $0x6c8] sm:$0xff]
        %v1232 = vld [vmem:[%s269 + $0x6d0] sm:$0xff]
        %v1233 = vld [vmem:[%s269 + $0x6d8] sm:$0xff]
        %v1234 = vld [vmem:[%s269 + $0x6e0] sm:$0xff]
        %v1235 = vld [vmem:[%s269 + $0x6e8] sm:$0xff]
        %v1236 = vld [vmem:[%s269 + $0x6f0] sm:$0xff]
        %v1237 = vld [vmem:[%s269 + $0x6f8] sm:$0xff]
        %v1238 = vld [vmem:[%s269 + $0x700] sm:$0xff]
        %v1239 = vld [vmem:[%s269 + $0x708] sm:$0xff]
        %v1240 = vld [vmem:[%s269 + $0x710] sm:$0xff]
        %v1241 = vld [vmem:[%s269 + $0x718] sm:$0xff]
        %v1242 = vld [vmem:[%s269 + $0x720] sm:$0xff]
        %v1243 = vld [vmem:[%s269 + $0x728] sm:$0xff]
        %v1244 = vld [vmem:[%s269 + $0x730] sm:$0xff]
        %v1245 = vld [vmem:[%s269 + $0x738] sm:$0xff]
        %v1246 = vld [vmem:[%s269 + $0x740] sm:$0xff]
        %v1247 = vld [vmem:[%s269 + $0x748] sm:$0xff]
        %v1248 = vld [vmem:[%s269 + $0x750] sm:$0xff]
        %v1249 = vld [vmem:[%s269 + $0x758] sm:$0xff]
        %v1250 = vld [vmem:[%s269 + $0x760] sm:$0xff]
        %v1251 = vld [vmem:[%s269 + $0x768] sm:$0xff]
        %v1252 = vld [vmem:[%s269 + $0x770] sm:$0xff]
        %v1253 = vld [vmem:[%s269 + $0x778] sm:$0xff]
        %v1254 = vld [vmem:[%s269 + $0x780] sm:$0xff]
        %v1255 = vld [vmem:[%s269 + $0x788] sm:$0xff]
        %v1256 = vld [vmem:[%s269 + $0x790] sm:$0xff]
        %v1257 = vld [vmem:[%s269 + $0x798] sm:$0xff]
        %v1258 = vld [vmem:[%s269 + $0x7a0] sm:$0xff]
        %v1259 = vld [vmem:[%s269 + $0x7a8] sm:$0xff]
        %v1260 = vld [vmem:[%s269 + $0x7b0] sm:$0xff]
        %v1261 = vld [vmem:[%s269 + $0x7b8] sm:$0xff]
        %v1262 = vld [vmem:[%s269 + $0x7c0] sm:$0xff]
        %v1263 = vld [vmem:[%s269 + $0x7c8] sm:$0xff]
        %v1264 = vld [vmem:[%s269 + $0x7d0] sm:$0xff]
        %v1265 = vld [vmem:[%s269 + $0x7d8] sm:$0xff]
        %v1266 = vld [vmem:[%s269 + $0x7e0] sm:$0xff]
        %v1267 = vld [vmem:[%s269 + $0x7e8] sm:$0xff]
        %v1268 = vld [vmem:[%s269 + $0x7f0] sm:$0xff]
        %v1269 = vld [vmem:[%s269 + $0x7f8] sm:$0xff]
        %v1270 = vld [vmem:[%s269 + $0x800] sm:$0xff]
        %v1271 = vld [vmem:[%s269 + $0x808] sm:$0xff]
        %v1272 = vld [vmem:[%s269 + $0x810] sm:$0xff]
        %v1273 = vld [vmem:[%s269 + $0x818] sm:$0xff]
        %v1274 = vld [vmem:[%s269 + $0x820] sm:$0xff]
        %v1275 = vld [vmem:[%s269 + $0x828] sm:$0xff]
        %v1276 = vld [vmem:[%s269 + $0x830] sm:$0xff]
        %v1277 = vld [vmem:[%s269 + $0x838] sm:$0xff]
        %v1278 = vld [vmem:[%s269 + $0x840] sm:$0xff]
        %v1279 = vld [vmem:[%s269 + $0x848] sm:$0xff]
        %v1280 = vld [vmem:[%s269 + $0x850] sm:$0xff]
        %v1281 = vld [vmem:[%s269 + $0x858] sm:$0xff]
        %v1282 = vld [vmem:[%s269 + $0x860] sm:$0xff]
        %v1283 = vld [vmem:[%s269 + $0x868] sm:$0xff]
        %v1284 = vld [vmem:[%s269 + $0x870] sm:$0xff]
        %v1285 = vld [vmem:[%s269 + $0x878] sm:$0xff]
        %v1286 = vld [vmem:[%s269 + $0x880] sm:$0xff]
        %v1287 = vld [vmem:[%s269 + $0x888] sm:$0xff]
        %v1288 = vld [vmem:[%s269 + $0x890] sm:$0xff]
        %v1289 = vld [vmem:[%s269 + $0x898] sm:$0xff]
        %v1290 = vld [vmem:[%s269 + $0x8a0] sm:$0xff]
        %v1291 = vld [vmem:[%s269 + $0x8a8] sm:$0xff]
        %v1292 = vld [vmem:[%s269 + $0x8b0] sm:$0xff]
        %v1293 = vld [vmem:[%s269 + $0x8b8] sm:$0xff]
        %v1294 = vld [vmem:[%s269 + $0x8c0] sm:$0xff]
        %v1295 = vld [vmem:[%s269 + $0x8c8] sm:$0xff]
        %v1296 = vld [vmem:[%s269 + $0x8d0] sm:$0xff]
        %v1297 = vld [vmem:[%s269 + $0x8d8] sm:$0xff]
        %v1298 = vld [vmem:[%s269 + $0x8e0] sm:$0xff]
        %v1299 = vld [vmem:[%s269 + $0x8e8] sm:$0xff]
        %v1300 = vld [vmem:[%s269 + $0x8f0] sm:$0xff]
        %v1301 = vld [vmem:[%s269 + $0x8f8] sm:$0xff]
        %v1302 = vld [vmem:[%s269 + $0x900] sm:$0xff]
        %v1303 = vld [vmem:[%s269 + $0x908] sm:$0xff]
        %v1304 = vld [vmem:[%s269 + $0x910] sm:$0xff]
        %v1305 = vld [vmem:[%s269 + $0x918] sm:$0xff]
        %v1306 = vld [vmem:[%s269 + $0x920] sm:$0xff]
        %v1307 = vld [vmem:[%s269 + $0x928] sm:$0xff]
        %v1308 = vld [vmem:[%s269 + $0x930] sm:$0xff]
        %v1309 = vld [vmem:[%s269 + $0x938] sm:$0xff]
        %v1310 = vld [vmem:[%s269 + $0x940] sm:$0xff]
        %v1311 = vld [vmem:[%s269 + $0x948] sm:$0xff]
        %v1312 = vld [vmem:[%s269 + $0x950] sm:$0xff]
        %v1313 = vld [vmem:[%s269 + $0x958] sm:$0xff]
        %v1314 = vld [vmem:[%s269 + $0x960] sm:$0xff]
        %v1315 = vld [vmem:[%s269 + $0x968] sm:$0xff]
        %v1316 = vld [vmem:[%s269 + $0x970] sm:$0xff]
        %v1317 = vld [vmem:[%s269 + $0x978] sm:$0xff]
        %v1318 = vld [vmem:[%s269 + $0x980] sm:$0xff]
        %v1319 = vld [vmem:[%s269 + $0x988] sm:$0xff]
        %v1320 = vld [vmem:[%s269 + $0x990] sm:$0xff]
        %v1321 = vld [vmem:[%s269 + $0x998] sm:$0xff]
        %v1322 = vld [vmem:[%s269 + $0x9a0] sm:$0xff]
        %v1323 = vld [vmem:[%s269 + $0x9a8] sm:$0xff]
        %v1324 = vld [vmem:[%s269 + $0x9b0] sm:$0xff]
        %v1325 = vld [vmem:[%s269 + $0x9b8] sm:$0xff]
        %v1326 = vld [vmem:[%s269 + $0x9c0] sm:$0xff]
        %v1327 = vld [vmem:[%s269 + $0x9c8] sm:$0xff]
        %v1328 = vld [vmem:[%s269 + $0x9d0] sm:$0xff]
        %v1329 = vld [vmem:[%s269 + $0x9d8] sm:$0xff]
        %v1330 = vld [vmem:[%s269 + $0x9e0] sm:$0xff]
        %v1331 = vld [vmem:[%s269 + $0x9e8] sm:$0xff]
        %v1332 = vld [vmem:[%s269 + $0x9f0] sm:$0xff]
        %v1333 = vld [vmem:[%s269 + $0x9f8] sm:$0xff]
        %v1334 = vld [vmem:[%s269 + $0xa00] sm:$0xff]
        %v1335 = vld [vmem:[%s269 + $0xa08] sm:$0xff]
        %v1336 = vld [vmem:[%s269 + $0xa10] sm:$0xff]
        %v1337 = vld [vmem:[%s269 + $0xa18] sm:$0xff]
        %v1338 = vld [vmem:[%s269 + $0xa20] sm:$0xff]
        %v1339 = vld [vmem:[%s269 + $0xa28] sm:$0xff]
        %v1340 = vld [vmem:[%s269 + $0xa30] sm:$0xff]
        %v1341 = vld [vmem:[%s269 + $0xa38] sm:$0xff]
        %v1342 = vld [vmem:[%s269 + $0xa40] sm:$0xff]
        %v1343 = vld [vmem:[%s269 + $0xa48] sm:$0xff]
        %v1344 = vld [vmem:[%s269 + $0xa50] sm:$0xff]
        %v1345 = vld [vmem:[%s269 + $0xa58] sm:$0xff]
        %v1346 = vld [vmem:[%s269 + $0xa60] sm:$0xff]
        %v1347 = vld [vmem:[%s269 + $0xa68] sm:$0xff]
        %v1348 = vld [vmem:[%s269 + $0xa70] sm:$0xff]
        %v1349 = vld [vmem:[%s269 + $0xa78] sm:$0xff]
        %v1350 = vld [vmem:[%s269 + $0xa80] sm:$0xff]
        %v1351 = vld [vmem:[%s269 + $0xa88] sm:$0xff]
        %v1352 = vld [vmem:[%s269 + $0xa90] sm:$0xff]
        %v1353 = vld [vmem:[%s269 + $0xa98] sm:$0xff]
        %v1354 = vld [vmem:[%s269 + $0xaa0] sm:$0xff]
        %v1355 = vld [vmem:[%s269 + $0xaa8] sm:$0xff]
        %v1356 = vld [vmem:[%s269 + $0xab0] sm:$0xff]
        %v1357 = vld [vmem:[%s269 + $0xab8] sm:$0xff]
        %v1358 = vld [vmem:[%s269 + $0xac0] sm:$0xff]
        %v1359 = vld [vmem:[%s269 + $0xac8] sm:$0xff]
        %v1360 = vld [vmem:[%s269 + $0xad0] sm:$0xff]
        %v1361 = vld [vmem:[%s269 + $0xad8] sm:$0xff]
        %v1362 = vld [vmem:[%s269 + $0xae0] sm:$0xff]
        %v1363 = vld [vmem:[%s269 + $0xae8] sm:$0xff]
        %v1364 = vld [vmem:[%s269 + $0xaf0] sm:$0xff]
        %v1365 = vld [vmem:[%s269 + $0xaf8] sm:$0xff]
        %v1366 = vld [vmem:[%s269 + $0xb00] sm:$0xff]
        %v1367 = vld [vmem:[%s269 + $0xb08] sm:$0xff]
        %v1368 = vld [vmem:[%s269 + $0xb10] sm:$0xff]
        %v1369 = vld [vmem:[%s269 + $0xb18] sm:$0xff]
        %v1370 = vld [vmem:[%s269 + $0xb20] sm:$0xff]
        %v1371 = vld [vmem:[%s269 + $0xb28] sm:$0xff]
        %v1372 = vld [vmem:[%s269 + $0xb30] sm:$0xff]
        %v1373 = vld [vmem:[%s269 + $0xb38] sm:$0xff]
        %v1374 = vld [vmem:[%s269 + $0xb40] sm:$0xff]
        %v1375 = vld [vmem:[%s269 + $0xb48] sm:$0xff]
        %v1376 = vld [vmem:[%s269 + $0xb50] sm:$0xff]
        %v1377 = vld [vmem:[%s269 + $0xb58] sm:$0xff]
        %v1378 = vld [vmem:[%s269 + $0xb60] sm:$0xff]
        %v1379 = vld [vmem:[%s269 + $0xb68] sm:$0xff]
        %v1380 = vld [vmem:[%s269 + $0xb70] sm:$0xff]
        %v1381 = vld [vmem:[%s269 + $0xb78] sm:$0xff]
        %v1382 = vld [vmem:[%s269 + $0xb80] sm:$0xff]
        %v1383 = vld [vmem:[%s269 + $0xb88] sm:$0xff]
        %v1384 = vld [vmem:[%s269 + $0xb90] sm:$0xff]
        %v1385 = vld [vmem:[%s269 + $0xb98] sm:$0xff]
        %v1386 = vld [vmem:[%s269 + $0xba0] sm:$0xff]
        %v1387 = vld [vmem:[%s269 + $0xba8] sm:$0xff]
        %v1388 = vld [vmem:[%s269 + $0xbb0] sm:$0xff]
        %v1389 = vld [vmem:[%s269 + $0xbb8] sm:$0xff]
        %v1390 = vld [vmem:[%s269 + $0xbc0] sm:$0xff]
        %v1391 = vld [vmem:[%s269 + $0xbc8] sm:$0xff]
        %v1392 = vld [vmem:[%s269 + $0xbd0] sm:$0xff]
        %v1393 = vld [vmem:[%s269 + $0xbd8] sm:$0xff]
        %v1394 = vld [vmem:[%s269 + $0xbe0] sm:$0xff]
        %v1395 = vld [vmem:[%s269 + $0xbe8] sm:$0xff]
        %v1396 = vld [vmem:[%s269 + $0xbf0] sm:$0xff]
        %v1397 = vld [vmem:[%s269 + $0xbf8] sm:$0xff]
        %v1398 = vld [vmem:[%s269 + $0xc00] sm:$0xff]
        %v1399 = vld [vmem:[%s269 + $0xc08] sm:$0xff]
        %v1400 = vld [vmem:[%s269 + $0xc10] sm:$0xff]
        %v1401 = vld [vmem:[%s269 + $0xc18] sm:$0xff]
        %v1402 = vld [vmem:[%s269 + $0xc20] sm:$0xff]
        %v1403 = vld [vmem:[%s269 + $0xc28] sm:$0xff]
        %v1404 = vld [vmem:[%s269 + $0xc30] sm:$0xff]
        %v1405 = vld [vmem:[%s269 + $0xc38] sm:$0xff]
        %v1406 = vld [vmem:[%s269 + $0xc40] sm:$0xff]
        %v1407 = vld [vmem:[%s269 + $0xc48] sm:$0xff]
        %v1408 = vld [vmem:[%s269 + $0xc50] sm:$0xff]
        %v1409 = vld [vmem:[%s269 + $0xc58] sm:$0xff]
        %v1410 = vld [vmem:[%s269 + $0xc60] sm:$0xff]
        %v1411 = vld [vmem:[%s269 + $0xc68] sm:$0xff]
        %v1412 = vld [vmem:[%s269 + $0xc70] sm:$0xff]
        %v1413 = vld [vmem:[%s269 + $0xc78] sm:$0xff]
        %v1414 = vld [vmem:[%s269 + $0xc80] sm:$0xff]
        %v1415 = vld [vmem:[%s269 + $0xc88] sm:$0xff]
        %v1416 = vld [vmem:[%s269 + $0xc90] sm:$0xff]
        %v1417 = vld [vmem:[%s269 + $0xc98] sm:$0xff]
        %v1418 = vld [vmem:[%s269 + $0xca0] sm:$0xff]
        %v1419 = vld [vmem:[%s269 + $0xca8] sm:$0xff]
        %v1420 = vld [vmem:[%s269 + $0xcb0] sm:$0xff]
        %v1421 = vld [vmem:[%s269 + $0xcb8] sm:$0xff]
        %v1422 = vld [vmem:[%s269 + $0xcc0] sm:$0xff]
        %v1423 = vld [vmem:[%s269 + $0xcc8] sm:$0xff]
        %v1424 = vld [vmem:[%s269 + $0xcd0] sm:$0xff]
        %v1425 = vld [vmem:[%s269 + $0xcd8] sm:$0xff]
        %v1426 = vld [vmem:[%s269 + $0xce0] sm:$0xff]
        %v1427 = vld [vmem:[%s269 + $0xce8] sm:$0xff]
        %v1428 = vld [vmem:[%s269 + $0xcf0] sm:$0xff]
        %v1429 = vld [vmem:[%s269 + $0xcf8] sm:$0xff]
        %v1430 = vld [vmem:[%s269 + $0xd00] sm:$0xff]
        %v1431 = vld [vmem:[%s269 + $0xd08] sm:$0xff]
        %v1432 = vld [vmem:[%s269 + $0xd10] sm:$0xff]
        %v1433 = vld [vmem:[%s269 + $0xd18] sm:$0xff]
        %v1434 = vld [vmem:[%s269 + $0xd20] sm:$0xff]
        %v1435 = vld [vmem:[%s269 + $0xd28] sm:$0xff]
        %v1436 = vld [vmem:[%s269 + $0xd30] sm:$0xff]
        %v1437 = vld [vmem:[%s269 + $0xd38] sm:$0xff]
        %v1438 = vld [vmem:[%s269 + $0xd40] sm:$0xff]
        %v1439 = vld [vmem:[%s269 + $0xd48] sm:$0xff]
        %v1440 = vld [vmem:[%s269 + $0xd50] sm:$0xff]
        %v1441 = vld [vmem:[%s269 + $0xd58] sm:$0xff]
        %v1442 = vld [vmem:[%s269 + $0xd60] sm:$0xff]
        %v1443 = vld [vmem:[%s269 + $0xd68] sm:$0xff]
        %v1444 = vld [vmem:[%s269 + $0xd70] sm:$0xff]
        %v1445 = vld [vmem:[%s269 + $0xd78] sm:$0xff]
        %v1446 = vld [vmem:[%s269 + $0xd80] sm:$0xff]
        %v1447 = vld [vmem:[%s269 + $0xd88] sm:$0xff]
        %v1448 = vld [vmem:[%s269 + $0xd90] sm:$0xff]
        %v1449 = vld [vmem:[%s269 + $0xd98] sm:$0xff]
        %v1450 = vld [vmem:[%s269 + $0xda0] sm:$0xff]
        %v1451 = vld [vmem:[%s269 + $0xda8] sm:$0xff]
        %v1452 = vld [vmem:[%s269 + $0xdb0] sm:$0xff]
        %v1453 = vld [vmem:[%s269 + $0xdb8] sm:$0xff]
        %v1454 = vld [vmem:[%s269 + $0xdc0] sm:$0xff]
        %v1455 = vld [vmem:[%s269 + $0xdc8] sm:$0xff]
        %v1456 = vld [vmem:[%s269 + $0xdd0] sm:$0xff]
        %v1457 = vld [vmem:[%s269 + $0xdd8] sm:$0xff]
        %v1458 = vld [vmem:[%s269 + $0xde0] sm:$0xff]
        %v1459 = vld [vmem:[%s269 + $0xde8] sm:$0xff]
        %v1460 = vld [vmem:[%s269 + $0xdf0] sm:$0xff]
        %v1461 = vld [vmem:[%s269 + $0xdf8] sm:$0xff]
        %v1462 = vld [vmem:[%s269 + $0xe00] sm:$0xff]
        %v1463 = vld [vmem:[%s269 + $0xe08] sm:$0xff]
        %v1464 = vld [vmem:[%s269 + $0xe10] sm:$0xff]
        %v1465 = vld [vmem:[%s269 + $0xe18] sm:$0xff]
        %v1466 = vld [vmem:[%s269 + $0xe20] sm:$0xff]
        %v1467 = vld [vmem:[%s269 + $0xe28] sm:$0xff]
        %v1468 = vld [vmem:[%s269 + $0xe30] sm:$0xff]
        %v1469 = vld [vmem:[%s269 + $0xe38] sm:$0xff]
        %v1470 = vld [vmem:[%s269 + $0xe40] sm:$0xff]
        %v1471 = vld [vmem:[%s269 + $0xe48] sm:$0xff]
        %v1472 = vld [vmem:[%s269 + $0xe50] sm:$0xff]
        %v1473 = vld [vmem:[%s269 + $0xe58] sm:$0xff]
        %v1474 = vld [vmem:[%s269 + $0xe60] sm:$0xff]
        %v1475 = vld [vmem:[%s269 + $0xe68] sm:$0xff]
        %v1476 = vld [vmem:[%s269 + $0xe70] sm:$0xff]
        %v1477 = vld [vmem:[%s269 + $0xe78] sm:$0xff]
        %v1478 = vld [vmem:[%s269 + $0xe80] sm:$0xff]
        %v1479 = vld [vmem:[%s269 + $0xe88] sm:$0xff]
        %v1480 = vld [vmem:[%s269 + $0xe90] sm:$0xff]
        %v1481 = vld [vmem:[%s269 + $0xe98] sm:$0xff]
        %v1482 = vld [vmem:[%s269 + $0xea0] sm:$0xff]
        %v1483 = vld [vmem:[%s269 + $0xea8] sm:$0xff]
        %v1484 = vld [vmem:[%s269 + $0xeb0] sm:$0xff]
        %v1485 = vld [vmem:[%s269 + $0xeb8] sm:$0xff]
        %v1486 = vld [vmem:[%s269 + $0xec0] sm:$0xff]
        %v1487 = vld [vmem:[%s269 + $0xec8] sm:$0xff]
        %v1488 = vld [vmem:[%s269 + $0xed0] sm:$0xff]
        %v1489 = vld [vmem:[%s269 + $0xed8] sm:$0xff]
        %v1490 = vld [vmem:[%s269 + $0xee0] sm:$0xff]
        %v1491 = vld [vmem:[%s269 + $0xee8] sm:$0xff]
        %v1492 = vld [vmem:[%s269 + $0xef0] sm:$0xff]
        %v1493 = vld [vmem:[%s269 + $0xef8] sm:$0xff]
        %v1494 = vld [vmem:[%s269 + $0xf00] sm:$0xff]
        %v1495 = vld [vmem:[%s269 + $0xf08] sm:$0xff]
        %v1496 = vld [vmem:[%s269 + $0xf10] sm:$0xff]
        %v1497 = vld [vmem:[%s269 + $0xf18] sm:$0xff]
        %v1498 = vld [vmem:[%s269 + $0xf20] sm:$0xff]
        %v1499 = vld [vmem:[%s269 + $0xf28] sm:$0xff]
        %v1500 = vld [vmem:[%s269 + $0xf30] sm:$0xff]
        %v1501 = vld [vmem:[%s269 + $0xf38] sm:$0xff]
        %v1502 = vld [vmem:[%s269 + $0xf40] sm:$0xff]
        %v1503 = vld [vmem:[%s269 + $0xf48] sm:$0xff]
        %v1504 = vld [vmem:[%s269 + $0xf50] sm:$0xff]
        %v1505 = vld [vmem:[%s269 + $0xf58] sm:$0xff]
        %v1506 = vld [vmem:[%s269 + $0xf60] sm:$0xff]
        %v1507 = vld [vmem:[%s269 + $0xf68] sm:$0xff]
        %v1508 = vld [vmem:[%s269 + $0xf70] sm:$0xff]
        %v1509 = vld [vmem:[%s269 + $0xf78] sm:$0xff]
        %v1510 = vld [vmem:[%s269 + $0xf80] sm:$0xff]
        %v1511 = vld [vmem:[%s269 + $0xf88] sm:$0xff]
        %v1512 = vld [vmem:[%s269 + $0xf90] sm:$0xff]
        %v1513 = vld [vmem:[%s269 + $0xf98] sm:$0xff]
        %v1514 = vld [vmem:[%s269 + $0xfa0] sm:$0xff]
        %v1515 = vld [vmem:[%s269 + $0xfa8] sm:$0xff]
        %v1516 = vld [vmem:[%s269 + $0xfb0] sm:$0xff]
        %v1517 = vld [vmem:[%s269 + $0xfb8] sm:$0xff]
        %v1518 = vld [vmem:[%s269 + $0xfc0] sm:$0xff]
        %v1519 = vld [vmem:[%s269 + $0xfc8] sm:$0xff]
        %v1520 = vld [vmem:[%s269 + $0xfd0] sm:$0xff]
        %v1521 = vld [vmem:[%s269 + $0xfd8] sm:$0xff]
        %v1522 = vld [vmem:[%s269 + $0xfe0] sm:$0xff]
        %v1523 = vld [vmem:[%s269 + $0xfe8] sm:$0xff]
        %v1524 = vld [vmem:[%s269 + $0xff0] sm:$0xff]
        %v1525 = vld [vmem:[%s269 + $0xff8] sm:$0xff]
        %v1526 = vld [vmem:[%s269 + $0x1000] sm:$0xff]
        %v1527 = vld [vmem:[%s269 + $0x1008] sm:$0xff]
        %v1528 = vld [vmem:[%s269 + $0x1010] sm:$0xff]
        %v1529 = vld [vmem:[%s269 + $0x1018] sm:$0xff]
        %v1530 = vld [vmem:[%s269 + $0x1020] sm:$0xff]
        %v1531 = vld [vmem:[%s269 + $0x1028] sm:$0xff]
        %v1532 = vld [vmem:[%s269 + $0x1030] sm:$0xff]
        %v1533 = vld [vmem:[%s269 + $0x1038] sm:$0xff]
        %v1534 = vld [vmem:[%s269 + $0x1040] sm:$0xff]
        %v1535 = vld [vmem:[%s269 + $0x1048] sm:$0xff]
        %v1536 = vld [vmem:[%s269 + $0x1050] sm:$0xff]
        %v1537 = vld [vmem:[%s269 + $0x1058] sm:$0xff]
        %v1538 = vld [vmem:[%s269 + $0x1060] sm:$0xff]
        %v1539 = vld [vmem:[%s269 + $0x1068] sm:$0xff]
        %v1540 = vld [vmem:[%s269 + $0x1070] sm:$0xff]
        %v1541 = vld [vmem:[%s269 + $0x1078] sm:$0xff]
        %v1542 = vld [vmem:[%s269 + $0x1080] sm:$0xff]
        %v1543 = vld [vmem:[%s269 + $0x1088] sm:$0xff]
        %v1544 = vld [vmem:[%s269 + $0x1090] sm:$0xff]
        %v1545 = vld [vmem:[%s269 + $0x1098] sm:$0xff]
        %v1546 = vld [vmem:[%s269 + $0x10a0] sm:$0xff]
        %v1547 = vld [vmem:[%s269 + $0x10a8] sm:$0xff]
        %v1548 = vld [vmem:[%s269 + $0x10b0] sm:$0xff]
        %v1549 = vld [vmem:[%s269 + $0x10b8] sm:$0xff]
        %v1550 = vld [vmem:[%s269 + $0x10c0] sm:$0xff]
        %v1551 = vld [vmem:[%s269 + $0x10c8] sm:$0xff]
        %v1552 = vld [vmem:[%s269 + $0x10d0] sm:$0xff]
        %v1553 = vld [vmem:[%s269 + $0x10d8] sm:$0xff]
        %v1554 = vld [vmem:[%s269 + $0x10e0] sm:$0xff]
        %v1555 = vld [vmem:[%s269 + $0x10e8] sm:$0xff]
        %v1556 = vld [vmem:[%s269 + $0x10f0] sm:$0xff]
        %v1557 = vld [vmem:[%s269 + $0x10f8] sm:$0xff]
        %v1558 = vld [vmem:[%s269 + $0x1100] sm:$0xff]
        %v1559 = vld [vmem:[%s269 + $0x1108] sm:$0xff]
        %v1560 = vld [vmem:[%s269 + $0x1110] sm:$0xff]
        %v1561 = vld [vmem:[%s269 + $0x1118] sm:$0xff]
        %v1562 = vld [vmem:[%s269 + $0x1120] sm:$0xff]
        %v1563 = vld [vmem:[%s269 + $0x1128] sm:$0xff]
        %v1564 = vld [vmem:[%s269 + $0x1130] sm:$0xff]
        %v1565 = vld [vmem:[%s269 + $0x1138] sm:$0xff]
        %v1566 = vld [vmem:[%s269 + $0x1140] sm:$0xff]
        %v1567 = vld [vmem:[%s269 + $0x1148] sm:$0xff]
        %v1568 = vld [vmem:[%s269 + $0x1150] sm:$0xff]
        %v1569 = vld [vmem:[%s269 + $0x1158] sm:$0xff]
        %v1570 = vld [vmem:[%s269 + $0x1160] sm:$0xff]
        %v1571 = vld [vmem:[%s269 + $0x1168] sm:$0xff]
        %v1572 = vld [vmem:[%s269 + $0x1170] sm:$0xff]
        %v1573 = vld [vmem:[%s269 + $0x1178] sm:$0xff]
        %v1574 = vld [vmem:[%s269 + $0x1180] sm:$0xff]
        %v1575 = vld [vmem:[%s269 + $0x1188] sm:$0xff]
        %v1576 = vld [vmem:[%s269 + $0x1190] sm:$0xff]
        %v1577 = vld [vmem:[%s269 + $0x1198] sm:$0xff]
        %v1578 = vld [vmem:[%s269 + $0x11a0] sm:$0xff]
        %v1579 = vld [vmem:[%s269 + $0x11a8] sm:$0xff]
        %v1580 = vld [vmem:[%s269 + $0x11b0] sm:$0xff]
        %v1581 = vld [vmem:[%s269 + $0x11b8] sm:$0xff]
        %v1582 = vld [vmem:[%s269 + $0x11c0] sm:$0xff]
        %v1583 = vld [vmem:[%s269 + $0x11c8] sm:$0xff]
        %v1584 = vld [vmem:[%s269 + $0x11d0] sm:$0xff]
        %v1585 = vld [vmem:[%s269 + $0x11d8] sm:$0xff]
        %v1586 = vld [vmem:[%s269 + $0x11e0] sm:$0xff]
        %v1587 = vld [vmem:[%s269 + $0x11e8] sm:$0xff]
        %v1588 = vld [vmem:[%s269 + $0x11f0] sm:$0xff]
        %v1589 = vld [vmem:[%s269 + $0x11f8] sm:$0xff]
        %1590 = vmatprep.subr.mxu0 %v1015
        %1591 = vmatpush1.msra.mxu0 %v1014
        %1592 = vmatprep.subr.mxu0 %v1033
        %1593 = vmatpush1.msra.mxu0 %v1032
        %1594 = vmatprep.subr.mxu0 %v1051
        %1595 = vmatpush1.msra.mxu0 %v1050
        %1596 = vmatprep.subr.mxu0 %v1069
        %1597 = vmatpush1.msra.mxu0 %v1068
        %1598 = vmatprep.subr.mxu0 %v1087
        %1599 = vmatpush1.msra.mxu0 %v1086
        %1600 = vmatprep.subr.mxu0 %v1105
        %1601 = vmatpush1.msra.mxu0 %v1104
        %1602 = vmatprep.subr.mxu0 %v1123
        %1603 = vmatpush1.msra.mxu0 %v1122
        %1604 = vmatprep.subr.mxu0 %v1141
        %1605 = vmatpush1.msra.mxu0 %v1140
        %1606 = vmatprep.subr.mxu0 %v1159
        %1607 = vmatpush1.msra.mxu0 %v1158
        %1608 = vmatprep.subr.mxu0 %v1177
        %1609 = vmatpush1.msra.mxu0 %v1176
        %1610 = vmatprep.subr.mxu0 %v1195
        %1611 = vmatpush1.msra.mxu0 %v1194
        %1612 = vmatprep.subr.mxu0 %v1213
        %1613 = vmatpush1.msra.mxu0 %v1212
        %1614 = vmatprep.subr.mxu0 %v1231
        %1615 = vmatpush1.msra.mxu0 %v1230
        %1616 = vmatprep.subr.mxu0 %v1249
        %1617 = vmatpush1.msra.mxu0 %v1248
        %1618 = vmatprep.subr.mxu0 %v1267
        %1619 = vmatpush1.msra.mxu0 %v1266
        %1620 = vmatprep.subr.mxu0 %v1285
        %1621 = vmatpush1.msra.mxu0 %v1284
        %1622 = vmatprep.subr.mxu0 %v1303
        %1623 = vmatpush1.msra.mxu0 %v1302
        %1624 = vmatprep.subr.mxu0 %v1321
        %1625 = vmatpush1.msra.mxu0 %v1320
        %1626 = vmatprep.subr.mxu0 %v1339
        %1627 = vmatpush1.msra.mxu0 %v1338
        %1628 = vmatprep.subr.mxu0 %v1357
        %1629 = vmatpush1.msra.mxu0 %v1356
        %1630 = vmatprep.subr.mxu0 %v1375
        %1631 = vmatpush1.msra.mxu0 %v1374
        %1632 = vmatprep.subr.mxu0 %v1393
        %1633 = vmatpush1.msra.mxu0 %v1392
        %1634 = vmatprep.subr.mxu0 %v1411
        %1635 = vmatpush1.msra.mxu0 %v1410
        %1636 = vmatprep.subr.mxu0 %v1429
        %1637 = vmatpush1.msra.mxu0 %v1428
        %1638 = vmatprep.subr.mxu0 %v1447
        %1639 = vmatpush1.msra.mxu0 %v1446
        %1640 = vmatprep.subr.mxu0 %v1465
        %1641 = vmatpush1.msra.mxu0 %v1464
        %1642 = vmatprep.subr.mxu0 %v1483
        %1643 = vmatpush1.msra.mxu0 %v1482
        %1644 = vmatprep.subr.mxu0 %v1501
        %1645 = vmatpush1.msra.mxu0 %v1500
        %1646 = vmatprep.subr.mxu0 %v1519
        %1647 = vmatpush1.msra.mxu0 %v1518
        %1648 = vmatprep.subr.mxu0 %v1537
        %1649 = vmatpush1.msra.mxu0 %v1536
        %1650 = vmatprep.subr.mxu0 %v1555
        %1651 = vmatpush1.msra.mxu0 %v1554
        %1652 = vmatprep.subr.mxu0 %v1573
        %1653 = vmatpush1.msra.mxu0 %v1572
        %1654 = vmatprep.mubr.f32.mxu0 %v951
        %1655 = vmatmul.mubr.f32.gmra.mrb[0].mxu0 %v950
        %v1656 = vpop.f32.mrb[0].mxu0
        %v1657 = vadd.f32 0.0, %v1656
        %v1658 = vpop.f32.mrb[0].mxu0
        %v1659 = vadd.f32 0.0, %v1658
        %1660 = vmatprep.mubr.f32.mxu0 %v953
        %1661 = vmatmul.mubr.f32.gmra.mrb[0].mxu0 %v952
        %v1662 = vpop.f32.mrb[0].mxu0
        %v1663 = vadd.f32 0.0, %v1662
        %v1664 = vpop.f32.mrb[0].mxu0
        %v1665 = vadd.f32 0.0, %v1664
        %1666 = vmatprep.mubr.f32.mxu0 %v955
        %1667 = vmatmul.mubr.f32.gmra.mrb[0].mxu0 %v954
        %v1668 = vpop.f32.mrb[0].mxu0
        %v1669 = vadd.f32 0.0, %v1668
        %v1670 = vpop.f32.mrb[0].mxu0
        %v1671 = vadd.f32 0.0, %v1670
        %1672 = vmatprep.mubr.f32.mxu0 %v957
        %1673 = vmatmul.mubr.f32.gmra.mrb[0].mxu0 %v956
        %v1674 = vpop.f32.mrb[0].mxu0
        %v1675 = vadd.f32 0.0, %v1674
        %v1676 = vpop.f32.mrb[0].mxu0
        %v1677 = vadd.f32 0.0, %v1676
        %1678 = vmatprep.mubr.f32.mxu0 %v959
        %1679 = vmatmul.mubr.f32.gmra.mrb[0].mxu0 %v958
        %v1680 = vpop.f32.mrb[0].mxu0
        %v1681 = vadd.f32 0.0, %v1680
        %v1682 = vpop.f32.mrb[0].mxu0
        %v1683 = vadd.f32 0.0, %v1682
        %1684 = vmatprep.mubr.f32.mxu0 %v961
        %1685 = vmatmul.mubr.f32.gmra.mrb[0].mxu0 %v960
        %v1686 = vpop.f32.mrb[0].mxu0
        %v1687 = vadd.f32 0.0, %v1686
        %v1688 = vpop.f32.mrb[0].mxu0
        %v1689 = vadd.f32 0.0, %v1688
        %1690 = vmatprep.mubr.f32.mxu0 %v963
        %1691 = vmatmul.mubr.f32.gmra.mrb[0].mxu0 %v962
        %v1692 = vpop.f32.mrb[0].mxu0
        %v1693 = vadd.f32 0.0, %v1692
        %v1694 = vpop.f32.mrb[0].mxu0
        %v1695 = vadd.f32 0.0, %v1694
        %1696 = vmatprep.mubr.f32.mxu0 %v965
        %1697 = vmatmul.mubr.f32.gmra.mrb[0].mxu0 %v964
        %v1698 = vpop.f32.mrb[0].mxu0
        %v1699 = vadd.f32 0.0, %v1698
        %v1700 = vpop.f32.mrb[0].mxu0
        %v1701 = vadd.f32 0.0, %v1700
        %1702 = vmatprep.mubr.f32.mxu0 %v967
        %1703 = vmatmul.mubr.f32.gmra.mrb[0].mxu0 %v966
        %v1704 = vpop.f32.mrb[0].mxu0
        %v1705 = vadd.f32 0.0, %v1704
        %v1706 = vpop.f32.mrb[0].mxu0
        %v1707 = vadd.f32 0.0, %v1706
        %1708 = vmatprep.mubr.f32.mxu0 %v969
        %1709 = vmatmul.mubr.f32.gmra.mrb[0].mxu0 %v968
        %v1710 = vpop.f32.mrb[0].mxu0
        %v1711 = vadd.f32 0.0, %v1710
        %v1712 = vpop.f32.mrb[0].mxu0
        %v1713 = vadd.f32 0.0, %v1712
        %1714 = vmatprep.mubr.f32.mxu0 %v971
        %1715 = vmatmul.mubr.f32.gmra.mrb[0].mxu0 %v970
        %v1716 = vpop.f32.mrb[0].mxu0
        %v1717 = vadd.f32 0.0, %v1716
        %v1718 = vpop.f32.mrb[0].mxu0
        %v1719 = vadd.f32 0.0, %v1718
        %1720 = vmatprep.mubr.f32.mxu0 %v973
        %1721 = vmatmul.mubr.f32.gmra.mrb[0].mxu0 %v972
        %v1722 = vpop.f32.mrb[0].mxu0
        %v1723 = vadd.f32 0.0, %v1722
        %v1724 = vpop.f32.mrb[0].mxu0
        %v1725 = vadd.f32 0.0, %v1724
        %1726 = vmatprep.mubr.f32.mxu0 %v975
        %1727 = vmatmul.mubr.f32.gmra.mrb[0].mxu0 %v974
        %v1728 = vpop.f32.mrb[0].mxu0
        %v1729 = vadd.f32 0.0, %v1728
        %v1730 = vpop.f32.mrb[0].mxu0
        %v1731 = vadd.f32 0.0, %v1730
        %1732 = vmatprep.mubr.f32.mxu0 %v977
        %1733 = vmatmul.mubr.f32.gmra.mrb[0].mxu0 %v976
        %v1734 = vpop.f32.mrb[0].mxu0
        %v1735 = vadd.f32 0.0, %v1734
        %v1736 = vpop.f32.mrb[0].mxu0
        %v1737 = vadd.f32 0.0, %v1736
        %1738 = vmatprep.mubr.f32.mxu0 %v979
        %1739 = vmatmul.mubr.f32.gmra.mrb[0].mxu0 %v978
        %v1740 = vpop.f32.mrb[0].mxu0
        %v1741 = vadd.f32 0.0, %v1740
        %v1742 = vpop.f32.mrb[0].mxu0
        %v1743 = vadd.f32 0.0, %v1742
        %1744 = vmatprep.mubr.f32.mxu0 %v981
        %1745 = vmatmul.mubr.f32.gmra.mrb[0].mxu0 %v980
        %v1746 = vpop.f32.mrb[0].mxu0
        %v1747 = vadd.f32 0.0, %v1746
        %v1748 = vpop.f32.mrb[0].mxu0
        %v1749 = vadd.f32 0.0, %v1748
        %1750 = vmatprep.mubr.f32.mxu0 %v983
        %1751 = vmatmul.mubr.f32.gmra.mrb[0].mxu0 %v982
        %v1752 = vpop.f32.mrb[0].mxu0
        %v1753 = vadd.f32 0.0, %v1752
        %v1754 = vpop.f32.mrb[0].mxu0
        %v1755 = vadd.f32 0.0, %v1754
        %1756 = vmatprep.mubr.f32.mxu0 %v985
        %1757 = vmatmul.mubr.f32.gmra.mrb[0].mxu0 %v984
        %v1758 = vpop.f32.mrb[0].mxu0
        %v1759 = vadd.f32 0.0, %v1758
        %v1760 = vpop.f32.mrb[0].mxu0
        %v1761 = vadd.f32 0.0, %v1760
        %1762 = vmatprep.mubr.f32.mxu0 %v987
        %1763 = vmatmul.mubr.f32.gmra.mrb[0].mxu0 %v986
        %v1764 = vpop.f32.mrb[0].mxu0
        %v1765 = vadd.f32 0.0, %v1764
        %v1766 = vpop.f32.mrb[0].mxu0
        %v1767 = vadd.f32 0.0, %v1766
        %1768 = vmatprep.mubr.f32.mxu0 %v989
        %1769 = vmatmul.mubr.f32.gmra.mrb[0].mxu0 %v988
        %v1770 = vpop.f32.mrb[0].mxu0
        %v1771 = vadd.f32 0.0, %v1770
        %v1772 = vpop.f32.mrb[0].mxu0
        %v1773 = vadd.f32 0.0, %v1772
        %1774 = vmatprep.mubr.f32.mxu0 %v991
        %1775 = vmatmul.mubr.f32.gmra.mrb[0].mxu0 %v990
        %v1776 = vpop.f32.mrb[0].mxu0
        %v1777 = vadd.f32 0.0, %v1776
        %v1778 = vpop.f32.mrb[0].mxu0
        %v1779 = vadd.f32 0.0, %v1778
        %1780 = vmatprep.mubr.f32.mxu0 %v993
        %1781 = vmatmul.mubr.f32.gmra.mrb[0].mxu0 %v992
        %v1782 = vpop.f32.mrb[0].mxu0
        %v1783 = vadd.f32 0.0, %v1782
        %v1784 = vpop.f32.mrb[0].mxu0
        %v1785 = vadd.f32 0.0, %v1784
        %1786 = vmatprep.mubr.f32.mxu0 %v995
        %1787 = vmatmul.mubr.f32.gmra.mrb[0].mxu0 %v994
        %v1788 = vpop.f32.mrb[0].mxu0
        %v1789 = vadd.f32 0.0, %v1788
        %v1790 = vpop.f32.mrb[0].mxu0
        %v1791 = vadd.f32 0.0, %v1790
        %1792 = vmatprep.mubr.f32.mxu0 %v997
        %1793 = vmatmul.mubr.f32.gmra.mrb[0].mxu0 %v996
        %v1794 = vpop.f32.mrb[0].mxu0
        %v1795 = vadd.f32 0.0, %v1794
        %v1796 = vpop.f32.mrb[0].mxu0
        %v1797 = vadd.f32 0.0, %v1796
        %1798 = vmatprep.mubr.f32.mxu0 %v999
        %1799 = vmatmul.mubr.f32.gmra.mrb[0].mxu0 %v998
        %v1800 = vpop.f32.mrb[0].mxu0
        %v1801 = vadd.f32 0.0, %v1800
        %v1802 = vpop.f32.mrb[0].mxu0
        %v1803 = vadd.f32 0.0, %v1802
        %1804 = vmatprep.mubr.f32.mxu0 %v1001
        %1805 = vmatmul.mubr.f32.gmra.mrb[0].mxu0 %v1000
        %v1806 = vpop.f32.mrb[0].mxu0
        %v1807 = vadd.f32 0.0, %v1806
        %v1808 = vpop.f32.mrb[0].mxu0
        %v1809 = vadd.f32 0.0, %v1808
        %1810 = vmatprep.mubr.f32.mxu0 %v1003
        %1811 = vmatmul.mubr.f32.gmra.mrb[0].mxu0 %v1002
        %v1812 = vpop.f32.mrb[0].mxu0
        %v1813 = vadd.f32 0.0, %v1812
        %v1814 = vpop.f32.mrb[0].mxu0
        %v1815 = vadd.f32 0.0, %v1814
        %1816 = vmatprep.mubr.f32.mxu0 %v1005
        %1817 = vmatmul.mubr.f32.gmra.mrb[0].mxu0 %v1004
        %v1818 = vpop.f32.mrb[0].mxu0
        %v1819 = vadd.f32 0.0, %v1818
        %v1820 = vpop.f32.mrb[0].mxu0
        %v1821 = vadd.f32 0.0, %v1820
        %1822 = vmatprep.mubr.f32.mxu0 %v1007
        %1823 = vmatmul.mubr.f32.gmra.mrb[0].mxu0 %v1006
        %v1824 = vpop.f32.mrb[0].mxu0
        %v1825 = vadd.f32 0.0, %v1824
        %v1826 = vpop.f32.mrb[0].mxu0
        %v1827 = vadd.f32 0.0, %v1826
        %1828 = vmatprep.mubr.f32.mxu0 %v1009
        %1829 = vmatmul.mubr.f32.gmra.mrb[0].mxu0 %v1008
        %v1830 = vpop.f32.mrb[0].mxu0
        %v1831 = vadd.f32 0.0, %v1830
        %v1832 = vpop.f32.mrb[0].mxu0
        %v1833 = vadd.f32 0.0, %v1832
        %1834 = vmatprep.mubr.f32.mxu0 %v1011
        %1835 = vmatmul.mubr.f32.gmra.mrb[0].mxu0 %v1010
        %v1836 = vpop.f32.mrb[0].mxu0
        %v1837 = vadd.f32 0.0, %v1836
        %v1838 = vpop.f32.mrb[0].mxu0
        %v1839 = vadd.f32 0.0, %v1838
        %1840 = vmatprep.mubr.f32.mxu0 %v1013
        %1841 = vmatmul.mubr.f32.gmra.mrb[0].mxu0 %v1012
        %v1842 = vpop.f32.mrb[0].mxu0
        %v1843 = vadd.f32 0.0, %v1842
        %v1844 = vpop.f32.mrb[0].mxu0
        %v1845 = vadd.f32 0.0, %v1844
        %1846 = vdwg.mxu0
        %1847 = vmatprep.subr.mxu0 %v1017
        %1848 = vmatpush1.msra.mxu0 %v1016
        %1849 = vmatprep.subr.mxu0 %v1035
        %1850 = vmatpush1.msra.mxu0 %v1034
        %1851 = vmatprep.subr.mxu0 %v1053
        %1852 = vmatpush1.msra.mxu0 %v1052
        %1853 = vmatprep.subr.mxu0 %v1071
        %1854 = vmatpush1.msra.mxu0 %v1070
        %1855 = vmatprep.subr.mxu0 %v1089
        %1856 = vmatpush1.msra.mxu0 %v1088
        %1857 = vmatprep.subr.mxu0 %v1107
        %1858 = vmatpush1.msra.mxu0 %v1106
        %1859 = vmatprep.subr.mxu0 %v1125
        %1860 = vmatpush1.msra.mxu0 %v1124
        %1861 = vmatprep.subr.mxu0 %v1143
        %1862 = vmatpush1.msra.mxu0 %v1142
        %1863 = vmatprep.subr.mxu0 %v1161
        %1864 = vmatpush1.msra.mxu0 %v1160
        %1865 = vmatprep.subr.mxu0 %v1179
        %1866 = vmatpush1.msra.mxu0 %v1178
        %1867 = vmatprep.subr.mxu0 %v1197
        %1868 = vmatpush1.msra.mxu0 %v1196
        %1869 = vmatprep.subr.mxu0 %v1215
        %1870 = vmatpush1.msra.mxu0 %v1214
        %1871 = vmatprep.subr.mxu0 %v1233
        %1872 = vmatpush1.msra.mxu0 %v1232
        %1873 = vmatprep.subr.mxu0 %v1251
        %1874 = vmatpush1.msra.mxu0 %v1250
        %1875 = vmatprep.subr.mxu0 %v1269
        %1876 = vmatpush1.msra.mxu0 %v1268
        %1877 = vmatprep.subr.mxu0 %v1287
        %1878 = vmatpush1.msra.mxu0 %v1286
        %1879 = vmatprep.subr.mxu0 %v1305
        %1880 = vmatpush1.msra.mxu0 %v1304
        %1881 = vmatprep.subr.mxu0 %v1323
        %1882 = vmatpush1.msra.mxu0 %v1322
        %1883 = vmatprep.subr.mxu0 %v1341
        %1884 = vmatpush1.msra.mxu0 %v1340
        %1885 = vmatprep.subr.mxu0 %v1359
        %1886 = vmatpush1.msra.mxu0 %v1358
        %1887 = vmatprep.subr.mxu0 %v1377
        %1888 = vmatpush1.msra.mxu0 %v1376
        %1889 = vmatprep.subr.mxu0 %v1395
        %1890 = vmatpush1.msra.mxu0 %v1394
        %1891 = vmatprep.subr.mxu0 %v1413
        %1892 = vmatpush1.msra.mxu0 %v1412
        %1893 = vmatprep.subr.mxu0 %v1431
        %1894 = vmatpush1.msra.mxu0 %v1430
        %1895 = vmatprep.subr.mxu0 %v1449
        %1896 = vmatpush1.msra.mxu0 %v1448
        %1897 = vmatprep.subr.mxu0 %v1467
        %1898 = vmatpush1.msra.mxu0 %v1466
        %1899 = vmatprep.subr.mxu0 %v1485
        %1900 = vmatpush1.msra.mxu0 %v1484
        %1901 = vmatprep.subr.mxu0 %v1503
        %1902 = vmatpush1.msra.mxu0 %v1502
        %1903 = vmatprep.subr.mxu0 %v1521
        %1904 = vmatpush1.msra.mxu0 %v1520
        %1905 = vmatprep.subr.mxu0 %v1539
        %1906 = vmatpush1.msra.mxu0 %v1538
        %1907 = vmatprep.subr.mxu0 %v1557
        %1908 = vmatpush1.msra.mxu0 %v1556
        %1909 = vmatprep.subr.mxu0 %v1575
        %1910 = vmatpush1.msra.mxu0 %v1574
        %1911 = vmatprep.mubr.f32.mxu0 %v951
        %1912 = vmatmul.mubr.f32.gmra.mrb[0].mxu0 %v950
        %v1913 = vpop.f32.mrb[0].mxu0
        %v1914 = vadd.f32 0.0, %v1913
        %v1915 = vpop.f32.mrb[0].mxu0
        %v1916 = vadd.f32 0.0, %v1915
        %1917 = vmatprep.mubr.f32.mxu0 %v953
        %1918 = vmatmul.mubr.f32.gmra.mrb[0].mxu0 %v952
        %v1919 = vpop.f32.mrb[0].mxu0
        %v1920 = vadd.f32 0.0, %v1919
        %v1921 = vpop.f32.mrb[0].mxu0
        %v1922 = vadd.f32 0.0, %v1921
        %1923 = vmatprep.mubr.f32.mxu0 %v955
        %1924 = vmatmul.mubr.f32.gmra.mrb[0].mxu0 %v954
        %v1925 = vpop.f32.mrb[0].mxu0
        %v1926 = vadd.f32 0.0, %v1925
        %v1927 = vpop.f32.mrb[0].mxu0
        %v1928 = vadd.f32 0.0, %v1927
        %1929 = vmatprep.mubr.f32.mxu0 %v957
        %1930 = vmatmul.mubr.f32.gmra.mrb[0].mxu0 %v956
        %v1931 = vpop.f32.mrb[0].mxu0
        %v1932 = vadd.f32 0.0, %v1931
        %v1933 = vpop.f32.mrb[0].mxu0
        %v1934 = vadd.f32 0.0, %v1933
        %1935 = vmatprep.mubr.f32.mxu0 %v959
        %1936 = vmatmul.mubr.f32.gmra.mrb[0].mxu0 %v958
        %v1937 = vpop.f32.mrb[0].mxu0
        %v1938 = vadd.f32 0.0, %v1937
        %v1939 = vpop.f32.mrb[0].mxu0
        %v1940 = vadd.f32 0.0, %v1939
        %1941 = vmatprep.mubr.f32.mxu0 %v961
        %1942 = vmatmul.mubr.f32.gmra.mrb[0].mxu0 %v960
        %v1943 = vpop.f32.mrb[0].mxu0
        %v1944 = vadd.f32 0.0, %v1943
        %v1945 = vpop.f32.mrb[0].mxu0
        %v1946 = vadd.f32 0.0, %v1945
        %1947 = vmatprep.mubr.f32.mxu0 %v963
        %1948 = vmatmul.mubr.f32.gmra.mrb[0].mxu0 %v962
        %v1949 = vpop.f32.mrb[0].mxu0
        %v1950 = vadd.f32 0.0, %v1949
        %v1951 = vpop.f32.mrb[0].mxu0
        %v1952 = vadd.f32 0.0, %v1951
        %1953 = vmatprep.mubr.f32.mxu0 %v965
        %1954 = vmatmul.mubr.f32.gmra.mrb[0].mxu0 %v964
        %v1955 = vpop.f32.mrb[0].mxu0
        %v1956 = vadd.f32 0.0, %v1955
        %v1957 = vpop.f32.mrb[0].mxu0
        %v1958 = vadd.f32 0.0, %v1957
        %1959 = vmatprep.mubr.f32.mxu0 %v967
        %1960 = vmatmul.mubr.f32.gmra.mrb[0].mxu0 %v966
        %v1961 = vpop.f32.mrb[0].mxu0
        %v1962 = vadd.f32 0.0, %v1961
        %v1963 = vpop.f32.mrb[0].mxu0
        %v1964 = vadd.f32 0.0, %v1963
        %1965 = vmatprep.mubr.f32.mxu0 %v969
        %1966 = vmatmul.mubr.f32.gmra.mrb[0].mxu0 %v968
        %v1967 = vpop.f32.mrb[0].mxu0
        %v1968 = vadd.f32 0.0, %v1967
        %v1969 = vpop.f32.mrb[0].mxu0
        %v1970 = vadd.f32 0.0, %v1969
        %1971 = vmatprep.mubr.f32.mxu0 %v971
        %1972 = vmatmul.mubr.f32.gmra.mrb[0].mxu0 %v970
        %v1973 = vpop.f32.mrb[0].mxu0
        %v1974 = vadd.f32 0.0, %v1973
        %v1975 = vpop.f32.mrb[0].mxu0
        %v1976 = vadd.f32 0.0, %v1975
        %1977 = vmatprep.mubr.f32.mxu0 %v973
        %1978 = vmatmul.mubr.f32.gmra.mrb[0].mxu0 %v972
        %v1979 = vpop.f32.mrb[0].mxu0
        %v1980 = vadd.f32 0.0, %v1979
        %v1981 = vpop.f32.mrb[0].mxu0
        %v1982 = vadd.f32 0.0, %v1981
        %1983 = vmatprep.mubr.f32.mxu0 %v975
        %1984 = vmatmul.mubr.f32.gmra.mrb[0].mxu0 %v974
        %v1985 = vpop.f32.mrb[0].mxu0
        %v1986 = vadd.f32 0.0, %v1985
        %v1987 = vpop.f32.mrb[0].mxu0
        %v1988 = vadd.f32 0.0, %v1987
        %1989 = vmatprep.mubr.f32.mxu0 %v977
        %1990 = vmatmul.mubr.f32.gmra.mrb[0].mxu0 %v976
        %v1991 = vpop.f32.mrb[0].mxu0
        %v1992 = vadd.f32 0.0, %v1991
        %v1993 = vpop.f32.mrb[0].mxu0
        %v1994 = vadd.f32 0.0, %v1993
        %1995 = vmatprep.mubr.f32.mxu0 %v979
        %1996 = vmatmul.mubr.f32.gmra.mrb[0].mxu0 %v978
        %v1997 = vpop.f32.mrb[0].mxu0
        %v1998 = vadd.f32 0.0, %v1997
        %v1999 = vpop.f32.mrb[0].mxu0
        %v2000 = vadd.f32 0.0, %v1999
        %2001 = vmatprep.mubr.f32.mxu0 %v981
        %2002 = vmatmul.mubr.f32.gmra.mrb[0].mxu0 %v980
        %v2003 = vpop.f32.mrb[0].mxu0
        %v2004 = vadd.f32 0.0, %v2003
        %v2005 = vpop.f32.mrb[0].mxu0
        %v2006 = vadd.f32 0.0, %v2005
        %2007 = vmatprep.mubr.f32.mxu0 %v983
        %2008 = vmatmul.mubr.f32.gmra.mrb[0].mxu0 %v982
        %v2009 = vpop.f32.mrb[0].mxu0
        %v2010 = vadd.f32 0.0, %v2009
        %v2011 = vpop.f32.mrb[0].mxu0
        %v2012 = vadd.f32 0.0, %v2011
        %2013 = vmatprep.mubr.f32.mxu0 %v985
        %2014 = vmatmul.mubr.f32.gmra.mrb[0].mxu0 %v984
        %v2015 = vpop.f32.mrb[0].mxu0
        %v2016 = vadd.f32 0.0, %v2015
        %v2017 = vpop.f32.mrb[0].mxu0
        %v2018 = vadd.f32 0.0, %v2017
        %2019 = vmatprep.mubr.f32.mxu0 %v987
        %2020 = vmatmul.mubr.f32.gmra.mrb[0].mxu0 %v986
        %v2021 = vpop.f32.mrb[0].mxu0
        %v2022 = vadd.f32 0.0, %v2021
        %v2023 = vpop.f32.mrb[0].mxu0
        %v2024 = vadd.f32 0.0, %v2023
        %2025 = vmatprep.mubr.f32.mxu0 %v989
        %2026 = vmatmul.mubr.f32.gmra.mrb[0].mxu0 %v988
        %v2027 = vpop.f32.mrb[0].mxu0
        %v2028 = vadd.f32 0.0, %v2027
        %v2029 = vpop.f32.mrb[0].mxu0
        %v2030 = vadd.f32 0.0, %v2029
        %2031 = vmatprep.mubr.f32.mxu0 %v991
        %2032 = vmatmul.mubr.f32.gmra.mrb[0].mxu0 %v990
        %v2033 = vpop.f32.mrb[0].mxu0
        %v2034 = vadd.f32 0.0, %v2033
        %v2035 = vpop.f32.mrb[0].mxu0
        %v2036 = vadd.f32 0.0, %v2035
        %2037 = vmatprep.mubr.f32.mxu0 %v993
        %2038 = vmatmul.mubr.f32.gmra.mrb[0].mxu0 %v992
        %v2039 = vpop.f32.mrb[0].mxu0
        %v2040 = vadd.f32 0.0, %v2039
        %v2041 = vpop.f32.mrb[0].mxu0
        %v2042 = vadd.f32 0.0, %v2041
        %2043 = vmatprep.mubr.f32.mxu0 %v995
        %2044 = vmatmul.mubr.f32.gmra.mrb[0].mxu0 %v994
        %v2045 = vpop.f32.mrb[0].mxu0
        %v2046 = vadd.f32 0.0, %v2045
        %v2047 = vpop.f32.mrb[0].mxu0
        %v2048 = vadd.f32 0.0, %v2047
        %2049 = vmatprep.mubr.f32.mxu0 %v997
        %2050 = vmatmul.mubr.f32.gmra.mrb[0].mxu0 %v996
        %v2051 = vpop.f32.mrb[0].mxu0
        %v2052 = vadd.f32 0.0, %v2051
        %v2053 = vpop.f32.mrb[0].mxu0
        %v2054 = vadd.f32 0.0, %v2053
        %2055 = vmatprep.mubr.f32.mxu0 %v999
        %2056 = vmatmul.mubr.f32.gmra.mrb[0].mxu0 %v998
        %v2057 = vpop.f32.mrb[0].mxu0
        %v2058 = vadd.f32 0.0, %v2057
        %v2059 = vpop.f32.mrb[0].mxu0
        %v2060 = vadd.f32 0.0, %v2059
        %2061 = vmatprep.mubr.f32.mxu0 %v1001
        %2062 = vmatmul.mubr.f32.gmra.mrb[0].mxu0 %v1000
        %v2063 = vpop.f32.mrb[0].mxu0
        %v2064 = vadd.f32 0.0, %v2063
        %v2065 = vpop.f32.mrb[0].mxu0
        %v2066 = vadd.f32 0.0, %v2065
        %2067 = vmatprep.mubr.f32.mxu0 %v1003
        %2068 = vmatmul.mubr.f32.gmra.mrb[0].mxu0 %v1002
        %v2069 = vpop.f32.mrb[0].mxu0
        %v2070 = vadd.f32 0.0, %v2069
        %v2071 = vpop.f32.mrb[0].mxu0
        %v2072 = vadd.f32 0.0, %v2071
        %2073 = vmatprep.mubr.f32.mxu0 %v1005
        %2074 = vmatmul.mubr.f32.gmra.mrb[0].mxu0 %v1004
        %v2075 = vpop.f32.mrb[0].mxu0
        %v2076 = vadd.f32 0.0, %v2075
        %v2077 = vpop.f32.mrb[0].mxu0
        %v2078 = vadd.f32 0.0, %v2077
        %2079 = vmatprep.mubr.f32.mxu0 %v1007
        %2080 = vmatmul.mubr.f32.gmra.mrb[0].mxu0 %v1006
        %v2081 = vpop.f32.mrb[0].mxu0
        %v2082 = vadd.f32 0.0, %v2081
        %v2083 = vpop.f32.mrb[0].mxu0
        %v2084 = vadd.f32 0.0, %v2083
        %2085 = vmatprep.mubr.f32.mxu0 %v1009
        %2086 = vmatmul.mubr.f32.gmra.mrb[0].mxu0 %v1008
        %v2087 = vpop.f32.mrb[0].mxu0
        %v2088 = vadd.f32 0.0, %v2087
        %v2089 = vpop.f32.mrb[0].mxu0
        %v2090 = vadd.f32 0.0, %v2089
        %2091 = vmatprep.mubr.f32.mxu0 %v1011
        %2092 = vmatmul.mubr.f32.gmra.mrb[0].mxu0 %v1010
        %v2093 = vpop.f32.mrb[0].mxu0
        %v2094 = vadd.f32 0.0, %v2093
        %v2095 = vpop.f32.mrb[0].mxu0
        %v2096 = vadd.f32 0.0, %v2095
        %2097 = vmatprep.mubr.f32.mxu0 %v1013
        %2098 = vmatmul.mubr.f32.gmra.mrb[0].mxu0 %v1012
        %v2099 = vpop.f32.mrb[0].mxu0
        %v2100 = vadd.f32 0.0, %v2099
        %v2101 = vpop.f32.mrb[0].mxu0
        %v2102 = vadd.f32 0.0, %v2101
        %2103 = vdwg.mxu0
        %2104 = vmatprep.subr.mxu0 %v1019
        %2105 = vmatpush1.msra.mxu0 %v1018
        %2106 = vmatprep.subr.mxu0 %v1037
        %2107 = vmatpush1.msra.mxu0 %v1036
        %2108 = vmatprep.subr.mxu0 %v1055
        %2109 = vmatpush1.msra.mxu0 %v1054
        %2110 = vmatprep.subr.mxu0 %v1073
        %2111 = vmatpush1.msra.mxu0 %v1072
        %2112 = vmatprep.subr.mxu0 %v1091
        %2113 = vmatpush1.msra.mxu0 %v1090
        %2114 = vmatprep.subr.mxu0 %v1109
        %2115 = vmatpush1.msra.mxu0 %v1108
        %2116 = vmatprep.subr.mxu0 %v1127
        %2117 = vmatpush1.msra.mxu0 %v1126
        %2118 = vmatprep.subr.mxu0 %v1145
        %2119 = vmatpush1.msra.mxu0 %v1144
        %2120 = vmatprep.subr.mxu0 %v1163
        %2121 = vmatpush1.msra.mxu0 %v1162
        %2122 = vmatprep.subr.mxu0 %v1181
        %2123 = vmatpush1.msra.mxu0 %v1180
        %2124 = vmatprep.subr.mxu0 %v1199
        %2125 = vmatpush1.msra.mxu0 %v1198
        %2126 = vmatprep.subr.mxu0 %v1217
        %2127 = vmatpush1.msra.mxu0 %v1216
        %2128 = vmatprep.subr.mxu0 %v1235
        %2129 = vmatpush1.msra.mxu0 %v1234
        %2130 = vmatprep.subr.mxu0 %v1253
        %2131 = vmatpush1.msra.mxu0 %v1252
        %2132 = vmatprep.subr.mxu0 %v1271
        %2133 = vmatpush1.msra.mxu0 %v1270
        %2134 = vmatprep.subr.mxu0 %v1289
        %2135 = vmatpush1.msra.mxu0 %v1288
        %2136 = vmatprep.subr.mxu0 %v1307
        %2137 = vmatpush1.msra.mxu0 %v1306
        %2138 = vmatprep.subr.mxu0 %v1325
        %2139 = vmatpush1.msra.mxu0 %v1324
        %2140 = vmatprep.subr.mxu0 %v1343
        %2141 = vmatpush1.msra.mxu0 %v1342
        %2142 = vmatprep.subr.mxu0 %v1361
        %2143 = vmatpush1.msra.mxu0 %v1360
        %2144 = vmatprep.subr.mxu0 %v1379
        %2145 = vmatpush1.msra.mxu0 %v1378
        %2146 = vmatprep.subr.mxu0 %v1397
        %2147 = vmatpush1.msra.mxu0 %v1396
        %2148 = vmatprep.subr.mxu0 %v1415
        %2149 = vmatpush1.msra.mxu0 %v1414
        %2150 = vmatprep.subr.mxu0 %v1433
        %2151 = vmatpush1.msra.mxu0 %v1432
        %2152 = vmatprep.subr.mxu0 %v1451
        %2153 = vmatpush1.msra.mxu0 %v1450
        %2154 = vmatprep.subr.mxu0 %v1469
        %2155 = vmatpush1.msra.mxu0 %v1468
        %2156 = vmatprep.subr.mxu0 %v1487
        %2157 = vmatpush1.msra.mxu0 %v1486
        %2158 = vmatprep.subr.mxu0 %v1505
        %2159 = vmatpush1.msra.mxu0 %v1504
        %2160 = vmatprep.subr.mxu0 %v1523
        %2161 = vmatpush1.msra.mxu0 %v1522
        %2162 = vmatprep.subr.mxu0 %v1541
        %2163 = vmatpush1.msra.mxu0 %v1540
        %2164 = vmatprep.subr.mxu0 %v1559
        %2165 = vmatpush1.msra.mxu0 %v1558
        %2166 = vmatprep.subr.mxu0 %v1577
        %2167 = vmatpush1.msra.mxu0 %v1576
        %2168 = vmatprep.mubr.f32.mxu0 %v951
        %2169 = vmatmul.mubr.f32.gmra.mrb[0].mxu0 %v950
        %v2170 = vpop.f32.mrb[0].mxu0
        %v2171 = vadd.f32 0.0, %v2170
        %v2172 = vpop.f32.mrb[0].mxu0
        %v2173 = vadd.f32 0.0, %v2172
        %2174 = vmatprep.mubr.f32.mxu0 %v953
        %2175 = vmatmul.mubr.f32.gmra.mrb[0].mxu0 %v952
        %v2176 = vpop.f32.mrb[0].mxu0
        %v2177 = vadd.f32 0.0, %v2176
        %v2178 = vpop.f32.mrb[0].mxu0
        %v2179 = vadd.f32 0.0, %v2178
        %2180 = vmatprep.mubr.f32.mxu0 %v955
        %2181 = vmatmul.mubr.f32.gmra.mrb[0].mxu0 %v954
        %v2182 = vpop.f32.mrb[0].mxu0
        %v2183 = vadd.f32 0.0, %v2182
        %v2184 = vpop.f32.mrb[0].mxu0
        %v2185 = vadd.f32 0.0, %v2184
        %2186 = vmatprep.mubr.f32.mxu0 %v957
        %2187 = vmatmul.mubr.f32.gmra.mrb[0].mxu0 %v956
        %v2188 = vpop.f32.mrb[0].mxu0
        %v2189 = vadd.f32 0.0, %v2188
        %v2190 = vpop.f32.mrb[0].mxu0
        %v2191 = vadd.f32 0.0, %v2190
        %2192 = vmatprep.mubr.f32.mxu0 %v959
        %2193 = vmatmul.mubr.f32.gmra.mrb[0].mxu0 %v958
        %v2194 = vpop.f32.mrb[0].mxu0
        %v2195 = vadd.f32 0.0, %v2194
        %v2196 = vpop.f32.mrb[0].mxu0
        %v2197 = vadd.f32 0.0, %v2196
        %2198 = vmatprep.mubr.f32.mxu0 %v961
        %2199 = vmatmul.mubr.f32.gmra.mrb[0].mxu0 %v960
        %v2200 = vpop.f32.mrb[0].mxu0
        %v2201 = vadd.f32 0.0, %v2200
        %v2202 = vpop.f32.mrb[0].mxu0
        %v2203 = vadd.f32 0.0, %v2202
        %2204 = vmatprep.mubr.f32.mxu0 %v963
        %2205 = vmatmul.mubr.f32.gmra.mrb[0].mxu0 %v962
        %v2206 = vpop.f32.mrb[0].mxu0
        %v2207 = vadd.f32 0.0, %v2206
        %v2208 = vpop.f32.mrb[0].mxu0
        %v2209 = vadd.f32 0.0, %v2208
        %2210 = vmatprep.mubr.f32.mxu0 %v965
        %2211 = vmatmul.mubr.f32.gmra.mrb[0].mxu0 %v964
        %v2212 = vpop.f32.mrb[0].mxu0
        %v2213 = vadd.f32 0.0, %v2212
        %v2214 = vpop.f32.mrb[0].mxu0
        %v2215 = vadd.f32 0.0, %v2214
        %2216 = vmatprep.mubr.f32.mxu0 %v967
        %2217 = vmatmul.mubr.f32.gmra.mrb[0].mxu0 %v966
        %v2218 = vpop.f32.mrb[0].mxu0
        %v2219 = vadd.f32 0.0, %v2218
        %v2220 = vpop.f32.mrb[0].mxu0
        %v2221 = vadd.f32 0.0, %v2220
        %2222 = vmatprep.mubr.f32.mxu0 %v969
        %2223 = vmatmul.mubr.f32.gmra.mrb[0].mxu0 %v968
        %v2224 = vpop.f32.mrb[0].mxu0
        %v2225 = vadd.f32 0.0, %v2224
        %v2226 = vpop.f32.mrb[0].mxu0
        %v2227 = vadd.f32 0.0, %v2226
        %2228 = vmatprep.mubr.f32.mxu0 %v971
        %2229 = vmatmul.mubr.f32.gmra.mrb[0].mxu0 %v970
        %v2230 = vpop.f32.mrb[0].mxu0
        %v2231 = vadd.f32 0.0, %v2230
        %v2232 = vpop.f32.mrb[0].mxu0
        %v2233 = vadd.f32 0.0, %v2232
        %2234 = vmatprep.mubr.f32.mxu0 %v973
        %2235 = vmatmul.mubr.f32.gmra.mrb[0].mxu0 %v972
        %v2236 = vpop.f32.mrb[0].mxu0
        %v2237 = vadd.f32 0.0, %v2236
        %v2238 = vpop.f32.mrb[0].mxu0
        %v2239 = vadd.f32 0.0, %v2238
        %2240 = vmatprep.mubr.f32.mxu0 %v975
        %2241 = vmatmul.mubr.f32.gmra.mrb[0].mxu0 %v974
        %v2242 = vpop.f32.mrb[0].mxu0
        %v2243 = vadd.f32 0.0, %v2242
        %v2244 = vpop.f32.mrb[0].mxu0
        %v2245 = vadd.f32 0.0, %v2244
        %2246 = vmatprep.mubr.f32.mxu0 %v977
        %2247 = vmatmul.mubr.f32.gmra.mrb[0].mxu0 %v976
        %v2248 = vpop.f32.mrb[0].mxu0
        %v2249 = vadd.f32 0.0, %v2248
        %v2250 = vpop.f32.mrb[0].mxu0
        %v2251 = vadd.f32 0.0, %v2250
        %2252 = vmatprep.mubr.f32.mxu0 %v979
        %2253 = vmatmul.mubr.f32.gmra.mrb[0].mxu0 %v978
        %v2254 = vpop.f32.mrb[0].mxu0
        %v2255 = vadd.f32 0.0, %v2254
        %v2256 = vpop.f32.mrb[0].mxu0
        %v2257 = vadd.f32 0.0, %v2256
        %2258 = vmatprep.mubr.f32.mxu0 %v981
        %2259 = vmatmul.mubr.f32.gmra.mrb[0].mxu0 %v980
        %v2260 = vpop.f32.mrb[0].mxu0
        %v2261 = vadd.f32 0.0, %v2260
        %v2262 = vpop.f32.mrb[0].mxu0
        %v2263 = vadd.f32 0.0, %v2262
        %2264 = vmatprep.mubr.f32.mxu0 %v983
        %2265 = vmatmul.mubr.f32.gmra.mrb[0].mxu0 %v982
        %v2266 = vpop.f32.mrb[0].mxu0
        %v2267 = vadd.f32 0.0, %v2266
        %v2268 = vpop.f32.mrb[0].mxu0
        %v2269 = vadd.f32 0.0, %v2268
        %2270 = vmatprep.mubr.f32.mxu0 %v985
        %2271 = vmatmul.mubr.f32.gmra.mrb[0].mxu0 %v984
        %v2272 = vpop.f32.mrb[0].mxu0
        %v2273 = vadd.f32 0.0, %v2272
        %v2274 = vpop.f32.mrb[0].mxu0
        %v2275 = vadd.f32 0.0, %v2274
        %2276 = vmatprep.mubr.f32.mxu0 %v987
        %2277 = vmatmul.mubr.f32.gmra.mrb[0].mxu0 %v986
        %v2278 = vpop.f32.mrb[0].mxu0
        %v2279 = vadd.f32 0.0, %v2278
        %v2280 = vpop.f32.mrb[0].mxu0
        %v2281 = vadd.f32 0.0, %v2280
        %2282 = vmatprep.mubr.f32.mxu0 %v989
        %2283 = vmatmul.mubr.f32.gmra.mrb[0].mxu0 %v988
        %v2284 = vpop.f32.mrb[0].mxu0
        %v2285 = vadd.f32 0.0, %v2284
        %v2286 = vpop.f32.mrb[0].mxu0
        %v2287 = vadd.f32 0.0, %v2286
        %2288 = vmatprep.mubr.f32.mxu0 %v991
        %2289 = vmatmul.mubr.f32.gmra.mrb[0].mxu0 %v990
        %v2290 = vpop.f32.mrb[0].mxu0
        %v2291 = vadd.f32 0.0, %v2290
        %v2292 = vpop.f32.mrb[0].mxu0
        %v2293 = vadd.f32 0.0, %v2292
        %2294 = vmatprep.mubr.f32.mxu0 %v993
        %2295 = vmatmul.mubr.f32.gmra.mrb[0].mxu0 %v992
        %v2296 = vpop.f32.mrb[0].mxu0
        %v2297 = vadd.f32 0.0, %v2296
        %v2298 = vpop.f32.mrb[0].mxu0
        %v2299 = vadd.f32 0.0, %v2298
        %2300 = vmatprep.mubr.f32.mxu0 %v995
        %2301 = vmatmul.mubr.f32.gmra.mrb[0].mxu0 %v994
        %v2302 = vpop.f32.mrb[0].mxu0
        %v2303 = vadd.f32 0.0, %v2302
        %v2304 = vpop.f32.mrb[0].mxu0
        %v2305 = vadd.f32 0.0, %v2304
        %2306 = vmatprep.mubr.f32.mxu0 %v997
        %2307 = vmatmul.mubr.f32.gmra.mrb[0].mxu0 %v996
        %v2308 = vpop.f32.mrb[0].mxu0
        %v2309 = vadd.f32 0.0, %v2308
        %v2310 = vpop.f32.mrb[0].mxu0
        %v2311 = vadd.f32 0.0, %v2310
        %2312 = vmatprep.mubr.f32.mxu0 %v999
        %2313 = vmatmul.mubr.f32.gmra.mrb[0].mxu0 %v998
        %v2314 = vpop.f32.mrb[0].mxu0
        %v2315 = vadd.f32 0.0, %v2314
        %v2316 = vpop.f32.mrb[0].mxu0
        %v2317 = vadd.f32 0.0, %v2316
        %2318 = vmatprep.mubr.f32.mxu0 %v1001
        %2319 = vmatmul.mubr.f32.gmra.mrb[0].mxu0 %v1000
        %v2320 = vpop.f32.mrb[0].mxu0
        %v2321 = vadd.f32 0.0, %v2320
        %v2322 = vpop.f32.mrb[0].mxu0
        %v2323 = vadd.f32 0.0, %v2322
        %2324 = vmatprep.mubr.f32.mxu0 %v1003
        %2325 = vmatmul.mubr.f32.gmra.mrb[0].mxu0 %v1002
        %v2326 = vpop.f32.mrb[0].mxu0
        %v2327 = vadd.f32 0.0, %v2326
        %v2328 = vpop.f32.mrb[0].mxu0
        %v2329 = vadd.f32 0.0, %v2328
        %2330 = vmatprep.mubr.f32.mxu0 %v1005
        %2331 = vmatmul.mubr.f32.gmra.mrb[0].mxu0 %v1004
        %v2332 = vpop.f32.mrb[0].mxu0
        %v2333 = vadd.f32 0.0, %v2332
        %v2334 = vpop.f32.mrb[0].mxu0
        %v2335 = vadd.f32 0.0, %v2334
        %2336 = vmatprep.mubr.f32.mxu0 %v1007
        %2337 = vmatmul.mubr.f32.gmra.mrb[0].mxu0 %v1006
        %v2338 = vpop.f32.mrb[0].mxu0
        %v2339 = vadd.f32 0.0, %v2338
        %v2340 = vpop.f32.mrb[0].mxu0
        %v2341 = vadd.f32 0.0, %v2340
        %2342 = vmatprep.mubr.f32.mxu0 %v1009
        %2343 = vmatmul.mubr.f32.gmra.mrb[0].mxu0 %v1008
        %v2344 = vpop.f32.mrb[0].mxu0
        %v2345 = vadd.f32 0.0, %v2344
        %v2346 = vpop.f32.mrb[0].mxu0
        %v2347 = vadd.f32 0.0, %v2346
        %2348 = vmatprep.mubr.f32.mxu0 %v1011
        %2349 = vmatmul.mubr.f32.gmra.mrb[0].mxu0 %v1010
        %v2350 = vpop.f32.mrb[0].mxu0
        %v2351 = vadd.f32 0.0, %v2350
        %v2352 = vpop.f32.mrb[0].mxu0
        %v2353 = vadd.f32 0.0, %v2352
        %2354 = vmatprep.mubr.f32.mxu0 %v1013
        %2355 = vmatmul.mubr.f32.gmra.mrb[0].mxu0 %v1012
        %v2356 = vpop.f32.mrb[0].mxu0
        %v2357 = vadd.f32 0.0, %v2356
        %v2358 = vpop.f32.mrb[0].mxu0
        %v2359 = vadd.f32 0.0, %v2358
        %2360 = vdwg.mxu0
        %2361 = vmatprep.subr.mxu0 %v1021
        %2362 = vmatpush1.msra.mxu0 %v1020
        %2363 = vmatprep.subr.mxu0 %v1039
        %2364 = vmatpush1.msra.mxu0 %v1038
        %2365 = vmatprep.subr.mxu0 %v1057
        %2366 = vmatpush1.msra.mxu0 %v1056
        %2367 = vmatprep.subr.mxu0 %v1075
        %2368 = vmatpush1.msra.mxu0 %v1074
        %2369 = vmatprep.subr.mxu0 %v1093
        %2370 = vmatpush1.msra.mxu0 %v1092
        %2371 = vmatprep.subr.mxu0 %v1111
        %2372 = vmatpush1.msra.mxu0 %v1110
        %2373 = vmatprep.subr.mxu0 %v1129
        %2374 = vmatpush1.msra.mxu0 %v1128
        %2375 = vmatprep.subr.mxu0 %v1147
        %2376 = vmatpush1.msra.mxu0 %v1146
        %2377 = vmatprep.subr.mxu0 %v1165
        %2378 = vmatpush1.msra.mxu0 %v1164
        %2379 = vmatprep.subr.mxu0 %v1183
        %2380 = vmatpush1.msra.mxu0 %v1182
        %2381 = vmatprep.subr.mxu0 %v1201
        %2382 = vmatpush1.msra.mxu0 %v1200
        %2383 = vmatprep.subr.mxu0 %v1219
        %2384 = vmatpush1.msra.mxu0 %v1218
        %2385 = vmatprep.subr.mxu0 %v1237
        %2386 = vmatpush1.msra.mxu0 %v1236
        %2387 = vmatprep.subr.mxu0 %v1255
        %2388 = vmatpush1.msra.mxu0 %v1254
        %2389 = vmatprep.subr.mxu0 %v1273
        %2390 = vmatpush1.msra.mxu0 %v1272
        %2391 = vmatprep.subr.mxu0 %v1291
        %2392 = vmatpush1.msra.mxu0 %v1290
        %2393 = vmatprep.subr.mxu0 %v1309
        %2394 = vmatpush1.msra.mxu0 %v1308
        %2395 = vmatprep.subr.mxu0 %v1327
        %2396 = vmatpush1.msra.mxu0 %v1326
        %2397 = vmatprep.subr.mxu0 %v1345
        %2398 = vmatpush1.msra.mxu0 %v1344
        %2399 = vmatprep.subr.mxu0 %v1363
        %2400 = vmatpush1.msra.mxu0 %v1362
        %2401 = vmatprep.subr.mxu0 %v1381
        %2402 = vmatpush1.msra.mxu0 %v1380
        %2403 = vmatprep.subr.mxu0 %v1399
        %2404 = vmatpush1.msra.mxu0 %v1398
        %2405 = vmatprep.subr.mxu0 %v1417
        %2406 = vmatpush1.msra.mxu0 %v1416
        %2407 = vmatprep.subr.mxu0 %v1435
        %2408 = vmatpush1.msra.mxu0 %v1434
        %2409 = vmatprep.subr.mxu0 %v1453
        %2410 = vmatpush1.msra.mxu0 %v1452
        %2411 = vmatprep.subr.mxu0 %v1471
        %2412 = vmatpush1.msra.mxu0 %v1470
        %2413 = vmatprep.subr.mxu0 %v1489
        %2414 = vmatpush1.msra.mxu0 %v1488
        %2415 = vmatprep.subr.mxu0 %v1507
        %2416 = vmatpush1.msra.mxu0 %v1506
        %2417 = vmatprep.subr.mxu0 %v1525
        %2418 = vmatpush1.msra.mxu0 %v1524
        %2419 = vmatprep.subr.mxu0 %v1543
        %2420 = vmatpush1.msra.mxu0 %v1542
        %2421 = vmatprep.subr.mxu0 %v1561
        %2422 = vmatpush1.msra.mxu0 %v1560
        %2423 = vmatprep.subr.mxu0 %v1579
        %2424 = vmatpush1.msra.mxu0 %v1578
        %2425 = vmatprep.mubr.f32.mxu0 %v951
        %2426 = vmatmul.mubr.f32.gmra.mrb[0].mxu0 %v950
        %v2427 = vpop.f32.mrb[0].mxu0
        %v2428 = vadd.f32 0.0, %v2427
        %v2429 = vpop.f32.mrb[0].mxu0
        %v2430 = vadd.f32 0.0, %v2429
        %2431 = vmatprep.mubr.f32.mxu0 %v953
        %2432 = vmatmul.mubr.f32.gmra.mrb[0].mxu0 %v952
        %v2433 = vpop.f32.mrb[0].mxu0
        %v2434 = vadd.f32 0.0, %v2433
        %v2435 = vpop.f32.mrb[0].mxu0
        %v2436 = vadd.f32 0.0, %v2435
        %2437 = vmatprep.mubr.f32.mxu0 %v955
        %2438 = vmatmul.mubr.f32.gmra.mrb[0].mxu0 %v954
        %v2439 = vpop.f32.mrb[0].mxu0
        %v2440 = vadd.f32 0.0, %v2439
        %v2441 = vpop.f32.mrb[0].mxu0
        %v2442 = vadd.f32 0.0, %v2441
        %2443 = vmatprep.mubr.f32.mxu0 %v957
        %2444 = vmatmul.mubr.f32.gmra.mrb[0].mxu0 %v956
        %v2445 = vpop.f32.mrb[0].mxu0
        %v2446 = vadd.f32 0.0, %v2445
        %v2447 = vpop.f32.mrb[0].mxu0
        %v2448 = vadd.f32 0.0, %v2447
        %2449 = vmatprep.mubr.f32.mxu0 %v959
        %2450 = vmatmul.mubr.f32.gmra.mrb[0].mxu0 %v958
        %v2451 = vpop.f32.mrb[0].mxu0
        %v2452 = vadd.f32 0.0, %v2451
        %v2453 = vpop.f32.mrb[0].mxu0
        %v2454 = vadd.f32 0.0, %v2453
        %2455 = vmatprep.mubr.f32.mxu0 %v961
        %2456 = vmatmul.mubr.f32.gmra.mrb[0].mxu0 %v960
        %v2457 = vpop.f32.mrb[0].mxu0
        %v2458 = vadd.f32 0.0, %v2457
        %v2459 = vpop.f32.mrb[0].mxu0
        %v2460 = vadd.f32 0.0, %v2459
        %2461 = vmatprep.mubr.f32.mxu0 %v963
        %2462 = vmatmul.mubr.f32.gmra.mrb[0].mxu0 %v962
        %v2463 = vpop.f32.mrb[0].mxu0
        %v2464 = vadd.f32 0.0, %v2463
        %v2465 = vpop.f32.mrb[0].mxu0
        %v2466 = vadd.f32 0.0, %v2465
        %2467 = vmatprep.mubr.f32.mxu0 %v965
        %2468 = vmatmul.mubr.f32.gmra.mrb[0].mxu0 %v964
        %v2469 = vpop.f32.mrb[0].mxu0
        %v2470 = vadd.f32 0.0, %v2469
        %v2471 = vpop.f32.mrb[0].mxu0
        %v2472 = vadd.f32 0.0, %v2471
        %2473 = vmatprep.mubr.f32.mxu0 %v967
        %2474 = vmatmul.mubr.f32.gmra.mrb[0].mxu0 %v966
        %v2475 = vpop.f32.mrb[0].mxu0
        %v2476 = vadd.f32 0.0, %v2475
        %v2477 = vpop.f32.mrb[0].mxu0
        %v2478 = vadd.f32 0.0, %v2477
        %2479 = vmatprep.mubr.f32.mxu0 %v969
        %2480 = vmatmul.mubr.f32.gmra.mrb[0].mxu0 %v968
        %v2481 = vpop.f32.mrb[0].mxu0
        %v2482 = vadd.f32 0.0, %v2481
        %v2483 = vpop.f32.mrb[0].mxu0
        %v2484 = vadd.f32 0.0, %v2483
        %2485 = vmatprep.mubr.f32.mxu0 %v971
        %2486 = vmatmul.mubr.f32.gmra.mrb[0].mxu0 %v970
        %v2487 = vpop.f32.mrb[0].mxu0
        %v2488 = vadd.f32 0.0, %v2487
        %v2489 = vpop.f32.mrb[0].mxu0
        %v2490 = vadd.f32 0.0, %v2489
        %2491 = vmatprep.mubr.f32.mxu0 %v973
        %2492 = vmatmul.mubr.f32.gmra.mrb[0].mxu0 %v972
        %v2493 = vpop.f32.mrb[0].mxu0
        %v2494 = vadd.f32 0.0, %v2493
        %v2495 = vpop.f32.mrb[0].mxu0
        %v2496 = vadd.f32 0.0, %v2495
        %2497 = vmatprep.mubr.f32.mxu0 %v975
        %2498 = vmatmul.mubr.f32.gmra.mrb[0].mxu0 %v974
        %v2499 = vpop.f32.mrb[0].mxu0
        %v2500 = vadd.f32 0.0, %v2499
        %v2501 = vpop.f32.mrb[0].mxu0
        %v2502 = vadd.f32 0.0, %v2501
        %2503 = vmatprep.mubr.f32.mxu0 %v977
        %2504 = vmatmul.mubr.f32.gmra.mrb[0].mxu0 %v976
        %v2505 = vpop.f32.mrb[0].mxu0
        %v2506 = vadd.f32 0.0, %v2505
        %v2507 = vpop.f32.mrb[0].mxu0
        %v2508 = vadd.f32 0.0, %v2507
        %2509 = vmatprep.mubr.f32.mxu0 %v979
        %2510 = vmatmul.mubr.f32.gmra.mrb[0].mxu0 %v978
        %v2511 = vpop.f32.mrb[0].mxu0
        %v2512 = vadd.f32 0.0, %v2511
        %v2513 = vpop.f32.mrb[0].mxu0
        %v2514 = vadd.f32 0.0, %v2513
        %2515 = vmatprep.mubr.f32.mxu0 %v981
        %2516 = vmatmul.mubr.f32.gmra.mrb[0].mxu0 %v980
        %v2517 = vpop.f32.mrb[0].mxu0
        %v2518 = vadd.f32 0.0, %v2517
        %v2519 = vpop.f32.mrb[0].mxu0
        %v2520 = vadd.f32 0.0, %v2519
        %2521 = vmatprep.mubr.f32.mxu0 %v983
        %2522 = vmatmul.mubr.f32.gmra.mrb[0].mxu0 %v982
        %v2523 = vpop.f32.mrb[0].mxu0
        %v2524 = vadd.f32 0.0, %v2523
        %v2525 = vpop.f32.mrb[0].mxu0
        %v2526 = vadd.f32 0.0, %v2525
        %2527 = vmatprep.mubr.f32.mxu0 %v985
        %2528 = vmatmul.mubr.f32.gmra.mrb[0].mxu0 %v984
        %v2529 = vpop.f32.mrb[0].mxu0
        %v2530 = vadd.f32 0.0, %v2529
        %v2531 = vpop.f32.mrb[0].mxu0
        %v2532 = vadd.f32 0.0, %v2531
        %2533 = vmatprep.mubr.f32.mxu0 %v987
        %2534 = vmatmul.mubr.f32.gmra.mrb[0].mxu0 %v986
        %v2535 = vpop.f32.mrb[0].mxu0
        %v2536 = vadd.f32 0.0, %v2535
        %v2537 = vpop.f32.mrb[0].mxu0
        %v2538 = vadd.f32 0.0, %v2537
        %2539 = vmatprep.mubr.f32.mxu0 %v989
        %2540 = vmatmul.mubr.f32.gmra.mrb[0].mxu0 %v988
        %v2541 = vpop.f32.mrb[0].mxu0
        %v2542 = vadd.f32 0.0, %v2541
        %v2543 = vpop.f32.mrb[0].mxu0
        %v2544 = vadd.f32 0.0, %v2543
        %2545 = vmatprep.mubr.f32.mxu0 %v991
        %2546 = vmatmul.mubr.f32.gmra.mrb[0].mxu0 %v990
        %v2547 = vpop.f32.mrb[0].mxu0
        %v2548 = vadd.f32 0.0, %v2547
        %v2549 = vpop.f32.mrb[0].mxu0
        %v2550 = vadd.f32 0.0, %v2549
        %2551 = vmatprep.mubr.f32.mxu0 %v993
        %2552 = vmatmul.mubr.f32.gmra.mrb[0].mxu0 %v992
        %v2553 = vpop.f32.mrb[0].mxu0
        %v2554 = vadd.f32 0.0, %v2553
        %v2555 = vpop.f32.mrb[0].mxu0
        %v2556 = vadd.f32 0.0, %v2555
        %2557 = vmatprep.mubr.f32.mxu0 %v995
        %2558 = vmatmul.mubr.f32.gmra.mrb[0].mxu0 %v994
        %v2559 = vpop.f32.mrb[0].mxu0
        %v2560 = vadd.f32 0.0, %v2559
        %v2561 = vpop.f32.mrb[0].mxu0
        %v2562 = vadd.f32 0.0, %v2561
        %2563 = vmatprep.mubr.f32.mxu0 %v997
        %2564 = vmatmul.mubr.f32.gmra.mrb[0].mxu0 %v996
        %v2565 = vpop.f32.mrb[0].mxu0
        %v2566 = vadd.f32 0.0, %v2565
        %v2567 = vpop.f32.mrb[0].mxu0
        %v2568 = vadd.f32 0.0, %v2567
        %2569 = vmatprep.mubr.f32.mxu0 %v999
        %2570 = vmatmul.mubr.f32.gmra.mrb[0].mxu0 %v998
        %v2571 = vpop.f32.mrb[0].mxu0
        %v2572 = vadd.f32 0.0, %v2571
        %v2573 = vpop.f32.mrb[0].mxu0
        %v2574 = vadd.f32 0.0, %v2573
        %2575 = vmatprep.mubr.f32.mxu0 %v1001
        %2576 = vmatmul.mubr.f32.gmra.mrb[0].mxu0 %v1000
        %v2577 = vpop.f32.mrb[0].mxu0
        %v2578 = vadd.f32 0.0, %v2577
        %v2579 = vpop.f32.mrb[0].mxu0
        %v2580 = vadd.f32 0.0, %v2579
        %2581 = vmatprep.mubr.f32.mxu0 %v1003
        %2582 = vmatmul.mubr.f32.gmra.mrb[0].mxu0 %v1002
        %v2583 = vpop.f32.mrb[0].mxu0
        %v2584 = vadd.f32 0.0, %v2583
        %v2585 = vpop.f32.mrb[0].mxu0
        %v2586 = vadd.f32 0.0, %v2585
        %2587 = vmatprep.mubr.f32.mxu0 %v1005
        %2588 = vmatmul.mubr.f32.gmra.mrb[0].mxu0 %v1004
        %v2589 = vpop.f32.mrb[0].mxu0
        %v2590 = vadd.f32 0.0, %v2589
        %v2591 = vpop.f32.mrb[0].mxu0
        %v2592 = vadd.f32 0.0, %v2591
        %2593 = vmatprep.mubr.f32.mxu0 %v1007
        %2594 = vmatmul.mubr.f32.gmra.mrb[0].mxu0 %v1006
        %v2595 = vpop.f32.mrb[0].mxu0
        %v2596 = vadd.f32 0.0, %v2595
        %v2597 = vpop.f32.mrb[0].mxu0
        %v2598 = vadd.f32 0.0, %v2597
        %2599 = vmatprep.mubr.f32.mxu0 %v1009
        %2600 = vmatmul.mubr.f32.gmra.mrb[0].mxu0 %v1008
        %v2601 = vpop.f32.mrb[0].mxu0
        %v2602 = vadd.f32 0.0, %v2601
        %v2603 = vpop.f32.mrb[0].mxu0
        %v2604 = vadd.f32 0.0, %v2603
        %2605 = vmatprep.mubr.f32.mxu0 %v1011
        %2606 = vmatmul.mubr.f32.gmra.mrb[0].mxu0 %v1010
        %v2607 = vpop.f32.mrb[0].mxu0
        %v2608 = vadd.f32 0.0, %v2607
        %v2609 = vpop.f32.mrb[0].mxu0
        %v2610 = vadd.f32 0.0, %v2609
        %2611 = vmatprep.mubr.f32.mxu0 %v1013
        %2612 = vmatmul.mubr.f32.gmra.mrb[0].mxu0 %v1012
        %v2613 = vpop.f32.mrb[0].mxu0
        %v2614 = vadd.f32 0.0, %v2613
        %v2615 = vpop.f32.mrb[0].mxu0
        %v2616 = vadd.f32 0.0, %v2615
        %2617 = vdwg.mxu0
        %2618 = vmatprep.subr.mxu0 %v1023
        %2619 = vmatpush1.msra.mxu0 %v1022
        %2620 = vmatprep.subr.mxu0 %v1041
        %2621 = vmatpush1.msra.mxu0 %v1040
        %2622 = vmatprep.subr.mxu0 %v1059
        %2623 = vmatpush1.msra.mxu0 %v1058
        %2624 = vmatprep.subr.mxu0 %v1077
        %2625 = vmatpush1.msra.mxu0 %v1076
        %2626 = vmatprep.subr.mxu0 %v1095
        %2627 = vmatpush1.msra.mxu0 %v1094
        %2628 = vmatprep.subr.mxu0 %v1113
        %2629 = vmatpush1.msra.mxu0 %v1112
        %2630 = vmatprep.subr.mxu0 %v1131
        %2631 = vmatpush1.msra.mxu0 %v1130
        %2632 = vmatprep.subr.mxu0 %v1149
        %2633 = vmatpush1.msra.mxu0 %v1148
        %2634 = vmatprep.subr.mxu0 %v1167
        %2635 = vmatpush1.msra.mxu0 %v1166
        %2636 = vmatprep.subr.mxu0 %v1185
        %2637 = vmatpush1.msra.mxu0 %v1184
        %2638 = vmatprep.subr.mxu0 %v1203
        %2639 = vmatpush1.msra.mxu0 %v1202
        %2640 = vmatprep.subr.mxu0 %v1221
        %2641 = vmatpush1.msra.mxu0 %v1220
        %2642 = vmatprep.subr.mxu0 %v1239
        %2643 = vmatpush1.msra.mxu0 %v1238
        %2644 = vmatprep.subr.mxu0 %v1257
        %2645 = vmatpush1.msra.mxu0 %v1256
        %2646 = vmatprep.subr.mxu0 %v1275
        %2647 = vmatpush1.msra.mxu0 %v1274
        %2648 = vmatprep.subr.mxu0 %v1293
        %2649 = vmatpush1.msra.mxu0 %v1292
        %2650 = vmatprep.subr.mxu0 %v1311
        %2651 = vmatpush1.msra.mxu0 %v1310
        %2652 = vmatprep.subr.mxu0 %v1329
        %2653 = vmatpush1.msra.mxu0 %v1328
        %2654 = vmatprep.subr.mxu0 %v1347
        %2655 = vmatpush1.msra.mxu0 %v1346
        %2656 = vmatprep.subr.mxu0 %v1365
        %2657 = vmatpush1.msra.mxu0 %v1364
        %2658 = vmatprep.subr.mxu0 %v1383
        %2659 = vmatpush1.msra.mxu0 %v1382
        %2660 = vmatprep.subr.mxu0 %v1401
        %2661 = vmatpush1.msra.mxu0 %v1400
        %2662 = vmatprep.subr.mxu0 %v1419
        %2663 = vmatpush1.msra.mxu0 %v1418
        %2664 = vmatprep.subr.mxu0 %v1437
        %2665 = vmatpush1.msra.mxu0 %v1436
        %2666 = vmatprep.subr.mxu0 %v1455
        %2667 = vmatpush1.msra.mxu0 %v1454
        %2668 = vmatprep.subr.mxu0 %v1473
        %2669 = vmatpush1.msra.mxu0 %v1472
        %2670 = vmatprep.subr.mxu0 %v1491
        %2671 = vmatpush1.msra.mxu0 %v1490
        %2672 = vmatprep.subr.mxu0 %v1509
        %2673 = vmatpush1.msra.mxu0 %v1508
        %2674 = vmatprep.subr.mxu0 %v1527
        %2675 = vmatpush1.msra.mxu0 %v1526
        %2676 = vmatprep.subr.mxu0 %v1545
        %2677 = vmatpush1.msra.mxu0 %v1544
        %2678 = vmatprep.subr.mxu0 %v1563
        %2679 = vmatpush1.msra.mxu0 %v1562
        %2680 = vmatprep.subr.mxu0 %v1581
        %2681 = vmatpush1.msra.mxu0 %v1580
        %2682 = vmatprep.mubr.f32.mxu0 %v951
        %2683 = vmatmul.mubr.f32.gmra.mrb[0].mxu0 %v950
        %v2684 = vpop.f32.mrb[0].mxu0
        %v2685 = vadd.f32 0.0, %v2684
        %v2686 = vpop.f32.mrb[0].mxu0
        %v2687 = vadd.f32 0.0, %v2686
        %2688 = vmatprep.mubr.f32.mxu0 %v953
        %2689 = vmatmul.mubr.f32.gmra.mrb[0].mxu0 %v952
        %v2690 = vpop.f32.mrb[0].mxu0
        %v2691 = vadd.f32 0.0, %v2690
        %v2692 = vpop.f32.mrb[0].mxu0
        %v2693 = vadd.f32 0.0, %v2692
        %2694 = vmatprep.mubr.f32.mxu0 %v955
        %2695 = vmatmul.mubr.f32.gmra.mrb[0].mxu0 %v954
        %v2696 = vpop.f32.mrb[0].mxu0
        %v2697 = vadd.f32 0.0, %v2696
        %v2698 = vpop.f32.mrb[0].mxu0
        %v2699 = vadd.f32 0.0, %v2698
        %2700 = vmatprep.mubr.f32.mxu0 %v957
        %2701 = vmatmul.mubr.f32.gmra.mrb[0].mxu0 %v956
        %v2702 = vpop.f32.mrb[0].mxu0
        %v2703 = vadd.f32 0.0, %v2702
        %v2704 = vpop.f32.mrb[0].mxu0
        %v2705 = vadd.f32 0.0, %v2704
        %2706 = vmatprep.mubr.f32.mxu0 %v959
        %2707 = vmatmul.mubr.f32.gmra.mrb[0].mxu0 %v958
        %v2708 = vpop.f32.mrb[0].mxu0
        %v2709 = vadd.f32 0.0, %v2708
        %v2710 = vpop.f32.mrb[0].mxu0
        %v2711 = vadd.f32 0.0, %v2710
        %2712 = vmatprep.mubr.f32.mxu0 %v961
        %2713 = vmatmul.mubr.f32.gmra.mrb[0].mxu0 %v960
        %v2714 = vpop.f32.mrb[0].mxu0
        %v2715 = vadd.f32 0.0, %v2714
        %v2716 = vpop.f32.mrb[0].mxu0
        %v2717 = vadd.f32 0.0, %v2716
        %2718 = vmatprep.mubr.f32.mxu0 %v963
        %2719 = vmatmul.mubr.f32.gmra.mrb[0].mxu0 %v962
        %v2720 = vpop.f32.mrb[0].mxu0
        %v2721 = vadd.f32 0.0, %v2720
        %v2722 = vpop.f32.mrb[0].mxu0
        %v2723 = vadd.f32 0.0, %v2722
        %2724 = vmatprep.mubr.f32.mxu0 %v965
        %2725 = vmatmul.mubr.f32.gmra.mrb[0].mxu0 %v964
        %v2726 = vpop.f32.mrb[0].mxu0
        %v2727 = vadd.f32 0.0, %v2726
        %v2728 = vpop.f32.mrb[0].mxu0
        %v2729 = vadd.f32 0.0, %v2728
        %2730 = vmatprep.mubr.f32.mxu0 %v967
        %2731 = vmatmul.mubr.f32.gmra.mrb[0].mxu0 %v966
        %v2732 = vpop.f32.mrb[0].mxu0
        %v2733 = vadd.f32 0.0, %v2732
        %v2734 = vpop.f32.mrb[0].mxu0
        %v2735 = vadd.f32 0.0, %v2734
        %2736 = vmatprep.mubr.f32.mxu0 %v969
        %2737 = vmatmul.mubr.f32.gmra.mrb[0].mxu0 %v968
        %v2738 = vpop.f32.mrb[0].mxu0
        %v2739 = vadd.f32 0.0, %v2738
        %v2740 = vpop.f32.mrb[0].mxu0
        %v2741 = vadd.f32 0.0, %v2740
        %2742 = vmatprep.mubr.f32.mxu0 %v971
        %2743 = vmatmul.mubr.f32.gmra.mrb[0].mxu0 %v970
        %v2744 = vpop.f32.mrb[0].mxu0
        %v2745 = vadd.f32 0.0, %v2744
        %v2746 = vpop.f32.mrb[0].mxu0
        %v2747 = vadd.f32 0.0, %v2746
        %2748 = vmatprep.mubr.f32.mxu0 %v973
        %2749 = vmatmul.mubr.f32.gmra.mrb[0].mxu0 %v972
        %v2750 = vpop.f32.mrb[0].mxu0
        %v2751 = vadd.f32 0.0, %v2750
        %v2752 = vpop.f32.mrb[0].mxu0
        %v2753 = vadd.f32 0.0, %v2752
        %2754 = vmatprep.mubr.f32.mxu0 %v975
        %2755 = vmatmul.mubr.f32.gmra.mrb[0].mxu0 %v974
        %v2756 = vpop.f32.mrb[0].mxu0
        %v2757 = vadd.f32 0.0, %v2756
        %v2758 = vpop.f32.mrb[0].mxu0
        %v2759 = vadd.f32 0.0, %v2758
        %2760 = vmatprep.mubr.f32.mxu0 %v977
        %2761 = vmatmul.mubr.f32.gmra.mrb[0].mxu0 %v976
        %v2762 = vpop.f32.mrb[0].mxu0
        %v2763 = vadd.f32 0.0, %v2762
        %v2764 = vpop.f32.mrb[0].mxu0
        %v2765 = vadd.f32 0.0, %v2764
        %2766 = vmatprep.mubr.f32.mxu0 %v979
        %2767 = vmatmul.mubr.f32.gmra.mrb[0].mxu0 %v978
        %v2768 = vpop.f32.mrb[0].mxu0
        %v2769 = vadd.f32 0.0, %v2768
        %v2770 = vpop.f32.mrb[0].mxu0
        %v2771 = vadd.f32 0.0, %v2770
        %2772 = vmatprep.mubr.f32.mxu0 %v981
        %2773 = vmatmul.mubr.f32.gmra.mrb[0].mxu0 %v980
        %v2774 = vpop.f32.mrb[0].mxu0
        %v2775 = vadd.f32 0.0, %v2774
        %v2776 = vpop.f32.mrb[0].mxu0
        %v2777 = vadd.f32 0.0, %v2776
        %2778 = vmatprep.mubr.f32.mxu0 %v983
        %2779 = vmatmul.mubr.f32.gmra.mrb[0].mxu0 %v982
        %v2780 = vpop.f32.mrb[0].mxu0
        %v2781 = vadd.f32 0.0, %v2780
        %v2782 = vpop.f32.mrb[0].mxu0
        %v2783 = vadd.f32 0.0, %v2782
        %2784 = vmatprep.mubr.f32.mxu0 %v985
        %2785 = vmatmul.mubr.f32.gmra.mrb[0].mxu0 %v984
        %v2786 = vpop.f32.mrb[0].mxu0
        %v2787 = vadd.f32 0.0, %v2786
        %v2788 = vpop.f32.mrb[0].mxu0
        %v2789 = vadd.f32 0.0, %v2788
        %2790 = vmatprep.mubr.f32.mxu0 %v987
        %2791 = vmatmul.mubr.f32.gmra.mrb[0].mxu0 %v986
        %v2792 = vpop.f32.mrb[0].mxu0
        %v2793 = vadd.f32 0.0, %v2792
        %v2794 = vpop.f32.mrb[0].mxu0
        %v2795 = vadd.f32 0.0, %v2794
        %2796 = vmatprep.mubr.f32.mxu0 %v989
        %2797 = vmatmul.mubr.f32.gmra.mrb[0].mxu0 %v988
        %v2798 = vpop.f32.mrb[0].mxu0
        %v2799 = vadd.f32 0.0, %v2798
        %v2800 = vpop.f32.mrb[0].mxu0
        %v2801 = vadd.f32 0.0, %v2800
        %2802 = vmatprep.mubr.f32.mxu0 %v991
        %2803 = vmatmul.mubr.f32.gmra.mrb[0].mxu0 %v990
        %v2804 = vpop.f32.mrb[0].mxu0
        %v2805 = vadd.f32 0.0, %v2804
        %v2806 = vpop.f32.mrb[0].mxu0
        %v2807 = vadd.f32 0.0, %v2806
        %2808 = vmatprep.mubr.f32.mxu0 %v993
        %2809 = vmatmul.mubr.f32.gmra.mrb[0].mxu0 %v992
        %v2810 = vpop.f32.mrb[0].mxu0
        %v2811 = vadd.f32 0.0, %v2810
        %v2812 = vpop.f32.mrb[0].mxu0
        %v2813 = vadd.f32 0.0, %v2812
        %2814 = vmatprep.mubr.f32.mxu0 %v995
        %2815 = vmatmul.mubr.f32.gmra.mrb[0].mxu0 %v994
        %v2816 = vpop.f32.mrb[0].mxu0
        %v2817 = vadd.f32 0.0, %v2816
        %v2818 = vpop.f32.mrb[0].mxu0
        %v2819 = vadd.f32 0.0, %v2818
        %2820 = vmatprep.mubr.f32.mxu0 %v997
        %2821 = vmatmul.mubr.f32.gmra.mrb[0].mxu0 %v996
        %v2822 = vpop.f32.mrb[0].mxu0
        %v2823 = vadd.f32 0.0, %v2822
        %v2824 = vpop.f32.mrb[0].mxu0
        %v2825 = vadd.f32 0.0, %v2824
        %2826 = vmatprep.mubr.f32.mxu0 %v999
        %2827 = vmatmul.mubr.f32.gmra.mrb[0].mxu0 %v998
        %v2828 = vpop.f32.mrb[0].mxu0
        %v2829 = vadd.f32 0.0, %v2828
        %v2830 = vpop.f32.mrb[0].mxu0
        %v2831 = vadd.f32 0.0, %v2830
        %2832 = vmatprep.mubr.f32.mxu0 %v1001
        %2833 = vmatmul.mubr.f32.gmra.mrb[0].mxu0 %v1000
        %v2834 = vpop.f32.mrb[0].mxu0
        %v2835 = vadd.f32 0.0, %v2834
        %v2836 = vpop.f32.mrb[0].mxu0
        %v2837 = vadd.f32 0.0, %v2836
        %2838 = vmatprep.mubr.f32.mxu0 %v1003
        %2839 = vmatmul.mubr.f32.gmra.mrb[0].mxu0 %v1002
        %v2840 = vpop.f32.mrb[0].mxu0
        %v2841 = vadd.f32 0.0, %v2840
        %v2842 = vpop.f32.mrb[0].mxu0
        %v2843 = vadd.f32 0.0, %v2842
        %2844 = vmatprep.mubr.f32.mxu0 %v1005
        %2845 = vmatmul.mubr.f32.gmra.mrb[0].mxu0 %v1004
        %v2846 = vpop.f32.mrb[0].mxu0
        %v2847 = vadd.f32 0.0, %v2846
        %v2848 = vpop.f32.mrb[0].mxu0
        %v2849 = vadd.f32 0.0, %v2848
        %2850 = vmatprep.mubr.f32.mxu0 %v1007
        %2851 = vmatmul.mubr.f32.gmra.mrb[0].mxu0 %v1006
        %v2852 = vpop.f32.mrb[0].mxu0
        %v2853 = vadd.f32 0.0, %v2852
        %v2854 = vpop.f32.mrb[0].mxu0
        %v2855 = vadd.f32 0.0, %v2854
        %2856 = vmatprep.mubr.f32.mxu0 %v1009
        %2857 = vmatmul.mubr.f32.gmra.mrb[0].mxu0 %v1008
        %v2858 = vpop.f32.mrb[0].mxu0
        %v2859 = vadd.f32 0.0, %v2858
        %v2860 = vpop.f32.mrb[0].mxu0
        %v2861 = vadd.f32 0.0, %v2860
        %2862 = vmatprep.mubr.f32.mxu0 %v1011
        %2863 = vmatmul.mubr.f32.gmra.mrb[0].mxu0 %v1010
        %v2864 = vpop.f32.mrb[0].mxu0
        %v2865 = vadd.f32 0.0, %v2864
        %v2866 = vpop.f32.mrb[0].mxu0
        %v2867 = vadd.f32 0.0, %v2866
        %2868 = vmatprep.mubr.f32.mxu0 %v1013
        %2869 = vmatmul.mubr.f32.gmra.mrb[0].mxu0 %v1012
        %v2870 = vpop.f32.mrb[0].mxu0
        %v2871 = vadd.f32 0.0, %v2870
        %v2872 = vpop.f32.mrb[0].mxu0
        %v2873 = vadd.f32 0.0, %v2872
        %2874 = vdwg.mxu0
        %2875 = vmatprep.subr.mxu0 %v1025
        %2876 = vmatpush1.msra.mxu0 %v1024
        %2877 = vmatprep.subr.mxu0 %v1043
        %2878 = vmatpush1.msra.mxu0 %v1042
        %2879 = vmatprep.subr.mxu0 %v1061
        %2880 = vmatpush1.msra.mxu0 %v1060
        %2881 = vmatprep.subr.mxu0 %v1079
        %2882 = vmatpush1.msra.mxu0 %v1078
        %2883 = vmatprep.subr.mxu0 %v1097
        %2884 = vmatpush1.msra.mxu0 %v1096
        %2885 = vmatprep.subr.mxu0 %v1115
        %2886 = vmatpush1.msra.mxu0 %v1114
        %2887 = vmatprep.subr.mxu0 %v1133
        %2888 = vmatpush1.msra.mxu0 %v1132
        %2889 = vmatprep.subr.mxu0 %v1151
        %2890 = vmatpush1.msra.mxu0 %v1150
        %2891 = vmatprep.subr.mxu0 %v1169
        %2892 = vmatpush1.msra.mxu0 %v1168
        %2893 = vmatprep.subr.mxu0 %v1187
        %2894 = vmatpush1.msra.mxu0 %v1186
        %2895 = vmatprep.subr.mxu0 %v1205
        %2896 = vmatpush1.msra.mxu0 %v1204
        %2897 = vmatprep.subr.mxu0 %v1223
        %2898 = vmatpush1.msra.mxu0 %v1222
        %2899 = vmatprep.subr.mxu0 %v1241
        %2900 = vmatpush1.msra.mxu0 %v1240
        %2901 = vmatprep.subr.mxu0 %v1259
        %2902 = vmatpush1.msra.mxu0 %v1258
        %2903 = vmatprep.subr.mxu0 %v1277
        %2904 = vmatpush1.msra.mxu0 %v1276
        %2905 = vmatprep.subr.mxu0 %v1295
        %2906 = vmatpush1.msra.mxu0 %v1294
        %2907 = vmatprep.subr.mxu0 %v1313
        %2908 = vmatpush1.msra.mxu0 %v1312
        %2909 = vmatprep.subr.mxu0 %v1331
        %2910 = vmatpush1.msra.mxu0 %v1330
        %2911 = vmatprep.subr.mxu0 %v1349
        %2912 = vmatpush1.msra.mxu0 %v1348
        %2913 = vmatprep.subr.mxu0 %v1367
        %2914 = vmatpush1.msra.mxu0 %v1366
        %2915 = vmatprep.subr.mxu0 %v1385
        %2916 = vmatpush1.msra.mxu0 %v1384
        %2917 = vmatprep.subr.mxu0 %v1403
        %2918 = vmatpush1.msra.mxu0 %v1402
        %2919 = vmatprep.subr.mxu0 %v1421
        %2920 = vmatpush1.msra.mxu0 %v1420
        %2921 = vmatprep.subr.mxu0 %v1439
        %2922 = vmatpush1.msra.mxu0 %v1438
        %2923 = vmatprep.subr.mxu0 %v1457
        %2924 = vmatpush1.msra.mxu0 %v1456
        %2925 = vmatprep.subr.mxu0 %v1475
        %2926 = vmatpush1.msra.mxu0 %v1474
        %2927 = vmatprep.subr.mxu0 %v1493
        %2928 = vmatpush1.msra.mxu0 %v1492
        %2929 = vmatprep.subr.mxu0 %v1511
        %2930 = vmatpush1.msra.mxu0 %v1510
        %2931 = vmatprep.subr.mxu0 %v1529
        %2932 = vmatpush1.msra.mxu0 %v1528
        %2933 = vmatprep.subr.mxu0 %v1547
        %2934 = vmatpush1.msra.mxu0 %v1546
        %2935 = vmatprep.subr.mxu0 %v1565
        %2936 = vmatpush1.msra.mxu0 %v1564
        %2937 = vmatprep.subr.mxu0 %v1583
        %2938 = vmatpush1.msra.mxu0 %v1582
        %2939 = vmatprep.mubr.f32.mxu0 %v951
        %2940 = vmatmul.mubr.f32.gmra.mrb[0].mxu0 %v950
        %v2941 = vpop.f32.mrb[0].mxu0
        %v2942 = vadd.f32 0.0, %v2941
        %v2943 = vpop.f32.mrb[0].mxu0
        %v2944 = vadd.f32 0.0, %v2943
        %2945 = vmatprep.mubr.f32.mxu0 %v953
        %2946 = vmatmul.mubr.f32.gmra.mrb[0].mxu0 %v952
        %v2947 = vpop.f32.mrb[0].mxu0
        %v2948 = vadd.f32 0.0, %v2947
        %v2949 = vpop.f32.mrb[0].mxu0
        %v2950 = vadd.f32 0.0, %v2949
        %2951 = vmatprep.mubr.f32.mxu0 %v955
        %2952 = vmatmul.mubr.f32.gmra.mrb[0].mxu0 %v954
        %v2953 = vpop.f32.mrb[0].mxu0
        %v2954 = vadd.f32 0.0, %v2953
        %v2955 = vpop.f32.mrb[0].mxu0
        %v2956 = vadd.f32 0.0, %v2955
        %2957 = vmatprep.mubr.f32.mxu0 %v957
        %2958 = vmatmul.mubr.f32.gmra.mrb[0].mxu0 %v956
        %v2959 = vpop.f32.mrb[0].mxu0
        %v2960 = vadd.f32 0.0, %v2959
        %v2961 = vpop.f32.mrb[0].mxu0
        %v2962 = vadd.f32 0.0, %v2961
        %2963 = vmatprep.mubr.f32.mxu0 %v959
        %2964 = vmatmul.mubr.f32.gmra.mrb[0].mxu0 %v958
        %v2965 = vpop.f32.mrb[0].mxu0
        %v2966 = vadd.f32 0.0, %v2965
        %v2967 = vpop.f32.mrb[0].mxu0
        %v2968 = vadd.f32 0.0, %v2967
        %2969 = vmatprep.mubr.f32.mxu0 %v961
        %2970 = vmatmul.mubr.f32.gmra.mrb[0].mxu0 %v960
        %v2971 = vpop.f32.mrb[0].mxu0
        %v2972 = vadd.f32 0.0, %v2971
        %v2973 = vpop.f32.mrb[0].mxu0
        %v2974 = vadd.f32 0.0, %v2973
        %2975 = vmatprep.mubr.f32.mxu0 %v963
        %2976 = vmatmul.mubr.f32.gmra.mrb[0].mxu0 %v962
        %v2977 = vpop.f32.mrb[0].mxu0
        %v2978 = vadd.f32 0.0, %v2977
        %v2979 = vpop.f32.mrb[0].mxu0
        %v2980 = vadd.f32 0.0, %v2979
        %2981 = vmatprep.mubr.f32.mxu0 %v965
        %2982 = vmatmul.mubr.f32.gmra.mrb[0].mxu0 %v964
        %v2983 = vpop.f32.mrb[0].mxu0
        %v2984 = vadd.f32 0.0, %v2983
        %v2985 = vpop.f32.mrb[0].mxu0
        %v2986 = vadd.f32 0.0, %v2985
        %2987 = vmatprep.mubr.f32.mxu0 %v967
        %2988 = vmatmul.mubr.f32.gmra.mrb[0].mxu0 %v966
        %v2989 = vpop.f32.mrb[0].mxu0
        %v2990 = vadd.f32 0.0, %v2989
        %v2991 = vpop.f32.mrb[0].mxu0
        %v2992 = vadd.f32 0.0, %v2991
        %2993 = vmatprep.mubr.f32.mxu0 %v969
        %2994 = vmatmul.mubr.f32.gmra.mrb[0].mxu0 %v968
        %v2995 = vpop.f32.mrb[0].mxu0
        %v2996 = vadd.f32 0.0, %v2995
        %v2997 = vpop.f32.mrb[0].mxu0
        %v2998 = vadd.f32 0.0, %v2997
        %2999 = vmatprep.mubr.f32.mxu0 %v971
        %3000 = vmatmul.mubr.f32.gmra.mrb[0].mxu0 %v970
        %v3001 = vpop.f32.mrb[0].mxu0
        %v3002 = vadd.f32 0.0, %v3001
        %v3003 = vpop.f32.mrb[0].mxu0
        %v3004 = vadd.f32 0.0, %v3003
        %3005 = vmatprep.mubr.f32.mxu0 %v973
        %3006 = vmatmul.mubr.f32.gmra.mrb[0].mxu0 %v972
        %v3007 = vpop.f32.mrb[0].mxu0
        %v3008 = vadd.f32 0.0, %v3007
        %v3009 = vpop.f32.mrb[0].mxu0
        %v3010 = vadd.f32 0.0, %v3009
        %3011 = vmatprep.mubr.f32.mxu0 %v975
        %3012 = vmatmul.mubr.f32.gmra.mrb[0].mxu0 %v974
        %v3013 = vpop.f32.mrb[0].mxu0
        %v3014 = vadd.f32 0.0, %v3013
        %v3015 = vpop.f32.mrb[0].mxu0
        %v3016 = vadd.f32 0.0, %v3015
        %3017 = vmatprep.mubr.f32.mxu0 %v977
        %3018 = vmatmul.mubr.f32.gmra.mrb[0].mxu0 %v976
        %v3019 = vpop.f32.mrb[0].mxu0
        %v3020 = vadd.f32 0.0, %v3019
        %v3021 = vpop.f32.mrb[0].mxu0
        %v3022 = vadd.f32 0.0, %v3021
        %3023 = vmatprep.mubr.f32.mxu0 %v979
        %3024 = vmatmul.mubr.f32.gmra.mrb[0].mxu0 %v978
        %v3025 = vpop.f32.mrb[0].mxu0
        %v3026 = vadd.f32 0.0, %v3025
        %v3027 = vpop.f32.mrb[0].mxu0
        %v3028 = vadd.f32 0.0, %v3027
        %3029 = vmatprep.mubr.f32.mxu0 %v981
        %3030 = vmatmul.mubr.f32.gmra.mrb[0].mxu0 %v980
        %v3031 = vpop.f32.mrb[0].mxu0
        %v3032 = vadd.f32 0.0, %v3031
        %v3033 = vpop.f32.mrb[0].mxu0
        %v3034 = vadd.f32 0.0, %v3033
        %3035 = vmatprep.mubr.f32.mxu0 %v983
        %3036 = vmatmul.mubr.f32.gmra.mrb[0].mxu0 %v982
        %v3037 = vpop.f32.mrb[0].mxu0
        %v3038 = vadd.f32 0.0, %v3037
        %v3039 = vpop.f32.mrb[0].mxu0
        %v3040 = vadd.f32 0.0, %v3039
        %3041 = vmatprep.mubr.f32.mxu0 %v985
        %3042 = vmatmul.mubr.f32.gmra.mrb[0].mxu0 %v984
        %v3043 = vpop.f32.mrb[0].mxu0
        %v3044 = vadd.f32 0.0, %v3043
        %v3045 = vpop.f32.mrb[0].mxu0
        %v3046 = vadd.f32 0.0, %v3045
        %3047 = vmatprep.mubr.f32.mxu0 %v987
        %3048 = vmatmul.mubr.f32.gmra.mrb[0].mxu0 %v986
        %v3049 = vpop.f32.mrb[0].mxu0
        %v3050 = vadd.f32 0.0, %v3049
        %v3051 = vpop.f32.mrb[0].mxu0
        %v3052 = vadd.f32 0.0, %v3051
        %3053 = vmatprep.mubr.f32.mxu0 %v989
        %3054 = vmatmul.mubr.f32.gmra.mrb[0].mxu0 %v988
        %v3055 = vpop.f32.mrb[0].mxu0
        %v3056 = vadd.f32 0.0, %v3055
        %v3057 = vpop.f32.mrb[0].mxu0
        %v3058 = vadd.f32 0.0, %v3057
        %3059 = vmatprep.mubr.f32.mxu0 %v991
        %3060 = vmatmul.mubr.f32.gmra.mrb[0].mxu0 %v990
        %v3061 = vpop.f32.mrb[0].mxu0
        %v3062 = vadd.f32 0.0, %v3061
        %v3063 = vpop.f32.mrb[0].mxu0
        %v3064 = vadd.f32 0.0, %v3063
        %3065 = vmatprep.mubr.f32.mxu0 %v993
        %3066 = vmatmul.mubr.f32.gmra.mrb[0].mxu0 %v992
        %v3067 = vpop.f32.mrb[0].mxu0
        %v3068 = vadd.f32 0.0, %v3067
        %v3069 = vpop.f32.mrb[0].mxu0
        %v3070 = vadd.f32 0.0, %v3069
        %3071 = vmatprep.mubr.f32.mxu0 %v995
        %3072 = vmatmul.mubr.f32.gmra.mrb[0].mxu0 %v994
        %v3073 = vpop.f32.mrb[0].mxu0
        %v3074 = vadd.f32 0.0, %v3073
        %v3075 = vpop.f32.mrb[0].mxu0
        %v3076 = vadd.f32 0.0, %v3075
        %3077 = vmatprep.mubr.f32.mxu0 %v997
        %3078 = vmatmul.mubr.f32.gmra.mrb[0].mxu0 %v996
        %v3079 = vpop.f32.mrb[0].mxu0
        %v3080 = vadd.f32 0.0, %v3079
        %v3081 = vpop.f32.mrb[0].mxu0
        %v3082 = vadd.f32 0.0, %v3081
        %3083 = vmatprep.mubr.f32.mxu0 %v999
        %3084 = vmatmul.mubr.f32.gmra.mrb[0].mxu0 %v998
        %v3085 = vpop.f32.mrb[0].mxu0
        %v3086 = vadd.f32 0.0, %v3085
        %v3087 = vpop.f32.mrb[0].mxu0
        %v3088 = vadd.f32 0.0, %v3087
        %3089 = vmatprep.mubr.f32.mxu0 %v1001
        %3090 = vmatmul.mubr.f32.gmra.mrb[0].mxu0 %v1000
        %v3091 = vpop.f32.mrb[0].mxu0
        %v3092 = vadd.f32 0.0, %v3091
        %v3093 = vpop.f32.mrb[0].mxu0
        %v3094 = vadd.f32 0.0, %v3093
        %3095 = vmatprep.mubr.f32.mxu0 %v1003
        %3096 = vmatmul.mubr.f32.gmra.mrb[0].mxu0 %v1002
        %v3097 = vpop.f32.mrb[0].mxu0
        %v3098 = vadd.f32 0.0, %v3097
        %v3099 = vpop.f32.mrb[0].mxu0
        %v3100 = vadd.f32 0.0, %v3099
        %3101 = vmatprep.mubr.f32.mxu0 %v1005
        %3102 = vmatmul.mubr.f32.gmra.mrb[0].mxu0 %v1004
        %v3103 = vpop.f32.mrb[0].mxu0
        %v3104 = vadd.f32 0.0, %v3103
        %v3105 = vpop.f32.mrb[0].mxu0
        %v3106 = vadd.f32 0.0, %v3105
        %3107 = vmatprep.mubr.f32.mxu0 %v1007
        %3108 = vmatmul.mubr.f32.gmra.mrb[0].mxu0 %v1006
        %v3109 = vpop.f32.mrb[0].mxu0
        %v3110 = vadd.f32 0.0, %v3109
        %v3111 = vpop.f32.mrb[0].mxu0
        %v3112 = vadd.f32 0.0, %v3111
        %3113 = vmatprep.mubr.f32.mxu0 %v1009
        %3114 = vmatmul.mubr.f32.gmra.mrb[0].mxu0 %v1008
        %v3115 = vpop.f32.mrb[0].mxu0
        %v3116 = vadd.f32 0.0, %v3115
        %v3117 = vpop.f32.mrb[0].mxu0
        %v3118 = vadd.f32 0.0, %v3117
        %3119 = vmatprep.mubr.f32.mxu0 %v1011
        %3120 = vmatmul.mubr.f32.gmra.mrb[0].mxu0 %v1010
        %v3121 = vpop.f32.mrb[0].mxu0
        %v3122 = vadd.f32 0.0, %v3121
        %v3123 = vpop.f32.mrb[0].mxu0
        %v3124 = vadd.f32 0.0, %v3123
        %3125 = vmatprep.mubr.f32.mxu0 %v1013
        %3126 = vmatmul.mubr.f32.gmra.mrb[0].mxu0 %v1012
        %v3127 = vpop.f32.mrb[0].mxu0
        %v3128 = vadd.f32 0.0, %v3127
        %v3129 = vpop.f32.mrb[0].mxu0
        %v3130 = vadd.f32 0.0, %v3129
        %3131 = vdwg.mxu0
        %3132 = vmatprep.subr.mxu0 %v1027
        %3133 = vmatpush1.msra.mxu0 %v1026
        %3134 = vmatprep.subr.mxu0 %v1045
        %3135 = vmatpush1.msra.mxu0 %v1044
        %3136 = vmatprep.subr.mxu0 %v1063
        %3137 = vmatpush1.msra.mxu0 %v1062
        %3138 = vmatprep.subr.mxu0 %v1081
        %3139 = vmatpush1.msra.mxu0 %v1080
        %3140 = vmatprep.subr.mxu0 %v1099
        %3141 = vmatpush1.msra.mxu0 %v1098
        %3142 = vmatprep.subr.mxu0 %v1117
        %3143 = vmatpush1.msra.mxu0 %v1116
        %3144 = vmatprep.subr.mxu0 %v1135
        %3145 = vmatpush1.msra.mxu0 %v1134
        %3146 = vmatprep.subr.mxu0 %v1153
        %3147 = vmatpush1.msra.mxu0 %v1152
        %3148 = vmatprep.subr.mxu0 %v1171
        %3149 = vmatpush1.msra.mxu0 %v1170
        %3150 = vmatprep.subr.mxu0 %v1189
        %3151 = vmatpush1.msra.mxu0 %v1188
        %3152 = vmatprep.subr.mxu0 %v1207
        %3153 = vmatpush1.msra.mxu0 %v1206
        %3154 = vmatprep.subr.mxu0 %v1225
        %3155 = vmatpush1.msra.mxu0 %v1224
        %3156 = vmatprep.subr.mxu0 %v1243
        %3157 = vmatpush1.msra.mxu0 %v1242
        %3158 = vmatprep.subr.mxu0 %v1261
        %3159 = vmatpush1.msra.mxu0 %v1260
        %3160 = vmatprep.subr.mxu0 %v1279
        %3161 = vmatpush1.msra.mxu0 %v1278
        %3162 = vmatprep.subr.mxu0 %v1297
        %3163 = vmatpush1.msra.mxu0 %v1296
        %3164 = vmatprep.subr.mxu0 %v1315
        %3165 = vmatpush1.msra.mxu0 %v1314
        %3166 = vmatprep.subr.mxu0 %v1333
        %3167 = vmatpush1.msra.mxu0 %v1332
        %3168 = vmatprep.subr.mxu0 %v1351
        %3169 = vmatpush1.msra.mxu0 %v1350
        %3170 = vmatprep.subr.mxu0 %v1369
        %3171 = vmatpush1.msra.mxu0 %v1368
        %3172 = vmatprep.subr.mxu0 %v1387
        %3173 = vmatpush1.msra.mxu0 %v1386
        %3174 = vmatprep.subr.mxu0 %v1405
        %3175 = vmatpush1.msra.mxu0 %v1404
        %3176 = vmatprep.subr.mxu0 %v1423
        %3177 = vmatpush1.msra.mxu0 %v1422
        %3178 = vmatprep.subr.mxu0 %v1441
        %3179 = vmatpush1.msra.mxu0 %v1440
        %3180 = vmatprep.subr.mxu0 %v1459
        %3181 = vmatpush1.msra.mxu0 %v1458
        %3182 = vmatprep.subr.mxu0 %v1477
        %3183 = vmatpush1.msra.mxu0 %v1476
        %3184 = vmatprep.subr.mxu0 %v1495
        %3185 = vmatpush1.msra.mxu0 %v1494
        %3186 = vmatprep.subr.mxu0 %v1513
        %3187 = vmatpush1.msra.mxu0 %v1512
        %3188 = vmatprep.subr.mxu0 %v1531
        %3189 = vmatpush1.msra.mxu0 %v1530
        %3190 = vmatprep.subr.mxu0 %v1549
        %3191 = vmatpush1.msra.mxu0 %v1548
        %3192 = vmatprep.subr.mxu0 %v1567
        %3193 = vmatpush1.msra.mxu0 %v1566
        %3194 = vmatprep.subr.mxu0 %v1585
        %3195 = vmatpush1.msra.mxu0 %v1584
        %3196 = vmatprep.mubr.f32.mxu0 %v951
        %3197 = vmatmul.mubr.f32.gmra.mrb[0].mxu0 %v950
        %v3198 = vpop.f32.mrb[0].mxu0
        %v3199 = vadd.f32 0.0, %v3198
        %v3200 = vpop.f32.mrb[0].mxu0
        %v3201 = vadd.f32 0.0, %v3200
        %3202 = vmatprep.mubr.f32.mxu0 %v953
        %3203 = vmatmul.mubr.f32.gmra.mrb[0].mxu0 %v952
        %v3204 = vpop.f32.mrb[0].mxu0
        %v3205 = vadd.f32 0.0, %v3204
        %v3206 = vpop.f32.mrb[0].mxu0
        %v3207 = vadd.f32 0.0, %v3206
        %3208 = vmatprep.mubr.f32.mxu0 %v955
        %3209 = vmatmul.mubr.f32.gmra.mrb[0].mxu0 %v954
        %v3210 = vpop.f32.mrb[0].mxu0
        %v3211 = vadd.f32 0.0, %v3210
        %v3212 = vpop.f32.mrb[0].mxu0
        %v3213 = vadd.f32 0.0, %v3212
        %3214 = vmatprep.mubr.f32.mxu0 %v957
        %3215 = vmatmul.mubr.f32.gmra.mrb[0].mxu0 %v956
        %v3216 = vpop.f32.mrb[0].mxu0
        %v3217 = vadd.f32 0.0, %v3216
        %v3218 = vpop.f32.mrb[0].mxu0
        %v3219 = vadd.f32 0.0, %v3218
        %3220 = vmatprep.mubr.f32.mxu0 %v959
        %3221 = vmatmul.mubr.f32.gmra.mrb[0].mxu0 %v958
        %v3222 = vpop.f32.mrb[0].mxu0
        %v3223 = vadd.f32 0.0, %v3222
        %v3224 = vpop.f32.mrb[0].mxu0
        %v3225 = vadd.f32 0.0, %v3224
        %3226 = vmatprep.mubr.f32.mxu0 %v961
        %3227 = vmatmul.mubr.f32.gmra.mrb[0].mxu0 %v960
        %v3228 = vpop.f32.mrb[0].mxu0
        %v3229 = vadd.f32 0.0, %v3228
        %v3230 = vpop.f32.mrb[0].mxu0
        %v3231 = vadd.f32 0.0, %v3230
        %3232 = vmatprep.mubr.f32.mxu0 %v963
        %3233 = vmatmul.mubr.f32.gmra.mrb[0].mxu0 %v962
        %v3234 = vpop.f32.mrb[0].mxu0
        %v3235 = vadd.f32 0.0, %v3234
        %v3236 = vpop.f32.mrb[0].mxu0
        %v3237 = vadd.f32 0.0, %v3236
        %3238 = vmatprep.mubr.f32.mxu0 %v965
        %3239 = vmatmul.mubr.f32.gmra.mrb[0].mxu0 %v964
        %v3240 = vpop.f32.mrb[0].mxu0
        %v3241 = vadd.f32 0.0, %v3240
        %v3242 = vpop.f32.mrb[0].mxu0
        %v3243 = vadd.f32 0.0, %v3242
        %3244 = vmatprep.mubr.f32.mxu0 %v967
        %3245 = vmatmul.mubr.f32.gmra.mrb[0].mxu0 %v966
        %v3246 = vpop.f32.mrb[0].mxu0
        %v3247 = vadd.f32 0.0, %v3246
        %v3248 = vpop.f32.mrb[0].mxu0
        %v3249 = vadd.f32 0.0, %v3248
        %3250 = vmatprep.mubr.f32.mxu0 %v969
        %3251 = vmatmul.mubr.f32.gmra.mrb[0].mxu0 %v968
        %v3252 = vpop.f32.mrb[0].mxu0
        %v3253 = vadd.f32 0.0, %v3252
        %v3254 = vpop.f32.mrb[0].mxu0
        %v3255 = vadd.f32 0.0, %v3254
        %3256 = vmatprep.mubr.f32.mxu0 %v971
        %3257 = vmatmul.mubr.f32.gmra.mrb[0].mxu0 %v970
        %v3258 = vpop.f32.mrb[0].mxu0
        %v3259 = vadd.f32 0.0, %v3258
        %v3260 = vpop.f32.mrb[0].mxu0
        %v3261 = vadd.f32 0.0, %v3260
        %3262 = vmatprep.mubr.f32.mxu0 %v973
        %3263 = vmatmul.mubr.f32.gmra.mrb[0].mxu0 %v972
        %v3264 = vpop.f32.mrb[0].mxu0
        %v3265 = vadd.f32 0.0, %v3264
        %v3266 = vpop.f32.mrb[0].mxu0
        %v3267 = vadd.f32 0.0, %v3266
        %3268 = vmatprep.mubr.f32.mxu0 %v975
        %3269 = vmatmul.mubr.f32.gmra.mrb[0].mxu0 %v974
        %v3270 = vpop.f32.mrb[0].mxu0
        %v3271 = vadd.f32 0.0, %v3270
        %v3272 = vpop.f32.mrb[0].mxu0
        %v3273 = vadd.f32 0.0, %v3272
        %3274 = vmatprep.mubr.f32.mxu0 %v977
        %3275 = vmatmul.mubr.f32.gmra.mrb[0].mxu0 %v976
        %v3276 = vpop.f32.mrb[0].mxu0
        %v3277 = vadd.f32 0.0, %v3276
        %v3278 = vpop.f32.mrb[0].mxu0
        %v3279 = vadd.f32 0.0, %v3278
        %3280 = vmatprep.mubr.f32.mxu0 %v979
        %3281 = vmatmul.mubr.f32.gmra.mrb[0].mxu0 %v978
        %v3282 = vpop.f32.mrb[0].mxu0
        %v3283 = vadd.f32 0.0, %v3282
        %v3284 = vpop.f32.mrb[0].mxu0
        %v3285 = vadd.f32 0.0, %v3284
        %3286 = vmatprep.mubr.f32.mxu0 %v981
        %3287 = vmatmul.mubr.f32.gmra.mrb[0].mxu0 %v980
        %v3288 = vpop.f32.mrb[0].mxu0
        %v3289 = vadd.f32 0.0, %v3288
        %v3290 = vpop.f32.mrb[0].mxu0
        %v3291 = vadd.f32 0.0, %v3290
        %3292 = vmatprep.mubr.f32.mxu0 %v983
        %3293 = vmatmul.mubr.f32.gmra.mrb[0].mxu0 %v982
        %v3294 = vpop.f32.mrb[0].mxu0
        %v3295 = vadd.f32 0.0, %v3294
        %v3296 = vpop.f32.mrb[0].mxu0
        %v3297 = vadd.f32 0.0, %v3296
        %3298 = vmatprep.mubr.f32.mxu0 %v985
        %3299 = vmatmul.mubr.f32.gmra.mrb[0].mxu0 %v984
        %v3300 = vpop.f32.mrb[0].mxu0
        %v3301 = vadd.f32 0.0, %v3300
        %v3302 = vpop.f32.mrb[0].mxu0
        %v3303 = vadd.f32 0.0, %v3302
        %3304 = vmatprep.mubr.f32.mxu0 %v987
        %3305 = vmatmul.mubr.f32.gmra.mrb[0].mxu0 %v986
        %v3306 = vpop.f32.mrb[0].mxu0
        %v3307 = vadd.f32 0.0, %v3306
        %v3308 = vpop.f32.mrb[0].mxu0
        %v3309 = vadd.f32 0.0, %v3308
        %3310 = vmatprep.mubr.f32.mxu0 %v989
        %3311 = vmatmul.mubr.f32.gmra.mrb[0].mxu0 %v988
        %v3312 = vpop.f32.mrb[0].mxu0
        %v3313 = vadd.f32 0.0, %v3312
        %v3314 = vpop.f32.mrb[0].mxu0
        %v3315 = vadd.f32 0.0, %v3314
        %3316 = vmatprep.mubr.f32.mxu0 %v991
        %3317 = vmatmul.mubr.f32.gmra.mrb[0].mxu0 %v990
        %v3318 = vpop.f32.mrb[0].mxu0
        %v3319 = vadd.f32 0.0, %v3318
        %v3320 = vpop.f32.mrb[0].mxu0
        %v3321 = vadd.f32 0.0, %v3320
        %3322 = vmatprep.mubr.f32.mxu0 %v993
        %3323 = vmatmul.mubr.f32.gmra.mrb[0].mxu0 %v992
        %v3324 = vpop.f32.mrb[0].mxu0
        %v3325 = vadd.f32 0.0, %v3324
        %v3326 = vpop.f32.mrb[0].mxu0
        %v3327 = vadd.f32 0.0, %v3326
        %3328 = vmatprep.mubr.f32.mxu0 %v995
        %3329 = vmatmul.mubr.f32.gmra.mrb[0].mxu0 %v994
        %v3330 = vpop.f32.mrb[0].mxu0
        %v3331 = vadd.f32 0.0, %v3330
        %v3332 = vpop.f32.mrb[0].mxu0
        %v3333 = vadd.f32 0.0, %v3332
        %3334 = vmatprep.mubr.f32.mxu0 %v997
        %3335 = vmatmul.mubr.f32.gmra.mrb[0].mxu0 %v996
        %v3336 = vpop.f32.mrb[0].mxu0
        %v3337 = vadd.f32 0.0, %v3336
        %v3338 = vpop.f32.mrb[0].mxu0
        %v3339 = vadd.f32 0.0, %v3338
        %3340 = vmatprep.mubr.f32.mxu0 %v999
        %3341 = vmatmul.mubr.f32.gmra.mrb[0].mxu0 %v998
        %v3342 = vpop.f32.mrb[0].mxu0
        %v3343 = vadd.f32 0.0, %v3342
        %v3344 = vpop.f32.mrb[0].mxu0
        %v3345 = vadd.f32 0.0, %v3344
        %3346 = vmatprep.mubr.f32.mxu0 %v1001
        %3347 = vmatmul.mubr.f32.gmra.mrb[0].mxu0 %v1000
        %v3348 = vpop.f32.mrb[0].mxu0
        %v3349 = vadd.f32 0.0, %v3348
        %v3350 = vpop.f32.mrb[0].mxu0
        %v3351 = vadd.f32 0.0, %v3350
        %3352 = vmatprep.mubr.f32.mxu0 %v1003
        %3353 = vmatmul.mubr.f32.gmra.mrb[0].mxu0 %v1002
        %v3354 = vpop.f32.mrb[0].mxu0
        %v3355 = vadd.f32 0.0, %v3354
        %v3356 = vpop.f32.mrb[0].mxu0
        %v3357 = vadd.f32 0.0, %v3356
        %3358 = vmatprep.mubr.f32.mxu0 %v1005
        %3359 = vmatmul.mubr.f32.gmra.mrb[0].mxu0 %v1004
        %v3360 = vpop.f32.mrb[0].mxu0
        %v3361 = vadd.f32 0.0, %v3360
        %v3362 = vpop.f32.mrb[0].mxu0
        %v3363 = vadd.f32 0.0, %v3362
        %3364 = vmatprep.mubr.f32.mxu0 %v1007
        %3365 = vmatmul.mubr.f32.gmra.mrb[0].mxu0 %v1006
        %v3366 = vpop.f32.mrb[0].mxu0
        %v3367 = vadd.f32 0.0, %v3366
        %v3368 = vpop.f32.mrb[0].mxu0
        %v3369 = vadd.f32 0.0, %v3368
        %3370 = vmatprep.mubr.f32.mxu0 %v1009
        %3371 = vmatmul.mubr.f32.gmra.mrb[0].mxu0 %v1008
        %v3372 = vpop.f32.mrb[0].mxu0
        %v3373 = vadd.f32 0.0, %v3372
        %v3374 = vpop.f32.mrb[0].mxu0
        %v3375 = vadd.f32 0.0, %v3374
        %3376 = vmatprep.mubr.f32.mxu0 %v1011
        %3377 = vmatmul.mubr.f32.gmra.mrb[0].mxu0 %v1010
        %v3378 = vpop.f32.mrb[0].mxu0
        %v3379 = vadd.f32 0.0, %v3378
        %v3380 = vpop.f32.mrb[0].mxu0
        %v3381 = vadd.f32 0.0, %v3380
        %3382 = vmatprep.mubr.f32.mxu0 %v1013
        %3383 = vmatmul.mubr.f32.gmra.mrb[0].mxu0 %v1012
        %v3384 = vpop.f32.mrb[0].mxu0
        %v3385 = vadd.f32 0.0, %v3384
        %v3386 = vpop.f32.mrb[0].mxu0
        %v3387 = vadd.f32 0.0, %v3386
        %3388 = vdwg.mxu0
        %3389 = vmatprep.subr.mxu0 %v1029
        %3390 = vmatpush1.msra.mxu0 %v1028
        %3391 = vmatprep.subr.mxu0 %v1047
        %3392 = vmatpush1.msra.mxu0 %v1046
        %3393 = vmatprep.subr.mxu0 %v1065
        %3394 = vmatpush1.msra.mxu0 %v1064
        %3395 = vmatprep.subr.mxu0 %v1083
        %3396 = vmatpush1.msra.mxu0 %v1082
        %3397 = vmatprep.subr.mxu0 %v1101
        %3398 = vmatpush1.msra.mxu0 %v1100
        %3399 = vmatprep.subr.mxu0 %v1119
        %3400 = vmatpush1.msra.mxu0 %v1118
        %3401 = vmatprep.subr.mxu0 %v1137
        %3402 = vmatpush1.msra.mxu0 %v1136
        %3403 = vmatprep.subr.mxu0 %v1155
        %3404 = vmatpush1.msra.mxu0 %v1154
        %3405 = vmatprep.subr.mxu0 %v1173
        %3406 = vmatpush1.msra.mxu0 %v1172
        %3407 = vmatprep.subr.mxu0 %v1191
        %3408 = vmatpush1.msra.mxu0 %v1190
        %3409 = vmatprep.subr.mxu0 %v1209
        %3410 = vmatpush1.msra.mxu0 %v1208
        %3411 = vmatprep.subr.mxu0 %v1227
        %3412 = vmatpush1.msra.mxu0 %v1226
        %3413 = vmatprep.subr.mxu0 %v1245
        %3414 = vmatpush1.msra.mxu0 %v1244
        %3415 = vmatprep.subr.mxu0 %v1263
        %3416 = vmatpush1.msra.mxu0 %v1262
        %3417 = vmatprep.subr.mxu0 %v1281
        %3418 = vmatpush1.msra.mxu0 %v1280
        %3419 = vmatprep.subr.mxu0 %v1299
        %3420 = vmatpush1.msra.mxu0 %v1298
        %3421 = vmatprep.subr.mxu0 %v1317
        %3422 = vmatpush1.msra.mxu0 %v1316
        %3423 = vmatprep.subr.mxu0 %v1335
        %3424 = vmatpush1.msra.mxu0 %v1334
        %3425 = vmatprep.subr.mxu0 %v1353
        %3426 = vmatpush1.msra.mxu0 %v1352
        %3427 = vmatprep.subr.mxu0 %v1371
        %3428 = vmatpush1.msra.mxu0 %v1370
        %3429 = vmatprep.subr.mxu0 %v1389
        %3430 = vmatpush1.msra.mxu0 %v1388
        %3431 = vmatprep.subr.mxu0 %v1407
        %3432 = vmatpush1.msra.mxu0 %v1406
        %3433 = vmatprep.subr.mxu0 %v1425
        %3434 = vmatpush1.msra.mxu0 %v1424
        %3435 = vmatprep.subr.mxu0 %v1443
        %3436 = vmatpush1.msra.mxu0 %v1442
        %3437 = vmatprep.subr.mxu0 %v1461
        %3438 = vmatpush1.msra.mxu0 %v1460
        %3439 = vmatprep.subr.mxu0 %v1479
        %3440 = vmatpush1.msra.mxu0 %v1478
        %3441 = vmatprep.subr.mxu0 %v1497
        %3442 = vmatpush1.msra.mxu0 %v1496
        %3443 = vmatprep.subr.mxu0 %v1515
        %3444 = vmatpush1.msra.mxu0 %v1514
        %3445 = vmatprep.subr.mxu0 %v1533
        %3446 = vmatpush1.msra.mxu0 %v1532
        %3447 = vmatprep.subr.mxu0 %v1551
        %3448 = vmatpush1.msra.mxu0 %v1550
        %3449 = vmatprep.subr.mxu0 %v1569
        %3450 = vmatpush1.msra.mxu0 %v1568
        %3451 = vmatprep.subr.mxu0 %v1587
        %3452 = vmatpush1.msra.mxu0 %v1586
        %3453 = vmatprep.mubr.f32.mxu0 %v951
        %3454 = vmatmul.mubr.f32.gmra.mrb[0].mxu0 %v950
        %v3455 = vpop.f32.mrb[0].mxu0
        %v3456 = vadd.f32 0.0, %v3455
        %v3457 = vpop.f32.mrb[0].mxu0
        %v3458 = vadd.f32 0.0, %v3457
        %3459 = vmatprep.mubr.f32.mxu0 %v953
        %3460 = vmatmul.mubr.f32.gmra.mrb[0].mxu0 %v952
        %v3461 = vpop.f32.mrb[0].mxu0
        %v3462 = vadd.f32 0.0, %v3461
        %v3463 = vpop.f32.mrb[0].mxu0
        %v3464 = vadd.f32 0.0, %v3463
        %3465 = vmatprep.mubr.f32.mxu0 %v955
        %3466 = vmatmul.mubr.f32.gmra.mrb[0].mxu0 %v954
        %v3467 = vpop.f32.mrb[0].mxu0
        %v3468 = vadd.f32 0.0, %v3467
        %v3469 = vpop.f32.mrb[0].mxu0
        %v3470 = vadd.f32 0.0, %v3469
        %3471 = vmatprep.mubr.f32.mxu0 %v957
        %3472 = vmatmul.mubr.f32.gmra.mrb[0].mxu0 %v956
        %v3473 = vpop.f32.mrb[0].mxu0
        %v3474 = vadd.f32 0.0, %v3473
        %v3475 = vpop.f32.mrb[0].mxu0
        %v3476 = vadd.f32 0.0, %v3475
        %3477 = vmatprep.mubr.f32.mxu0 %v959
        %3478 = vmatmul.mubr.f32.gmra.mrb[0].mxu0 %v958
        %v3479 = vpop.f32.mrb[0].mxu0
        %v3480 = vadd.f32 0.0, %v3479
        %v3481 = vpop.f32.mrb[0].mxu0
        %v3482 = vadd.f32 0.0, %v3481
        %3483 = vmatprep.mubr.f32.mxu0 %v961
        %3484 = vmatmul.mubr.f32.gmra.mrb[0].mxu0 %v960
        %v3485 = vpop.f32.mrb[0].mxu0
        %v3486 = vadd.f32 0.0, %v3485
        %v3487 = vpop.f32.mrb[0].mxu0
        %v3488 = vadd.f32 0.0, %v3487
        %3489 = vmatprep.mubr.f32.mxu0 %v963
        %3490 = vmatmul.mubr.f32.gmra.mrb[0].mxu0 %v962
        %v3491 = vpop.f32.mrb[0].mxu0
        %v3492 = vadd.f32 0.0, %v3491
        %v3493 = vpop.f32.mrb[0].mxu0
        %v3494 = vadd.f32 0.0, %v3493
        %3495 = vmatprep.mubr.f32.mxu0 %v965
        %3496 = vmatmul.mubr.f32.gmra.mrb[0].mxu0 %v964
        %v3497 = vpop.f32.mrb[0].mxu0
        %v3498 = vadd.f32 0.0, %v3497
        %v3499 = vpop.f32.mrb[0].mxu0
        %v3500 = vadd.f32 0.0, %v3499
        %3501 = vmatprep.mubr.f32.mxu0 %v967
        %3502 = vmatmul.mubr.f32.gmra.mrb[0].mxu0 %v966
        %v3503 = vpop.f32.mrb[0].mxu0
        %v3504 = vadd.f32 0.0, %v3503
        %v3505 = vpop.f32.mrb[0].mxu0
        %v3506 = vadd.f32 0.0, %v3505
        %3507 = vmatprep.mubr.f32.mxu0 %v969
        %3508 = vmatmul.mubr.f32.gmra.mrb[0].mxu0 %v968
        %v3509 = vpop.f32.mrb[0].mxu0
        %v3510 = vadd.f32 0.0, %v3509
        %v3511 = vpop.f32.mrb[0].mxu0
        %v3512 = vadd.f32 0.0, %v3511
        %3513 = vmatprep.mubr.f32.mxu0 %v971
        %3514 = vmatmul.mubr.f32.gmra.mrb[0].mxu0 %v970
        %v3515 = vpop.f32.mrb[0].mxu0
        %v3516 = vadd.f32 0.0, %v3515
        %v3517 = vpop.f32.mrb[0].mxu0
        %v3518 = vadd.f32 0.0, %v3517
        %3519 = vmatprep.mubr.f32.mxu0 %v973
        %3520 = vmatmul.mubr.f32.gmra.mrb[0].mxu0 %v972
        %v3521 = vpop.f32.mrb[0].mxu0
        %v3522 = vadd.f32 0.0, %v3521
        %v3523 = vpop.f32.mrb[0].mxu0
        %v3524 = vadd.f32 0.0, %v3523
        %3525 = vmatprep.mubr.f32.mxu0 %v975
        %3526 = vmatmul.mubr.f32.gmra.mrb[0].mxu0 %v974
        %v3527 = vpop.f32.mrb[0].mxu0
        %v3528 = vadd.f32 0.0, %v3527
        %v3529 = vpop.f32.mrb[0].mxu0
        %v3530 = vadd.f32 0.0, %v3529
        %3531 = vmatprep.mubr.f32.mxu0 %v977
        %3532 = vmatmul.mubr.f32.gmra.mrb[0].mxu0 %v976
        %v3533 = vpop.f32.mrb[0].mxu0
        %v3534 = vadd.f32 0.0, %v3533
        %v3535 = vpop.f32.mrb[0].mxu0
        %v3536 = vadd.f32 0.0, %v3535
        %3537 = vmatprep.mubr.f32.mxu0 %v979
        %3538 = vmatmul.mubr.f32.gmra.mrb[0].mxu0 %v978
        %v3539 = vpop.f32.mrb[0].mxu0
        %v3540 = vadd.f32 0.0, %v3539
        %v3541 = vpop.f32.mrb[0].mxu0
        %v3542 = vadd.f32 0.0, %v3541
        %3543 = vmatprep.mubr.f32.mxu0 %v981
        %3544 = vmatmul.mubr.f32.gmra.mrb[0].mxu0 %v980
        %v3545 = vpop.f32.mrb[0].mxu0
        %v3546 = vadd.f32 0.0, %v3545
        %v3547 = vpop.f32.mrb[0].mxu0
        %v3548 = vadd.f32 0.0, %v3547
        %3549 = vmatprep.mubr.f32.mxu0 %v983
        %3550 = vmatmul.mubr.f32.gmra.mrb[0].mxu0 %v982
        %v3551 = vpop.f32.mrb[0].mxu0
        %v3552 = vadd.f32 0.0, %v3551
        %v3553 = vpop.f32.mrb[0].mxu0
        %v3554 = vadd.f32 0.0, %v3553
        %3555 = vmatprep.mubr.f32.mxu0 %v985
        %3556 = vmatmul.mubr.f32.gmra.mrb[0].mxu0 %v984
        %v3557 = vpop.f32.mrb[0].mxu0
        %v3558 = vadd.f32 0.0, %v3557
        %v3559 = vpop.f32.mrb[0].mxu0
        %v3560 = vadd.f32 0.0, %v3559
        %3561 = vmatprep.mubr.f32.mxu0 %v987
        %3562 = vmatmul.mubr.f32.gmra.mrb[0].mxu0 %v986
        %v3563 = vpop.f32.mrb[0].mxu0
        %v3564 = vadd.f32 0.0, %v3563
        %v3565 = vpop.f32.mrb[0].mxu0
        %v3566 = vadd.f32 0.0, %v3565
        %3567 = vmatprep.mubr.f32.mxu0 %v989
        %3568 = vmatmul.mubr.f32.gmra.mrb[0].mxu0 %v988
        %v3569 = vpop.f32.mrb[0].mxu0
        %v3570 = vadd.f32 0.0, %v3569
        %v3571 = vpop.f32.mrb[0].mxu0
        %v3572 = vadd.f32 0.0, %v3571
        %3573 = vmatprep.mubr.f32.mxu0 %v991
        %3574 = vmatmul.mubr.f32.gmra.mrb[0].mxu0 %v990
        %v3575 = vpop.f32.mrb[0].mxu0
        %v3576 = vadd.f32 0.0, %v3575
        %v3577 = vpop.f32.mrb[0].mxu0
        %v3578 = vadd.f32 0.0, %v3577
        %3579 = vmatprep.mubr.f32.mxu0 %v993
        %3580 = vmatmul.mubr.f32.gmra.mrb[0].mxu0 %v992
        %v3581 = vpop.f32.mrb[0].mxu0
        %v3582 = vadd.f32 0.0, %v3581
        %v3583 = vpop.f32.mrb[0].mxu0
        %v3584 = vadd.f32 0.0, %v3583
        %3585 = vmatprep.mubr.f32.mxu0 %v995
        %3586 = vmatmul.mubr.f32.gmra.mrb[0].mxu0 %v994
        %v3587 = vpop.f32.mrb[0].mxu0
        %v3588 = vadd.f32 0.0, %v3587
        %v3589 = vpop.f32.mrb[0].mxu0
        %v3590 = vadd.f32 0.0, %v3589
        %3591 = vmatprep.mubr.f32.mxu0 %v997
        %3592 = vmatmul.mubr.f32.gmra.mrb[0].mxu0 %v996
        %v3593 = vpop.f32.mrb[0].mxu0
        %v3594 = vadd.f32 0.0, %v3593
        %v3595 = vpop.f32.mrb[0].mxu0
        %v3596 = vadd.f32 0.0, %v3595
        %3597 = vmatprep.mubr.f32.mxu0 %v999
        %3598 = vmatmul.mubr.f32.gmra.mrb[0].mxu0 %v998
        %v3599 = vpop.f32.mrb[0].mxu0
        %v3600 = vadd.f32 0.0, %v3599
        %v3601 = vpop.f32.mrb[0].mxu0
        %v3602 = vadd.f32 0.0, %v3601
        %3603 = vmatprep.mubr.f32.mxu0 %v1001
        %3604 = vmatmul.mubr.f32.gmra.mrb[0].mxu0 %v1000
        %v3605 = vpop.f32.mrb[0].mxu0
        %v3606 = vadd.f32 0.0, %v3605
        %v3607 = vpop.f32.mrb[0].mxu0
        %v3608 = vadd.f32 0.0, %v3607
        %3609 = vmatprep.mubr.f32.mxu0 %v1003
        %3610 = vmatmul.mubr.f32.gmra.mrb[0].mxu0 %v1002
        %v3611 = vpop.f32.mrb[0].mxu0
        %v3612 = vadd.f32 0.0, %v3611
        %v3613 = vpop.f32.mrb[0].mxu0
        %v3614 = vadd.f32 0.0, %v3613
        %3615 = vmatprep.mubr.f32.mxu0 %v1005
        %3616 = vmatmul.mubr.f32.gmra.mrb[0].mxu0 %v1004
        %v3617 = vpop.f32.mrb[0].mxu0
        %v3618 = vadd.f32 0.0, %v3617
        %v3619 = vpop.f32.mrb[0].mxu0
        %v3620 = vadd.f32 0.0, %v3619
        %3621 = vmatprep.mubr.f32.mxu0 %v1007
        %3622 = vmatmul.mubr.f32.gmra.mrb[0].mxu0 %v1006
        %v3623 = vpop.f32.mrb[0].mxu0
        %v3624 = vadd.f32 0.0, %v3623
        %v3625 = vpop.f32.mrb[0].mxu0
        %v3626 = vadd.f32 0.0, %v3625
        %3627 = vmatprep.mubr.f32.mxu0 %v1009
        %3628 = vmatmul.mubr.f32.gmra.mrb[0].mxu0 %v1008
        %v3629 = vpop.f32.mrb[0].mxu0
        %v3630 = vadd.f32 0.0, %v3629
        %v3631 = vpop.f32.mrb[0].mxu0
        %v3632 = vadd.f32 0.0, %v3631
        %3633 = vmatprep.mubr.f32.mxu0 %v1011
        %3634 = vmatmul.mubr.f32.gmra.mrb[0].mxu0 %v1010
        %v3635 = vpop.f32.mrb[0].mxu0
        %v3636 = vadd.f32 0.0, %v3635
        %v3637 = vpop.f32.mrb[0].mxu0
        %v3638 = vadd.f32 0.0, %v3637
        %3639 = vmatprep.mubr.f32.mxu0 %v1013
        %3640 = vmatmul.mubr.f32.gmra.mrb[0].mxu0 %v1012
        %v3641 = vpop.f32.mrb[0].mxu0
        %v3642 = vadd.f32 0.0, %v3641
        %v3643 = vpop.f32.mrb[0].mxu0
        %v3644 = vadd.f32 0.0, %v3643
        %3645 = vdwg.mxu0
        %3646 = vmatprep.subr.mxu0 %v1031
        %3647 = vmatpush1.msra.mxu0 %v1030
        %3648 = vmatprep.subr.mxu0 %v1049
        %3649 = vmatpush1.msra.mxu0 %v1048
        %3650 = vmatprep.subr.mxu0 %v1067
        %3651 = vmatpush1.msra.mxu0 %v1066
        %3652 = vmatprep.subr.mxu0 %v1085
        %3653 = vmatpush1.msra.mxu0 %v1084
        %3654 = vmatprep.subr.mxu0 %v1103
        %3655 = vmatpush1.msra.mxu0 %v1102
        %3656 = vmatprep.subr.mxu0 %v1121
        %3657 = vmatpush1.msra.mxu0 %v1120
        %3658 = vmatprep.subr.mxu0 %v1139
        %3659 = vmatpush1.msra.mxu0 %v1138
        %3660 = vmatprep.subr.mxu0 %v1157
        %3661 = vmatpush1.msra.mxu0 %v1156
        %3662 = vmatprep.subr.mxu0 %v1175
        %3663 = vmatpush1.msra.mxu0 %v1174
        %3664 = vmatprep.subr.mxu0 %v1193
        %3665 = vmatpush1.msra.mxu0 %v1192
        %3666 = vmatprep.subr.mxu0 %v1211
        %3667 = vmatpush1.msra.mxu0 %v1210
        %3668 = vmatprep.subr.mxu0 %v1229
        %3669 = vmatpush1.msra.mxu0 %v1228
        %3670 = vmatprep.subr.mxu0 %v1247
        %3671 = vmatpush1.msra.mxu0 %v1246
        %3672 = vmatprep.subr.mxu0 %v1265
        %3673 = vmatpush1.msra.mxu0 %v1264
        %3674 = vmatprep.subr.mxu0 %v1283
        %3675 = vmatpush1.msra.mxu0 %v1282
        %3676 = vmatprep.subr.mxu0 %v1301
        %3677 = vmatpush1.msra.mxu0 %v1300
        %3678 = vmatprep.subr.mxu0 %v1319
        %3679 = vmatpush1.msra.mxu0 %v1318
        %3680 = vmatprep.subr.mxu0 %v1337
        %3681 = vmatpush1.msra.mxu0 %v1336
        %3682 = vmatprep.subr.mxu0 %v1355
        %3683 = vmatpush1.msra.mxu0 %v1354
        %3684 = vmatprep.subr.mxu0 %v1373
        %3685 = vmatpush1.msra.mxu0 %v1372
        %3686 = vmatprep.subr.mxu0 %v1391
        %3687 = vmatpush1.msra.mxu0 %v1390
        %3688 = vmatprep.subr.mxu0 %v1409
        %3689 = vmatpush1.msra.mxu0 %v1408
        %3690 = vmatprep.subr.mxu0 %v1427
        %3691 = vmatpush1.msra.mxu0 %v1426
        %3692 = vmatprep.subr.mxu0 %v1445
        %3693 = vmatpush1.msra.mxu0 %v1444
        %3694 = vmatprep.subr.mxu0 %v1463
        %3695 = vmatpush1.msra.mxu0 %v1462
        %3696 = vmatprep.subr.mxu0 %v1481
        %3697 = vmatpush1.msra.mxu0 %v1480
        %3698 = vmatprep.subr.mxu0 %v1499
        %3699 = vmatpush1.msra.mxu0 %v1498
        %3700 = vmatprep.subr.mxu0 %v1517
        %3701 = vmatpush1.msra.mxu0 %v1516
        %3702 = vmatprep.subr.mxu0 %v1535
        %3703 = vmatpush1.msra.mxu0 %v1534
        %3704 = vmatprep.subr.mxu0 %v1553
        %3705 = vmatpush1.msra.mxu0 %v1552
        %3706 = vmatprep.subr.mxu0 %v1571
        %3707 = vmatpush1.msra.mxu0 %v1570
        %3708 = vmatprep.subr.mxu0 %v1589
        %3709 = vmatpush1.msra.mxu0 %v1588
        %3710 = vmatprep.mubr.f32.mxu0 %v951
        %3711 = vmatmul.mubr.f32.gmra.mrb[0].mxu0 %v950
        %v3712 = vpop.f32.mrb[0].mxu0
        %v3713 = vadd.f32 0.0, %v3712
        %v3714 = vpop.f32.mrb[0].mxu0
        %v3715 = vadd.f32 0.0, %v3714
        %3716 = vmatprep.mubr.f32.mxu0 %v953
        %3717 = vmatmul.mubr.f32.gmra.mrb[0].mxu0 %v952
        %v3718 = vpop.f32.mrb[0].mxu0
        %v3719 = vadd.f32 0.0, %v3718
        %v3720 = vpop.f32.mrb[0].mxu0
        %v3721 = vadd.f32 0.0, %v3720
        %3722 = vmatprep.mubr.f32.mxu0 %v955
        %3723 = vmatmul.mubr.f32.gmra.mrb[0].mxu0 %v954
        %v3724 = vpop.f32.mrb[0].mxu0
        %v3725 = vadd.f32 0.0, %v3724
        %v3726 = vpop.f32.mrb[0].mxu0
        %v3727 = vadd.f32 0.0, %v3726
        %3728 = vmatprep.mubr.f32.mxu0 %v957
        %3729 = vmatmul.mubr.f32.gmra.mrb[0].mxu0 %v956
        %v3730 = vpop.f32.mrb[0].mxu0
        %v3731 = vadd.f32 0.0, %v3730
        %v3732 = vpop.f32.mrb[0].mxu0
        %v3733 = vadd.f32 0.0, %v3732
        %3734 = vmatprep.mubr.f32.mxu0 %v959
        %3735 = vmatmul.mubr.f32.gmra.mrb[0].mxu0 %v958
        %v3736 = vpop.f32.mrb[0].mxu0
        %v3737 = vadd.f32 0.0, %v3736
        %v3738 = vpop.f32.mrb[0].mxu0
        %v3739 = vadd.f32 0.0, %v3738
        %3740 = vmatprep.mubr.f32.mxu0 %v961
        %3741 = vmatmul.mubr.f32.gmra.mrb[0].mxu0 %v960
        %v3742 = vpop.f32.mrb[0].mxu0
        %v3743 = vadd.f32 0.0, %v3742
        %v3744 = vpop.f32.mrb[0].mxu0
        %v3745 = vadd.f32 0.0, %v3744
        %3746 = vmatprep.mubr.f32.mxu0 %v963
        %3747 = vmatmul.mubr.f32.gmra.mrb[0].mxu0 %v962
        %v3748 = vpop.f32.mrb[0].mxu0
        %v3749 = vadd.f32 0.0, %v3748
        %v3750 = vpop.f32.mrb[0].mxu0
        %v3751 = vadd.f32 0.0, %v3750
        %3752 = vmatprep.mubr.f32.mxu0 %v965
        %3753 = vmatmul.mubr.f32.gmra.mrb[0].mxu0 %v964
        %v3754 = vpop.f32.mrb[0].mxu0
        %v3755 = vadd.f32 0.0, %v3754
        %v3756 = vpop.f32.mrb[0].mxu0
        %v3757 = vadd.f32 0.0, %v3756
        %3758 = vmatprep.mubr.f32.mxu0 %v967
        %3759 = vmatmul.mubr.f32.gmra.mrb[0].mxu0 %v966
        %v3760 = vpop.f32.mrb[0].mxu0
        %v3761 = vadd.f32 0.0, %v3760
        %v3762 = vpop.f32.mrb[0].mxu0
        %v3763 = vadd.f32 0.0, %v3762
        %3764 = vmatprep.mubr.f32.mxu0 %v969
        %3765 = vmatmul.mubr.f32.gmra.mrb[0].mxu0 %v968
        %v3766 = vpop.f32.mrb[0].mxu0
        %v3767 = vadd.f32 0.0, %v3766
        %v3768 = vpop.f32.mrb[0].mxu0
        %v3769 = vadd.f32 0.0, %v3768
        %3770 = vmatprep.mubr.f32.mxu0 %v971
        %3771 = vmatmul.mubr.f32.gmra.mrb[0].mxu0 %v970
        %v3772 = vpop.f32.mrb[0].mxu0
        %v3773 = vadd.f32 0.0, %v3772
        %v3774 = vpop.f32.mrb[0].mxu0
        %v3775 = vadd.f32 0.0, %v3774
        %3776 = vmatprep.mubr.f32.mxu0 %v973
        %3777 = vmatmul.mubr.f32.gmra.mrb[0].mxu0 %v972
        %v3778 = vpop.f32.mrb[0].mxu0
        %v3779 = vadd.f32 0.0, %v3778
        %v3780 = vpop.f32.mrb[0].mxu0
        %v3781 = vadd.f32 0.0, %v3780
        %3782 = vmatprep.mubr.f32.mxu0 %v975
        %3783 = vmatmul.mubr.f32.gmra.mrb[0].mxu0 %v974
        %v3784 = vpop.f32.mrb[0].mxu0
        %v3785 = vadd.f32 0.0, %v3784
        %v3786 = vpop.f32.mrb[0].mxu0
        %v3787 = vadd.f32 0.0, %v3786
        %3788 = vmatprep.mubr.f32.mxu0 %v977
        %3789 = vmatmul.mubr.f32.gmra.mrb[0].mxu0 %v976
        %v3790 = vpop.f32.mrb[0].mxu0
        %v3791 = vadd.f32 0.0, %v3790
        %v3792 = vpop.f32.mrb[0].mxu0
        %v3793 = vadd.f32 0.0, %v3792
        %3794 = vmatprep.mubr.f32.mxu0 %v979
        %3795 = vmatmul.mubr.f32.gmra.mrb[0].mxu0 %v978
        %v3796 = vpop.f32.mrb[0].mxu0
        %v3797 = vadd.f32 0.0, %v3796
        %v3798 = vpop.f32.mrb[0].mxu0
        %v3799 = vadd.f32 0.0, %v3798
        %3800 = vmatprep.mubr.f32.mxu0 %v981
        %3801 = vmatmul.mubr.f32.gmra.mrb[0].mxu0 %v980
        %v3802 = vpop.f32.mrb[0].mxu0
        %v3803 = vadd.f32 0.0, %v3802
        %v3804 = vpop.f32.mrb[0].mxu0
        %v3805 = vadd.f32 0.0, %v3804
        %3806 = vmatprep.mubr.f32.mxu0 %v983
        %3807 = vmatmul.mubr.f32.gmra.mrb[0].mxu0 %v982
        %v3808 = vpop.f32.mrb[0].mxu0
        %v3809 = vadd.f32 0.0, %v3808
        %v3810 = vpop.f32.mrb[0].mxu0
        %v3811 = vadd.f32 0.0, %v3810
        %3812 = vmatprep.mubr.f32.mxu0 %v985
        %3813 = vmatmul.mubr.f32.gmra.mrb[0].mxu0 %v984
        %v3814 = vpop.f32.mrb[0].mxu0
        %v3815 = vadd.f32 0.0, %v3814
        %v3816 = vpop.f32.mrb[0].mxu0
        %v3817 = vadd.f32 0.0, %v3816
        %3818 = vmatprep.mubr.f32.mxu0 %v987
        %3819 = vmatmul.mubr.f32.gmra.mrb[0].mxu0 %v986
        %v3820 = vpop.f32.mrb[0].mxu0
        %v3821 = vadd.f32 0.0, %v3820
        %v3822 = vpop.f32.mrb[0].mxu0
        %v3823 = vadd.f32 0.0, %v3822
        %3824 = vmatprep.mubr.f32.mxu0 %v989
        %3825 = vmatmul.mubr.f32.gmra.mrb[0].mxu0 %v988
        %v3826 = vpop.f32.mrb[0].mxu0
        %v3827 = vadd.f32 0.0, %v3826
        %v3828 = vpop.f32.mrb[0].mxu0
        %v3829 = vadd.f32 0.0, %v3828
        %3830 = vmatprep.mubr.f32.mxu0 %v991
        %3831 = vmatmul.mubr.f32.gmra.mrb[0].mxu0 %v990
        %v3832 = vpop.f32.mrb[0].mxu0
        %v3833 = vadd.f32 0.0, %v3832
        %v3834 = vpop.f32.mrb[0].mxu0
        %v3835 = vadd.f32 0.0, %v3834
        %3836 = vmatprep.mubr.f32.mxu0 %v993
        %3837 = vmatmul.mubr.f32.gmra.mrb[0].mxu0 %v992
        %v3838 = vpop.f32.mrb[0].mxu0
        %v3839 = vadd.f32 0.0, %v3838
        %v3840 = vpop.f32.mrb[0].mxu0
        %v3841 = vadd.f32 0.0, %v3840
        %3842 = vmatprep.mubr.f32.mxu0 %v995
        %3843 = vmatmul.mubr.f32.gmra.mrb[0].mxu0 %v994
        %v3844 = vpop.f32.mrb[0].mxu0
        %v3845 = vadd.f32 0.0, %v3844
        %v3846 = vpop.f32.mrb[0].mxu0
        %v3847 = vadd.f32 0.0, %v3846
        %3848 = vmatprep.mubr.f32.mxu0 %v997
        %3849 = vmatmul.mubr.f32.gmra.mrb[0].mxu0 %v996
        %v3850 = vpop.f32.mrb[0].mxu0
        %v3851 = vadd.f32 0.0, %v3850
        %v3852 = vpop.f32.mrb[0].mxu0
        %v3853 = vadd.f32 0.0, %v3852
        %3854 = vmatprep.mubr.f32.mxu0 %v999
        %3855 = vmatmul.mubr.f32.gmra.mrb[0].mxu0 %v998
        %v3856 = vpop.f32.mrb[0].mxu0
        %v3857 = vadd.f32 0.0, %v3856
        %v3858 = vpop.f32.mrb[0].mxu0
        %v3859 = vadd.f32 0.0, %v3858
        %3860 = vmatprep.mubr.f32.mxu0 %v1001
        %3861 = vmatmul.mubr.f32.gmra.mrb[0].mxu0 %v1000
        %v3862 = vpop.f32.mrb[0].mxu0
        %v3863 = vadd.f32 0.0, %v3862
        %v3864 = vpop.f32.mrb[0].mxu0
        %v3865 = vadd.f32 0.0, %v3864
        %3866 = vmatprep.mubr.f32.mxu0 %v1003
        %3867 = vmatmul.mubr.f32.gmra.mrb[0].mxu0 %v1002
        %v3868 = vpop.f32.mrb[0].mxu0
        %v3869 = vadd.f32 0.0, %v3868
        %v3870 = vpop.f32.mrb[0].mxu0
        %v3871 = vadd.f32 0.0, %v3870
        %3872 = vmatprep.mubr.f32.mxu0 %v1005
        %3873 = vmatmul.mubr.f32.gmra.mrb[0].mxu0 %v1004
        %v3874 = vpop.f32.mrb[0].mxu0
        %v3875 = vadd.f32 0.0, %v3874
        %v3876 = vpop.f32.mrb[0].mxu0
        %v3877 = vadd.f32 0.0, %v3876
        %3878 = vmatprep.mubr.f32.mxu0 %v1007
        %3879 = vmatmul.mubr.f32.gmra.mrb[0].mxu0 %v1006
        %v3880 = vpop.f32.mrb[0].mxu0
        %v3881 = vadd.f32 0.0, %v3880
        %v3882 = vpop.f32.mrb[0].mxu0
        %v3883 = vadd.f32 0.0, %v3882
        %3884 = vmatprep.mubr.f32.mxu0 %v1009
        %3885 = vmatmul.mubr.f32.gmra.mrb[0].mxu0 %v1008
        %v3886 = vpop.f32.mrb[0].mxu0
        %v3887 = vadd.f32 0.0, %v3886
        %v3888 = vpop.f32.mrb[0].mxu0
        %v3889 = vadd.f32 0.0, %v3888
        %3890 = vmatprep.mubr.f32.mxu0 %v1011
        %3891 = vmatmul.mubr.f32.gmra.mrb[0].mxu0 %v1010
        %v3892 = vpop.f32.mrb[0].mxu0
        %v3893 = vadd.f32 0.0, %v3892
        %v3894 = vpop.f32.mrb[0].mxu0
        %v3895 = vadd.f32 0.0, %v3894
        %3896 = vmatprep.mubr.f32.mxu0 %v1013
        %3897 = vmatmul.mubr.f32.gmra.mrb[0].mxu0 %v1012
        %v3898 = vpop.f32.mrb[0].mxu0
        %v3899 = vadd.f32 0.0, %v3898
        %v3900 = vpop.f32.mrb[0].mxu0
        %v3901 = vadd.f32 0.0, %v3900
        %3902 = vdwg.mxu0
        %3903 = vmatprep.subr.mxu0 %v375
        %3904 = vmatpush1.msra.mxu0 %v374
        %3905 = vmatprep.subr.mxu0 %v393
        %3906 = vmatpush1.msra.mxu0 %v392
        %3907 = vmatprep.subr.mxu0 %v411
        %3908 = vmatpush1.msra.mxu0 %v410
        %3909 = vmatprep.subr.mxu0 %v429
        %3910 = vmatpush1.msra.mxu0 %v428
        %3911 = vmatprep.subr.mxu0 %v447
        %3912 = vmatpush1.msra.mxu0 %v446
        %3913 = vmatprep.subr.mxu0 %v465
        %3914 = vmatpush1.msra.mxu0 %v464
        %3915 = vmatprep.subr.mxu0 %v483
        %3916 = vmatpush1.msra.mxu0 %v482
        %3917 = vmatprep.subr.mxu0 %v501
        %3918 = vmatpush1.msra.mxu0 %v500
        %3919 = vmatprep.subr.mxu0 %v519
        %3920 = vmatpush1.msra.mxu0 %v518
        %3921 = vmatprep.subr.mxu0 %v537
        %3922 = vmatpush1.msra.mxu0 %v536
        %3923 = vmatprep.subr.mxu0 %v555
        %3924 = vmatpush1.msra.mxu0 %v554
        %3925 = vmatprep.subr.mxu0 %v573
        %3926 = vmatpush1.msra.mxu0 %v572
        %3927 = vmatprep.subr.mxu0 %v591
        %3928 = vmatpush1.msra.mxu0 %v590
        %3929 = vmatprep.subr.mxu0 %v609
        %3930 = vmatpush1.msra.mxu0 %v608
        %3931 = vmatprep.subr.mxu0 %v627
        %3932 = vmatpush1.msra.mxu0 %v626
        %3933 = vmatprep.subr.mxu0 %v645
        %3934 = vmatpush1.msra.mxu0 %v644
        %3935 = vmatprep.subr.mxu0 %v663
        %3936 = vmatpush1.msra.mxu0 %v662
        %3937 = vmatprep.subr.mxu0 %v681
        %3938 = vmatpush1.msra.mxu0 %v680
        %3939 = vmatprep.subr.mxu0 %v699
        %3940 = vmatpush1.msra.mxu0 %v698
        %3941 = vmatprep.subr.mxu0 %v717
        %3942 = vmatpush1.msra.mxu0 %v716
        %3943 = vmatprep.subr.mxu0 %v735
        %3944 = vmatpush1.msra.mxu0 %v734
        %3945 = vmatprep.subr.mxu0 %v753
        %3946 = vmatpush1.msra.mxu0 %v752
        %3947 = vmatprep.subr.mxu0 %v771
        %3948 = vmatpush1.msra.mxu0 %v770
        %3949 = vmatprep.subr.mxu0 %v789
        %3950 = vmatpush1.msra.mxu0 %v788
        %3951 = vmatprep.subr.mxu0 %v807
        %3952 = vmatpush1.msra.mxu0 %v806
        %3953 = vmatprep.subr.mxu0 %v825
        %3954 = vmatpush1.msra.mxu0 %v824
        %3955 = vmatprep.subr.mxu0 %v843
        %3956 = vmatpush1.msra.mxu0 %v842
        %3957 = vmatprep.subr.mxu0 %v861
        %3958 = vmatpush1.msra.mxu0 %v860
        %3959 = vmatprep.subr.mxu0 %v879
        %3960 = vmatpush1.msra.mxu0 %v878
        %3961 = vmatprep.subr.mxu0 %v897
        %3962 = vmatpush1.msra.mxu0 %v896
        %3963 = vmatprep.subr.mxu0 %v915
        %3964 = vmatpush1.msra.mxu0 %v914
        %3965 = vmatprep.subr.mxu0 %v933
        %3966 = vmatpush1.msra.mxu0 %v932
        %3967 = vmatprep.mubr.f32.mxu0 %v311
        %3968 = vmatmul.mubr.f32.gmra.mrb[0].mxu0 %v310
        %v3969 = vpop.f32.mrb[0].mxu0
        %v3970 = vadd.f32 %v1657, %v3969
        %v3971 = vpop.f32.mrb[0].mxu0
        %v3972 = vadd.f32 %v1659, %v3971
        %3973 = vmatprep.mubr.f32.mxu0 %v313
        %3974 = vmatmul.mubr.f32.gmra.mrb[0].mxu0 %v312
        %v3975 = vpop.f32.mrb[0].mxu0
        %v3976 = vadd.f32 %v1663, %v3975
        %v3977 = vpop.f32.mrb[0].mxu0
        %v3978 = vadd.f32 %v1665, %v3977
        %3979 = vmatprep.mubr.f32.mxu0 %v315
        %3980 = vmatmul.mubr.f32.gmra.mrb[0].mxu0 %v314
        %v3981 = vpop.f32.mrb[0].mxu0
        %v3982 = vadd.f32 %v1669, %v3981
        %v3983 = vpop.f32.mrb[0].mxu0
        %v3984 = vadd.f32 %v1671, %v3983
        %3985 = vmatprep.mubr.f32.mxu0 %v317
        %3986 = vmatmul.mubr.f32.gmra.mrb[0].mxu0 %v316
        %v3987 = vpop.f32.mrb[0].mxu0
        %v3988 = vadd.f32 %v1675, %v3987
        %v3989 = vpop.f32.mrb[0].mxu0
        %v3990 = vadd.f32 %v1677, %v3989
        %3991 = vmatprep.mubr.f32.mxu0 %v319
        %3992 = vmatmul.mubr.f32.gmra.mrb[0].mxu0 %v318
        %v3993 = vpop.f32.mrb[0].mxu0
        %v3994 = vadd.f32 %v1681, %v3993
        %v3995 = vpop.f32.mrb[0].mxu0
        %v3996 = vadd.f32 %v1683, %v3995
        %3997 = vmatprep.mubr.f32.mxu0 %v321
        %3998 = vmatmul.mubr.f32.gmra.mrb[0].mxu0 %v320
        %v3999 = vpop.f32.mrb[0].mxu0
        %v4000 = vadd.f32 %v1687, %v3999
        %v4001 = vpop.f32.mrb[0].mxu0
        %v4002 = vadd.f32 %v1689, %v4001
        %4003 = vmatprep.mubr.f32.mxu0 %v323
        %4004 = vmatmul.mubr.f32.gmra.mrb[0].mxu0 %v322
        %v4005 = vpop.f32.mrb[0].mxu0
        %v4006 = vadd.f32 %v1693, %v4005
        %v4007 = vpop.f32.mrb[0].mxu0
        %v4008 = vadd.f32 %v1695, %v4007
        %4009 = vmatprep.mubr.f32.mxu0 %v325
        %4010 = vmatmul.mubr.f32.gmra.mrb[0].mxu0 %v324
        %v4011 = vpop.f32.mrb[0].mxu0
        %v4012 = vadd.f32 %v1699, %v4011
        %v4013 = vpop.f32.mrb[0].mxu0
        %v4014 = vadd.f32 %v1701, %v4013
        %4015 = vmatprep.mubr.f32.mxu0 %v327
        %4016 = vmatmul.mubr.f32.gmra.mrb[0].mxu0 %v326
        %v4017 = vpop.f32.mrb[0].mxu0
        %v4018 = vadd.f32 %v1705, %v4017
        %v4019 = vpop.f32.mrb[0].mxu0
        %v4020 = vadd.f32 %v1707, %v4019
        %4021 = vmatprep.mubr.f32.mxu0 %v329
        %4022 = vmatmul.mubr.f32.gmra.mrb[0].mxu0 %v328
        %v4023 = vpop.f32.mrb[0].mxu0
        %v4024 = vadd.f32 %v1711, %v4023
        %v4025 = vpop.f32.mrb[0].mxu0
        %v4026 = vadd.f32 %v1713, %v4025
        %4027 = vmatprep.mubr.f32.mxu0 %v331
        %4028 = vmatmul.mubr.f32.gmra.mrb[0].mxu0 %v330
        %v4029 = vpop.f32.mrb[0].mxu0
        %v4030 = vadd.f32 %v1717, %v4029
        %v4031 = vpop.f32.mrb[0].mxu0
        %v4032 = vadd.f32 %v1719, %v4031
        %4033 = vmatprep.mubr.f32.mxu0 %v333
        %4034 = vmatmul.mubr.f32.gmra.mrb[0].mxu0 %v332
        %v4035 = vpop.f32.mrb[0].mxu0
        %v4036 = vadd.f32 %v1723, %v4035
        %v4037 = vpop.f32.mrb[0].mxu0
        %v4038 = vadd.f32 %v1725, %v4037
        %4039 = vmatprep.mubr.f32.mxu0 %v335
        %4040 = vmatmul.mubr.f32.gmra.mrb[0].mxu0 %v334
        %v4041 = vpop.f32.mrb[0].mxu0
        %v4042 = vadd.f32 %v1729, %v4041
        %v4043 = vpop.f32.mrb[0].mxu0
        %v4044 = vadd.f32 %v1731, %v4043
        %4045 = vmatprep.mubr.f32.mxu0 %v337
        %4046 = vmatmul.mubr.f32.gmra.mrb[0].mxu0 %v336
        %v4047 = vpop.f32.mrb[0].mxu0
        %v4048 = vadd.f32 %v1735, %v4047
        %v4049 = vpop.f32.mrb[0].mxu0
        %v4050 = vadd.f32 %v1737, %v4049
        %4051 = vmatprep.mubr.f32.mxu0 %v339
        %4052 = vmatmul.mubr.f32.gmra.mrb[0].mxu0 %v338
        %v4053 = vpop.f32.mrb[0].mxu0
        %v4054 = vadd.f32 %v1741, %v4053
        %v4055 = vpop.f32.mrb[0].mxu0
        %v4056 = vadd.f32 %v1743, %v4055
        %4057 = vmatprep.mubr.f32.mxu0 %v341
        %4058 = vmatmul.mubr.f32.gmra.mrb[0].mxu0 %v340
        %v4059 = vpop.f32.mrb[0].mxu0
        %v4060 = vadd.f32 %v1747, %v4059
        %v4061 = vpop.f32.mrb[0].mxu0
        %v4062 = vadd.f32 %v1749, %v4061
        %4063 = vmatprep.mubr.f32.mxu0 %v343
        %4064 = vmatmul.mubr.f32.gmra.mrb[0].mxu0 %v342
        %v4065 = vpop.f32.mrb[0].mxu0
        %v4066 = vadd.f32 %v1753, %v4065
        %v4067 = vpop.f32.mrb[0].mxu0
        %v4068 = vadd.f32 %v1755, %v4067
        %4069 = vmatprep.mubr.f32.mxu0 %v345
        %4070 = vmatmul.mubr.f32.gmra.mrb[0].mxu0 %v344
        %v4071 = vpop.f32.mrb[0].mxu0
        %v4072 = vadd.f32 %v1759, %v4071
        %v4073 = vpop.f32.mrb[0].mxu0
        %v4074 = vadd.f32 %v1761, %v4073
        %4075 = vmatprep.mubr.f32.mxu0 %v347
        %4076 = vmatmul.mubr.f32.gmra.mrb[0].mxu0 %v346
        %v4077 = vpop.f32.mrb[0].mxu0
        %v4078 = vadd.f32 %v1765, %v4077
        %v4079 = vpop.f32.mrb[0].mxu0
        %v4080 = vadd.f32 %v1767, %v4079
        %4081 = vmatprep.mubr.f32.mxu0 %v349
        %4082 = vmatmul.mubr.f32.gmra.mrb[0].mxu0 %v348
        %v4083 = vpop.f32.mrb[0].mxu0
        %v4084 = vadd.f32 %v1771, %v4083
        %v4085 = vpop.f32.mrb[0].mxu0
        %v4086 = vadd.f32 %v1773, %v4085
        %4087 = vmatprep.mubr.f32.mxu0 %v351
        %4088 = vmatmul.mubr.f32.gmra.mrb[0].mxu0 %v350
        %v4089 = vpop.f32.mrb[0].mxu0
        %v4090 = vadd.f32 %v1777, %v4089
        %v4091 = vpop.f32.mrb[0].mxu0
        %v4092 = vadd.f32 %v1779, %v4091
        %4093 = vmatprep.mubr.f32.mxu0 %v353
        %4094 = vmatmul.mubr.f32.gmra.mrb[0].mxu0 %v352
        %v4095 = vpop.f32.mrb[0].mxu0
        %v4096 = vadd.f32 %v1783, %v4095
        %v4097 = vpop.f32.mrb[0].mxu0
        %v4098 = vadd.f32 %v1785, %v4097
        %4099 = vmatprep.mubr.f32.mxu0 %v355
        %4100 = vmatmul.mubr.f32.gmra.mrb[0].mxu0 %v354
        %v4101 = vpop.f32.mrb[0].mxu0
        %v4102 = vadd.f32 %v1789, %v4101
        %v4103 = vpop.f32.mrb[0].mxu0
        %v4104 = vadd.f32 %v1791, %v4103
        %4105 = vmatprep.mubr.f32.mxu0 %v357
        %4106 = vmatmul.mubr.f32.gmra.mrb[0].mxu0 %v356
        %v4107 = vpop.f32.mrb[0].mxu0
        %v4108 = vadd.f32 %v1795, %v4107
        %v4109 = vpop.f32.mrb[0].mxu0
        %v4110 = vadd.f32 %v1797, %v4109
        %4111 = vmatprep.mubr.f32.mxu0 %v359
        %4112 = vmatmul.mubr.f32.gmra.mrb[0].mxu0 %v358
        %v4113 = vpop.f32.mrb[0].mxu0
        %v4114 = vadd.f32 %v1801, %v4113
        %v4115 = vpop.f32.mrb[0].mxu0
        %v4116 = vadd.f32 %v1803, %v4115
        %4117 = vmatprep.mubr.f32.mxu0 %v361
        %4118 = vmatmul.mubr.f32.gmra.mrb[0].mxu0 %v360
        %v4119 = vpop.f32.mrb[0].mxu0
        %v4120 = vadd.f32 %v1807, %v4119
        %v4121 = vpop.f32.mrb[0].mxu0
        %v4122 = vadd.f32 %v1809, %v4121
        %4123 = vmatprep.mubr.f32.mxu0 %v363
        %4124 = vmatmul.mubr.f32.gmra.mrb[0].mxu0 %v362
        %v4125 = vpop.f32.mrb[0].mxu0
        %v4126 = vadd.f32 %v1813, %v4125
        %v4127 = vpop.f32.mrb[0].mxu0
        %v4128 = vadd.f32 %v1815, %v4127
        %4129 = vmatprep.mubr.f32.mxu0 %v365
        %4130 = vmatmul.mubr.f32.gmra.mrb[0].mxu0 %v364
        %v4131 = vpop.f32.mrb[0].mxu0
        %v4132 = vadd.f32 %v1819, %v4131
        %v4133 = vpop.f32.mrb[0].mxu0
        %v4134 = vadd.f32 %v1821, %v4133
        %4135 = vmatprep.mubr.f32.mxu0 %v367
        %4136 = vmatmul.mubr.f32.gmra.mrb[0].mxu0 %v366
        %v4137 = vpop.f32.mrb[0].mxu0
        %v4138 = vadd.f32 %v1825, %v4137
        %v4139 = vpop.f32.mrb[0].mxu0
        %v4140 = vadd.f32 %v1827, %v4139
        %4141 = vmatprep.mubr.f32.mxu0 %v369
        %4142 = vmatmul.mubr.f32.gmra.mrb[0].mxu0 %v368
        %v4143 = vpop.f32.mrb[0].mxu0
        %v4144 = vadd.f32 %v1831, %v4143
        %v4145 = vpop.f32.mrb[0].mxu0
        %v4146 = vadd.f32 %v1833, %v4145
        %4147 = vmatprep.mubr.f32.mxu0 %v371
        %4148 = vmatmul.mubr.f32.gmra.mrb[0].mxu0 %v370
        %v4149 = vpop.f32.mrb[0].mxu0
        %v4150 = vadd.f32 %v1837, %v4149
        %v4151 = vpop.f32.mrb[0].mxu0
        %v4152 = vadd.f32 %v1839, %v4151
        %4153 = vmatprep.mubr.f32.mxu0 %v373
        %4154 = vmatmul.mubr.f32.gmra.mrb[0].mxu0 %v372
        %v4155 = vpop.f32.mrb[0].mxu0
        %v4156 = vadd.f32 %v1843, %v4155
        %v4157 = vpop.f32.mrb[0].mxu0
        %v4158 = vadd.f32 %v1845, %v4157
        %4159 = vdwg.mxu0
        %4160 = vmatprep.subr.mxu0 %v377
        %4161 = vmatpush1.msra.mxu0 %v376
        %4162 = vmatprep.subr.mxu0 %v395
        %4163 = vmatpush1.msra.mxu0 %v394
        %4164 = vmatprep.subr.mxu0 %v413
        %4165 = vmatpush1.msra.mxu0 %v412
        %4166 = vmatprep.subr.mxu0 %v431
        %4167 = vmatpush1.msra.mxu0 %v430
        %4168 = vmatprep.subr.mxu0 %v449
        %4169 = vmatpush1.msra.mxu0 %v448
        %4170 = vmatprep.subr.mxu0 %v467
        %4171 = vmatpush1.msra.mxu0 %v466
        %4172 = vmatprep.subr.mxu0 %v485
        %4173 = vmatpush1.msra.mxu0 %v484
        %4174 = vmatprep.subr.mxu0 %v503
        %4175 = vmatpush1.msra.mxu0 %v502
        %4176 = vmatprep.subr.mxu0 %v521
        %4177 = vmatpush1.msra.mxu0 %v520
        %4178 = vmatprep.subr.mxu0 %v539
        %4179 = vmatpush1.msra.mxu0 %v538
        %4180 = vmatprep.subr.mxu0 %v557
        %4181 = vmatpush1.msra.mxu0 %v556
        %4182 = vmatprep.subr.mxu0 %v575
        %4183 = vmatpush1.msra.mxu0 %v574
        %4184 = vmatprep.subr.mxu0 %v593
        %4185 = vmatpush1.msra.mxu0 %v592
        %4186 = vmatprep.subr.mxu0 %v611
        %4187 = vmatpush1.msra.mxu0 %v610
        %4188 = vmatprep.subr.mxu0 %v629
        %4189 = vmatpush1.msra.mxu0 %v628
        %4190 = vmatprep.subr.mxu0 %v647
        %4191 = vmatpush1.msra.mxu0 %v646
        %4192 = vmatprep.subr.mxu0 %v665
        %4193 = vmatpush1.msra.mxu0 %v664
        %4194 = vmatprep.subr.mxu0 %v683
        %4195 = vmatpush1.msra.mxu0 %v682
        %4196 = vmatprep.subr.mxu0 %v701
        %4197 = vmatpush1.msra.mxu0 %v700
        %4198 = vmatprep.subr.mxu0 %v719
        %4199 = vmatpush1.msra.mxu0 %v718
        %4200 = vmatprep.subr.mxu0 %v737
        %4201 = vmatpush1.msra.mxu0 %v736
        %4202 = vmatprep.subr.mxu0 %v755
        %4203 = vmatpush1.msra.mxu0 %v754
        %4204 = vmatprep.subr.mxu0 %v773
        %4205 = vmatpush1.msra.mxu0 %v772
        %4206 = vmatprep.subr.mxu0 %v791
        %4207 = vmatpush1.msra.mxu0 %v790
        %4208 = vmatprep.subr.mxu0 %v809
        %4209 = vmatpush1.msra.mxu0 %v808
        %4210 = vmatprep.subr.mxu0 %v827
        %4211 = vmatpush1.msra.mxu0 %v826
        %4212 = vmatprep.subr.mxu0 %v845
        %4213 = vmatpush1.msra.mxu0 %v844
        %4214 = vmatprep.subr.mxu0 %v863
        %4215 = vmatpush1.msra.mxu0 %v862
        %4216 = vmatprep.subr.mxu0 %v881
        %4217 = vmatpush1.msra.mxu0 %v880
        %4218 = vmatprep.subr.mxu0 %v899
        %4219 = vmatpush1.msra.mxu0 %v898
        %4220 = vmatprep.subr.mxu0 %v917
        %4221 = vmatpush1.msra.mxu0 %v916
        %4222 = vmatprep.subr.mxu0 %v935
        %4223 = vmatpush1.msra.mxu0 %v934
        %4224 = vmatprep.mubr.f32.mxu0 %v311
        %4225 = vmatmul.mubr.f32.gmra.mrb[0].mxu0 %v310
        %v4226 = vpop.f32.mrb[0].mxu0
        %v4227 = vadd.f32 %v1914, %v4226
        %v4228 = vpop.f32.mrb[0].mxu0
        %v4229 = vadd.f32 %v1916, %v4228
        %4230 = vmatprep.mubr.f32.mxu0 %v313
        %4231 = vmatmul.mubr.f32.gmra.mrb[0].mxu0 %v312
        %v4232 = vpop.f32.mrb[0].mxu0
        %v4233 = vadd.f32 %v1920, %v4232
        %v4234 = vpop.f32.mrb[0].mxu0
        %v4235 = vadd.f32 %v1922, %v4234
        %4236 = vmatprep.mubr.f32.mxu0 %v315
        %4237 = vmatmul.mubr.f32.gmra.mrb[0].mxu0 %v314
        %v4238 = vpop.f32.mrb[0].mxu0
        %v4239 = vadd.f32 %v1926, %v4238
        %v4240 = vpop.f32.mrb[0].mxu0
        %v4241 = vadd.f32 %v1928, %v4240
        %4242 = vmatprep.mubr.f32.mxu0 %v317
        %4243 = vmatmul.mubr.f32.gmra.mrb[0].mxu0 %v316
        %v4244 = vpop.f32.mrb[0].mxu0
        %v4245 = vadd.f32 %v1932, %v4244
        %v4246 = vpop.f32.mrb[0].mxu0
        %v4247 = vadd.f32 %v1934, %v4246
        %4248 = vmatprep.mubr.f32.mxu0 %v319
        %4249 = vmatmul.mubr.f32.gmra.mrb[0].mxu0 %v318
        %v4250 = vpop.f32.mrb[0].mxu0
        %v4251 = vadd.f32 %v1938, %v4250
        %v4252 = vpop.f32.mrb[0].mxu0
        %v4253 = vadd.f32 %v1940, %v4252
        %4254 = vmatprep.mubr.f32.mxu0 %v321
        %4255 = vmatmul.mubr.f32.gmra.mrb[0].mxu0 %v320
        %v4256 = vpop.f32.mrb[0].mxu0
        %v4257 = vadd.f32 %v1944, %v4256
        %v4258 = vpop.f32.mrb[0].mxu0
        %v4259 = vadd.f32 %v1946, %v4258
        %4260 = vmatprep.mubr.f32.mxu0 %v323
        %4261 = vmatmul.mubr.f32.gmra.mrb[0].mxu0 %v322
        %v4262 = vpop.f32.mrb[0].mxu0
        %v4263 = vadd.f32 %v1950, %v4262
        %v4264 = vpop.f32.mrb[0].mxu0
        %v4265 = vadd.f32 %v1952, %v4264
        %4266 = vmatprep.mubr.f32.mxu0 %v325
        %4267 = vmatmul.mubr.f32.gmra.mrb[0].mxu0 %v324
        %v4268 = vpop.f32.mrb[0].mxu0
        %v4269 = vadd.f32 %v1956, %v4268
        %v4270 = vpop.f32.mrb[0].mxu0
        %v4271 = vadd.f32 %v1958, %v4270
        %4272 = vmatprep.mubr.f32.mxu0 %v327
        %4273 = vmatmul.mubr.f32.gmra.mrb[0].mxu0 %v326
        %v4274 = vpop.f32.mrb[0].mxu0
        %v4275 = vadd.f32 %v1962, %v4274
        %v4276 = vpop.f32.mrb[0].mxu0
        %v4277 = vadd.f32 %v1964, %v4276
        %4278 = vmatprep.mubr.f32.mxu0 %v329
        %4279 = vmatmul.mubr.f32.gmra.mrb[0].mxu0 %v328
        %v4280 = vpop.f32.mrb[0].mxu0
        %v4281 = vadd.f32 %v1968, %v4280
        %v4282 = vpop.f32.mrb[0].mxu0
        %v4283 = vadd.f32 %v1970, %v4282
        %4284 = vmatprep.mubr.f32.mxu0 %v331
        %4285 = vmatmul.mubr.f32.gmra.mrb[0].mxu0 %v330
        %v4286 = vpop.f32.mrb[0].mxu0
        %v4287 = vadd.f32 %v1974, %v4286
        %v4288 = vpop.f32.mrb[0].mxu0
        %v4289 = vadd.f32 %v1976, %v4288
        %4290 = vmatprep.mubr.f32.mxu0 %v333
        %4291 = vmatmul.mubr.f32.gmra.mrb[0].mxu0 %v332
        %v4292 = vpop.f32.mrb[0].mxu0
        %v4293 = vadd.f32 %v1980, %v4292
        %v4294 = vpop.f32.mrb[0].mxu0
        %v4295 = vadd.f32 %v1982, %v4294
        %4296 = vmatprep.mubr.f32.mxu0 %v335
        %4297 = vmatmul.mubr.f32.gmra.mrb[0].mxu0 %v334
        %v4298 = vpop.f32.mrb[0].mxu0
        %v4299 = vadd.f32 %v1986, %v4298
        %v4300 = vpop.f32.mrb[0].mxu0
        %v4301 = vadd.f32 %v1988, %v4300
        %4302 = vmatprep.mubr.f32.mxu0 %v337
        %4303 = vmatmul.mubr.f32.gmra.mrb[0].mxu0 %v336
        %v4304 = vpop.f32.mrb[0].mxu0
        %v4305 = vadd.f32 %v1992, %v4304
        %v4306 = vpop.f32.mrb[0].mxu0
        %v4307 = vadd.f32 %v1994, %v4306
        %4308 = vmatprep.mubr.f32.mxu0 %v339
        %4309 = vmatmul.mubr.f32.gmra.mrb[0].mxu0 %v338
        %v4310 = vpop.f32.mrb[0].mxu0
        %v4311 = vadd.f32 %v1998, %v4310
        %v4312 = vpop.f32.mrb[0].mxu0
        %v4313 = vadd.f32 %v2000, %v4312
        %4314 = vmatprep.mubr.f32.mxu0 %v341
        %4315 = vmatmul.mubr.f32.gmra.mrb[0].mxu0 %v340
        %v4316 = vpop.f32.mrb[0].mxu0
        %v4317 = vadd.f32 %v2004, %v4316
        %v4318 = vpop.f32.mrb[0].mxu0
        %v4319 = vadd.f32 %v2006, %v4318
        %4320 = vmatprep.mubr.f32.mxu0 %v343
        %4321 = vmatmul.mubr.f32.gmra.mrb[0].mxu0 %v342
        %v4322 = vpop.f32.mrb[0].mxu0
        %v4323 = vadd.f32 %v2010, %v4322
        %v4324 = vpop.f32.mrb[0].mxu0
        %v4325 = vadd.f32 %v2012, %v4324
        %4326 = vmatprep.mubr.f32.mxu0 %v345
        %4327 = vmatmul.mubr.f32.gmra.mrb[0].mxu0 %v344
        %v4328 = vpop.f32.mrb[0].mxu0
        %v4329 = vadd.f32 %v2016, %v4328
        %v4330 = vpop.f32.mrb[0].mxu0
        %v4331 = vadd.f32 %v2018, %v4330
        %4332 = vmatprep.mubr.f32.mxu0 %v347
        %4333 = vmatmul.mubr.f32.gmra.mrb[0].mxu0 %v346
        %v4334 = vpop.f32.mrb[0].mxu0
        %v4335 = vadd.f32 %v2022, %v4334
        %v4336 = vpop.f32.mrb[0].mxu0
        %v4337 = vadd.f32 %v2024, %v4336
        %4338 = vmatprep.mubr.f32.mxu0 %v349
        %4339 = vmatmul.mubr.f32.gmra.mrb[0].mxu0 %v348
        %v4340 = vpop.f32.mrb[0].mxu0
        %v4341 = vadd.f32 %v2028, %v4340
        %v4342 = vpop.f32.mrb[0].mxu0
        %v4343 = vadd.f32 %v2030, %v4342
        %4344 = vmatprep.mubr.f32.mxu0 %v351
        %4345 = vmatmul.mubr.f32.gmra.mrb[0].mxu0 %v350
        %v4346 = vpop.f32.mrb[0].mxu0
        %v4347 = vadd.f32 %v2034, %v4346
        %v4348 = vpop.f32.mrb[0].mxu0
        %v4349 = vadd.f32 %v2036, %v4348
        %4350 = vmatprep.mubr.f32.mxu0 %v353
        %4351 = vmatmul.mubr.f32.gmra.mrb[0].mxu0 %v352
        %v4352 = vpop.f32.mrb[0].mxu0
        %v4353 = vadd.f32 %v2040, %v4352
        %v4354 = vpop.f32.mrb[0].mxu0
        %v4355 = vadd.f32 %v2042, %v4354
        %4356 = vmatprep.mubr.f32.mxu0 %v355
        %4357 = vmatmul.mubr.f32.gmra.mrb[0].mxu0 %v354
        %v4358 = vpop.f32.mrb[0].mxu0
        %v4359 = vadd.f32 %v2046, %v4358
        %v4360 = vpop.f32.mrb[0].mxu0
        %v4361 = vadd.f32 %v2048, %v4360
        %4362 = vmatprep.mubr.f32.mxu0 %v357
        %4363 = vmatmul.mubr.f32.gmra.mrb[0].mxu0 %v356
        %v4364 = vpop.f32.mrb[0].mxu0
        %v4365 = vadd.f32 %v2052, %v4364
        %v4366 = vpop.f32.mrb[0].mxu0
        %v4367 = vadd.f32 %v2054, %v4366
        %4368 = vmatprep.mubr.f32.mxu0 %v359
        %4369 = vmatmul.mubr.f32.gmra.mrb[0].mxu0 %v358
        %v4370 = vpop.f32.mrb[0].mxu0
        %v4371 = vadd.f32 %v2058, %v4370
        %v4372 = vpop.f32.mrb[0].mxu0
        %v4373 = vadd.f32 %v2060, %v4372
        %4374 = vmatprep.mubr.f32.mxu0 %v361
        %4375 = vmatmul.mubr.f32.gmra.mrb[0].mxu0 %v360
        %v4376 = vpop.f32.mrb[0].mxu0
        %v4377 = vadd.f32 %v2064, %v4376
        %v4378 = vpop.f32.mrb[0].mxu0
        %v4379 = vadd.f32 %v2066, %v4378
        %4380 = vmatprep.mubr.f32.mxu0 %v363
        %4381 = vmatmul.mubr.f32.gmra.mrb[0].mxu0 %v362
        %v4382 = vpop.f32.mrb[0].mxu0
        %v4383 = vadd.f32 %v2070, %v4382
        %v4384 = vpop.f32.mrb[0].mxu0
        %v4385 = vadd.f32 %v2072, %v4384
        %4386 = vmatprep.mubr.f32.mxu0 %v365
        %4387 = vmatmul.mubr.f32.gmra.mrb[0].mxu0 %v364
        %v4388 = vpop.f32.mrb[0].mxu0
        %v4389 = vadd.f32 %v2076, %v4388
        %v4390 = vpop.f32.mrb[0].mxu0
        %v4391 = vadd.f32 %v2078, %v4390
        %4392 = vmatprep.mubr.f32.mxu0 %v367
        %4393 = vmatmul.mubr.f32.gmra.mrb[0].mxu0 %v366
        %v4394 = vpop.f32.mrb[0].mxu0
        %v4395 = vadd.f32 %v2082, %v4394
        %v4396 = vpop.f32.mrb[0].mxu0
        %v4397 = vadd.f32 %v2084, %v4396
        %4398 = vmatprep.mubr.f32.mxu0 %v369
        %4399 = vmatmul.mubr.f32.gmra.mrb[0].mxu0 %v368
        %v4400 = vpop.f32.mrb[0].mxu0
        %v4401 = vadd.f32 %v2088, %v4400
        %v4402 = vpop.f32.mrb[0].mxu0
        %v4403 = vadd.f32 %v2090, %v4402
        %4404 = vmatprep.mubr.f32.mxu0 %v371
        %4405 = vmatmul.mubr.f32.gmra.mrb[0].mxu0 %v370
        %v4406 = vpop.f32.mrb[0].mxu0
        %v4407 = vadd.f32 %v2094, %v4406
        %v4408 = vpop.f32.mrb[0].mxu0
        %v4409 = vadd.f32 %v2096, %v4408
        %4410 = vmatprep.mubr.f32.mxu0 %v373
        %4411 = vmatmul.mubr.f32.gmra.mrb[0].mxu0 %v372
        %v4412 = vpop.f32.mrb[0].mxu0
        %v4413 = vadd.f32 %v2100, %v4412
        %v4414 = vpop.f32.mrb[0].mxu0
        %v4415 = vadd.f32 %v2102, %v4414
        %4416 = vdwg.mxu0
        %4417 = vmatprep.subr.mxu0 %v379
        %4418 = vmatpush1.msra.mxu0 %v378
        %4419 = vmatprep.subr.mxu0 %v397
        %4420 = vmatpush1.msra.mxu0 %v396
        %4421 = vmatprep.subr.mxu0 %v415
        %4422 = vmatpush1.msra.mxu0 %v414
        %4423 = vmatprep.subr.mxu0 %v433
        %4424 = vmatpush1.msra.mxu0 %v432
        %4425 = vmatprep.subr.mxu0 %v451
        %4426 = vmatpush1.msra.mxu0 %v450
        %4427 = vmatprep.subr.mxu0 %v469
        %4428 = vmatpush1.msra.mxu0 %v468
        %4429 = vmatprep.subr.mxu0 %v487
        %4430 = vmatpush1.msra.mxu0 %v486
        %4431 = vmatprep.subr.mxu0 %v505
        %4432 = vmatpush1.msra.mxu0 %v504
        %4433 = vmatprep.subr.mxu0 %v523
        %4434 = vmatpush1.msra.mxu0 %v522
        %4435 = vmatprep.subr.mxu0 %v541
        %4436 = vmatpush1.msra.mxu0 %v540
        %4437 = vmatprep.subr.mxu0 %v559
        %4438 = vmatpush1.msra.mxu0 %v558
        %4439 = vmatprep.subr.mxu0 %v577
        %4440 = vmatpush1.msra.mxu0 %v576
        %4441 = vmatprep.subr.mxu0 %v595
        %4442 = vmatpush1.msra.mxu0 %v594
        %4443 = vmatprep.subr.mxu0 %v613
        %4444 = vmatpush1.msra.mxu0 %v612
        %4445 = vmatprep.subr.mxu0 %v631
        %4446 = vmatpush1.msra.mxu0 %v630
        %4447 = vmatprep.subr.mxu0 %v649
        %4448 = vmatpush1.msra.mxu0 %v648
        %4449 = vmatprep.subr.mxu0 %v667
        %4450 = vmatpush1.msra.mxu0 %v666
        %4451 = vmatprep.subr.mxu0 %v685
        %4452 = vmatpush1.msra.mxu0 %v684
        %4453 = vmatprep.subr.mxu0 %v703
        %4454 = vmatpush1.msra.mxu0 %v702
        %4455 = vmatprep.subr.mxu0 %v721
        %4456 = vmatpush1.msra.mxu0 %v720
        %4457 = vmatprep.subr.mxu0 %v739
        %4458 = vmatpush1.msra.mxu0 %v738
        %4459 = vmatprep.subr.mxu0 %v757
        %4460 = vmatpush1.msra.mxu0 %v756
        %4461 = vmatprep.subr.mxu0 %v775
        %4462 = vmatpush1.msra.mxu0 %v774
        %4463 = vmatprep.subr.mxu0 %v793
        %4464 = vmatpush1.msra.mxu0 %v792
        %4465 = vmatprep.subr.mxu0 %v811
        %4466 = vmatpush1.msra.mxu0 %v810
        %4467 = vmatprep.subr.mxu0 %v829
        %4468 = vmatpush1.msra.mxu0 %v828
        %4469 = vmatprep.subr.mxu0 %v847
        %4470 = vmatpush1.msra.mxu0 %v846
        %4471 = vmatprep.subr.mxu0 %v865
        %4472 = vmatpush1.msra.mxu0 %v864
        %4473 = vmatprep.subr.mxu0 %v883
        %4474 = vmatpush1.msra.mxu0 %v882
        %4475 = vmatprep.subr.mxu0 %v901
        %4476 = vmatpush1.msra.mxu0 %v900
        %4477 = vmatprep.subr.mxu0 %v919
        %4478 = vmatpush1.msra.mxu0 %v918
        %4479 = vmatprep.subr.mxu0 %v937
        %4480 = vmatpush1.msra.mxu0 %v936
        %4481 = vmatprep.mubr.f32.mxu0 %v311
        %4482 = vmatmul.mubr.f32.gmra.mrb[0].mxu0 %v310
        %v4483 = vpop.f32.mrb[0].mxu0
        %v4484 = vadd.f32 %v2171, %v4483
        %v4485 = vpop.f32.mrb[0].mxu0
        %v4486 = vadd.f32 %v2173, %v4485
        %4487 = vmatprep.mubr.f32.mxu0 %v313
        %4488 = vmatmul.mubr.f32.gmra.mrb[0].mxu0 %v312
        %v4489 = vpop.f32.mrb[0].mxu0
        %v4490 = vadd.f32 %v2177, %v4489
        %v4491 = vpop.f32.mrb[0].mxu0
        %v4492 = vadd.f32 %v2179, %v4491
        %4493 = vmatprep.mubr.f32.mxu0 %v315
        %4494 = vmatmul.mubr.f32.gmra.mrb[0].mxu0 %v314
        %v4495 = vpop.f32.mrb[0].mxu0
        %v4496 = vadd.f32 %v2183, %v4495
        %v4497 = vpop.f32.mrb[0].mxu0
        %v4498 = vadd.f32 %v2185, %v4497
        %4499 = vmatprep.mubr.f32.mxu0 %v317
        %4500 = vmatmul.mubr.f32.gmra.mrb[0].mxu0 %v316
        %v4501 = vpop.f32.mrb[0].mxu0
        %v4502 = vadd.f32 %v2189, %v4501
        %v4503 = vpop.f32.mrb[0].mxu0
        %v4504 = vadd.f32 %v2191, %v4503
        %4505 = vmatprep.mubr.f32.mxu0 %v319
        %4506 = vmatmul.mubr.f32.gmra.mrb[0].mxu0 %v318
        %v4507 = vpop.f32.mrb[0].mxu0
        %v4508 = vadd.f32 %v2195, %v4507
        %v4509 = vpop.f32.mrb[0].mxu0
        %v4510 = vadd.f32 %v2197, %v4509
        %4511 = vmatprep.mubr.f32.mxu0 %v321
        %4512 = vmatmul.mubr.f32.gmra.mrb[0].mxu0 %v320
        %v4513 = vpop.f32.mrb[0].mxu0
        %v4514 = vadd.f32 %v2201, %v4513
        %v4515 = vpop.f32.mrb[0].mxu0
        %v4516 = vadd.f32 %v2203, %v4515
        %4517 = vmatprep.mubr.f32.mxu0 %v323
        %4518 = vmatmul.mubr.f32.gmra.mrb[0].mxu0 %v322
        %v4519 = vpop.f32.mrb[0].mxu0
        %v4520 = vadd.f32 %v2207, %v4519
        %v4521 = vpop.f32.mrb[0].mxu0
        %v4522 = vadd.f32 %v2209, %v4521
        %4523 = vmatprep.mubr.f32.mxu0 %v325
        %4524 = vmatmul.mubr.f32.gmra.mrb[0].mxu0 %v324
        %v4525 = vpop.f32.mrb[0].mxu0
        %v4526 = vadd.f32 %v2213, %v4525
        %v4527 = vpop.f32.mrb[0].mxu0
        %v4528 = vadd.f32 %v2215, %v4527
        %4529 = vmatprep.mubr.f32.mxu0 %v327
        %4530 = vmatmul.mubr.f32.gmra.mrb[0].mxu0 %v326
        %v4531 = vpop.f32.mrb[0].mxu0
        %v4532 = vadd.f32 %v2219, %v4531
        %v4533 = vpop.f32.mrb[0].mxu0
        %v4534 = vadd.f32 %v2221, %v4533
        %4535 = vmatprep.mubr.f32.mxu0 %v329
        %4536 = vmatmul.mubr.f32.gmra.mrb[0].mxu0 %v328
        %v4537 = vpop.f32.mrb[0].mxu0
        %v4538 = vadd.f32 %v2225, %v4537
        %v4539 = vpop.f32.mrb[0].mxu0
        %v4540 = vadd.f32 %v2227, %v4539
        %4541 = vmatprep.mubr.f32.mxu0 %v331
        %4542 = vmatmul.mubr.f32.gmra.mrb[0].mxu0 %v330
        %v4543 = vpop.f32.mrb[0].mxu0
        %v4544 = vadd.f32 %v2231, %v4543
        %v4545 = vpop.f32.mrb[0].mxu0
        %v4546 = vadd.f32 %v2233, %v4545
        %4547 = vmatprep.mubr.f32.mxu0 %v333
        %4548 = vmatmul.mubr.f32.gmra.mrb[0].mxu0 %v332
        %v4549 = vpop.f32.mrb[0].mxu0
        %v4550 = vadd.f32 %v2237, %v4549
        %v4551 = vpop.f32.mrb[0].mxu0
        %v4552 = vadd.f32 %v2239, %v4551
        %4553 = vmatprep.mubr.f32.mxu0 %v335
        %4554 = vmatmul.mubr.f32.gmra.mrb[0].mxu0 %v334
        %v4555 = vpop.f32.mrb[0].mxu0
        %v4556 = vadd.f32 %v2243, %v4555
        %v4557 = vpop.f32.mrb[0].mxu0
        %v4558 = vadd.f32 %v2245, %v4557
        %4559 = vmatprep.mubr.f32.mxu0 %v337
        %4560 = vmatmul.mubr.f32.gmra.mrb[0].mxu0 %v336
        %v4561 = vpop.f32.mrb[0].mxu0
        %v4562 = vadd.f32 %v2249, %v4561
        %v4563 = vpop.f32.mrb[0].mxu0
        %v4564 = vadd.f32 %v2251, %v4563
        %4565 = vmatprep.mubr.f32.mxu0 %v339
        %4566 = vmatmul.mubr.f32.gmra.mrb[0].mxu0 %v338
        %v4567 = vpop.f32.mrb[0].mxu0
        %v4568 = vadd.f32 %v2255, %v4567
        %v4569 = vpop.f32.mrb[0].mxu0
        %v4570 = vadd.f32 %v2257, %v4569
        %4571 = vmatprep.mubr.f32.mxu0 %v341
        %4572 = vmatmul.mubr.f32.gmra.mrb[0].mxu0 %v340
        %v4573 = vpop.f32.mrb[0].mxu0
        %v4574 = vadd.f32 %v2261, %v4573
        %v4575 = vpop.f32.mrb[0].mxu0
        %v4576 = vadd.f32 %v2263, %v4575
        %4577 = vmatprep.mubr.f32.mxu0 %v343
        %4578 = vmatmul.mubr.f32.gmra.mrb[0].mxu0 %v342
        %v4579 = vpop.f32.mrb[0].mxu0
        %v4580 = vadd.f32 %v2267, %v4579
        %v4581 = vpop.f32.mrb[0].mxu0
        %v4582 = vadd.f32 %v2269, %v4581
        %4583 = vmatprep.mubr.f32.mxu0 %v345
        %4584 = vmatmul.mubr.f32.gmra.mrb[0].mxu0 %v344
        %v4585 = vpop.f32.mrb[0].mxu0
        %v4586 = vadd.f32 %v2273, %v4585
        %v4587 = vpop.f32.mrb[0].mxu0
        %v4588 = vadd.f32 %v2275, %v4587
        %4589 = vmatprep.mubr.f32.mxu0 %v347
        %4590 = vmatmul.mubr.f32.gmra.mrb[0].mxu0 %v346
        %v4591 = vpop.f32.mrb[0].mxu0
        %v4592 = vadd.f32 %v2279, %v4591
        %v4593 = vpop.f32.mrb[0].mxu0
        %v4594 = vadd.f32 %v2281, %v4593
        %4595 = vmatprep.mubr.f32.mxu0 %v349
        %4596 = vmatmul.mubr.f32.gmra.mrb[0].mxu0 %v348
        %v4597 = vpop.f32.mrb[0].mxu0
        %v4598 = vadd.f32 %v2285, %v4597
        %v4599 = vpop.f32.mrb[0].mxu0
        %v4600 = vadd.f32 %v2287, %v4599
        %4601 = vmatprep.mubr.f32.mxu0 %v351
        %4602 = vmatmul.mubr.f32.gmra.mrb[0].mxu0 %v350
        %v4603 = vpop.f32.mrb[0].mxu0
        %v4604 = vadd.f32 %v2291, %v4603
        %v4605 = vpop.f32.mrb[0].mxu0
        %v4606 = vadd.f32 %v2293, %v4605
        %4607 = vmatprep.mubr.f32.mxu0 %v353
        %4608 = vmatmul.mubr.f32.gmra.mrb[0].mxu0 %v352
        %v4609 = vpop.f32.mrb[0].mxu0
        %v4610 = vadd.f32 %v2297, %v4609
        %v4611 = vpop.f32.mrb[0].mxu0
        %v4612 = vadd.f32 %v2299, %v4611
        %4613 = vmatprep.mubr.f32.mxu0 %v355
        %4614 = vmatmul.mubr.f32.gmra.mrb[0].mxu0 %v354
        %v4615 = vpop.f32.mrb[0].mxu0
        %v4616 = vadd.f32 %v2303, %v4615
        %v4617 = vpop.f32.mrb[0].mxu0
        %v4618 = vadd.f32 %v2305, %v4617
        %4619 = vmatprep.mubr.f32.mxu0 %v357
        %4620 = vmatmul.mubr.f32.gmra.mrb[0].mxu0 %v356
        %v4621 = vpop.f32.mrb[0].mxu0
        %v4622 = vadd.f32 %v2309, %v4621
        %v4623 = vpop.f32.mrb[0].mxu0
        %v4624 = vadd.f32 %v2311, %v4623
        %4625 = vmatprep.mubr.f32.mxu0 %v359
        %4626 = vmatmul.mubr.f32.gmra.mrb[0].mxu0 %v358
        %v4627 = vpop.f32.mrb[0].mxu0
        %v4628 = vadd.f32 %v2315, %v4627
        %v4629 = vpop.f32.mrb[0].mxu0
        %v4630 = vadd.f32 %v2317, %v4629
        %4631 = vmatprep.mubr.f32.mxu0 %v361
        %4632 = vmatmul.mubr.f32.gmra.mrb[0].mxu0 %v360
        %v4633 = vpop.f32.mrb[0].mxu0
        %v4634 = vadd.f32 %v2321, %v4633
        %v4635 = vpop.f32.mrb[0].mxu0
        %v4636 = vadd.f32 %v2323, %v4635
        %4637 = vmatprep.mubr.f32.mxu0 %v363
        %4638 = vmatmul.mubr.f32.gmra.mrb[0].mxu0 %v362
        %v4639 = vpop.f32.mrb[0].mxu0
        %v4640 = vadd.f32 %v2327, %v4639
        %v4641 = vpop.f32.mrb[0].mxu0
        %v4642 = vadd.f32 %v2329, %v4641
        %4643 = vmatprep.mubr.f32.mxu0 %v365
        %4644 = vmatmul.mubr.f32.gmra.mrb[0].mxu0 %v364
        %v4645 = vpop.f32.mrb[0].mxu0
        %v4646 = vadd.f32 %v2333, %v4645
        %v4647 = vpop.f32.mrb[0].mxu0
        %v4648 = vadd.f32 %v2335, %v4647
        %4649 = vmatprep.mubr.f32.mxu0 %v367
        %4650 = vmatmul.mubr.f32.gmra.mrb[0].mxu0 %v366
        %v4651 = vpop.f32.mrb[0].mxu0
        %v4652 = vadd.f32 %v2339, %v4651
        %v4653 = vpop.f32.mrb[0].mxu0
        %v4654 = vadd.f32 %v2341, %v4653
        %4655 = vmatprep.mubr.f32.mxu0 %v369
        %4656 = vmatmul.mubr.f32.gmra.mrb[0].mxu0 %v368
        %v4657 = vpop.f32.mrb[0].mxu0
        %v4658 = vadd.f32 %v2345, %v4657
        %v4659 = vpop.f32.mrb[0].mxu0
        %v4660 = vadd.f32 %v2347, %v4659
        %4661 = vmatprep.mubr.f32.mxu0 %v371
        %4662 = vmatmul.mubr.f32.gmra.mrb[0].mxu0 %v370
        %v4663 = vpop.f32.mrb[0].mxu0
        %v4664 = vadd.f32 %v2351, %v4663
        %v4665 = vpop.f32.mrb[0].mxu0
        %v4666 = vadd.f32 %v2353, %v4665
        %4667 = vmatprep.mubr.f32.mxu0 %v373
        %4668 = vmatmul.mubr.f32.gmra.mrb[0].mxu0 %v372
        %v4669 = vpop.f32.mrb[0].mxu0
        %v4670 = vadd.f32 %v2357, %v4669
        %v4671 = vpop.f32.mrb[0].mxu0
        %v4672 = vadd.f32 %v2359, %v4671
        %4673 = vdwg.mxu0
        %4674 = vmatprep.subr.mxu0 %v381
        %4675 = vmatpush1.msra.mxu0 %v380
        %4676 = vmatprep.subr.mxu0 %v399
        %4677 = vmatpush1.msra.mxu0 %v398
        %4678 = vmatprep.subr.mxu0 %v417
        %4679 = vmatpush1.msra.mxu0 %v416
        %4680 = vmatprep.subr.mxu0 %v435
        %4681 = vmatpush1.msra.mxu0 %v434
        %4682 = vmatprep.subr.mxu0 %v453
        %4683 = vmatpush1.msra.mxu0 %v452
        %4684 = vmatprep.subr.mxu0 %v471
        %4685 = vmatpush1.msra.mxu0 %v470
        %4686 = vmatprep.subr.mxu0 %v489
        %4687 = vmatpush1.msra.mxu0 %v488
        %4688 = vmatprep.subr.mxu0 %v507
        %4689 = vmatpush1.msra.mxu0 %v506
        %4690 = vmatprep.subr.mxu0 %v525
        %4691 = vmatpush1.msra.mxu0 %v524
        %4692 = vmatprep.subr.mxu0 %v543
        %4693 = vmatpush1.msra.mxu0 %v542
        %4694 = vmatprep.subr.mxu0 %v561
        %4695 = vmatpush1.msra.mxu0 %v560
        %4696 = vmatprep.subr.mxu0 %v579
        %4697 = vmatpush1.msra.mxu0 %v578
        %4698 = vmatprep.subr.mxu0 %v597
        %4699 = vmatpush1.msra.mxu0 %v596
        %4700 = vmatprep.subr.mxu0 %v615
        %4701 = vmatpush1.msra.mxu0 %v614
        %4702 = vmatprep.subr.mxu0 %v633
        %4703 = vmatpush1.msra.mxu0 %v632
        %4704 = vmatprep.subr.mxu0 %v651
        %4705 = vmatpush1.msra.mxu0 %v650
        %4706 = vmatprep.subr.mxu0 %v669
        %4707 = vmatpush1.msra.mxu0 %v668
        %4708 = vmatprep.subr.mxu0 %v687
        %4709 = vmatpush1.msra.mxu0 %v686
        %4710 = vmatprep.subr.mxu0 %v705
        %4711 = vmatpush1.msra.mxu0 %v704
        %4712 = vmatprep.subr.mxu0 %v723
        %4713 = vmatpush1.msra.mxu0 %v722
        %4714 = vmatprep.subr.mxu0 %v741
        %4715 = vmatpush1.msra.mxu0 %v740
        %4716 = vmatprep.subr.mxu0 %v759
        %4717 = vmatpush1.msra.mxu0 %v758
        %4718 = vmatprep.subr.mxu0 %v777
        %4719 = vmatpush1.msra.mxu0 %v776
        %4720 = vmatprep.subr.mxu0 %v795
        %4721 = vmatpush1.msra.mxu0 %v794
        %4722 = vmatprep.subr.mxu0 %v813
        %4723 = vmatpush1.msra.mxu0 %v812
        %4724 = vmatprep.subr.mxu0 %v831
        %4725 = vmatpush1.msra.mxu0 %v830
        %4726 = vmatprep.subr.mxu0 %v849
        %4727 = vmatpush1.msra.mxu0 %v848
        %4728 = vmatprep.subr.mxu0 %v867
        %4729 = vmatpush1.msra.mxu0 %v866
        %4730 = vmatprep.subr.mxu0 %v885
        %4731 = vmatpush1.msra.mxu0 %v884
        %4732 = vmatprep.subr.mxu0 %v903
        %4733 = vmatpush1.msra.mxu0 %v902
        %4734 = vmatprep.subr.mxu0 %v921
        %4735 = vmatpush1.msra.mxu0 %v920
        %4736 = vmatprep.subr.mxu0 %v939
        %4737 = vmatpush1.msra.mxu0 %v938
        %4738 = vmatprep.mubr.f32.mxu0 %v311
        %4739 = vmatmul.mubr.f32.gmra.mrb[0].mxu0 %v310
        %v4740 = vpop.f32.mrb[0].mxu0
        %v4741 = vadd.f32 %v2428, %v4740
        %v4742 = vpop.f32.mrb[0].mxu0
        %v4743 = vadd.f32 %v2430, %v4742
        %4744 = vmatprep.mubr.f32.mxu0 %v313
        %4745 = vmatmul.mubr.f32.gmra.mrb[0].mxu0 %v312
        %v4746 = vpop.f32.mrb[0].mxu0
        %v4747 = vadd.f32 %v2434, %v4746
        %v4748 = vpop.f32.mrb[0].mxu0
        %v4749 = vadd.f32 %v2436, %v4748
        %4750 = vmatprep.mubr.f32.mxu0 %v315
        %4751 = vmatmul.mubr.f32.gmra.mrb[0].mxu0 %v314
        %v4752 = vpop.f32.mrb[0].mxu0
        %v4753 = vadd.f32 %v2440, %v4752
        %v4754 = vpop.f32.mrb[0].mxu0
        %v4755 = vadd.f32 %v2442, %v4754
        %4756 = vmatprep.mubr.f32.mxu0 %v317
        %4757 = vmatmul.mubr.f32.gmra.mrb[0].mxu0 %v316
        %v4758 = vpop.f32.mrb[0].mxu0
        %v4759 = vadd.f32 %v2446, %v4758
        %v4760 = vpop.f32.mrb[0].mxu0
        %v4761 = vadd.f32 %v2448, %v4760
        %4762 = vmatprep.mubr.f32.mxu0 %v319
        %4763 = vmatmul.mubr.f32.gmra.mrb[0].mxu0 %v318
        %v4764 = vpop.f32.mrb[0].mxu0
        %v4765 = vadd.f32 %v2452, %v4764
        %v4766 = vpop.f32.mrb[0].mxu0
        %v4767 = vadd.f32 %v2454, %v4766
        %4768 = vmatprep.mubr.f32.mxu0 %v321
        %4769 = vmatmul.mubr.f32.gmra.mrb[0].mxu0 %v320
        %v4770 = vpop.f32.mrb[0].mxu0
        %v4771 = vadd.f32 %v2458, %v4770
        %v4772 = vpop.f32.mrb[0].mxu0
        %v4773 = vadd.f32 %v2460, %v4772
        %4774 = vmatprep.mubr.f32.mxu0 %v323
        %4775 = vmatmul.mubr.f32.gmra.mrb[0].mxu0 %v322
        %v4776 = vpop.f32.mrb[0].mxu0
        %v4777 = vadd.f32 %v2464, %v4776
        %v4778 = vpop.f32.mrb[0].mxu0
        %v4779 = vadd.f32 %v2466, %v4778
        %4780 = vmatprep.mubr.f32.mxu0 %v325
        %4781 = vmatmul.mubr.f32.gmra.mrb[0].mxu0 %v324
        %v4782 = vpop.f32.mrb[0].mxu0
        %v4783 = vadd.f32 %v2470, %v4782
        %v4784 = vpop.f32.mrb[0].mxu0
        %v4785 = vadd.f32 %v2472, %v4784
        %4786 = vmatprep.mubr.f32.mxu0 %v327
        %4787 = vmatmul.mubr.f32.gmra.mrb[0].mxu0 %v326
        %v4788 = vpop.f32.mrb[0].mxu0
        %v4789 = vadd.f32 %v2476, %v4788
        %v4790 = vpop.f32.mrb[0].mxu0
        %v4791 = vadd.f32 %v2478, %v4790
        %4792 = vmatprep.mubr.f32.mxu0 %v329
        %4793 = vmatmul.mubr.f32.gmra.mrb[0].mxu0 %v328
        %v4794 = vpop.f32.mrb[0].mxu0
        %v4795 = vadd.f32 %v2482, %v4794
        %v4796 = vpop.f32.mrb[0].mxu0
        %v4797 = vadd.f32 %v2484, %v4796
        %4798 = vmatprep.mubr.f32.mxu0 %v331
        %4799 = vmatmul.mubr.f32.gmra.mrb[0].mxu0 %v330
        %v4800 = vpop.f32.mrb[0].mxu0
        %v4801 = vadd.f32 %v2488, %v4800
        %v4802 = vpop.f32.mrb[0].mxu0
        %v4803 = vadd.f32 %v2490, %v4802
        %4804 = vmatprep.mubr.f32.mxu0 %v333
        %4805 = vmatmul.mubr.f32.gmra.mrb[0].mxu0 %v332
        %v4806 = vpop.f32.mrb[0].mxu0
        %v4807 = vadd.f32 %v2494, %v4806
        %v4808 = vpop.f32.mrb[0].mxu0
        %v4809 = vadd.f32 %v2496, %v4808
        %4810 = vmatprep.mubr.f32.mxu0 %v335
        %4811 = vmatmul.mubr.f32.gmra.mrb[0].mxu0 %v334
        %v4812 = vpop.f32.mrb[0].mxu0
        %v4813 = vadd.f32 %v2500, %v4812
        %v4814 = vpop.f32.mrb[0].mxu0
        %v4815 = vadd.f32 %v2502, %v4814
        %4816 = vmatprep.mubr.f32.mxu0 %v337
        %4817 = vmatmul.mubr.f32.gmra.mrb[0].mxu0 %v336
        %v4818 = vpop.f32.mrb[0].mxu0
        %v4819 = vadd.f32 %v2506, %v4818
        %v4820 = vpop.f32.mrb[0].mxu0
        %v4821 = vadd.f32 %v2508, %v4820
        %4822 = vmatprep.mubr.f32.mxu0 %v339
        %4823 = vmatmul.mubr.f32.gmra.mrb[0].mxu0 %v338
        %v4824 = vpop.f32.mrb[0].mxu0
        %v4825 = vadd.f32 %v2512, %v4824
        %v4826 = vpop.f32.mrb[0].mxu0
        %v4827 = vadd.f32 %v2514, %v4826
        %4828 = vmatprep.mubr.f32.mxu0 %v341
        %4829 = vmatmul.mubr.f32.gmra.mrb[0].mxu0 %v340
        %v4830 = vpop.f32.mrb[0].mxu0
        %v4831 = vadd.f32 %v2518, %v4830
        %v4832 = vpop.f32.mrb[0].mxu0
        %v4833 = vadd.f32 %v2520, %v4832
        %4834 = vmatprep.mubr.f32.mxu0 %v343
        %4835 = vmatmul.mubr.f32.gmra.mrb[0].mxu0 %v342
        %v4836 = vpop.f32.mrb[0].mxu0
        %v4837 = vadd.f32 %v2524, %v4836
        %v4838 = vpop.f32.mrb[0].mxu0
        %v4839 = vadd.f32 %v2526, %v4838
        %4840 = vmatprep.mubr.f32.mxu0 %v345
        %4841 = vmatmul.mubr.f32.gmra.mrb[0].mxu0 %v344
        %v4842 = vpop.f32.mrb[0].mxu0
        %v4843 = vadd.f32 %v2530, %v4842
        %v4844 = vpop.f32.mrb[0].mxu0
        %v4845 = vadd.f32 %v2532, %v4844
        %4846 = vmatprep.mubr.f32.mxu0 %v347
        %4847 = vmatmul.mubr.f32.gmra.mrb[0].mxu0 %v346
        %v4848 = vpop.f32.mrb[0].mxu0
        %v4849 = vadd.f32 %v2536, %v4848
        %v4850 = vpop.f32.mrb[0].mxu0
        %v4851 = vadd.f32 %v2538, %v4850
        %4852 = vmatprep.mubr.f32.mxu0 %v349
        %4853 = vmatmul.mubr.f32.gmra.mrb[0].mxu0 %v348
        %v4854 = vpop.f32.mrb[0].mxu0
        %v4855 = vadd.f32 %v2542, %v4854
        %v4856 = vpop.f32.mrb[0].mxu0
        %v4857 = vadd.f32 %v2544, %v4856
        %4858 = vmatprep.mubr.f32.mxu0 %v351
        %4859 = vmatmul.mubr.f32.gmra.mrb[0].mxu0 %v350
        %v4860 = vpop.f32.mrb[0].mxu0
        %v4861 = vadd.f32 %v2548, %v4860
        %v4862 = vpop.f32.mrb[0].mxu0
        %v4863 = vadd.f32 %v2550, %v4862
        %4864 = vmatprep.mubr.f32.mxu0 %v353
        %4865 = vmatmul.mubr.f32.gmra.mrb[0].mxu0 %v352
        %v4866 = vpop.f32.mrb[0].mxu0
        %v4867 = vadd.f32 %v2554, %v4866
        %v4868 = vpop.f32.mrb[0].mxu0
        %v4869 = vadd.f32 %v2556, %v4868
        %4870 = vmatprep.mubr.f32.mxu0 %v355
        %4871 = vmatmul.mubr.f32.gmra.mrb[0].mxu0 %v354
        %v4872 = vpop.f32.mrb[0].mxu0
        %v4873 = vadd.f32 %v2560, %v4872
        %v4874 = vpop.f32.mrb[0].mxu0
        %v4875 = vadd.f32 %v2562, %v4874
        %4876 = vmatprep.mubr.f32.mxu0 %v357
        %4877 = vmatmul.mubr.f32.gmra.mrb[0].mxu0 %v356
        %v4878 = vpop.f32.mrb[0].mxu0
        %v4879 = vadd.f32 %v2566, %v4878
        %v4880 = vpop.f32.mrb[0].mxu0
        %v4881 = vadd.f32 %v2568, %v4880
        %4882 = vmatprep.mubr.f32.mxu0 %v359
        %4883 = vmatmul.mubr.f32.gmra.mrb[0].mxu0 %v358
        %v4884 = vpop.f32.mrb[0].mxu0
        %v4885 = vadd.f32 %v2572, %v4884
        %v4886 = vpop.f32.mrb[0].mxu0
        %v4887 = vadd.f32 %v2574, %v4886
        %4888 = vmatprep.mubr.f32.mxu0 %v361
        %4889 = vmatmul.mubr.f32.gmra.mrb[0].mxu0 %v360
        %v4890 = vpop.f32.mrb[0].mxu0
        %v4891 = vadd.f32 %v2578, %v4890
        %v4892 = vpop.f32.mrb[0].mxu0
        %v4893 = vadd.f32 %v2580, %v4892
        %4894 = vmatprep.mubr.f32.mxu0 %v363
        %4895 = vmatmul.mubr.f32.gmra.mrb[0].mxu0 %v362
        %v4896 = vpop.f32.mrb[0].mxu0
        %v4897 = vadd.f32 %v2584, %v4896
        %v4898 = vpop.f32.mrb[0].mxu0
        %v4899 = vadd.f32 %v2586, %v4898
        %4900 = vmatprep.mubr.f32.mxu0 %v365
        %4901 = vmatmul.mubr.f32.gmra.mrb[0].mxu0 %v364
        %v4902 = vpop.f32.mrb[0].mxu0
        %v4903 = vadd.f32 %v2590, %v4902
        %v4904 = vpop.f32.mrb[0].mxu0
        %v4905 = vadd.f32 %v2592, %v4904
        %4906 = vmatprep.mubr.f32.mxu0 %v367
        %4907 = vmatmul.mubr.f32.gmra.mrb[0].mxu0 %v366
        %v4908 = vpop.f32.mrb[0].mxu0
        %v4909 = vadd.f32 %v2596, %v4908
        %v4910 = vpop.f32.mrb[0].mxu0
        %v4911 = vadd.f32 %v2598, %v4910
        %4912 = vmatprep.mubr.f32.mxu0 %v369
        %4913 = vmatmul.mubr.f32.gmra.mrb[0].mxu0 %v368
        %v4914 = vpop.f32.mrb[0].mxu0
        %v4915 = vadd.f32 %v2602, %v4914
        %v4916 = vpop.f32.mrb[0].mxu0
        %v4917 = vadd.f32 %v2604, %v4916
        %4918 = vmatprep.mubr.f32.mxu0 %v371
        %4919 = vmatmul.mubr.f32.gmra.mrb[0].mxu0 %v370
        %v4920 = vpop.f32.mrb[0].mxu0
        %v4921 = vadd.f32 %v2608, %v4920
        %v4922 = vpop.f32.mrb[0].mxu0
        %v4923 = vadd.f32 %v2610, %v4922
        %4924 = vmatprep.mubr.f32.mxu0 %v373
        %4925 = vmatmul.mubr.f32.gmra.mrb[0].mxu0 %v372
        %v4926 = vpop.f32.mrb[0].mxu0
        %v4927 = vadd.f32 %v2614, %v4926
        %v4928 = vpop.f32.mrb[0].mxu0
        %v4929 = vadd.f32 %v2616, %v4928
        %4930 = vdwg.mxu0
        %4931 = vmatprep.subr.mxu0 %v383
        %4932 = vmatpush1.msra.mxu0 %v382
        %4933 = vmatprep.subr.mxu0 %v401
        %4934 = vmatpush1.msra.mxu0 %v400
        %4935 = vmatprep.subr.mxu0 %v419
        %4936 = vmatpush1.msra.mxu0 %v418
        %4937 = vmatprep.subr.mxu0 %v437
        %4938 = vmatpush1.msra.mxu0 %v436
        %4939 = vmatprep.subr.mxu0 %v455
        %4940 = vmatpush1.msra.mxu0 %v454
        %4941 = vmatprep.subr.mxu0 %v473
        %4942 = vmatpush1.msra.mxu0 %v472
        %4943 = vmatprep.subr.mxu0 %v491
        %4944 = vmatpush1.msra.mxu0 %v490
        %4945 = vmatprep.subr.mxu0 %v509
        %4946 = vmatpush1.msra.mxu0 %v508
        %4947 = vmatprep.subr.mxu0 %v527
        %4948 = vmatpush1.msra.mxu0 %v526
        %4949 = vmatprep.subr.mxu0 %v545
        %4950 = vmatpush1.msra.mxu0 %v544
        %4951 = vmatprep.subr.mxu0 %v563
        %4952 = vmatpush1.msra.mxu0 %v562
        %4953 = vmatprep.subr.mxu0 %v581
        %4954 = vmatpush1.msra.mxu0 %v580
        %4955 = vmatprep.subr.mxu0 %v599
        %4956 = vmatpush1.msra.mxu0 %v598
        %4957 = vmatprep.subr.mxu0 %v617
        %4958 = vmatpush1.msra.mxu0 %v616
        %4959 = vmatprep.subr.mxu0 %v635
        %4960 = vmatpush1.msra.mxu0 %v634
        %4961 = vmatprep.subr.mxu0 %v653
        %4962 = vmatpush1.msra.mxu0 %v652
        %4963 = vmatprep.subr.mxu0 %v671
        %4964 = vmatpush1.msra.mxu0 %v670
        %4965 = vmatprep.subr.mxu0 %v689
        %4966 = vmatpush1.msra.mxu0 %v688
        %4967 = vmatprep.subr.mxu0 %v707
        %4968 = vmatpush1.msra.mxu0 %v706
        %4969 = vmatprep.subr.mxu0 %v725
        %4970 = vmatpush1.msra.mxu0 %v724
        %4971 = vmatprep.subr.mxu0 %v743
        %4972 = vmatpush1.msra.mxu0 %v742
        %4973 = vmatprep.subr.mxu0 %v761
        %4974 = vmatpush1.msra.mxu0 %v760
        %4975 = vmatprep.subr.mxu0 %v779
        %4976 = vmatpush1.msra.mxu0 %v778
        %4977 = vmatprep.subr.mxu0 %v797
        %4978 = vmatpush1.msra.mxu0 %v796
        %4979 = vmatprep.subr.mxu0 %v815
        %4980 = vmatpush1.msra.mxu0 %v814
        %4981 = vmatprep.subr.mxu0 %v833
        %4982 = vmatpush1.msra.mxu0 %v832
        %4983 = vmatprep.subr.mxu0 %v851
        %4984 = vmatpush1.msra.mxu0 %v850
        %4985 = vmatprep.subr.mxu0 %v869
        %4986 = vmatpush1.msra.mxu0 %v868
        %4987 = vmatprep.subr.mxu0 %v887
        %4988 = vmatpush1.msra.mxu0 %v886
        %4989 = vmatprep.subr.mxu0 %v905
        %4990 = vmatpush1.msra.mxu0 %v904
        %4991 = vmatprep.subr.mxu0 %v923
        %4992 = vmatpush1.msra.mxu0 %v922
        %4993 = vmatprep.subr.mxu0 %v941
        %4994 = vmatpush1.msra.mxu0 %v940
        %4995 = vmatprep.mubr.f32.mxu0 %v311
        %4996 = vmatmul.mubr.f32.gmra.mrb[0].mxu0 %v310
        %v4997 = vpop.f32.mrb[0].mxu0
        %v4998 = vadd.f32 %v2685, %v4997
        %v4999 = vpop.f32.mrb[0].mxu0
        %v5000 = vadd.f32 %v2687, %v4999
        %5001 = vmatprep.mubr.f32.mxu0 %v313
        %5002 = vmatmul.mubr.f32.gmra.mrb[0].mxu0 %v312
        %v5003 = vpop.f32.mrb[0].mxu0
        %v5004 = vadd.f32 %v2691, %v5003
        %v5005 = vpop.f32.mrb[0].mxu0
        %v5006 = vadd.f32 %v2693, %v5005
        %5007 = vmatprep.mubr.f32.mxu0 %v315
        %5008 = vmatmul.mubr.f32.gmra.mrb[0].mxu0 %v314
        %v5009 = vpop.f32.mrb[0].mxu0
        %v5010 = vadd.f32 %v2697, %v5009
        %v5011 = vpop.f32.mrb[0].mxu0
        %v5012 = vadd.f32 %v2699, %v5011
        %5013 = vmatprep.mubr.f32.mxu0 %v317
        %5014 = vmatmul.mubr.f32.gmra.mrb[0].mxu0 %v316
        %v5015 = vpop.f32.mrb[0].mxu0
        %v5016 = vadd.f32 %v2703, %v5015
        %v5017 = vpop.f32.mrb[0].mxu0
        %v5018 = vadd.f32 %v2705, %v5017
        %5019 = vmatprep.mubr.f32.mxu0 %v319
        %5020 = vmatmul.mubr.f32.gmra.mrb[0].mxu0 %v318
        %v5021 = vpop.f32.mrb[0].mxu0
        %v5022 = vadd.f32 %v2709, %v5021
        %v5023 = vpop.f32.mrb[0].mxu0
        %v5024 = vadd.f32 %v2711, %v5023
        %5025 = vmatprep.mubr.f32.mxu0 %v321
        %5026 = vmatmul.mubr.f32.gmra.mrb[0].mxu0 %v320
        %v5027 = vpop.f32.mrb[0].mxu0
        %v5028 = vadd.f32 %v2715, %v5027
        %v5029 = vpop.f32.mrb[0].mxu0
        %v5030 = vadd.f32 %v2717, %v5029
        %5031 = vmatprep.mubr.f32.mxu0 %v323
        %5032 = vmatmul.mubr.f32.gmra.mrb[0].mxu0 %v322
        %v5033 = vpop.f32.mrb[0].mxu0
        %v5034 = vadd.f32 %v2721, %v5033
        %v5035 = vpop.f32.mrb[0].mxu0
        %v5036 = vadd.f32 %v2723, %v5035
        %5037 = vmatprep.mubr.f32.mxu0 %v325
        %5038 = vmatmul.mubr.f32.gmra.mrb[0].mxu0 %v324
        %v5039 = vpop.f32.mrb[0].mxu0
        %v5040 = vadd.f32 %v2727, %v5039
        %v5041 = vpop.f32.mrb[0].mxu0
        %v5042 = vadd.f32 %v2729, %v5041
        %5043 = vmatprep.mubr.f32.mxu0 %v327
        %5044 = vmatmul.mubr.f32.gmra.mrb[0].mxu0 %v326
        %v5045 = vpop.f32.mrb[0].mxu0
        %v5046 = vadd.f32 %v2733, %v5045
        %v5047 = vpop.f32.mrb[0].mxu0
        %v5048 = vadd.f32 %v2735, %v5047
        %5049 = vmatprep.mubr.f32.mxu0 %v329
        %5050 = vmatmul.mubr.f32.gmra.mrb[0].mxu0 %v328
        %v5051 = vpop.f32.mrb[0].mxu0
        %v5052 = vadd.f32 %v2739, %v5051
        %v5053 = vpop.f32.mrb[0].mxu0
        %v5054 = vadd.f32 %v2741, %v5053
        %5055 = vmatprep.mubr.f32.mxu0 %v331
        %5056 = vmatmul.mubr.f32.gmra.mrb[0].mxu0 %v330
        %v5057 = vpop.f32.mrb[0].mxu0
        %v5058 = vadd.f32 %v2745, %v5057
        %v5059 = vpop.f32.mrb[0].mxu0
        %v5060 = vadd.f32 %v2747, %v5059
        %5061 = vmatprep.mubr.f32.mxu0 %v333
        %5062 = vmatmul.mubr.f32.gmra.mrb[0].mxu0 %v332
        %v5063 = vpop.f32.mrb[0].mxu0
        %v5064 = vadd.f32 %v2751, %v5063
        %v5065 = vpop.f32.mrb[0].mxu0
        %v5066 = vadd.f32 %v2753, %v5065
        %5067 = vmatprep.mubr.f32.mxu0 %v335
        %5068 = vmatmul.mubr.f32.gmra.mrb[0].mxu0 %v334
        %v5069 = vpop.f32.mrb[0].mxu0
        %v5070 = vadd.f32 %v2757, %v5069
        %v5071 = vpop.f32.mrb[0].mxu0
        %v5072 = vadd.f32 %v2759, %v5071
        %5073 = vmatprep.mubr.f32.mxu0 %v337
        %5074 = vmatmul.mubr.f32.gmra.mrb[0].mxu0 %v336
        %v5075 = vpop.f32.mrb[0].mxu0
        %v5076 = vadd.f32 %v2763, %v5075
        %v5077 = vpop.f32.mrb[0].mxu0
        %v5078 = vadd.f32 %v2765, %v5077
        %5079 = vmatprep.mubr.f32.mxu0 %v339
        %5080 = vmatmul.mubr.f32.gmra.mrb[0].mxu0 %v338
        %v5081 = vpop.f32.mrb[0].mxu0
        %v5082 = vadd.f32 %v2769, %v5081
        %v5083 = vpop.f32.mrb[0].mxu0
        %v5084 = vadd.f32 %v2771, %v5083
        %5085 = vmatprep.mubr.f32.mxu0 %v341
        %5086 = vmatmul.mubr.f32.gmra.mrb[0].mxu0 %v340
        %v5087 = vpop.f32.mrb[0].mxu0
        %v5088 = vadd.f32 %v2775, %v5087
        %v5089 = vpop.f32.mrb[0].mxu0
        %v5090 = vadd.f32 %v2777, %v5089
        %5091 = vmatprep.mubr.f32.mxu0 %v343
        %5092 = vmatmul.mubr.f32.gmra.mrb[0].mxu0 %v342
        %v5093 = vpop.f32.mrb[0].mxu0
        %v5094 = vadd.f32 %v2781, %v5093
        %v5095 = vpop.f32.mrb[0].mxu0
        %v5096 = vadd.f32 %v2783, %v5095
        %5097 = vmatprep.mubr.f32.mxu0 %v345
        %5098 = vmatmul.mubr.f32.gmra.mrb[0].mxu0 %v344
        %v5099 = vpop.f32.mrb[0].mxu0
        %v5100 = vadd.f32 %v2787, %v5099
        %v5101 = vpop.f32.mrb[0].mxu0
        %v5102 = vadd.f32 %v2789, %v5101
        %5103 = vmatprep.mubr.f32.mxu0 %v347
        %5104 = vmatmul.mubr.f32.gmra.mrb[0].mxu0 %v346
        %v5105 = vpop.f32.mrb[0].mxu0
        %v5106 = vadd.f32 %v2793, %v5105
        %v5107 = vpop.f32.mrb[0].mxu0
        %v5108 = vadd.f32 %v2795, %v5107
        %5109 = vmatprep.mubr.f32.mxu0 %v349
        %5110 = vmatmul.mubr.f32.gmra.mrb[0].mxu0 %v348
        %v5111 = vpop.f32.mrb[0].mxu0
        %v5112 = vadd.f32 %v2799, %v5111
        %v5113 = vpop.f32.mrb[0].mxu0
        %v5114 = vadd.f32 %v2801, %v5113
        %5115 = vmatprep.mubr.f32.mxu0 %v351
        %5116 = vmatmul.mubr.f32.gmra.mrb[0].mxu0 %v350
        %v5117 = vpop.f32.mrb[0].mxu0
        %v5118 = vadd.f32 %v2805, %v5117
        %v5119 = vpop.f32.mrb[0].mxu0
        %v5120 = vadd.f32 %v2807, %v5119
        %5121 = vmatprep.mubr.f32.mxu0 %v353
        %5122 = vmatmul.mubr.f32.gmra.mrb[0].mxu0 %v352
        %v5123 = vpop.f32.mrb[0].mxu0
        %v5124 = vadd.f32 %v2811, %v5123
        %v5125 = vpop.f32.mrb[0].mxu0
        %v5126 = vadd.f32 %v2813, %v5125
        %5127 = vmatprep.mubr.f32.mxu0 %v355
        %5128 = vmatmul.mubr.f32.gmra.mrb[0].mxu0 %v354
        %v5129 = vpop.f32.mrb[0].mxu0
        %v5130 = vadd.f32 %v2817, %v5129
        %v5131 = vpop.f32.mrb[0].mxu0
        %v5132 = vadd.f32 %v2819, %v5131
        %5133 = vmatprep.mubr.f32.mxu0 %v357
        %5134 = vmatmul.mubr.f32.gmra.mrb[0].mxu0 %v356
        %v5135 = vpop.f32.mrb[0].mxu0
        %v5136 = vadd.f32 %v2823, %v5135
        %v5137 = vpop.f32.mrb[0].mxu0
        %v5138 = vadd.f32 %v2825, %v5137
        %5139 = vmatprep.mubr.f32.mxu0 %v359
        %5140 = vmatmul.mubr.f32.gmra.mrb[0].mxu0 %v358
        %v5141 = vpop.f32.mrb[0].mxu0
        %v5142 = vadd.f32 %v2829, %v5141
        %v5143 = vpop.f32.mrb[0].mxu0
        %v5144 = vadd.f32 %v2831, %v5143
        %5145 = vmatprep.mubr.f32.mxu0 %v361
        %5146 = vmatmul.mubr.f32.gmra.mrb[0].mxu0 %v360
        %v5147 = vpop.f32.mrb[0].mxu0
        %v5148 = vadd.f32 %v2835, %v5147
        %v5149 = vpop.f32.mrb[0].mxu0
        %v5150 = vadd.f32 %v2837, %v5149
        %5151 = vmatprep.mubr.f32.mxu0 %v363
        %5152 = vmatmul.mubr.f32.gmra.mrb[0].mxu0 %v362
        %v5153 = vpop.f32.mrb[0].mxu0
        %v5154 = vadd.f32 %v2841, %v5153
        %v5155 = vpop.f32.mrb[0].mxu0
        %v5156 = vadd.f32 %v2843, %v5155
        %5157 = vmatprep.mubr.f32.mxu0 %v365
        %5158 = vmatmul.mubr.f32.gmra.mrb[0].mxu0 %v364
        %v5159 = vpop.f32.mrb[0].mxu0
        %v5160 = vadd.f32 %v2847, %v5159
        %v5161 = vpop.f32.mrb[0].mxu0
        %v5162 = vadd.f32 %v2849, %v5161
        %5163 = vmatprep.mubr.f32.mxu0 %v367
        %5164 = vmatmul.mubr.f32.gmra.mrb[0].mxu0 %v366
        %v5165 = vpop.f32.mrb[0].mxu0
        %v5166 = vadd.f32 %v2853, %v5165
        %v5167 = vpop.f32.mrb[0].mxu0
        %v5168 = vadd.f32 %v2855, %v5167
        %5169 = vmatprep.mubr.f32.mxu0 %v369
        %5170 = vmatmul.mubr.f32.gmra.mrb[0].mxu0 %v368
        %v5171 = vpop.f32.mrb[0].mxu0
        %v5172 = vadd.f32 %v2859, %v5171
        %v5173 = vpop.f32.mrb[0].mxu0
        %v5174 = vadd.f32 %v2861, %v5173
        %5175 = vmatprep.mubr.f32.mxu0 %v371
        %5176 = vmatmul.mubr.f32.gmra.mrb[0].mxu0 %v370
        %v5177 = vpop.f32.mrb[0].mxu0
        %v5178 = vadd.f32 %v2865, %v5177
        %v5179 = vpop.f32.mrb[0].mxu0
        %v5180 = vadd.f32 %v2867, %v5179
        %5181 = vmatprep.mubr.f32.mxu0 %v373
        %5182 = vmatmul.mubr.f32.gmra.mrb[0].mxu0 %v372
        %v5183 = vpop.f32.mrb[0].mxu0
        %v5184 = vadd.f32 %v2871, %v5183
        %v5185 = vpop.f32.mrb[0].mxu0
        %v5186 = vadd.f32 %v2873, %v5185
        %5187 = vdwg.mxu0
        %5188 = vmatprep.subr.mxu0 %v385
        %5189 = vmatpush1.msra.mxu0 %v384
        %5190 = vmatprep.subr.mxu0 %v403
        %5191 = vmatpush1.msra.mxu0 %v402
        %5192 = vmatprep.subr.mxu0 %v421
        %5193 = vmatpush1.msra.mxu0 %v420
        %5194 = vmatprep.subr.mxu0 %v439
        %5195 = vmatpush1.msra.mxu0 %v438
        %5196 = vmatprep.subr.mxu0 %v457
        %5197 = vmatpush1.msra.mxu0 %v456
        %5198 = vmatprep.subr.mxu0 %v475
        %5199 = vmatpush1.msra.mxu0 %v474
        %5200 = vmatprep.subr.mxu0 %v493
        %5201 = vmatpush1.msra.mxu0 %v492
        %5202 = vmatprep.subr.mxu0 %v511
        %5203 = vmatpush1.msra.mxu0 %v510
        %5204 = vmatprep.subr.mxu0 %v529
        %5205 = vmatpush1.msra.mxu0 %v528
        %5206 = vmatprep.subr.mxu0 %v547
        %5207 = vmatpush1.msra.mxu0 %v546
        %5208 = vmatprep.subr.mxu0 %v565
        %5209 = vmatpush1.msra.mxu0 %v564
        %5210 = vmatprep.subr.mxu0 %v583
        %5211 = vmatpush1.msra.mxu0 %v582
        %5212 = vmatprep.subr.mxu0 %v601
        %5213 = vmatpush1.msra.mxu0 %v600
        %5214 = vmatprep.subr.mxu0 %v619
        %5215 = vmatpush1.msra.mxu0 %v618
        %5216 = vmatprep.subr.mxu0 %v637
        %5217 = vmatpush1.msra.mxu0 %v636
        %5218 = vmatprep.subr.mxu0 %v655
        %5219 = vmatpush1.msra.mxu0 %v654
        %5220 = vmatprep.subr.mxu0 %v673
        %5221 = vmatpush1.msra.mxu0 %v672
        %5222 = vmatprep.subr.mxu0 %v691
        %5223 = vmatpush1.msra.mxu0 %v690
        %5224 = vmatprep.subr.mxu0 %v709
        %5225 = vmatpush1.msra.mxu0 %v708
        %5226 = vmatprep.subr.mxu0 %v727
        %5227 = vmatpush1.msra.mxu0 %v726
        %5228 = vmatprep.subr.mxu0 %v745
        %5229 = vmatpush1.msra.mxu0 %v744
        %5230 = vmatprep.subr.mxu0 %v763
        %5231 = vmatpush1.msra.mxu0 %v762
        %5232 = vmatprep.subr.mxu0 %v781
        %5233 = vmatpush1.msra.mxu0 %v780
        %5234 = vmatprep.subr.mxu0 %v799
        %5235 = vmatpush1.msra.mxu0 %v798
        %5236 = vmatprep.subr.mxu0 %v817
        %5237 = vmatpush1.msra.mxu0 %v816
        %5238 = vmatprep.subr.mxu0 %v835
        %5239 = vmatpush1.msra.mxu0 %v834
        %5240 = vmatprep.subr.mxu0 %v853
        %5241 = vmatpush1.msra.mxu0 %v852
        %5242 = vmatprep.subr.mxu0 %v871
        %5243 = vmatpush1.msra.mxu0 %v870
        %5244 = vmatprep.subr.mxu0 %v889
        %5245 = vmatpush1.msra.mxu0 %v888
        %5246 = vmatprep.subr.mxu0 %v907
        %5247 = vmatpush1.msra.mxu0 %v906
        %5248 = vmatprep.subr.mxu0 %v925
        %5249 = vmatpush1.msra.mxu0 %v924
        %5250 = vmatprep.subr.mxu0 %v943
        %5251 = vmatpush1.msra.mxu0 %v942
        %5252 = vmatprep.mubr.f32.mxu0 %v311
        %5253 = vmatmul.mubr.f32.gmra.mrb[0].mxu0 %v310
        %v5254 = vpop.f32.mrb[0].mxu0
        %v5255 = vadd.f32 %v2942, %v5254
        %v5256 = vpop.f32.mrb[0].mxu0
        %v5257 = vadd.f32 %v2944, %v5256
        %5258 = vmatprep.mubr.f32.mxu0 %v313
        %5259 = vmatmul.mubr.f32.gmra.mrb[0].mxu0 %v312
        %v5260 = vpop.f32.mrb[0].mxu0
        %v5261 = vadd.f32 %v2948, %v5260
        %v5262 = vpop.f32.mrb[0].mxu0
        %v5263 = vadd.f32 %v2950, %v5262
        %5264 = vmatprep.mubr.f32.mxu0 %v315
        %5265 = vmatmul.mubr.f32.gmra.mrb[0].mxu0 %v314
        %v5266 = vpop.f32.mrb[0].mxu0
        %v5267 = vadd.f32 %v2954, %v5266
        %v5268 = vpop.f32.mrb[0].mxu0
        %v5269 = vadd.f32 %v2956, %v5268
        %5270 = vmatprep.mubr.f32.mxu0 %v317
        %5271 = vmatmul.mubr.f32.gmra.mrb[0].mxu0 %v316
        %v5272 = vpop.f32.mrb[0].mxu0
        %v5273 = vadd.f32 %v2960, %v5272
        %v5274 = vpop.f32.mrb[0].mxu0
        %v5275 = vadd.f32 %v2962, %v5274
        %5276 = vmatprep.mubr.f32.mxu0 %v319
        %5277 = vmatmul.mubr.f32.gmra.mrb[0].mxu0 %v318
        %v5278 = vpop.f32.mrb[0].mxu0
        %v5279 = vadd.f32 %v2966, %v5278
        %v5280 = vpop.f32.mrb[0].mxu0
        %v5281 = vadd.f32 %v2968, %v5280
        %5282 = vmatprep.mubr.f32.mxu0 %v321
        %5283 = vmatmul.mubr.f32.gmra.mrb[0].mxu0 %v320
        %v5284 = vpop.f32.mrb[0].mxu0
        %v5285 = vadd.f32 %v2972, %v5284
        %v5286 = vpop.f32.mrb[0].mxu0
        %v5287 = vadd.f32 %v2974, %v5286
        %5288 = vmatprep.mubr.f32.mxu0 %v323
        %5289 = vmatmul.mubr.f32.gmra.mrb[0].mxu0 %v322
        %v5290 = vpop.f32.mrb[0].mxu0
        %v5291 = vadd.f32 %v2978, %v5290
        %v5292 = vpop.f32.mrb[0].mxu0
        %v5293 = vadd.f32 %v2980, %v5292
        %5294 = vmatprep.mubr.f32.mxu0 %v325
        %5295 = vmatmul.mubr.f32.gmra.mrb[0].mxu0 %v324
        %v5296 = vpop.f32.mrb[0].mxu0
        %v5297 = vadd.f32 %v2984, %v5296
        %v5298 = vpop.f32.mrb[0].mxu0
        %v5299 = vadd.f32 %v2986, %v5298
        %5300 = vmatprep.mubr.f32.mxu0 %v327
        %5301 = vmatmul.mubr.f32.gmra.mrb[0].mxu0 %v326
        %v5302 = vpop.f32.mrb[0].mxu0
        %v5303 = vadd.f32 %v2990, %v5302
        %v5304 = vpop.f32.mrb[0].mxu0
        %v5305 = vadd.f32 %v2992, %v5304
        %5306 = vmatprep.mubr.f32.mxu0 %v329
        %5307 = vmatmul.mubr.f32.gmra.mrb[0].mxu0 %v328
        %v5308 = vpop.f32.mrb[0].mxu0
        %v5309 = vadd.f32 %v2996, %v5308
        %v5310 = vpop.f32.mrb[0].mxu0
        %v5311 = vadd.f32 %v2998, %v5310
        %5312 = vmatprep.mubr.f32.mxu0 %v331
        %5313 = vmatmul.mubr.f32.gmra.mrb[0].mxu0 %v330
        %v5314 = vpop.f32.mrb[0].mxu0
        %v5315 = vadd.f32 %v3002, %v5314
        %v5316 = vpop.f32.mrb[0].mxu0
        %v5317 = vadd.f32 %v3004, %v5316
        %5318 = vmatprep.mubr.f32.mxu0 %v333
        %5319 = vmatmul.mubr.f32.gmra.mrb[0].mxu0 %v332
        %v5320 = vpop.f32.mrb[0].mxu0
        %v5321 = vadd.f32 %v3008, %v5320
        %v5322 = vpop.f32.mrb[0].mxu0
        %v5323 = vadd.f32 %v3010, %v5322
        %5324 = vmatprep.mubr.f32.mxu0 %v335
        %5325 = vmatmul.mubr.f32.gmra.mrb[0].mxu0 %v334
        %v5326 = vpop.f32.mrb[0].mxu0
        %v5327 = vadd.f32 %v3014, %v5326
        %v5328 = vpop.f32.mrb[0].mxu0
        %v5329 = vadd.f32 %v3016, %v5328
        %5330 = vmatprep.mubr.f32.mxu0 %v337
        %5331 = vmatmul.mubr.f32.gmra.mrb[0].mxu0 %v336
        %v5332 = vpop.f32.mrb[0].mxu0
        %v5333 = vadd.f32 %v3020, %v5332
        %v5334 = vpop.f32.mrb[0].mxu0
        %v5335 = vadd.f32 %v3022, %v5334
        %5336 = vmatprep.mubr.f32.mxu0 %v339
        %5337 = vmatmul.mubr.f32.gmra.mrb[0].mxu0 %v338
        %v5338 = vpop.f32.mrb[0].mxu0
        %v5339 = vadd.f32 %v3026, %v5338
        %v5340 = vpop.f32.mrb[0].mxu0
        %v5341 = vadd.f32 %v3028, %v5340
        %5342 = vmatprep.mubr.f32.mxu0 %v341
        %5343 = vmatmul.mubr.f32.gmra.mrb[0].mxu0 %v340
        %v5344 = vpop.f32.mrb[0].mxu0
        %v5345 = vadd.f32 %v3032, %v5344
        %v5346 = vpop.f32.mrb[0].mxu0
        %v5347 = vadd.f32 %v3034, %v5346
        %5348 = vmatprep.mubr.f32.mxu0 %v343
        %5349 = vmatmul.mubr.f32.gmra.mrb[0].mxu0 %v342
        %v5350 = vpop.f32.mrb[0].mxu0
        %v5351 = vadd.f32 %v3038, %v5350
        %v5352 = vpop.f32.mrb[0].mxu0
        %v5353 = vadd.f32 %v3040, %v5352
        %5354 = vmatprep.mubr.f32.mxu0 %v345
        %5355 = vmatmul.mubr.f32.gmra.mrb[0].mxu0 %v344
        %v5356 = vpop.f32.mrb[0].mxu0
        %v5357 = vadd.f32 %v3044, %v5356
        %v5358 = vpop.f32.mrb[0].mxu0
        %v5359 = vadd.f32 %v3046, %v5358
        %5360 = vmatprep.mubr.f32.mxu0 %v347
        %5361 = vmatmul.mubr.f32.gmra.mrb[0].mxu0 %v346
        %v5362 = vpop.f32.mrb[0].mxu0
        %v5363 = vadd.f32 %v3050, %v5362
        %v5364 = vpop.f32.mrb[0].mxu0
        %v5365 = vadd.f32 %v3052, %v5364
        %5366 = vmatprep.mubr.f32.mxu0 %v349
        %5367 = vmatmul.mubr.f32.gmra.mrb[0].mxu0 %v348
        %v5368 = vpop.f32.mrb[0].mxu0
        %v5369 = vadd.f32 %v3056, %v5368
        %v5370 = vpop.f32.mrb[0].mxu0
        %v5371 = vadd.f32 %v3058, %v5370
        %5372 = vmatprep.mubr.f32.mxu0 %v351
        %5373 = vmatmul.mubr.f32.gmra.mrb[0].mxu0 %v350
        %v5374 = vpop.f32.mrb[0].mxu0
        %v5375 = vadd.f32 %v3062, %v5374
        %v5376 = vpop.f32.mrb[0].mxu0
        %v5377 = vadd.f32 %v3064, %v5376
        %5378 = vmatprep.mubr.f32.mxu0 %v353
        %5379 = vmatmul.mubr.f32.gmra.mrb[0].mxu0 %v352
        %v5380 = vpop.f32.mrb[0].mxu0
        %v5381 = vadd.f32 %v3068, %v5380
        %v5382 = vpop.f32.mrb[0].mxu0
        %v5383 = vadd.f32 %v3070, %v5382
        %5384 = vmatprep.mubr.f32.mxu0 %v355
        %5385 = vmatmul.mubr.f32.gmra.mrb[0].mxu0 %v354
        %v5386 = vpop.f32.mrb[0].mxu0
        %v5387 = vadd.f32 %v3074, %v5386
        %v5388 = vpop.f32.mrb[0].mxu0
        %v5389 = vadd.f32 %v3076, %v5388
        %5390 = vmatprep.mubr.f32.mxu0 %v357
        %5391 = vmatmul.mubr.f32.gmra.mrb[0].mxu0 %v356
        %v5392 = vpop.f32.mrb[0].mxu0
        %v5393 = vadd.f32 %v3080, %v5392
        %v5394 = vpop.f32.mrb[0].mxu0
        %v5395 = vadd.f32 %v3082, %v5394
        %5396 = vmatprep.mubr.f32.mxu0 %v359
        %5397 = vmatmul.mubr.f32.gmra.mrb[0].mxu0 %v358
        %v5398 = vpop.f32.mrb[0].mxu0
        %v5399 = vadd.f32 %v3086, %v5398
        %v5400 = vpop.f32.mrb[0].mxu0
        %v5401 = vadd.f32 %v3088, %v5400
        %5402 = vmatprep.mubr.f32.mxu0 %v361
        %5403 = vmatmul.mubr.f32.gmra.mrb[0].mxu0 %v360
        %v5404 = vpop.f32.mrb[0].mxu0
        %v5405 = vadd.f32 %v3092, %v5404
        %v5406 = vpop.f32.mrb[0].mxu0
        %v5407 = vadd.f32 %v3094, %v5406
        %5408 = vmatprep.mubr.f32.mxu0 %v363
        %5409 = vmatmul.mubr.f32.gmra.mrb[0].mxu0 %v362
        %v5410 = vpop.f32.mrb[0].mxu0
        %v5411 = vadd.f32 %v3098, %v5410
        %v5412 = vpop.f32.mrb[0].mxu0
        %v5413 = vadd.f32 %v3100, %v5412
        %5414 = vmatprep.mubr.f32.mxu0 %v365
        %5415 = vmatmul.mubr.f32.gmra.mrb[0].mxu0 %v364
        %v5416 = vpop.f32.mrb[0].mxu0
        %v5417 = vadd.f32 %v3104, %v5416
        %v5418 = vpop.f32.mrb[0].mxu0
        %v5419 = vadd.f32 %v3106, %v5418
        %5420 = vmatprep.mubr.f32.mxu0 %v367
        %5421 = vmatmul.mubr.f32.gmra.mrb[0].mxu0 %v366
        %v5422 = vpop.f32.mrb[0].mxu0
        %v5423 = vadd.f32 %v3110, %v5422
        %v5424 = vpop.f32.mrb[0].mxu0
        %v5425 = vadd.f32 %v3112, %v5424
        %5426 = vmatprep.mubr.f32.mxu0 %v369
        %5427 = vmatmul.mubr.f32.gmra.mrb[0].mxu0 %v368
        %v5428 = vpop.f32.mrb[0].mxu0
        %v5429 = vadd.f32 %v3116, %v5428
        %v5430 = vpop.f32.mrb[0].mxu0
        %v5431 = vadd.f32 %v3118, %v5430
        %5432 = vmatprep.mubr.f32.mxu0 %v371
        %5433 = vmatmul.mubr.f32.gmra.mrb[0].mxu0 %v370
        %v5434 = vpop.f32.mrb[0].mxu0
        %v5435 = vadd.f32 %v3122, %v5434
        %v5436 = vpop.f32.mrb[0].mxu0
        %v5437 = vadd.f32 %v3124, %v5436
        %5438 = vmatprep.mubr.f32.mxu0 %v373
        %5439 = vmatmul.mubr.f32.gmra.mrb[0].mxu0 %v372
        %v5440 = vpop.f32.mrb[0].mxu0
        %v5441 = vadd.f32 %v3128, %v5440
        %v5442 = vpop.f32.mrb[0].mxu0
        %v5443 = vadd.f32 %v3130, %v5442
        %5444 = vdwg.mxu0
        %5445 = vmatprep.subr.mxu0 %v387
        %5446 = vmatpush1.msra.mxu0 %v386
        %5447 = vmatprep.subr.mxu0 %v405
        %5448 = vmatpush1.msra.mxu0 %v404
        %5449 = vmatprep.subr.mxu0 %v423
        %5450 = vmatpush1.msra.mxu0 %v422
        %5451 = vmatprep.subr.mxu0 %v441
        %5452 = vmatpush1.msra.mxu0 %v440
        %5453 = vmatprep.subr.mxu0 %v459
        %5454 = vmatpush1.msra.mxu0 %v458
        %5455 = vmatprep.subr.mxu0 %v477
        %5456 = vmatpush1.msra.mxu0 %v476
        %5457 = vmatprep.subr.mxu0 %v495
        %5458 = vmatpush1.msra.mxu0 %v494
        %5459 = vmatprep.subr.mxu0 %v513
        %5460 = vmatpush1.msra.mxu0 %v512
        %5461 = vmatprep.subr.mxu0 %v531
        %5462 = vmatpush1.msra.mxu0 %v530
        %5463 = vmatprep.subr.mxu0 %v549
        %5464 = vmatpush1.msra.mxu0 %v548
        %5465 = vmatprep.subr.mxu0 %v567
        %5466 = vmatpush1.msra.mxu0 %v566
        %5467 = vmatprep.subr.mxu0 %v585
        %5468 = vmatpush1.msra.mxu0 %v584
        %5469 = vmatprep.subr.mxu0 %v603
        %5470 = vmatpush1.msra.mxu0 %v602
        %5471 = vmatprep.subr.mxu0 %v621
        %5472 = vmatpush1.msra.mxu0 %v620
        %5473 = vmatprep.subr.mxu0 %v639
        %5474 = vmatpush1.msra.mxu0 %v638
        %5475 = vmatprep.subr.mxu0 %v657
        %5476 = vmatpush1.msra.mxu0 %v656
        %5477 = vmatprep.subr.mxu0 %v675
        %5478 = vmatpush1.msra.mxu0 %v674
        %5479 = vmatprep.subr.mxu0 %v693
        %5480 = vmatpush1.msra.mxu0 %v692
        %5481 = vmatprep.subr.mxu0 %v711
        %5482 = vmatpush1.msra.mxu0 %v710
        %5483 = vmatprep.subr.mxu0 %v729
        %5484 = vmatpush1.msra.mxu0 %v728
        %5485 = vmatprep.subr.mxu0 %v747
        %5486 = vmatpush1.msra.mxu0 %v746
        %5487 = vmatprep.subr.mxu0 %v765
        %5488 = vmatpush1.msra.mxu0 %v764
        %5489 = vmatprep.subr.mxu0 %v783
        %5490 = vmatpush1.msra.mxu0 %v782
        %5491 = vmatprep.subr.mxu0 %v801
        %5492 = vmatpush1.msra.mxu0 %v800
        %5493 = vmatprep.subr.mxu0 %v819
        %5494 = vmatpush1.msra.mxu0 %v818
        %5495 = vmatprep.subr.mxu0 %v837
        %5496 = vmatpush1.msra.mxu0 %v836
        %5497 = vmatprep.subr.mxu0 %v855
        %5498 = vmatpush1.msra.mxu0 %v854
        %5499 = vmatprep.subr.mxu0 %v873
        %5500 = vmatpush1.msra.mxu0 %v872
        %5501 = vmatprep.subr.mxu0 %v891
        %5502 = vmatpush1.msra.mxu0 %v890
        %5503 = vmatprep.subr.mxu0 %v909
        %5504 = vmatpush1.msra.mxu0 %v908
        %5505 = vmatprep.subr.mxu0 %v927
        %5506 = vmatpush1.msra.mxu0 %v926
        %5507 = vmatprep.subr.mxu0 %v945
        %5508 = vmatpush1.msra.mxu0 %v944
        %5509 = vmatprep.mubr.f32.mxu0 %v311
        %5510 = vmatmul.mubr.f32.gmra.mrb[0].mxu0 %v310
        %v5511 = vpop.f32.mrb[0].mxu0
        %v5512 = vadd.f32 %v3199, %v5511
        %v5513 = vpop.f32.mrb[0].mxu0
        %v5514 = vadd.f32 %v3201, %v5513
        %5515 = vmatprep.mubr.f32.mxu0 %v313
        %5516 = vmatmul.mubr.f32.gmra.mrb[0].mxu0 %v312
        %v5517 = vpop.f32.mrb[0].mxu0
        %v5518 = vadd.f32 %v3205, %v5517
        %v5519 = vpop.f32.mrb[0].mxu0
        %v5520 = vadd.f32 %v3207, %v5519
        %5521 = vmatprep.mubr.f32.mxu0 %v315
        %5522 = vmatmul.mubr.f32.gmra.mrb[0].mxu0 %v314
        %v5523 = vpop.f32.mrb[0].mxu0
        %v5524 = vadd.f32 %v3211, %v5523
        %v5525 = vpop.f32.mrb[0].mxu0
        %v5526 = vadd.f32 %v3213, %v5525
        %5527 = vmatprep.mubr.f32.mxu0 %v317
        %5528 = vmatmul.mubr.f32.gmra.mrb[0].mxu0 %v316
        %v5529 = vpop.f32.mrb[0].mxu0
        %v5530 = vadd.f32 %v3217, %v5529
        %v5531 = vpop.f32.mrb[0].mxu0
        %v5532 = vadd.f32 %v3219, %v5531
        %5533 = vmatprep.mubr.f32.mxu0 %v319
        %5534 = vmatmul.mubr.f32.gmra.mrb[0].mxu0 %v318
        %v5535 = vpop.f32.mrb[0].mxu0
        %v5536 = vadd.f32 %v3223, %v5535
        %v5537 = vpop.f32.mrb[0].mxu0
        %v5538 = vadd.f32 %v3225, %v5537
        %5539 = vmatprep.mubr.f32.mxu0 %v321
        %5540 = vmatmul.mubr.f32.gmra.mrb[0].mxu0 %v320
        %v5541 = vpop.f32.mrb[0].mxu0
        %v5542 = vadd.f32 %v3229, %v5541
        %v5543 = vpop.f32.mrb[0].mxu0
        %v5544 = vadd.f32 %v3231, %v5543
        %5545 = vmatprep.mubr.f32.mxu0 %v323
        %5546 = vmatmul.mubr.f32.gmra.mrb[0].mxu0 %v322
        %v5547 = vpop.f32.mrb[0].mxu0
        %v5548 = vadd.f32 %v3235, %v5547
        %v5549 = vpop.f32.mrb[0].mxu0
        %v5550 = vadd.f32 %v3237, %v5549
        %5551 = vmatprep.mubr.f32.mxu0 %v325
        %5552 = vmatmul.mubr.f32.gmra.mrb[0].mxu0 %v324
        %v5553 = vpop.f32.mrb[0].mxu0
        %v5554 = vadd.f32 %v3241, %v5553
        %v5555 = vpop.f32.mrb[0].mxu0
        %v5556 = vadd.f32 %v3243, %v5555
        %5557 = vmatprep.mubr.f32.mxu0 %v327
        %5558 = vmatmul.mubr.f32.gmra.mrb[0].mxu0 %v326
        %v5559 = vpop.f32.mrb[0].mxu0
        %v5560 = vadd.f32 %v3247, %v5559
        %v5561 = vpop.f32.mrb[0].mxu0
        %v5562 = vadd.f32 %v3249, %v5561
        %5563 = vmatprep.mubr.f32.mxu0 %v329
        %5564 = vmatmul.mubr.f32.gmra.mrb[0].mxu0 %v328
        %v5565 = vpop.f32.mrb[0].mxu0
        %v5566 = vadd.f32 %v3253, %v5565
        %v5567 = vpop.f32.mrb[0].mxu0
        %v5568 = vadd.f32 %v3255, %v5567
        %5569 = vmatprep.mubr.f32.mxu0 %v331
        %5570 = vmatmul.mubr.f32.gmra.mrb[0].mxu0 %v330
        %v5571 = vpop.f32.mrb[0].mxu0
        %v5572 = vadd.f32 %v3259, %v5571
        %v5573 = vpop.f32.mrb[0].mxu0
        %v5574 = vadd.f32 %v3261, %v5573
        %5575 = vmatprep.mubr.f32.mxu0 %v333
        %5576 = vmatmul.mubr.f32.gmra.mrb[0].mxu0 %v332
        %v5577 = vpop.f32.mrb[0].mxu0
        %v5578 = vadd.f32 %v3265, %v5577
        %v5579 = vpop.f32.mrb[0].mxu0
        %v5580 = vadd.f32 %v3267, %v5579
        %5581 = vmatprep.mubr.f32.mxu0 %v335
        %5582 = vmatmul.mubr.f32.gmra.mrb[0].mxu0 %v334
        %v5583 = vpop.f32.mrb[0].mxu0
        %v5584 = vadd.f32 %v3271, %v5583
        %v5585 = vpop.f32.mrb[0].mxu0
        %v5586 = vadd.f32 %v3273, %v5585
        %5587 = vmatprep.mubr.f32.mxu0 %v337
        %5588 = vmatmul.mubr.f32.gmra.mrb[0].mxu0 %v336
        %v5589 = vpop.f32.mrb[0].mxu0
        %v5590 = vadd.f32 %v3277, %v5589
        %v5591 = vpop.f32.mrb[0].mxu0
        %v5592 = vadd.f32 %v3279, %v5591
        %5593 = vmatprep.mubr.f32.mxu0 %v339
        %5594 = vmatmul.mubr.f32.gmra.mrb[0].mxu0 %v338
        %v5595 = vpop.f32.mrb[0].mxu0
        %v5596 = vadd.f32 %v3283, %v5595
        %v5597 = vpop.f32.mrb[0].mxu0
        %v5598 = vadd.f32 %v3285, %v5597
        %5599 = vmatprep.mubr.f32.mxu0 %v341
        %5600 = vmatmul.mubr.f32.gmra.mrb[0].mxu0 %v340
        %v5601 = vpop.f32.mrb[0].mxu0
        %v5602 = vadd.f32 %v3289, %v5601
        %v5603 = vpop.f32.mrb[0].mxu0
        %v5604 = vadd.f32 %v3291, %v5603
        %5605 = vmatprep.mubr.f32.mxu0 %v343
        %5606 = vmatmul.mubr.f32.gmra.mrb[0].mxu0 %v342
        %v5607 = vpop.f32.mrb[0].mxu0
        %v5608 = vadd.f32 %v3295, %v5607
        %v5609 = vpop.f32.mrb[0].mxu0
        %v5610 = vadd.f32 %v3297, %v5609
        %5611 = vmatprep.mubr.f32.mxu0 %v345
        %5612 = vmatmul.mubr.f32.gmra.mrb[0].mxu0 %v344
        %v5613 = vpop.f32.mrb[0].mxu0
        %v5614 = vadd.f32 %v3301, %v5613
        %v5615 = vpop.f32.mrb[0].mxu0
        %v5616 = vadd.f32 %v3303, %v5615
        %5617 = vmatprep.mubr.f32.mxu0 %v347
        %5618 = vmatmul.mubr.f32.gmra.mrb[0].mxu0 %v346
        %v5619 = vpop.f32.mrb[0].mxu0
        %v5620 = vadd.f32 %v3307, %v5619
        %v5621 = vpop.f32.mrb[0].mxu0
        %v5622 = vadd.f32 %v3309, %v5621
        %5623 = vmatprep.mubr.f32.mxu0 %v349
        %5624 = vmatmul.mubr.f32.gmra.mrb[0].mxu0 %v348
        %v5625 = vpop.f32.mrb[0].mxu0
        %v5626 = vadd.f32 %v3313, %v5625
        %v5627 = vpop.f32.mrb[0].mxu0
        %v5628 = vadd.f32 %v3315, %v5627
        %5629 = vmatprep.mubr.f32.mxu0 %v351
        %5630 = vmatmul.mubr.f32.gmra.mrb[0].mxu0 %v350
        %v5631 = vpop.f32.mrb[0].mxu0
        %v5632 = vadd.f32 %v3319, %v5631
        %v5633 = vpop.f32.mrb[0].mxu0
        %v5634 = vadd.f32 %v3321, %v5633
        %5635 = vmatprep.mubr.f32.mxu0 %v353
        %5636 = vmatmul.mubr.f32.gmra.mrb[0].mxu0 %v352
        %v5637 = vpop.f32.mrb[0].mxu0
        %v5638 = vadd.f32 %v3325, %v5637
        %v5639 = vpop.f32.mrb[0].mxu0
        %v5640 = vadd.f32 %v3327, %v5639
        %5641 = vmatprep.mubr.f32.mxu0 %v355
        %5642 = vmatmul.mubr.f32.gmra.mrb[0].mxu0 %v354
        %v5643 = vpop.f32.mrb[0].mxu0
        %v5644 = vadd.f32 %v3331, %v5643
        %v5645 = vpop.f32.mrb[0].mxu0
        %v5646 = vadd.f32 %v3333, %v5645
        %5647 = vmatprep.mubr.f32.mxu0 %v357
        %5648 = vmatmul.mubr.f32.gmra.mrb[0].mxu0 %v356
        %v5649 = vpop.f32.mrb[0].mxu0
        %v5650 = vadd.f32 %v3337, %v5649
        %v5651 = vpop.f32.mrb[0].mxu0
        %v5652 = vadd.f32 %v3339, %v5651
        %5653 = vmatprep.mubr.f32.mxu0 %v359
        %5654 = vmatmul.mubr.f32.gmra.mrb[0].mxu0 %v358
        %v5655 = vpop.f32.mrb[0].mxu0
        %v5656 = vadd.f32 %v3343, %v5655
        %v5657 = vpop.f32.mrb[0].mxu0
        %v5658 = vadd.f32 %v3345, %v5657
        %5659 = vmatprep.mubr.f32.mxu0 %v361
        %5660 = vmatmul.mubr.f32.gmra.mrb[0].mxu0 %v360
        %v5661 = vpop.f32.mrb[0].mxu0
        %v5662 = vadd.f32 %v3349, %v5661
        %v5663 = vpop.f32.mrb[0].mxu0
        %v5664 = vadd.f32 %v3351, %v5663
        %5665 = vmatprep.mubr.f32.mxu0 %v363
        %5666 = vmatmul.mubr.f32.gmra.mrb[0].mxu0 %v362
        %v5667 = vpop.f32.mrb[0].mxu0
        %v5668 = vadd.f32 %v3355, %v5667
        %v5669 = vpop.f32.mrb[0].mxu0
        %v5670 = vadd.f32 %v3357, %v5669
        %5671 = vmatprep.mubr.f32.mxu0 %v365
        %5672 = vmatmul.mubr.f32.gmra.mrb[0].mxu0 %v364
        %v5673 = vpop.f32.mrb[0].mxu0
        %v5674 = vadd.f32 %v3361, %v5673
        %v5675 = vpop.f32.mrb[0].mxu0
        %v5676 = vadd.f32 %v3363, %v5675
        %5677 = vmatprep.mubr.f32.mxu0 %v367
        %5678 = vmatmul.mubr.f32.gmra.mrb[0].mxu0 %v366
        %v5679 = vpop.f32.mrb[0].mxu0
        %v5680 = vadd.f32 %v3367, %v5679
        %v5681 = vpop.f32.mrb[0].mxu0
        %v5682 = vadd.f32 %v3369, %v5681
        %5683 = vmatprep.mubr.f32.mxu0 %v369
        %5684 = vmatmul.mubr.f32.gmra.mrb[0].mxu0 %v368
        %v5685 = vpop.f32.mrb[0].mxu0
        %v5686 = vadd.f32 %v3373, %v5685
        %v5687 = vpop.f32.mrb[0].mxu0
        %v5688 = vadd.f32 %v3375, %v5687
        %5689 = vmatprep.mubr.f32.mxu0 %v371
        %5690 = vmatmul.mubr.f32.gmra.mrb[0].mxu0 %v370
        %v5691 = vpop.f32.mrb[0].mxu0
        %v5692 = vadd.f32 %v3379, %v5691
        %v5693 = vpop.f32.mrb[0].mxu0
        %v5694 = vadd.f32 %v3381, %v5693
        %5695 = vmatprep.mubr.f32.mxu0 %v373
        %5696 = vmatmul.mubr.f32.gmra.mrb[0].mxu0 %v372
        %v5697 = vpop.f32.mrb[0].mxu0
        %v5698 = vadd.f32 %v3385, %v5697
        %v5699 = vpop.f32.mrb[0].mxu0
        %v5700 = vadd.f32 %v3387, %v5699
        %5701 = vdwg.mxu0
        %5702 = vmatprep.subr.mxu0 %v389
        %5703 = vmatpush1.msra.mxu0 %v388
        %5704 = vmatprep.subr.mxu0 %v407
        %5705 = vmatpush1.msra.mxu0 %v406
        %5706 = vmatprep.subr.mxu0 %v425
        %5707 = vmatpush1.msra.mxu0 %v424
        %5708 = vmatprep.subr.mxu0 %v443
        %5709 = vmatpush1.msra.mxu0 %v442
        %5710 = vmatprep.subr.mxu0 %v461
        %5711 = vmatpush1.msra.mxu0 %v460
        %5712 = vmatprep.subr.mxu0 %v479
        %5713 = vmatpush1.msra.mxu0 %v478
        %5714 = vmatprep.subr.mxu0 %v497
        %5715 = vmatpush1.msra.mxu0 %v496
        %5716 = vmatprep.subr.mxu0 %v515
        %5717 = vmatpush1.msra.mxu0 %v514
        %5718 = vmatprep.subr.mxu0 %v533
        %5719 = vmatpush1.msra.mxu0 %v532
        %5720 = vmatprep.subr.mxu0 %v551
        %5721 = vmatpush1.msra.mxu0 %v550
        %5722 = vmatprep.subr.mxu0 %v569
        %5723 = vmatpush1.msra.mxu0 %v568
        %5724 = vmatprep.subr.mxu0 %v587
        %5725 = vmatpush1.msra.mxu0 %v586
        %5726 = vmatprep.subr.mxu0 %v605
        %5727 = vmatpush1.msra.mxu0 %v604
        %5728 = vmatprep.subr.mxu0 %v623
        %5729 = vmatpush1.msra.mxu0 %v622
        %5730 = vmatprep.subr.mxu0 %v641
        %5731 = vmatpush1.msra.mxu0 %v640
        %5732 = vmatprep.subr.mxu0 %v659
        %5733 = vmatpush1.msra.mxu0 %v658
        %5734 = vmatprep.subr.mxu0 %v677
        %5735 = vmatpush1.msra.mxu0 %v676
        %5736 = vmatprep.subr.mxu0 %v695
        %5737 = vmatpush1.msra.mxu0 %v694
        %5738 = vmatprep.subr.mxu0 %v713
        %5739 = vmatpush1.msra.mxu0 %v712
        %5740 = vmatprep.subr.mxu0 %v731
        %5741 = vmatpush1.msra.mxu0 %v730
        %5742 = vmatprep.subr.mxu0 %v749
        %5743 = vmatpush1.msra.mxu0 %v748
        %5744 = vmatprep.subr.mxu0 %v767
        %5745 = vmatpush1.msra.mxu0 %v766
        %5746 = vmatprep.subr.mxu0 %v785
        %5747 = vmatpush1.msra.mxu0 %v784
        %5748 = vmatprep.subr.mxu0 %v803
        %5749 = vmatpush1.msra.mxu0 %v802
        %5750 = vmatprep.subr.mxu0 %v821
        %5751 = vmatpush1.msra.mxu0 %v820
        %5752 = vmatprep.subr.mxu0 %v839
        %5753 = vmatpush1.msra.mxu0 %v838
        %5754 = vmatprep.subr.mxu0 %v857
        %5755 = vmatpush1.msra.mxu0 %v856
        %5756 = vmatprep.subr.mxu0 %v875
        %5757 = vmatpush1.msra.mxu0 %v874
        %5758 = vmatprep.subr.mxu0 %v893
        %5759 = vmatpush1.msra.mxu0 %v892
        %5760 = vmatprep.subr.mxu0 %v911
        %5761 = vmatpush1.msra.mxu0 %v910
        %5762 = vmatprep.subr.mxu0 %v929
        %5763 = vmatpush1.msra.mxu0 %v928
        %5764 = vmatprep.subr.mxu0 %v947
        %5765 = vmatpush1.msra.mxu0 %v946
        %5766 = vmatprep.mubr.f32.mxu0 %v311
        %5767 = vmatmul.mubr.f32.gmra.mrb[0].mxu0 %v310
        %v5768 = vpop.f32.mrb[0].mxu0
        %v5769 = vadd.f32 %v3456, %v5768
        %v5770 = vpop.f32.mrb[0].mxu0
        %v5771 = vadd.f32 %v3458, %v5770
        %5772 = vmatprep.mubr.f32.mxu0 %v313
        %5773 = vmatmul.mubr.f32.gmra.mrb[0].mxu0 %v312
        %v5774 = vpop.f32.mrb[0].mxu0
        %v5775 = vadd.f32 %v3462, %v5774
        %v5776 = vpop.f32.mrb[0].mxu0
        %v5777 = vadd.f32 %v3464, %v5776
        %5778 = vmatprep.mubr.f32.mxu0 %v315
        %5779 = vmatmul.mubr.f32.gmra.mrb[0].mxu0 %v314
        %v5780 = vpop.f32.mrb[0].mxu0
        %v5781 = vadd.f32 %v3468, %v5780
        %v5782 = vpop.f32.mrb[0].mxu0
        %v5783 = vadd.f32 %v3470, %v5782
        %5784 = vmatprep.mubr.f32.mxu0 %v317
        %5785 = vmatmul.mubr.f32.gmra.mrb[0].mxu0 %v316
        %v5786 = vpop.f32.mrb[0].mxu0
        %v5787 = vadd.f32 %v3474, %v5786
        %v5788 = vpop.f32.mrb[0].mxu0
        %v5789 = vadd.f32 %v3476, %v5788
        %5790 = vmatprep.mubr.f32.mxu0 %v319
        %5791 = vmatmul.mubr.f32.gmra.mrb[0].mxu0 %v318
        %v5792 = vpop.f32.mrb[0].mxu0
        %v5793 = vadd.f32 %v3480, %v5792
        %v5794 = vpop.f32.mrb[0].mxu0
        %v5795 = vadd.f32 %v3482, %v5794
        %5796 = vmatprep.mubr.f32.mxu0 %v321
        %5797 = vmatmul.mubr.f32.gmra.mrb[0].mxu0 %v320
        %v5798 = vpop.f32.mrb[0].mxu0
        %v5799 = vadd.f32 %v3486, %v5798
        %v5800 = vpop.f32.mrb[0].mxu0
        %v5801 = vadd.f32 %v3488, %v5800
        %5802 = vmatprep.mubr.f32.mxu0 %v323
        %5803 = vmatmul.mubr.f32.gmra.mrb[0].mxu0 %v322
        %v5804 = vpop.f32.mrb[0].mxu0
        %v5805 = vadd.f32 %v3492, %v5804
        %v5806 = vpop.f32.mrb[0].mxu0
        %v5807 = vadd.f32 %v3494, %v5806
        %5808 = vmatprep.mubr.f32.mxu0 %v325
        %5809 = vmatmul.mubr.f32.gmra.mrb[0].mxu0 %v324
        %v5810 = vpop.f32.mrb[0].mxu0
        %v5811 = vadd.f32 %v3498, %v5810
        %v5812 = vpop.f32.mrb[0].mxu0
        %v5813 = vadd.f32 %v3500, %v5812
        %5814 = vmatprep.mubr.f32.mxu0 %v327
        %5815 = vmatmul.mubr.f32.gmra.mrb[0].mxu0 %v326
        %v5816 = vpop.f32.mrb[0].mxu0
        %v5817 = vadd.f32 %v3504, %v5816
        %v5818 = vpop.f32.mrb[0].mxu0
        %v5819 = vadd.f32 %v3506, %v5818
        %5820 = vmatprep.mubr.f32.mxu0 %v329
        %5821 = vmatmul.mubr.f32.gmra.mrb[0].mxu0 %v328
        %v5822 = vpop.f32.mrb[0].mxu0
        %v5823 = vadd.f32 %v3510, %v5822
        %v5824 = vpop.f32.mrb[0].mxu0
        %v5825 = vadd.f32 %v3512, %v5824
        %5826 = vmatprep.mubr.f32.mxu0 %v331
        %5827 = vmatmul.mubr.f32.gmra.mrb[0].mxu0 %v330
        %v5828 = vpop.f32.mrb[0].mxu0
        %v5829 = vadd.f32 %v3516, %v5828
        %v5830 = vpop.f32.mrb[0].mxu0
        %v5831 = vadd.f32 %v3518, %v5830
        %5832 = vmatprep.mubr.f32.mxu0 %v333
        %5833 = vmatmul.mubr.f32.gmra.mrb[0].mxu0 %v332
        %v5834 = vpop.f32.mrb[0].mxu0
        %v5835 = vadd.f32 %v3522, %v5834
        %v5836 = vpop.f32.mrb[0].mxu0
        %v5837 = vadd.f32 %v3524, %v5836
        %5838 = vmatprep.mubr.f32.mxu0 %v335
        %5839 = vmatmul.mubr.f32.gmra.mrb[0].mxu0 %v334
        %v5840 = vpop.f32.mrb[0].mxu0
        %v5841 = vadd.f32 %v3528, %v5840
        %v5842 = vpop.f32.mrb[0].mxu0
        %v5843 = vadd.f32 %v3530, %v5842
        %5844 = vmatprep.mubr.f32.mxu0 %v337
        %5845 = vmatmul.mubr.f32.gmra.mrb[0].mxu0 %v336
        %v5846 = vpop.f32.mrb[0].mxu0
        %v5847 = vadd.f32 %v3534, %v5846
        %v5848 = vpop.f32.mrb[0].mxu0
        %v5849 = vadd.f32 %v3536, %v5848
        %5850 = vmatprep.mubr.f32.mxu0 %v339
        %5851 = vmatmul.mubr.f32.gmra.mrb[0].mxu0 %v338
        %v5852 = vpop.f32.mrb[0].mxu0
        %v5853 = vadd.f32 %v3540, %v5852
        %v5854 = vpop.f32.mrb[0].mxu0
        %v5855 = vadd.f32 %v3542, %v5854
        %5856 = vmatprep.mubr.f32.mxu0 %v341
        %5857 = vmatmul.mubr.f32.gmra.mrb[0].mxu0 %v340
        %v5858 = vpop.f32.mrb[0].mxu0
        %v5859 = vadd.f32 %v3546, %v5858
        %v5860 = vpop.f32.mrb[0].mxu0
        %v5861 = vadd.f32 %v3548, %v5860
        %5862 = vmatprep.mubr.f32.mxu0 %v343
        %5863 = vmatmul.mubr.f32.gmra.mrb[0].mxu0 %v342
        %v5864 = vpop.f32.mrb[0].mxu0
        %v5865 = vadd.f32 %v3552, %v5864
        %v5866 = vpop.f32.mrb[0].mxu0
        %v5867 = vadd.f32 %v3554, %v5866
        %5868 = vmatprep.mubr.f32.mxu0 %v345
        %5869 = vmatmul.mubr.f32.gmra.mrb[0].mxu0 %v344
        %v5870 = vpop.f32.mrb[0].mxu0
        %v5871 = vadd.f32 %v3558, %v5870
        %v5872 = vpop.f32.mrb[0].mxu0
        %v5873 = vadd.f32 %v3560, %v5872
        %5874 = vmatprep.mubr.f32.mxu0 %v347
        %5875 = vmatmul.mubr.f32.gmra.mrb[0].mxu0 %v346
        %v5876 = vpop.f32.mrb[0].mxu0
        %v5877 = vadd.f32 %v3564, %v5876
        %v5878 = vpop.f32.mrb[0].mxu0
        %v5879 = vadd.f32 %v3566, %v5878
        %5880 = vmatprep.mubr.f32.mxu0 %v349
        %5881 = vmatmul.mubr.f32.gmra.mrb[0].mxu0 %v348
        %v5882 = vpop.f32.mrb[0].mxu0
        %v5883 = vadd.f32 %v3570, %v5882
        %v5884 = vpop.f32.mrb[0].mxu0
        %v5885 = vadd.f32 %v3572, %v5884
        %5886 = vmatprep.mubr.f32.mxu0 %v351
        %5887 = vmatmul.mubr.f32.gmra.mrb[0].mxu0 %v350
        %v5888 = vpop.f32.mrb[0].mxu0
        %v5889 = vadd.f32 %v3576, %v5888
        %v5890 = vpop.f32.mrb[0].mxu0
        %v5891 = vadd.f32 %v3578, %v5890
        %5892 = vmatprep.mubr.f32.mxu0 %v353
        %5893 = vmatmul.mubr.f32.gmra.mrb[0].mxu0 %v352
        %v5894 = vpop.f32.mrb[0].mxu0
        %v5895 = vadd.f32 %v3582, %v5894
        %v5896 = vpop.f32.mrb[0].mxu0
        %v5897 = vadd.f32 %v3584, %v5896
        %5898 = vmatprep.mubr.f32.mxu0 %v355
        %5899 = vmatmul.mubr.f32.gmra.mrb[0].mxu0 %v354
        %v5900 = vpop.f32.mrb[0].mxu0
        %v5901 = vadd.f32 %v3588, %v5900
        %v5902 = vpop.f32.mrb[0].mxu0
        %v5903 = vadd.f32 %v3590, %v5902
        %5904 = vmatprep.mubr.f32.mxu0 %v357
        %5905 = vmatmul.mubr.f32.gmra.mrb[0].mxu0 %v356
        %v5906 = vpop.f32.mrb[0].mxu0
        %v5907 = vadd.f32 %v3594, %v5906
        %v5908 = vpop.f32.mrb[0].mxu0
        %v5909 = vadd.f32 %v3596, %v5908
        %5910 = vmatprep.mubr.f32.mxu0 %v359
        %5911 = vmatmul.mubr.f32.gmra.mrb[0].mxu0 %v358
        %v5912 = vpop.f32.mrb[0].mxu0
        %v5913 = vadd.f32 %v3600, %v5912
        %v5914 = vpop.f32.mrb[0].mxu0
        %v5915 = vadd.f32 %v3602, %v5914
        %5916 = vmatprep.mubr.f32.mxu0 %v361
        %5917 = vmatmul.mubr.f32.gmra.mrb[0].mxu0 %v360
        %v5918 = vpop.f32.mrb[0].mxu0
        %v5919 = vadd.f32 %v3606, %v5918
        %v5920 = vpop.f32.mrb[0].mxu0
        %v5921 = vadd.f32 %v3608, %v5920
        %5922 = vmatprep.mubr.f32.mxu0 %v363
        %5923 = vmatmul.mubr.f32.gmra.mrb[0].mxu0 %v362
        %v5924 = vpop.f32.mrb[0].mxu0
        %v5925 = vadd.f32 %v3612, %v5924
        %v5926 = vpop.f32.mrb[0].mxu0
        %v5927 = vadd.f32 %v3614, %v5926
        %5928 = vmatprep.mubr.f32.mxu0 %v365
        %5929 = vmatmul.mubr.f32.gmra.mrb[0].mxu0 %v364
        %v5930 = vpop.f32.mrb[0].mxu0
        %v5931 = vadd.f32 %v3618, %v5930
        %v5932 = vpop.f32.mrb[0].mxu0
        %v5933 = vadd.f32 %v3620, %v5932
        %5934 = vmatprep.mubr.f32.mxu0 %v367
        %5935 = vmatmul.mubr.f32.gmra.mrb[0].mxu0 %v366
        %v5936 = vpop.f32.mrb[0].mxu0
        %v5937 = vadd.f32 %v3624, %v5936
        %v5938 = vpop.f32.mrb[0].mxu0
        %v5939 = vadd.f32 %v3626, %v5938
        %5940 = vmatprep.mubr.f32.mxu0 %v369
        %5941 = vmatmul.mubr.f32.gmra.mrb[0].mxu0 %v368
        %v5942 = vpop.f32.mrb[0].mxu0
        %v5943 = vadd.f32 %v3630, %v5942
        %v5944 = vpop.f32.mrb[0].mxu0
        %v5945 = vadd.f32 %v3632, %v5944
        %5946 = vmatprep.mubr.f32.mxu0 %v371
        %5947 = vmatmul.mubr.f32.gmra.mrb[0].mxu0 %v370
        %v5948 = vpop.f32.mrb[0].mxu0
        %v5949 = vadd.f32 %v3636, %v5948
        %v5950 = vpop.f32.mrb[0].mxu0
        %v5951 = vadd.f32 %v3638, %v5950
        %5952 = vmatprep.mubr.f32.mxu0 %v373
        %5953 = vmatmul.mubr.f32.gmra.mrb[0].mxu0 %v372
        %v5954 = vpop.f32.mrb[0].mxu0
        %v5955 = vadd.f32 %v3642, %v5954
        %v5956 = vpop.f32.mrb[0].mxu0
        %v5957 = vadd.f32 %v3644, %v5956
        %5958 = vdwg.mxu0
        %5959 = vmatprep.subr.mxu0 %v391
        %5960 = vmatpush1.msra.mxu0 %v390
        %5961 = vmatprep.subr.mxu0 %v409
        %5962 = vmatpush1.msra.mxu0 %v408
        %5963 = vmatprep.subr.mxu0 %v427
        %5964 = vmatpush1.msra.mxu0 %v426
        %5965 = vmatprep.subr.mxu0 %v445
        %5966 = vmatpush1.msra.mxu0 %v444
        %5967 = vmatprep.subr.mxu0 %v463
        %5968 = vmatpush1.msra.mxu0 %v462
        %5969 = vmatprep.subr.mxu0 %v481
        %5970 = vmatpush1.msra.mxu0 %v480
        %5971 = vmatprep.subr.mxu0 %v499
        %5972 = vmatpush1.msra.mxu0 %v498
        %5973 = vmatprep.subr.mxu0 %v517
        %5974 = vmatpush1.msra.mxu0 %v516
        %5975 = vmatprep.subr.mxu0 %v535
        %5976 = vmatpush1.msra.mxu0 %v534
        %5977 = vmatprep.subr.mxu0 %v553
        %5978 = vmatpush1.msra.mxu0 %v552
        %5979 = vmatprep.subr.mxu0 %v571
        %5980 = vmatpush1.msra.mxu0 %v570
        %5981 = vmatprep.subr.mxu0 %v589
        %5982 = vmatpush1.msra.mxu0 %v588
        %5983 = vmatprep.subr.mxu0 %v607
        %5984 = vmatpush1.msra.mxu0 %v606
        %5985 = vmatprep.subr.mxu0 %v625
        %5986 = vmatpush1.msra.mxu0 %v624
        %5987 = vmatprep.subr.mxu0 %v643
        %5988 = vmatpush1.msra.mxu0 %v642
        %5989 = vmatprep.subr.mxu0 %v661
        %5990 = vmatpush1.msra.mxu0 %v660
        %5991 = vmatprep.subr.mxu0 %v679
        %5992 = vmatpush1.msra.mxu0 %v678
        %5993 = vmatprep.subr.mxu0 %v697
        %5994 = vmatpush1.msra.mxu0 %v696
        %5995 = vmatprep.subr.mxu0 %v715
        %5996 = vmatpush1.msra.mxu0 %v714
        %5997 = vmatprep.subr.mxu0 %v733
        %5998 = vmatpush1.msra.mxu0 %v732
        %5999 = vmatprep.subr.mxu0 %v751
        %6000 = vmatpush1.msra.mxu0 %v750
        %6001 = vmatprep.subr.mxu0 %v769
        %6002 = vmatpush1.msra.mxu0 %v768
        %6003 = vmatprep.subr.mxu0 %v787
        %6004 = vmatpush1.msra.mxu0 %v786
        %6005 = vmatprep.subr.mxu0 %v805
        %6006 = vmatpush1.msra.mxu0 %v804
        %6007 = vmatprep.subr.mxu0 %v823
        %6008 = vmatpush1.msra.mxu0 %v822
        %6009 = vmatprep.subr.mxu0 %v841
        %6010 = vmatpush1.msra.mxu0 %v840
        %6011 = vmatprep.subr.mxu0 %v859
        %6012 = vmatpush1.msra.mxu0 %v858
        %6013 = vmatprep.subr.mxu0 %v877
        %6014 = vmatpush1.msra.mxu0 %v876
        %6015 = vmatprep.subr.mxu0 %v895
        %6016 = vmatpush1.msra.mxu0 %v894
        %6017 = vmatprep.subr.mxu0 %v913
        %6018 = vmatpush1.msra.mxu0 %v912
        %6019 = vmatprep.subr.mxu0 %v931
        %6020 = vmatpush1.msra.mxu0 %v930
        %6021 = vmatprep.subr.mxu0 %v949
        %6022 = vmatpush1.msra.mxu0 %v948
        %6023 = vmatprep.mubr.f32.mxu0 %v311
        %6024 = vmatmul.mubr.f32.gmra.mrb[0].mxu0 %v310
        %v6025 = vpop.f32.mrb[0].mxu0
        %v6026 = vadd.f32 %v3713, %v6025
        %v6027 = vpop.f32.mrb[0].mxu0
        %v6028 = vadd.f32 %v3715, %v6027
        %6029 = vmatprep.mubr.f32.mxu0 %v313
        %6030 = vmatmul.mubr.f32.gmra.mrb[0].mxu0 %v312
        %v6031 = vpop.f32.mrb[0].mxu0
        %v6032 = vadd.f32 %v3719, %v6031
        %v6033 = vpop.f32.mrb[0].mxu0
        %v6034 = vadd.f32 %v3721, %v6033
        %6035 = vmatprep.mubr.f32.mxu0 %v315
        %6036 = vmatmul.mubr.f32.gmra.mrb[0].mxu0 %v314
        %v6037 = vpop.f32.mrb[0].mxu0
        %v6038 = vadd.f32 %v3725, %v6037
        %v6039 = vpop.f32.mrb[0].mxu0
        %v6040 = vadd.f32 %v3727, %v6039
        %6041 = vmatprep.mubr.f32.mxu0 %v317
        %6042 = vmatmul.mubr.f32.gmra.mrb[0].mxu0 %v316
        %v6043 = vpop.f32.mrb[0].mxu0
        %v6044 = vadd.f32 %v3731, %v6043
        %v6045 = vpop.f32.mrb[0].mxu0
        %v6046 = vadd.f32 %v3733, %v6045
        %6047 = vmatprep.mubr.f32.mxu0 %v319
        %6048 = vmatmul.mubr.f32.gmra.mrb[0].mxu0 %v318
        %v6049 = vpop.f32.mrb[0].mxu0
        %v6050 = vadd.f32 %v3737, %v6049
        %v6051 = vpop.f32.mrb[0].mxu0
        %v6052 = vadd.f32 %v3739, %v6051
        %6053 = vmatprep.mubr.f32.mxu0 %v321
        %6054 = vmatmul.mubr.f32.gmra.mrb[0].mxu0 %v320
        %v6055 = vpop.f32.mrb[0].mxu0
        %v6056 = vadd.f32 %v3743, %v6055
        %v6057 = vpop.f32.mrb[0].mxu0
        %v6058 = vadd.f32 %v3745, %v6057
        %6059 = vmatprep.mubr.f32.mxu0 %v323
        %6060 = vmatmul.mubr.f32.gmra.mrb[0].mxu0 %v322
        %v6061 = vpop.f32.mrb[0].mxu0
        %v6062 = vadd.f32 %v3749, %v6061
        %v6063 = vpop.f32.mrb[0].mxu0
        %v6064 = vadd.f32 %v3751, %v6063
        %6065 = vmatprep.mubr.f32.mxu0 %v325
        %6066 = vmatmul.mubr.f32.gmra.mrb[0].mxu0 %v324
        %v6067 = vpop.f32.mrb[0].mxu0
        %v6068 = vadd.f32 %v3755, %v6067
        %v6069 = vpop.f32.mrb[0].mxu0
        %v6070 = vadd.f32 %v3757, %v6069
        %6071 = vmatprep.mubr.f32.mxu0 %v327
        %6072 = vmatmul.mubr.f32.gmra.mrb[0].mxu0 %v326
        %v6073 = vpop.f32.mrb[0].mxu0
        %v6074 = vadd.f32 %v3761, %v6073
        %v6075 = vpop.f32.mrb[0].mxu0
        %v6076 = vadd.f32 %v3763, %v6075
        %6077 = vmatprep.mubr.f32.mxu0 %v329
        %6078 = vmatmul.mubr.f32.gmra.mrb[0].mxu0 %v328
        %v6079 = vpop.f32.mrb[0].mxu0
        %v6080 = vadd.f32 %v3767, %v6079
        %v6081 = vpop.f32.mrb[0].mxu0
        %v6082 = vadd.f32 %v3769, %v6081
        %6083 = vmatprep.mubr.f32.mxu0 %v331
        %6084 = vmatmul.mubr.f32.gmra.mrb[0].mxu0 %v330
        %v6085 = vpop.f32.mrb[0].mxu0
        %v6086 = vadd.f32 %v3773, %v6085
        %v6087 = vpop.f32.mrb[0].mxu0
        %v6088 = vadd.f32 %v3775, %v6087
        %6089 = vmatprep.mubr.f32.mxu0 %v333
        %6090 = vmatmul.mubr.f32.gmra.mrb[0].mxu0 %v332
        %v6091 = vpop.f32.mrb[0].mxu0
        %v6092 = vadd.f32 %v3779, %v6091
        %v6093 = vpop.f32.mrb[0].mxu0
        %v6094 = vadd.f32 %v3781, %v6093
        %6095 = vmatprep.mubr.f32.mxu0 %v335
        %6096 = vmatmul.mubr.f32.gmra.mrb[0].mxu0 %v334
        %v6097 = vpop.f32.mrb[0].mxu0
        %v6098 = vadd.f32 %v3785, %v6097
        %v6099 = vpop.f32.mrb[0].mxu0
        %v6100 = vadd.f32 %v3787, %v6099
        %6101 = vmatprep.mubr.f32.mxu0 %v337
        %6102 = vmatmul.mubr.f32.gmra.mrb[0].mxu0 %v336
        %v6103 = vpop.f32.mrb[0].mxu0
        %v6104 = vadd.f32 %v3791, %v6103
        %v6105 = vpop.f32.mrb[0].mxu0
        %v6106 = vadd.f32 %v3793, %v6105
        %6107 = vmatprep.mubr.f32.mxu0 %v339
        %6108 = vmatmul.mubr.f32.gmra.mrb[0].mxu0 %v338
        %v6109 = vpop.f32.mrb[0].mxu0
        %v6110 = vadd.f32 %v3797, %v6109
        %v6111 = vpop.f32.mrb[0].mxu0
        %v6112 = vadd.f32 %v3799, %v6111
        %6113 = vmatprep.mubr.f32.mxu0 %v341
        %6114 = vmatmul.mubr.f32.gmra.mrb[0].mxu0 %v340
        %v6115 = vpop.f32.mrb[0].mxu0
        %v6116 = vadd.f32 %v3803, %v6115
        %v6117 = vpop.f32.mrb[0].mxu0
        %v6118 = vadd.f32 %v3805, %v6117
        %6119 = vmatprep.mubr.f32.mxu0 %v343
        %6120 = vmatmul.mubr.f32.gmra.mrb[0].mxu0 %v342
        %v6121 = vpop.f32.mrb[0].mxu0
        %v6122 = vadd.f32 %v3809, %v6121
        %v6123 = vpop.f32.mrb[0].mxu0
        %v6124 = vadd.f32 %v3811, %v6123
        %6125 = vmatprep.mubr.f32.mxu0 %v345
        %6126 = vmatmul.mubr.f32.gmra.mrb[0].mxu0 %v344
        %v6127 = vpop.f32.mrb[0].mxu0
        %v6128 = vadd.f32 %v3815, %v6127
        %v6129 = vpop.f32.mrb[0].mxu0
        %v6130 = vadd.f32 %v3817, %v6129
        %6131 = vmatprep.mubr.f32.mxu0 %v347
        %6132 = vmatmul.mubr.f32.gmra.mrb[0].mxu0 %v346
        %v6133 = vpop.f32.mrb[0].mxu0
        %v6134 = vadd.f32 %v3821, %v6133
        %v6135 = vpop.f32.mrb[0].mxu0
        %v6136 = vadd.f32 %v3823, %v6135
        %6137 = vmatprep.mubr.f32.mxu0 %v349
        %6138 = vmatmul.mubr.f32.gmra.mrb[0].mxu0 %v348
        %v6139 = vpop.f32.mrb[0].mxu0
        %v6140 = vadd.f32 %v3827, %v6139
        %v6141 = vpop.f32.mrb[0].mxu0
        %v6142 = vadd.f32 %v3829, %v6141
        %6143 = vmatprep.mubr.f32.mxu0 %v351
        %6144 = vmatmul.mubr.f32.gmra.mrb[0].mxu0 %v350
        %v6145 = vpop.f32.mrb[0].mxu0
        %v6146 = vadd.f32 %v3833, %v6145
        %v6147 = vpop.f32.mrb[0].mxu0
        %v6148 = vadd.f32 %v3835, %v6147
        %6149 = vmatprep.mubr.f32.mxu0 %v353
        %6150 = vmatmul.mubr.f32.gmra.mrb[0].mxu0 %v352
        %v6151 = vpop.f32.mrb[0].mxu0
        %v6152 = vadd.f32 %v3839, %v6151
        %v6153 = vpop.f32.mrb[0].mxu0
        %v6154 = vadd.f32 %v3841, %v6153
        %6155 = vmatprep.mubr.f32.mxu0 %v355
        %6156 = vmatmul.mubr.f32.gmra.mrb[0].mxu0 %v354
        %v6157 = vpop.f32.mrb[0].mxu0
        %v6158 = vadd.f32 %v3845, %v6157
        %v6159 = vpop.f32.mrb[0].mxu0
        %v6160 = vadd.f32 %v3847, %v6159
        %6161 = vmatprep.mubr.f32.mxu0 %v357
        %6162 = vmatmul.mubr.f32.gmra.mrb[0].mxu0 %v356
        %v6163 = vpop.f32.mrb[0].mxu0
        %v6164 = vadd.f32 %v3851, %v6163
        %v6165 = vpop.f32.mrb[0].mxu0
        %v6166 = vadd.f32 %v3853, %v6165
        %6167 = vmatprep.mubr.f32.mxu0 %v359
        %6168 = vmatmul.mubr.f32.gmra.mrb[0].mxu0 %v358
        %v6169 = vpop.f32.mrb[0].mxu0
        %v6170 = vadd.f32 %v3857, %v6169
        %v6171 = vpop.f32.mrb[0].mxu0
        %v6172 = vadd.f32 %v3859, %v6171
        %6173 = vmatprep.mubr.f32.mxu0 %v361
        %6174 = vmatmul.mubr.f32.gmra.mrb[0].mxu0 %v360
        %v6175 = vpop.f32.mrb[0].mxu0
        %v6176 = vadd.f32 %v3863, %v6175
        %v6177 = vpop.f32.mrb[0].mxu0
        %v6178 = vadd.f32 %v3865, %v6177
        %6179 = vmatprep.mubr.f32.mxu0 %v363
        %6180 = vmatmul.mubr.f32.gmra.mrb[0].mxu0 %v362
        %v6181 = vpop.f32.mrb[0].mxu0
        %v6182 = vadd.f32 %v3869, %v6181
        %v6183 = vpop.f32.mrb[0].mxu0
        %v6184 = vadd.f32 %v3871, %v6183
        %6185 = vmatprep.mubr.f32.mxu0 %v365
        %6186 = vmatmul.mubr.f32.gmra.mrb[0].mxu0 %v364
        %v6187 = vpop.f32.mrb[0].mxu0
        %v6188 = vadd.f32 %v3875, %v6187
        %v6189 = vpop.f32.mrb[0].mxu0
        %v6190 = vadd.f32 %v3877, %v6189
        %6191 = vmatprep.mubr.f32.mxu0 %v367
        %6192 = vmatmul.mubr.f32.gmra.mrb[0].mxu0 %v366
        %v6193 = vpop.f32.mrb[0].mxu0
        %v6194 = vadd.f32 %v3881, %v6193
        %v6195 = vpop.f32.mrb[0].mxu0
        %v6196 = vadd.f32 %v3883, %v6195
        %6197 = vmatprep.mubr.f32.mxu0 %v369
        %6198 = vmatmul.mubr.f32.gmra.mrb[0].mxu0 %v368
        %v6199 = vpop.f32.mrb[0].mxu0
        %v6200 = vadd.f32 %v3887, %v6199
        %v6201 = vpop.f32.mrb[0].mxu0
        %v6202 = vadd.f32 %v3889, %v6201
        %6203 = vmatprep.mubr.f32.mxu0 %v371
        %6204 = vmatmul.mubr.f32.gmra.mrb[0].mxu0 %v370
        %v6205 = vpop.f32.mrb[0].mxu0
        %v6206 = vadd.f32 %v3893, %v6205
        %v6207 = vpop.f32.mrb[0].mxu0
        %v6208 = vadd.f32 %v3895, %v6207
        %6209 = vmatprep.mubr.f32.mxu0 %v373
        %6210 = vmatmul.mubr.f32.gmra.mrb[0].mxu0 %v372
        %v6211 = vpop.f32.mrb[0].mxu0
        %v6212 = vadd.f32 %v3899, %v6211
        %v6213 = vpop.f32.mrb[0].mxu0
        %v6214 = vadd.f32 %v3901, %v6213
        %6215 = vdwg.mxu0
        %v6216 = vld [vmem:[#allocation8] sm:$0xff]
        %v6217 = vld [vmem:[#allocation8 + $0x8] sm:$0xff]
        %v6218 = vld [vmem:[#allocation8 + $0x10] sm:$0xff]
        %v6219 = vld [vmem:[#allocation8 + $0x18] sm:$0xff]
        %v6220 = vld [vmem:[#allocation8 + $0x20] sm:$0xff]
        %v6221 = vld [vmem:[#allocation8 + $0x28] sm:$0xff]
        %v6222 = vld [vmem:[#allocation8 + $0x30] sm:$0xff]
        %v6223 = vld [vmem:[#allocation8 + $0x38] sm:$0xff]
        %v6224 = vld [vmem:[#allocation8 + $0x40] sm:$0xff]
        %v6225 = vld [vmem:[#allocation8 + $0x48] sm:$0xff]
        %v6226 = vld [vmem:[#allocation8 + $0x50] sm:$0xff]
        %v6227 = vld [vmem:[#allocation8 + $0x58] sm:$0xff]
        %v6228 = vld [vmem:[#allocation8 + $0x60] sm:$0xff]
        %v6229 = vld [vmem:[#allocation8 + $0x68] sm:$0xff]
        %v6230 = vld [vmem:[#allocation8 + $0x70] sm:$0xff]
        %v6231 = vld [vmem:[#allocation8 + $0x78] sm:$0xff]
        %v6232 = vld [vmem:[#allocation8 + $0x80] sm:$0xff]
        %v6233 = vld [vmem:[#allocation8 + $0x88] sm:$0xff]
        %v6234 = vld [vmem:[#allocation8 + $0x90] sm:$0xff]
        %v6235 = vld [vmem:[#allocation8 + $0x98] sm:$0xff]
        %v6236 = vld [vmem:[#allocation8 + $0xa0] sm:$0xff]
        %v6237 = vld [vmem:[#allocation8 + $0xa8] sm:$0xff]
        %v6238 = vld [vmem:[#allocation8 + $0xb0] sm:$0xff]
        %v6239 = vld [vmem:[#allocation8 + $0xb8] sm:$0xff]
        %v6240 = vld [vmem:[#allocation8 + $0xc0] sm:$0xff]
        %v6241 = vld [vmem:[#allocation8 + $0xc8] sm:$0xff]
        %v6242 = vld [vmem:[#allocation8 + $0xd0] sm:$0xff]
        %v6243 = vld [vmem:[#allocation8 + $0xd8] sm:$0xff]
        %v6244 = vld [vmem:[#allocation8 + $0xe0] sm:$0xff]
        %v6245 = vld [vmem:[#allocation8 + $0xe8] sm:$0xff]
        %v6246 = vld [vmem:[#allocation8 + $0xf0] sm:$0xff]
        %v6247 = vld [vmem:[#allocation8 + $0xf8] sm:$0xff]
        %6249 = vset.pattern.permute.xlu0 0
        %6250 = vperm.xlu0 %6249, %v6216
        %v6251 = vpop.permute.xlu0 %6250
        %6254 = vset.pattern.permute.xlu0 0
        %6255 = vperm.xlu0 %6254, %v6217
        %v6256 = vpop.permute.xlu0 %6255
        %6259 = vset.pattern.permute.xlu0 0
        %6260 = vperm.xlu0 %6259, %v6218
        %v6261 = vpop.permute.xlu0 %6260
        %6264 = vset.pattern.permute.xlu0 0
        %6265 = vperm.xlu0 %6264, %v6219
        %v6266 = vpop.permute.xlu0 %6265
        %6269 = vset.pattern.permute.xlu0 0
        %6270 = vperm.xlu0 %6269, %v6220
        %v6271 = vpop.permute.xlu0 %6270
        %6274 = vset.pattern.permute.xlu0 0
        %6275 = vperm.xlu0 %6274, %v6221
        %v6276 = vpop.permute.xlu0 %6275
        %6279 = vset.pattern.permute.xlu0 0
        %6280 = vperm.xlu0 %6279, %v6222
        %v6281 = vpop.permute.xlu0 %6280
        %6284 = vset.pattern.permute.xlu0 0
        %6285 = vperm.xlu0 %6284, %v6223
        %v6286 = vpop.permute.xlu0 %6285
        %6289 = vset.pattern.permute.xlu0 0
        %6290 = vperm.xlu0 %6289, %v6224
        %v6291 = vpop.permute.xlu0 %6290
        %6294 = vset.pattern.permute.xlu0 0
        %6295 = vperm.xlu0 %6294, %v6225
        %v6296 = vpop.permute.xlu0 %6295
        %6299 = vset.pattern.permute.xlu0 0
        %6300 = vperm.xlu0 %6299, %v6226
        %v6301 = vpop.permute.xlu0 %6300
        %6304 = vset.pattern.permute.xlu0 0
        %6305 = vperm.xlu0 %6304, %v6227
        %v6306 = vpop.permute.xlu0 %6305
        %6309 = vset.pattern.permute.xlu0 0
        %6310 = vperm.xlu0 %6309, %v6228
        %v6311 = vpop.permute.xlu0 %6310
        %6314 = vset.pattern.permute.xlu0 0
        %6315 = vperm.xlu0 %6314, %v6229
        %v6316 = vpop.permute.xlu0 %6315
        %6319 = vset.pattern.permute.xlu0 0
        %6320 = vperm.xlu0 %6319, %v6230
        %v6321 = vpop.permute.xlu0 %6320
        %6324 = vset.pattern.permute.xlu0 0
        %6325 = vperm.xlu0 %6324, %v6231
        %v6326 = vpop.permute.xlu0 %6325
        %6329 = vset.pattern.permute.xlu0 0
        %6330 = vperm.xlu0 %6329, %v6232
        %v6331 = vpop.permute.xlu0 %6330
        %6334 = vset.pattern.permute.xlu0 0
        %6335 = vperm.xlu0 %6334, %v6233
        %v6336 = vpop.permute.xlu0 %6335
        %6339 = vset.pattern.permute.xlu0 0
        %6340 = vperm.xlu0 %6339, %v6234
        %v6341 = vpop.permute.xlu0 %6340
        %6344 = vset.pattern.permute.xlu0 0
        %6345 = vperm.xlu0 %6344, %v6235
        %v6346 = vpop.permute.xlu0 %6345
        %6349 = vset.pattern.permute.xlu0 0
        %6350 = vperm.xlu0 %6349, %v6236
        %v6351 = vpop.permute.xlu0 %6350
        %6354 = vset.pattern.permute.xlu0 0
        %6355 = vperm.xlu0 %6354, %v6237
        %v6356 = vpop.permute.xlu0 %6355
        %6359 = vset.pattern.permute.xlu0 0
        %6360 = vperm.xlu0 %6359, %v6238
        %v6361 = vpop.permute.xlu0 %6360
        %6364 = vset.pattern.permute.xlu0 0
        %6365 = vperm.xlu0 %6364, %v6239
        %v6366 = vpop.permute.xlu0 %6365
        %6369 = vset.pattern.permute.xlu0 0
        %6370 = vperm.xlu0 %6369, %v6240
        %v6371 = vpop.permute.xlu0 %6370
        %6374 = vset.pattern.permute.xlu0 0
        %6375 = vperm.xlu0 %6374, %v6241
        %v6376 = vpop.permute.xlu0 %6375
        %6379 = vset.pattern.permute.xlu0 0
        %6380 = vperm.xlu0 %6379, %v6242
        %v6381 = vpop.permute.xlu0 %6380
        %6384 = vset.pattern.permute.xlu0 0
        %6385 = vperm.xlu0 %6384, %v6243
        %v6386 = vpop.permute.xlu0 %6385
        %6389 = vset.pattern.permute.xlu0 0
        %6390 = vperm.xlu0 %6389, %v6244
        %v6391 = vpop.permute.xlu0 %6390
        %6394 = vset.pattern.permute.xlu0 0
        %6395 = vperm.xlu0 %6394, %v6245
        %v6396 = vpop.permute.xlu0 %6395
        %6399 = vset.pattern.permute.xlu0 0
        %6400 = vperm.xlu0 %6399, %v6246
        %v6401 = vpop.permute.xlu0 %6400
        %6404 = vset.pattern.permute.xlu0 0
        %6405 = vperm.xlu0 %6404, %v6247
        %v6406 = vpop.permute.xlu0 %6405
        %v6408 = vadd.f32 %v3970, %v6251
        %v6409 = vadd.f32 %v3972, %v6251
        %v6410 = vadd.f32 %v4227, %v6251
        %v6411 = vadd.f32 %v4229, %v6251
        %v6412 = vadd.f32 %v4484, %v6251
        %v6413 = vadd.f32 %v4486, %v6251
        %v6414 = vadd.f32 %v4741, %v6251
        %v6415 = vadd.f32 %v4743, %v6251
        %v6416 = vadd.f32 %v4998, %v6251
        %v6417 = vadd.f32 %v5000, %v6251
        %v6418 = vadd.f32 %v5255, %v6251
        %v6419 = vadd.f32 %v5257, %v6251
        %v6420 = vadd.f32 %v5512, %v6251
        %v6421 = vadd.f32 %v5514, %v6251
        %v6422 = vadd.f32 %v5769, %v6251
        %v6423 = vadd.f32 %v5771, %v6251
        %v6424 = vadd.f32 %v6026, %v6251
        %v6425 = vadd.f32 %v6028, %v6251
        %v6426 = vadd.f32 %v3976, %v6256
        %v6427 = vadd.f32 %v3978, %v6256
        %v6428 = vadd.f32 %v4233, %v6256
        %v6429 = vadd.f32 %v4235, %v6256
        %v6430 = vadd.f32 %v4490, %v6256
        %v6431 = vadd.f32 %v4492, %v6256
        %v6432 = vadd.f32 %v4747, %v6256
        %v6433 = vadd.f32 %v4749, %v6256
        %v6434 = vadd.f32 %v5004, %v6256
        %v6435 = vadd.f32 %v5006, %v6256
        %v6436 = vadd.f32 %v5261, %v6256
        %v6437 = vadd.f32 %v5263, %v6256
        %v6438 = vadd.f32 %v5518, %v6256
        %v6439 = vadd.f32 %v5520, %v6256
        %v6440 = vadd.f32 %v5775, %v6256
        %v6441 = vadd.f32 %v5777, %v6256
        %v6442 = vadd.f32 %v6032, %v6256
        %v6443 = vadd.f32 %v6034, %v6256
        %v6444 = vadd.f32 %v3982, %v6261
        %v6445 = vadd.f32 %v3984, %v6261
        %v6446 = vadd.f32 %v4239, %v6261
        %v6447 = vadd.f32 %v4241, %v6261
        %v6448 = vadd.f32 %v4496, %v6261
        %v6449 = vadd.f32 %v4498, %v6261
        %v6450 = vadd.f32 %v4753, %v6261
        %v6451 = vadd.f32 %v4755, %v6261
        %v6452 = vadd.f32 %v5010, %v6261
        %v6453 = vadd.f32 %v5012, %v6261
        %v6454 = vadd.f32 %v5267, %v6261
        %v6455 = vadd.f32 %v5269, %v6261
        %v6456 = vadd.f32 %v5524, %v6261
        %v6457 = vadd.f32 %v5526, %v6261
        %v6458 = vadd.f32 %v5781, %v6261
        %v6459 = vadd.f32 %v5783, %v6261
        %v6460 = vadd.f32 %v6038, %v6261
        %v6461 = vadd.f32 %v6040, %v6261
        %v6462 = vadd.f32 %v3988, %v6266
        %v6463 = vadd.f32 %v3990, %v6266
        %v6464 = vadd.f32 %v4245, %v6266
        %v6465 = vadd.f32 %v4247, %v6266
        %v6466 = vadd.f32 %v4502, %v6266
        %v6467 = vadd.f32 %v4504, %v6266
        %v6468 = vadd.f32 %v4759, %v6266
        %v6469 = vadd.f32 %v4761, %v6266
        %v6470 = vadd.f32 %v5016, %v6266
        %v6471 = vadd.f32 %v5018, %v6266
        %v6472 = vadd.f32 %v5273, %v6266
        %v6473 = vadd.f32 %v5275, %v6266
        %v6474 = vadd.f32 %v5530, %v6266
        %v6475 = vadd.f32 %v5532, %v6266
        %v6476 = vadd.f32 %v5787, %v6266
        %v6477 = vadd.f32 %v5789, %v6266
        %v6478 = vadd.f32 %v6044, %v6266
        %v6479 = vadd.f32 %v6046, %v6266
        %v6480 = vadd.f32 %v3994, %v6271
        %v6481 = vadd.f32 %v3996, %v6271
        %v6482 = vadd.f32 %v4251, %v6271
        %v6483 = vadd.f32 %v4253, %v6271
        %v6484 = vadd.f32 %v4508, %v6271
        %v6485 = vadd.f32 %v4510, %v6271
        %v6486 = vadd.f32 %v4765, %v6271
        %v6487 = vadd.f32 %v4767, %v6271
        %v6488 = vadd.f32 %v5022, %v6271
        %v6489 = vadd.f32 %v5024, %v6271
        %v6490 = vadd.f32 %v5279, %v6271
        %v6491 = vadd.f32 %v5281, %v6271
        %v6492 = vadd.f32 %v5536, %v6271
        %v6493 = vadd.f32 %v5538, %v6271
        %v6494 = vadd.f32 %v5793, %v6271
        %v6495 = vadd.f32 %v5795, %v6271
        %v6496 = vadd.f32 %v6050, %v6271
        %v6497 = vadd.f32 %v6052, %v6271
        %v6498 = vadd.f32 %v4000, %v6276
        %v6499 = vadd.f32 %v4002, %v6276
        %v6500 = vadd.f32 %v4257, %v6276
        %v6501 = vadd.f32 %v4259, %v6276
        %v6502 = vadd.f32 %v4514, %v6276
        %v6503 = vadd.f32 %v4516, %v6276
        %v6504 = vadd.f32 %v4771, %v6276
        %v6505 = vadd.f32 %v4773, %v6276
        %v6506 = vadd.f32 %v5028, %v6276
        %v6507 = vadd.f32 %v5030, %v6276
        %v6508 = vadd.f32 %v5285, %v6276
        %v6509 = vadd.f32 %v5287, %v6276
        %v6510 = vadd.f32 %v5542, %v6276
        %v6511 = vadd.f32 %v5544, %v6276
        %v6512 = vadd.f32 %v5799, %v6276
        %v6513 = vadd.f32 %v5801, %v6276
        %v6514 = vadd.f32 %v6056, %v6276
        %v6515 = vadd.f32 %v6058, %v6276
        %v6516 = vadd.f32 %v4006, %v6281
        %v6517 = vadd.f32 %v4008, %v6281
        %v6518 = vadd.f32 %v4263, %v6281
        %v6519 = vadd.f32 %v4265, %v6281
        %v6520 = vadd.f32 %v4520, %v6281
        %v6521 = vadd.f32 %v4522, %v6281
        %v6522 = vadd.f32 %v4777, %v6281
        %v6523 = vadd.f32 %v4779, %v6281
        %v6524 = vadd.f32 %v5034, %v6281
        %v6525 = vadd.f32 %v5036, %v6281
        %v6526 = vadd.f32 %v5291, %v6281
        %v6527 = vadd.f32 %v5293, %v6281
        %v6528 = vadd.f32 %v5548, %v6281
        %v6529 = vadd.f32 %v5550, %v6281
        %v6530 = vadd.f32 %v5805, %v6281
        %v6531 = vadd.f32 %v5807, %v6281
        %v6532 = vadd.f32 %v6062, %v6281
        %v6533 = vadd.f32 %v6064, %v6281
        %v6534 = vadd.f32 %v4012, %v6286
        %v6535 = vadd.f32 %v4014, %v6286
        %v6536 = vadd.f32 %v4269, %v6286
        %v6537 = vadd.f32 %v4271, %v6286
        %v6538 = vadd.f32 %v4526, %v6286
        %v6539 = vadd.f32 %v4528, %v6286
        %v6540 = vadd.f32 %v4783, %v6286
        %v6541 = vadd.f32 %v4785, %v6286
        %v6542 = vadd.f32 %v5040, %v6286
        %v6543 = vadd.f32 %v5042, %v6286
        %v6544 = vadd.f32 %v5297, %v6286
        %v6545 = vadd.f32 %v5299, %v6286
        %v6546 = vadd.f32 %v5554, %v6286
        %v6547 = vadd.f32 %v5556, %v6286
        %v6548 = vadd.f32 %v5811, %v6286
        %v6549 = vadd.f32 %v5813, %v6286
        %v6550 = vadd.f32 %v6068, %v6286
        %v6551 = vadd.f32 %v6070, %v6286
        %v6552 = vadd.f32 %v4018, %v6291
        %v6553 = vadd.f32 %v4020, %v6291
        %v6554 = vadd.f32 %v4275, %v6291
        %v6555 = vadd.f32 %v4277, %v6291
        %v6556 = vadd.f32 %v4532, %v6291
        %v6557 = vadd.f32 %v4534, %v6291
        %v6558 = vadd.f32 %v4789, %v6291
        %v6559 = vadd.f32 %v4791, %v6291
        %v6560 = vadd.f32 %v5046, %v6291
        %v6561 = vadd.f32 %v5048, %v6291
        %v6562 = vadd.f32 %v5303, %v6291
        %v6563 = vadd.f32 %v5305, %v6291
        %v6564 = vadd.f32 %v5560, %v6291
        %v6565 = vadd.f32 %v5562, %v6291
        %v6566 = vadd.f32 %v5817, %v6291
        %v6567 = vadd.f32 %v5819, %v6291
        %v6568 = vadd.f32 %v6074, %v6291
        %v6569 = vadd.f32 %v6076, %v6291
        %v6570 = vadd.f32 %v4024, %v6296
        %v6571 = vadd.f32 %v4026, %v6296
        %v6572 = vadd.f32 %v4281, %v6296
        %v6573 = vadd.f32 %v4283, %v6296
        %v6574 = vadd.f32 %v4538, %v6296
        %v6575 = vadd.f32 %v4540, %v6296
        %v6576 = vadd.f32 %v4795, %v6296
        %v6577 = vadd.f32 %v4797, %v6296
        %v6578 = vadd.f32 %v5052, %v6296
        %v6579 = vadd.f32 %v5054, %v6296
        %v6580 = vadd.f32 %v5309, %v6296
        %v6581 = vadd.f32 %v5311, %v6296
        %v6582 = vadd.f32 %v5566, %v6296
        %v6583 = vadd.f32 %v5568, %v6296
        %v6584 = vadd.f32 %v5823, %v6296
        %v6585 = vadd.f32 %v5825, %v6296
        %v6586 = vadd.f32 %v6080, %v6296
        %v6587 = vadd.f32 %v6082, %v6296
        %v6588 = vadd.f32 %v4030, %v6301
        %v6589 = vadd.f32 %v4032, %v6301
        %v6590 = vadd.f32 %v4287, %v6301
        %v6591 = vadd.f32 %v4289, %v6301
        %v6592 = vadd.f32 %v4544, %v6301
        %v6593 = vadd.f32 %v4546, %v6301
        %v6594 = vadd.f32 %v4801, %v6301
        %v6595 = vadd.f32 %v4803, %v6301
        %v6596 = vadd.f32 %v5058, %v6301
        %v6597 = vadd.f32 %v5060, %v6301
        %v6598 = vadd.f32 %v5315, %v6301
        %v6599 = vadd.f32 %v5317, %v6301
        %v6600 = vadd.f32 %v5572, %v6301
        %v6601 = vadd.f32 %v5574, %v6301
        %v6602 = vadd.f32 %v5829, %v6301
        %v6603 = vadd.f32 %v5831, %v6301
        %v6604 = vadd.f32 %v6086, %v6301
        %v6605 = vadd.f32 %v6088, %v6301
        %v6606 = vadd.f32 %v4036, %v6306
        %v6607 = vadd.f32 %v4038, %v6306
        %v6608 = vadd.f32 %v4293, %v6306
        %v6609 = vadd.f32 %v4295, %v6306
        %v6610 = vadd.f32 %v4550, %v6306
        %v6611 = vadd.f32 %v4552, %v6306
        %v6612 = vadd.f32 %v4807, %v6306
        %v6613 = vadd.f32 %v4809, %v6306
        %v6614 = vadd.f32 %v5064, %v6306
        %v6615 = vadd.f32 %v5066, %v6306
        %v6616 = vadd.f32 %v5321, %v6306
        %v6617 = vadd.f32 %v5323, %v6306
        %v6618 = vadd.f32 %v5578, %v6306
        %v6619 = vadd.f32 %v5580, %v6306
        %v6620 = vadd.f32 %v5835, %v6306
        %v6621 = vadd.f32 %v5837, %v6306
        %v6622 = vadd.f32 %v6092, %v6306
        %v6623 = vadd.f32 %v6094, %v6306
        %v6624 = vadd.f32 %v4042, %v6311
        %v6625 = vadd.f32 %v4044, %v6311
        %v6626 = vadd.f32 %v4299, %v6311
        %v6627 = vadd.f32 %v4301, %v6311
        %v6628 = vadd.f32 %v4556, %v6311
        %v6629 = vadd.f32 %v4558, %v6311
        %v6630 = vadd.f32 %v4813, %v6311
        %v6631 = vadd.f32 %v4815, %v6311
        %v6632 = vadd.f32 %v5070, %v6311
        %v6633 = vadd.f32 %v5072, %v6311
        %v6634 = vadd.f32 %v5327, %v6311
        %v6635 = vadd.f32 %v5329, %v6311
        %v6636 = vadd.f32 %v5584, %v6311
        %v6637 = vadd.f32 %v5586, %v6311
        %v6638 = vadd.f32 %v5841, %v6311
        %v6639 = vadd.f32 %v5843, %v6311
        %v6640 = vadd.f32 %v6098, %v6311
        %v6641 = vadd.f32 %v6100, %v6311
        %v6642 = vadd.f32 %v4048, %v6316
        %v6643 = vadd.f32 %v4050, %v6316
        %v6644 = vadd.f32 %v4305, %v6316
        %v6645 = vadd.f32 %v4307, %v6316
        %v6646 = vadd.f32 %v4562, %v6316
        %v6647 = vadd.f32 %v4564, %v6316
        %v6648 = vadd.f32 %v4819, %v6316
        %v6649 = vadd.f32 %v4821, %v6316
        %v6650 = vadd.f32 %v5076, %v6316
        %v6651 = vadd.f32 %v5078, %v6316
        %v6652 = vadd.f32 %v5333, %v6316
        %v6653 = vadd.f32 %v5335, %v6316
        %v6654 = vadd.f32 %v5590, %v6316
        %v6655 = vadd.f32 %v5592, %v6316
        %v6656 = vadd.f32 %v5847, %v6316
        %v6657 = vadd.f32 %v5849, %v6316
        %v6658 = vadd.f32 %v6104, %v6316
        %v6659 = vadd.f32 %v6106, %v6316
        %v6660 = vadd.f32 %v4054, %v6321
        %v6661 = vadd.f32 %v4056, %v6321
        %v6662 = vadd.f32 %v4311, %v6321
        %v6663 = vadd.f32 %v4313, %v6321
        %v6664 = vadd.f32 %v4568, %v6321
        %v6665 = vadd.f32 %v4570, %v6321
        %v6666 = vadd.f32 %v4825, %v6321
        %v6667 = vadd.f32 %v4827, %v6321
        %v6668 = vadd.f32 %v5082, %v6321
        %v6669 = vadd.f32 %v5084, %v6321
        %v6670 = vadd.f32 %v5339, %v6321
        %v6671 = vadd.f32 %v5341, %v6321
        %v6672 = vadd.f32 %v5596, %v6321
        %v6673 = vadd.f32 %v5598, %v6321
        %v6674 = vadd.f32 %v5853, %v6321
        %v6675 = vadd.f32 %v5855, %v6321
        %v6676 = vadd.f32 %v6110, %v6321
        %v6677 = vadd.f32 %v6112, %v6321
        %v6678 = vadd.f32 %v4060, %v6326
        %v6679 = vadd.f32 %v4062, %v6326
        %v6680 = vadd.f32 %v4317, %v6326
        %v6681 = vadd.f32 %v4319, %v6326
        %v6682 = vadd.f32 %v4574, %v6326
        %v6683 = vadd.f32 %v4576, %v6326
        %v6684 = vadd.f32 %v4831, %v6326
        %v6685 = vadd.f32 %v4833, %v6326
        %v6686 = vadd.f32 %v5088, %v6326
        %v6687 = vadd.f32 %v5090, %v6326
        %v6688 = vadd.f32 %v5345, %v6326
        %v6689 = vadd.f32 %v5347, %v6326
        %v6690 = vadd.f32 %v5602, %v6326
        %v6691 = vadd.f32 %v5604, %v6326
        %v6692 = vadd.f32 %v5859, %v6326
        %v6693 = vadd.f32 %v5861, %v6326
        %v6694 = vadd.f32 %v6116, %v6326
        %v6695 = vadd.f32 %v6118, %v6326
        %v6696 = vadd.f32 %v4066, %v6331
        %v6697 = vadd.f32 %v4068, %v6331
        %v6698 = vadd.f32 %v4323, %v6331
        %v6699 = vadd.f32 %v4325, %v6331
        %v6700 = vadd.f32 %v4580, %v6331
        %v6701 = vadd.f32 %v4582, %v6331
        %v6702 = vadd.f32 %v4837, %v6331
        %v6703 = vadd.f32 %v4839, %v6331
        %v6704 = vadd.f32 %v5094, %v6331
        %v6705 = vadd.f32 %v5096, %v6331
        %v6706 = vadd.f32 %v5351, %v6331
        %v6707 = vadd.f32 %v5353, %v6331
        %v6708 = vadd.f32 %v5608, %v6331
        %v6709 = vadd.f32 %v5610, %v6331
        %v6710 = vadd.f32 %v5865, %v6331
        %v6711 = vadd.f32 %v5867, %v6331
        %v6712 = vadd.f32 %v6122, %v6331
        %v6713 = vadd.f32 %v6124, %v6331
        %v6714 = vadd.f32 %v4072, %v6336
        %v6715 = vadd.f32 %v4074, %v6336
        %v6716 = vadd.f32 %v4329, %v6336
        %v6717 = vadd.f32 %v4331, %v6336
        %v6718 = vadd.f32 %v4586, %v6336
        %v6719 = vadd.f32 %v4588, %v6336
        %v6720 = vadd.f32 %v4843, %v6336
        %v6721 = vadd.f32 %v4845, %v6336
        %v6722 = vadd.f32 %v5100, %v6336
        %v6723 = vadd.f32 %v5102, %v6336
        %v6724 = vadd.f32 %v5357, %v6336
        %v6725 = vadd.f32 %v5359, %v6336
        %v6726 = vadd.f32 %v5614, %v6336
        %v6727 = vadd.f32 %v5616, %v6336
        %v6728 = vadd.f32 %v5871, %v6336
        %v6729 = vadd.f32 %v5873, %v6336
        %v6730 = vadd.f32 %v6128, %v6336
        %v6731 = vadd.f32 %v6130, %v6336
        %v6732 = vadd.f32 %v4078, %v6341
        %v6733 = vadd.f32 %v4080, %v6341
        %v6734 = vadd.f32 %v4335, %v6341
        %v6735 = vadd.f32 %v4337, %v6341
        %v6736 = vadd.f32 %v4592, %v6341
        %v6737 = vadd.f32 %v4594, %v6341
        %v6738 = vadd.f32 %v4849, %v6341
        %v6739 = vadd.f32 %v4851, %v6341
        %v6740 = vadd.f32 %v5106, %v6341
        %v6741 = vadd.f32 %v5108, %v6341
        %v6742 = vadd.f32 %v5363, %v6341
        %v6743 = vadd.f32 %v5365, %v6341
        %v6744 = vadd.f32 %v5620, %v6341
        %v6745 = vadd.f32 %v5622, %v6341
        %v6746 = vadd.f32 %v5877, %v6341
        %v6747 = vadd.f32 %v5879, %v6341
        %v6748 = vadd.f32 %v6134, %v6341
        %v6749 = vadd.f32 %v6136, %v6341
        %v6750 = vadd.f32 %v4084, %v6346
        %v6751 = vadd.f32 %v4086, %v6346
        %v6752 = vadd.f32 %v4341, %v6346
        %v6753 = vadd.f32 %v4343, %v6346
        %v6754 = vadd.f32 %v4598, %v6346
        %v6755 = vadd.f32 %v4600, %v6346
        %v6756 = vadd.f32 %v4855, %v6346
        %v6757 = vadd.f32 %v4857, %v6346
        %v6758 = vadd.f32 %v5112, %v6346
        %v6759 = vadd.f32 %v5114, %v6346
        %v6760 = vadd.f32 %v5369, %v6346
        %v6761 = vadd.f32 %v5371, %v6346
        %v6762 = vadd.f32 %v5626, %v6346
        %v6763 = vadd.f32 %v5628, %v6346
        %v6764 = vadd.f32 %v5883, %v6346
        %v6765 = vadd.f32 %v5885, %v6346
        %v6766 = vadd.f32 %v6140, %v6346
        %v6767 = vadd.f32 %v6142, %v6346
        %v6768 = vadd.f32 %v4090, %v6351
        %v6769 = vadd.f32 %v4092, %v6351
        %v6770 = vadd.f32 %v4347, %v6351
        %v6771 = vadd.f32 %v4349, %v6351
        %v6772 = vadd.f32 %v4604, %v6351
        %v6773 = vadd.f32 %v4606, %v6351
        %v6774 = vadd.f32 %v4861, %v6351
        %v6775 = vadd.f32 %v4863, %v6351
        %v6776 = vadd.f32 %v5118, %v6351
        %v6777 = vadd.f32 %v5120, %v6351
        %v6778 = vadd.f32 %v5375, %v6351
        %v6779 = vadd.f32 %v5377, %v6351
        %v6780 = vadd.f32 %v5632, %v6351
        %v6781 = vadd.f32 %v5634, %v6351
        %v6782 = vadd.f32 %v5889, %v6351
        %v6783 = vadd.f32 %v5891, %v6351
        %v6784 = vadd.f32 %v6146, %v6351
        %v6785 = vadd.f32 %v6148, %v6351
        %v6786 = vadd.f32 %v4096, %v6356
        %v6787 = vadd.f32 %v4098, %v6356
        %v6788 = vadd.f32 %v4353, %v6356
        %v6789 = vadd.f32 %v4355, %v6356
        %v6790 = vadd.f32 %v4610, %v6356
        %v6791 = vadd.f32 %v4612, %v6356
        %v6792 = vadd.f32 %v4867, %v6356
        %v6793 = vadd.f32 %v4869, %v6356
        %v6794 = vadd.f32 %v5124, %v6356
        %v6795 = vadd.f32 %v5126, %v6356
        %v6796 = vadd.f32 %v5381, %v6356
        %v6797 = vadd.f32 %v5383, %v6356
        %v6798 = vadd.f32 %v5638, %v6356
        %v6799 = vadd.f32 %v5640, %v6356
        %v6800 = vadd.f32 %v5895, %v6356
        %v6801 = vadd.f32 %v5897, %v6356
        %v6802 = vadd.f32 %v6152, %v6356
        %v6803 = vadd.f32 %v6154, %v6356
        %v6804 = vadd.f32 %v4102, %v6361
        %v6805 = vadd.f32 %v4104, %v6361
        %v6806 = vadd.f32 %v4359, %v6361
        %v6807 = vadd.f32 %v4361, %v6361
        %v6808 = vadd.f32 %v4616, %v6361
        %v6809 = vadd.f32 %v4618, %v6361
        %v6810 = vadd.f32 %v4873, %v6361
        %v6811 = vadd.f32 %v4875, %v6361
        %v6812 = vadd.f32 %v5130, %v6361
        %v6813 = vadd.f32 %v5132, %v6361
        %v6814 = vadd.f32 %v5387, %v6361
        %v6815 = vadd.f32 %v5389, %v6361
        %v6816 = vadd.f32 %v5644, %v6361
        %v6817 = vadd.f32 %v5646, %v6361
        %v6818 = vadd.f32 %v5901, %v6361
        %v6819 = vadd.f32 %v5903, %v6361
        %v6820 = vadd.f32 %v6158, %v6361
        %v6821 = vadd.f32 %v6160, %v6361
        %v6822 = vadd.f32 %v4108, %v6366
        %v6823 = vadd.f32 %v4110, %v6366
        %v6824 = vadd.f32 %v4365, %v6366
        %v6825 = vadd.f32 %v4367, %v6366
        %v6826 = vadd.f32 %v4622, %v6366
        %v6827 = vadd.f32 %v4624, %v6366
        %v6828 = vadd.f32 %v4879, %v6366
        %v6829 = vadd.f32 %v4881, %v6366
        %v6830 = vadd.f32 %v5136, %v6366
        %v6831 = vadd.f32 %v5138, %v6366
        %v6832 = vadd.f32 %v5393, %v6366
        %v6833 = vadd.f32 %v5395, %v6366
        %v6834 = vadd.f32 %v5650, %v6366
        %v6835 = vadd.f32 %v5652, %v6366
        %v6836 = vadd.f32 %v5907, %v6366
        %v6837 = vadd.f32 %v5909, %v6366
        %v6838 = vadd.f32 %v6164, %v6366
        %v6839 = vadd.f32 %v6166, %v6366
        %v6840 = vadd.f32 %v4114, %v6371
        %v6841 = vadd.f32 %v4116, %v6371
        %v6842 = vadd.f32 %v4371, %v6371
        %v6843 = vadd.f32 %v4373, %v6371
        %v6844 = vadd.f32 %v4628, %v6371
        %v6845 = vadd.f32 %v4630, %v6371
        %v6846 = vadd.f32 %v4885, %v6371
        %v6847 = vadd.f32 %v4887, %v6371
        %v6848 = vadd.f32 %v5142, %v6371
        %v6849 = vadd.f32 %v5144, %v6371
        %v6850 = vadd.f32 %v5399, %v6371
        %v6851 = vadd.f32 %v5401, %v6371
        %v6852 = vadd.f32 %v5656, %v6371
        %v6853 = vadd.f32 %v5658, %v6371
        %v6854 = vadd.f32 %v5913, %v6371
        %v6855 = vadd.f32 %v5915, %v6371
        %v6856 = vadd.f32 %v6170, %v6371
        %v6857 = vadd.f32 %v6172, %v6371
        %v6858 = vadd.f32 %v4120, %v6376
        %v6859 = vadd.f32 %v4122, %v6376
        %v6860 = vadd.f32 %v4377, %v6376
        %v6861 = vadd.f32 %v4379, %v6376
        %v6862 = vadd.f32 %v4634, %v6376
        %v6863 = vadd.f32 %v4636, %v6376
        %v6864 = vadd.f32 %v4891, %v6376
        %v6865 = vadd.f32 %v4893, %v6376
        %v6866 = vadd.f32 %v5148, %v6376
        %v6867 = vadd.f32 %v5150, %v6376
        %v6868 = vadd.f32 %v5405, %v6376
        %v6869 = vadd.f32 %v5407, %v6376
        %v6870 = vadd.f32 %v5662, %v6376
        %v6871 = vadd.f32 %v5664, %v6376
        %v6872 = vadd.f32 %v5919, %v6376
        %v6873 = vadd.f32 %v5921, %v6376
        %v6874 = vadd.f32 %v6176, %v6376
        %v6875 = vadd.f32 %v6178, %v6376
        %v6876 = vadd.f32 %v4126, %v6381
        %v6877 = vadd.f32 %v4128, %v6381
        %v6878 = vadd.f32 %v4383, %v6381
        %v6879 = vadd.f32 %v4385, %v6381
        %v6880 = vadd.f32 %v4640, %v6381
        %v6881 = vadd.f32 %v4642, %v6381
        %v6882 = vadd.f32 %v4897, %v6381
        %v6883 = vadd.f32 %v4899, %v6381
        %v6884 = vadd.f32 %v5154, %v6381
        %v6885 = vadd.f32 %v5156, %v6381
        %v6886 = vadd.f32 %v5411, %v6381
        %v6887 = vadd.f32 %v5413, %v6381
        %v6888 = vadd.f32 %v5668, %v6381
        %v6889 = vadd.f32 %v5670, %v6381
        %v6890 = vadd.f32 %v5925, %v6381
        %v6891 = vadd.f32 %v5927, %v6381
        %v6892 = vadd.f32 %v6182, %v6381
        %v6893 = vadd.f32 %v6184, %v6381
        %v6894 = vadd.f32 %v4132, %v6386
        %v6895 = vadd.f32 %v4134, %v6386
        %v6896 = vadd.f32 %v4389, %v6386
        %v6897 = vadd.f32 %v4391, %v6386
        %v6898 = vadd.f32 %v4646, %v6386
        %v6899 = vadd.f32 %v4648, %v6386
        %v6900 = vadd.f32 %v4903, %v6386
        %v6901 = vadd.f32 %v4905, %v6386
        %v6902 = vadd.f32 %v5160, %v6386
        %v6903 = vadd.f32 %v5162, %v6386
        %v6904 = vadd.f32 %v5417, %v6386
        %v6905 = vadd.f32 %v5419, %v6386
        %v6906 = vadd.f32 %v5674, %v6386
        %v6907 = vadd.f32 %v5676, %v6386
        %v6908 = vadd.f32 %v5931, %v6386
        %v6909 = vadd.f32 %v5933, %v6386
        %v6910 = vadd.f32 %v6188, %v6386
        %v6911 = vadd.f32 %v6190, %v6386
        %v6912 = vadd.f32 %v4138, %v6391
        %v6913 = vadd.f32 %v4140, %v6391
        %v6914 = vadd.f32 %v4395, %v6391
        %v6915 = vadd.f32 %v4397, %v6391
        %v6916 = vadd.f32 %v4652, %v6391
        %v6917 = vadd.f32 %v4654, %v6391
        %v6918 = vadd.f32 %v4909, %v6391
        %v6919 = vadd.f32 %v4911, %v6391
        %v6920 = vadd.f32 %v5166, %v6391
        %v6921 = vadd.f32 %v5168, %v6391
        %v6922 = vadd.f32 %v5423, %v6391
        %v6923 = vadd.f32 %v5425, %v6391
        %v6924 = vadd.f32 %v5680, %v6391
        %v6925 = vadd.f32 %v5682, %v6391
        %v6926 = vadd.f32 %v5937, %v6391
        %v6927 = vadd.f32 %v5939, %v6391
        %v6928 = vadd.f32 %v6194, %v6391
        %v6929 = vadd.f32 %v6196, %v6391
        %v6930 = vadd.f32 %v4144, %v6396
        %v6931 = vadd.f32 %v4146, %v6396
        %v6932 = vadd.f32 %v4401, %v6396
        %v6933 = vadd.f32 %v4403, %v6396
        %v6934 = vadd.f32 %v4658, %v6396
        %v6935 = vadd.f32 %v4660, %v6396
        %v6936 = vadd.f32 %v4915, %v6396
        %v6937 = vadd.f32 %v4917, %v6396
        %v6938 = vadd.f32 %v5172, %v6396
        %v6939 = vadd.f32 %v5174, %v6396
        %v6940 = vadd.f32 %v5429, %v6396
        %v6941 = vadd.f32 %v5431, %v6396
        %v6942 = vadd.f32 %v5686, %v6396
        %v6943 = vadd.f32 %v5688, %v6396
        %v6944 = vadd.f32 %v5943, %v6396
        %v6945 = vadd.f32 %v5945, %v6396
        %v6946 = vadd.f32 %v6200, %v6396
        %v6947 = vadd.f32 %v6202, %v6396
        %v6948 = vadd.f32 %v4150, %v6401
        %v6949 = vadd.f32 %v4152, %v6401
        %v6950 = vadd.f32 %v4407, %v6401
        %v6951 = vadd.f32 %v4409, %v6401
        %v6952 = vadd.f32 %v4664, %v6401
        %v6953 = vadd.f32 %v4666, %v6401
        %v6954 = vadd.f32 %v4921, %v6401
        %v6955 = vadd.f32 %v4923, %v6401
        %v6956 = vadd.f32 %v5178, %v6401
        %v6957 = vadd.f32 %v5180, %v6401
        %v6958 = vadd.f32 %v5435, %v6401
        %v6959 = vadd.f32 %v5437, %v6401
        %v6960 = vadd.f32 %v5692, %v6401
        %v6961 = vadd.f32 %v5694, %v6401
        %v6962 = vadd.f32 %v5949, %v6401
        %v6963 = vadd.f32 %v5951, %v6401
        %v6964 = vadd.f32 %v6206, %v6401
        %v6965 = vadd.f32 %v6208, %v6401
        %v6966 = vadd.f32 %v4156, %v6406
        %v6967 = vadd.f32 %v4158, %v6406
        %v6968 = vadd.f32 %v4413, %v6406
        %v6969 = vadd.f32 %v4415, %v6406
        %v6970 = vadd.f32 %v4670, %v6406
        %v6971 = vadd.f32 %v4672, %v6406
        %v6972 = vadd.f32 %v4927, %v6406
        %v6973 = vadd.f32 %v4929, %v6406
        %v6974 = vadd.f32 %v5184, %v6406
        %v6975 = vadd.f32 %v5186, %v6406
        %v6976 = vadd.f32 %v5441, %v6406
        %v6977 = vadd.f32 %v5443, %v6406
        %v6978 = vadd.f32 %v5698, %v6406
        %v6979 = vadd.f32 %v5700, %v6406
        %v6980 = vadd.f32 %v5955, %v6406
        %v6981 = vadd.f32 %v5957, %v6406
        %v6982 = vadd.f32 %v6212, %v6406
        %v6983 = vadd.f32 %v6214, %v6406
        %6984 = vst [vmem:[%s306] sm:$0xff] %v6408
        %6985 = vst [vmem:[%s306 + $0x8] sm:$0xff] %v6409
        %6986 = vst [vmem:[%s306 + $0x10] sm:$0xff] %v6410
        %6987 = vst [vmem:[%s306 + $0x18] sm:$0xff] %v6411
        %6988 = vst [vmem:[%s306 + $0x20] sm:$0xff] %v6412
        %6989 = vst [vmem:[%s306 + $0x28] sm:$0xff] %v6413
        %6990 = vst [vmem:[%s306 + $0x30] sm:$0xff] %v6414
        %6991 = vst [vmem:[%s306 + $0x38] sm:$0xff] %v6415
        %6992 = vst [vmem:[%s306 + $0x40] sm:$0xff] %v6416
        %6993 = vst [vmem:[%s306 + $0x48] sm:$0xff] %v6417
        %6994 = vst [vmem:[%s306 + $0x50] sm:$0xff] %v6418
        %6995 = vst [vmem:[%s306 + $0x58] sm:$0xff] %v6419
        %6996 = vst [vmem:[%s306 + $0x60] sm:$0xff] %v6420
        %6997 = vst [vmem:[%s306 + $0x68] sm:$0xff] %v6421
        %6998 = vst [vmem:[%s306 + $0x70] sm:$0xff] %v6422
        %6999 = vst [vmem:[%s306 + $0x78] sm:$0xff] %v6423
        %7000 = vst [vmem:[%s306 + $0x80] sm:$0xff] %v6424
        %7001 = vst [vmem:[%s306 + $0x88] sm:$0xff] %v6425
        %7002 = vst [vmem:[%s306 + $0x90] sm:$0xff] %v6426
        %7003 = vst [vmem:[%s306 + $0x98] sm:$0xff] %v6427
        %7004 = vst [vmem:[%s306 + $0xa0] sm:$0xff] %v6428
        %7005 = vst [vmem:[%s306 + $0xa8] sm:$0xff] %v6429
        %7006 = vst [vmem:[%s306 + $0xb0] sm:$0xff] %v6430
        %7007 = vst [vmem:[%s306 + $0xb8] sm:$0xff] %v6431
        %7008 = vst [vmem:[%s306 + $0xc0] sm:$0xff] %v6432
        %7009 = vst [vmem:[%s306 + $0xc8] sm:$0xff] %v6433
        %7010 = vst [vmem:[%s306 + $0xd0] sm:$0xff] %v6434
        %7011 = vst [vmem:[%s306 + $0xd8] sm:$0xff] %v6435
        %7012 = vst [vmem:[%s306 + $0xe0] sm:$0xff] %v6436
        %7013 = vst [vmem:[%s306 + $0xe8] sm:$0xff] %v6437
        %7014 = vst [vmem:[%s306 + $0xf0] sm:$0xff] %v6438
        %7015 = vst [vmem:[%s306 + $0xf8] sm:$0xff] %v6439
        %7016 = vst [vmem:[%s306 + $0x100] sm:$0xff] %v6440
        %7017 = vst [vmem:[%s306 + $0x108] sm:$0xff] %v6441
        %7018 = vst [vmem:[%s306 + $0x110] sm:$0xff] %v6442
        %7019 = vst [vmem:[%s306 + $0x118] sm:$0xff] %v6443
        %7020 = vst [vmem:[%s306 + $0x120] sm:$0xff] %v6444
        %7021 = vst [vmem:[%s306 + $0x128] sm:$0xff] %v6445
        %7022 = vst [vmem:[%s306 + $0x130] sm:$0xff] %v6446
        %7023 = vst [vmem:[%s306 + $0x138] sm:$0xff] %v6447
        %7024 = vst [vmem:[%s306 + $0x140] sm:$0xff] %v6448
        %7025 = vst [vmem:[%s306 + $0x148] sm:$0xff] %v6449
        %7026 = vst [vmem:[%s306 + $0x150] sm:$0xff] %v6450
        %7027 = vst [vmem:[%s306 + $0x158] sm:$0xff] %v6451
        %7028 = vst [vmem:[%s306 + $0x160] sm:$0xff] %v6452
        %7029 = vst [vmem:[%s306 + $0x168] sm:$0xff] %v6453
        %7030 = vst [vmem:[%s306 + $0x170] sm:$0xff] %v6454
        %7031 = vst [vmem:[%s306 + $0x178] sm:$0xff] %v6455
        %7032 = vst [vmem:[%s306 + $0x180] sm:$0xff] %v6456
        %7033 = vst [vmem:[%s306 + $0x188] sm:$0xff] %v6457
        %7034 = vst [vmem:[%s306 + $0x190] sm:$0xff] %v6458
        %7035 = vst [vmem:[%s306 + $0x198] sm:$0xff] %v6459
        %7036 = vst [vmem:[%s306 + $0x1a0] sm:$0xff] %v6460
        %7037 = vst [vmem:[%s306 + $0x1a8] sm:$0xff] %v6461
        %7038 = vst [vmem:[%s306 + $0x1b0] sm:$0xff] %v6462
        %7039 = vst [vmem:[%s306 + $0x1b8] sm:$0xff] %v6463
        %7040 = vst [vmem:[%s306 + $0x1c0] sm:$0xff] %v6464
        %7041 = vst [vmem:[%s306 + $0x1c8] sm:$0xff] %v6465
        %7042 = vst [vmem:[%s306 + $0x1d0] sm:$0xff] %v6466
        %7043 = vst [vmem:[%s306 + $0x1d8] sm:$0xff] %v6467
        %7044 = vst [vmem:[%s306 + $0x1e0] sm:$0xff] %v6468
        %7045 = vst [vmem:[%s306 + $0x1e8] sm:$0xff] %v6469
        %7046 = vst [vmem:[%s306 + $0x1f0] sm:$0xff] %v6470
        %7047 = vst [vmem:[%s306 + $0x1f8] sm:$0xff] %v6471
        %7048 = vst [vmem:[%s306 + $0x200] sm:$0xff] %v6472
        %7049 = vst [vmem:[%s306 + $0x208] sm:$0xff] %v6473
        %7050 = vst [vmem:[%s306 + $0x210] sm:$0xff] %v6474
        %7051 = vst [vmem:[%s306 + $0x218] sm:$0xff] %v6475
        %7052 = vst [vmem:[%s306 + $0x220] sm:$0xff] %v6476
        %7053 = vst [vmem:[%s306 + $0x228] sm:$0xff] %v6477
        %7054 = vst [vmem:[%s306 + $0x230] sm:$0xff] %v6478
        %7055 = vst [vmem:[%s306 + $0x238] sm:$0xff] %v6479
        %7056 = vst [vmem:[%s306 + $0x240] sm:$0xff] %v6480
        %7057 = vst [vmem:[%s306 + $0x248] sm:$0xff] %v6481
        %7058 = vst [vmem:[%s306 + $0x250] sm:$0xff] %v6482
        %7059 = vst [vmem:[%s306 + $0x258] sm:$0xff] %v6483
        %7060 = vst [vmem:[%s306 + $0x260] sm:$0xff] %v6484
        %7061 = vst [vmem:[%s306 + $0x268] sm:$0xff] %v6485
        %7062 = vst [vmem:[%s306 + $0x270] sm:$0xff] %v6486
        %7063 = vst [vmem:[%s306 + $0x278] sm:$0xff] %v6487
        %7064 = vst [vmem:[%s306 + $0x280] sm:$0xff] %v6488
        %7065 = vst [vmem:[%s306 + $0x288] sm:$0xff] %v6489
        %7066 = vst [vmem:[%s306 + $0x290] sm:$0xff] %v6490
        %7067 = vst [vmem:[%s306 + $0x298] sm:$0xff] %v6491
        %7068 = vst [vmem:[%s306 + $0x2a0] sm:$0xff] %v6492
        %7069 = vst [vmem:[%s306 + $0x2a8] sm:$0xff] %v6493
        %7070 = vst [vmem:[%s306 + $0x2b0] sm:$0xff] %v6494
        %7071 = vst [vmem:[%s306 + $0x2b8] sm:$0xff] %v6495
        %7072 = vst [vmem:[%s306 + $0x2c0] sm:$0xff] %v6496
        %7073 = vst [vmem:[%s306 + $0x2c8] sm:$0xff] %v6497
        %7074 = vst [vmem:[%s306 + $0x2d0] sm:$0xff] %v6498
        %7075 = vst [vmem:[%s306 + $0x2d8] sm:$0xff] %v6499
        %7076 = vst [vmem:[%s306 + $0x2e0] sm:$0xff] %v6500
        %7077 = vst [vmem:[%s306 + $0x2e8] sm:$0xff] %v6501
        %7078 = vst [vmem:[%s306 + $0x2f0] sm:$0xff] %v6502
        %7079 = vst [vmem:[%s306 + $0x2f8] sm:$0xff] %v6503
        %7080 = vst [vmem:[%s306 + $0x300] sm:$0xff] %v6504
        %7081 = vst [vmem:[%s306 + $0x308] sm:$0xff] %v6505
        %7082 = vst [vmem:[%s306 + $0x310] sm:$0xff] %v6506
        %7083 = vst [vmem:[%s306 + $0x318] sm:$0xff] %v6507
        %7084 = vst [vmem:[%s306 + $0x320] sm:$0xff] %v6508
        %7085 = vst [vmem:[%s306 + $0x328] sm:$0xff] %v6509
        %7086 = vst [vmem:[%s306 + $0x330] sm:$0xff] %v6510
        %7087 = vst [vmem:[%s306 + $0x338] sm:$0xff] %v6511
        %7088 = vst [vmem:[%s306 + $0x340] sm:$0xff] %v6512
        %7089 = vst [vmem:[%s306 + $0x348] sm:$0xff] %v6513
        %7090 = vst [vmem:[%s306 + $0x350] sm:$0xff] %v6514
        %7091 = vst [vmem:[%s306 + $0x358] sm:$0xff] %v6515
        %7092 = vst [vmem:[%s306 + $0x360] sm:$0xff] %v6516
        %7093 = vst [vmem:[%s306 + $0x368] sm:$0xff] %v6517
        %7094 = vst [vmem:[%s306 + $0x370] sm:$0xff] %v6518
        %7095 = vst [vmem:[%s306 + $0x378] sm:$0xff] %v6519
        %7096 = vst [vmem:[%s306 + $0x380] sm:$0xff] %v6520
        %7097 = vst [vmem:[%s306 + $0x388] sm:$0xff] %v6521
        %7098 = vst [vmem:[%s306 + $0x390] sm:$0xff] %v6522
        %7099 = vst [vmem:[%s306 + $0x398] sm:$0xff] %v6523
        %7100 = vst [vmem:[%s306 + $0x3a0] sm:$0xff] %v6524
        %7101 = vst [vmem:[%s306 + $0x3a8] sm:$0xff] %v6525
        %7102 = vst [vmem:[%s306 + $0x3b0] sm:$0xff] %v6526
        %7103 = vst [vmem:[%s306 + $0x3b8] sm:$0xff] %v6527
        %7104 = vst [vmem:[%s306 + $0x3c0] sm:$0xff] %v6528
        %7105 = vst [vmem:[%s306 + $0x3c8] sm:$0xff] %v6529
        %7106 = vst [vmem:[%s306 + $0x3d0] sm:$0xff] %v6530
        %7107 = vst [vmem:[%s306 + $0x3d8] sm:$0xff] %v6531
        %7108 = vst [vmem:[%s306 + $0x3e0] sm:$0xff] %v6532
        %7109 = vst [vmem:[%s306 + $0x3e8] sm:$0xff] %v6533
        %7110 = vst [vmem:[%s306 + $0x3f0] sm:$0xff] %v6534
        %7111 = vst [vmem:[%s306 + $0x3f8] sm:$0xff] %v6535
        %7112 = vst [vmem:[%s306 + $0x400] sm:$0xff] %v6536
        %7113 = vst [vmem:[%s306 + $0x408] sm:$0xff] %v6537
        %7114 = vst [vmem:[%s306 + $0x410] sm:$0xff] %v6538
        %7115 = vst [vmem:[%s306 + $0x418] sm:$0xff] %v6539
        %7116 = vst [vmem:[%s306 + $0x420] sm:$0xff] %v6540
        %7117 = vst [vmem:[%s306 + $0x428] sm:$0xff] %v6541
        %7118 = vst [vmem:[%s306 + $0x430] sm:$0xff] %v6542
        %7119 = vst [vmem:[%s306 + $0x438] sm:$0xff] %v6543
        %7120 = vst [vmem:[%s306 + $0x440] sm:$0xff] %v6544
        %7121 = vst [vmem:[%s306 + $0x448] sm:$0xff] %v6545
        %7122 = vst [vmem:[%s306 + $0x450] sm:$0xff] %v6546
        %7123 = vst [vmem:[%s306 + $0x458] sm:$0xff] %v6547
        %7124 = vst [vmem:[%s306 + $0x460] sm:$0xff] %v6548
        %7125 = vst [vmem:[%s306 + $0x468] sm:$0xff] %v6549
        %7126 = vst [vmem:[%s306 + $0x470] sm:$0xff] %v6550
        %7127 = vst [vmem:[%s306 + $0x478] sm:$0xff] %v6551
        %7128 = vst [vmem:[%s306 + $0x480] sm:$0xff] %v6552
        %7129 = vst [vmem:[%s306 + $0x488] sm:$0xff] %v6553
        %7130 = vst [vmem:[%s306 + $0x490] sm:$0xff] %v6554
        %7131 = vst [vmem:[%s306 + $0x498] sm:$0xff] %v6555
        %7132 = vst [vmem:[%s306 + $0x4a0] sm:$0xff] %v6556
        %7133 = vst [vmem:[%s306 + $0x4a8] sm:$0xff] %v6557
        %7134 = vst [vmem:[%s306 + $0x4b0] sm:$0xff] %v6558
        %7135 = vst [vmem:[%s306 + $0x4b8] sm:$0xff] %v6559
        %7136 = vst [vmem:[%s306 + $0x4c0] sm:$0xff] %v6560
        %7137 = vst [vmem:[%s306 + $0x4c8] sm:$0xff] %v6561
        %7138 = vst [vmem:[%s306 + $0x4d0] sm:$0xff] %v6562
        %7139 = vst [vmem:[%s306 + $0x4d8] sm:$0xff] %v6563
        %7140 = vst [vmem:[%s306 + $0x4e0] sm:$0xff] %v6564
        %7141 = vst [vmem:[%s306 + $0x4e8] sm:$0xff] %v6565
        %7142 = vst [vmem:[%s306 + $0x4f0] sm:$0xff] %v6566
        %7143 = vst [vmem:[%s306 + $0x4f8] sm:$0xff] %v6567
        %7144 = vst [vmem:[%s306 + $0x500] sm:$0xff] %v6568
        %7145 = vst [vmem:[%s306 + $0x508] sm:$0xff] %v6569
        %7146 = vst [vmem:[%s306 + $0x510] sm:$0xff] %v6570
        %7147 = vst [vmem:[%s306 + $0x518] sm:$0xff] %v6571
        %7148 = vst [vmem:[%s306 + $0x520] sm:$0xff] %v6572
        %7149 = vst [vmem:[%s306 + $0x528] sm:$0xff] %v6573
        %7150 = vst [vmem:[%s306 + $0x530] sm:$0xff] %v6574
        %7151 = vst [vmem:[%s306 + $0x538] sm:$0xff] %v6575
        %7152 = vst [vmem:[%s306 + $0x540] sm:$0xff] %v6576
        %7153 = vst [vmem:[%s306 + $0x548] sm:$0xff] %v6577
        %7154 = vst [vmem:[%s306 + $0x550] sm:$0xff] %v6578
        %7155 = vst [vmem:[%s306 + $0x558] sm:$0xff] %v6579
        %7156 = vst [vmem:[%s306 + $0x560] sm:$0xff] %v6580
        %7157 = vst [vmem:[%s306 + $0x568] sm:$0xff] %v6581
        %7158 = vst [vmem:[%s306 + $0x570] sm:$0xff] %v6582
        %7159 = vst [vmem:[%s306 + $0x578] sm:$0xff] %v6583
        %7160 = vst [vmem:[%s306 + $0x580] sm:$0xff] %v6584
        %7161 = vst [vmem:[%s306 + $0x588] sm:$0xff] %v6585
        %7162 = vst [vmem:[%s306 + $0x590] sm:$0xff] %v6586
        %7163 = vst [vmem:[%s306 + $0x598] sm:$0xff] %v6587
        %7164 = vst [vmem:[%s306 + $0x5a0] sm:$0xff] %v6588
        %7165 = vst [vmem:[%s306 + $0x5a8] sm:$0xff] %v6589
        %7166 = vst [vmem:[%s306 + $0x5b0] sm:$0xff] %v6590
        %7167 = vst [vmem:[%s306 + $0x5b8] sm:$0xff] %v6591
        %7168 = vst [vmem:[%s306 + $0x5c0] sm:$0xff] %v6592
        %7169 = vst [vmem:[%s306 + $0x5c8] sm:$0xff] %v6593
        %7170 = vst [vmem:[%s306 + $0x5d0] sm:$0xff] %v6594
        %7171 = vst [vmem:[%s306 + $0x5d8] sm:$0xff] %v6595
        %7172 = vst [vmem:[%s306 + $0x5e0] sm:$0xff] %v6596
        %7173 = vst [vmem:[%s306 + $0x5e8] sm:$0xff] %v6597
        %7174 = vst [vmem:[%s306 + $0x5f0] sm:$0xff] %v6598
        %7175 = vst [vmem:[%s306 + $0x5f8] sm:$0xff] %v6599
        %7176 = vst [vmem:[%s306 + $0x600] sm:$0xff] %v6600
        %7177 = vst [vmem:[%s306 + $0x608] sm:$0xff] %v6601
        %7178 = vst [vmem:[%s306 + $0x610] sm:$0xff] %v6602
        %7179 = vst [vmem:[%s306 + $0x618] sm:$0xff] %v6603
        %7180 = vst [vmem:[%s306 + $0x620] sm:$0xff] %v6604
        %7181 = vst [vmem:[%s306 + $0x628] sm:$0xff] %v6605
        %7182 = vst [vmem:[%s306 + $0x630] sm:$0xff] %v6606
        %7183 = vst [vmem:[%s306 + $0x638] sm:$0xff] %v6607
        %7184 = vst [vmem:[%s306 + $0x640] sm:$0xff] %v6608
        %7185 = vst [vmem:[%s306 + $0x648] sm:$0xff] %v6609
        %7186 = vst [vmem:[%s306 + $0x650] sm:$0xff] %v6610
        %7187 = vst [vmem:[%s306 + $0x658] sm:$0xff] %v6611
        %7188 = vst [vmem:[%s306 + $0x660] sm:$0xff] %v6612
        %7189 = vst [vmem:[%s306 + $0x668] sm:$0xff] %v6613
        %7190 = vst [vmem:[%s306 + $0x670] sm:$0xff] %v6614
        %7191 = vst [vmem:[%s306 + $0x678] sm:$0xff] %v6615
        %7192 = vst [vmem:[%s306 + $0x680] sm:$0xff] %v6616
        %7193 = vst [vmem:[%s306 + $0x688] sm:$0xff] %v6617
        %7194 = vst [vmem:[%s306 + $0x690] sm:$0xff] %v6618
        %7195 = vst [vmem:[%s306 + $0x698] sm:$0xff] %v6619
        %7196 = vst [vmem:[%s306 + $0x6a0] sm:$0xff] %v6620
        %7197 = vst [vmem:[%s306 + $0x6a8] sm:$0xff] %v6621
        %7198 = vst [vmem:[%s306 + $0x6b0] sm:$0xff] %v6622
        %7199 = vst [vmem:[%s306 + $0x6b8] sm:$0xff] %v6623
        %7200 = vst [vmem:[%s306 + $0x6c0] sm:$0xff] %v6624
        %7201 = vst [vmem:[%s306 + $0x6c8] sm:$0xff] %v6625
        %7202 = vst [vmem:[%s306 + $0x6d0] sm:$0xff] %v6626
        %7203 = vst [vmem:[%s306 + $0x6d8] sm:$0xff] %v6627
        %7204 = vst [vmem:[%s306 + $0x6e0] sm:$0xff] %v6628
        %7205 = vst [vmem:[%s306 + $0x6e8] sm:$0xff] %v6629
        %7206 = vst [vmem:[%s306 + $0x6f0] sm:$0xff] %v6630
        %7207 = vst [vmem:[%s306 + $0x6f8] sm:$0xff] %v6631
        %7208 = vst [vmem:[%s306 + $0x700] sm:$0xff] %v6632
        %7209 = vst [vmem:[%s306 + $0x708] sm:$0xff] %v6633
        %7210 = vst [vmem:[%s306 + $0x710] sm:$0xff] %v6634
        %7211 = vst [vmem:[%s306 + $0x718] sm:$0xff] %v6635
        %7212 = vst [vmem:[%s306 + $0x720] sm:$0xff] %v6636
        %7213 = vst [vmem:[%s306 + $0x728] sm:$0xff] %v6637
        %7214 = vst [vmem:[%s306 + $0x730] sm:$0xff] %v6638
        %7215 = vst [vmem:[%s306 + $0x738] sm:$0xff] %v6639
        %7216 = vst [vmem:[%s306 + $0x740] sm:$0xff] %v6640
        %7217 = vst [vmem:[%s306 + $0x748] sm:$0xff] %v6641
        %7218 = vst [vmem:[%s306 + $0x750] sm:$0xff] %v6642
        %7219 = vst [vmem:[%s306 + $0x758] sm:$0xff] %v6643
        %7220 = vst [vmem:[%s306 + $0x760] sm:$0xff] %v6644
        %7221 = vst [vmem:[%s306 + $0x768] sm:$0xff] %v6645
        %7222 = vst [vmem:[%s306 + $0x770] sm:$0xff] %v6646
        %7223 = vst [vmem:[%s306 + $0x778] sm:$0xff] %v6647
        %7224 = vst [vmem:[%s306 + $0x780] sm:$0xff] %v6648
        %7225 = vst [vmem:[%s306 + $0x788] sm:$0xff] %v6649
        %7226 = vst [vmem:[%s306 + $0x790] sm:$0xff] %v6650
        %7227 = vst [vmem:[%s306 + $0x798] sm:$0xff] %v6651
        %7228 = vst [vmem:[%s306 + $0x7a0] sm:$0xff] %v6652
        %7229 = vst [vmem:[%s306 + $0x7a8] sm:$0xff] %v6653
        %7230 = vst [vmem:[%s306 + $0x7b0] sm:$0xff] %v6654
        %7231 = vst [vmem:[%s306 + $0x7b8] sm:$0xff] %v6655
        %7232 = vst [vmem:[%s306 + $0x7c0] sm:$0xff] %v6656
        %7233 = vst [vmem:[%s306 + $0x7c8] sm:$0xff] %v6657
        %7234 = vst [vmem:[%s306 + $0x7d0] sm:$0xff] %v6658
        %7235 = vst [vmem:[%s306 + $0x7d8] sm:$0xff] %v6659
        %7236 = vst [vmem:[%s306 + $0x7e0] sm:$0xff] %v6660
        %7237 = vst [vmem:[%s306 + $0x7e8] sm:$0xff] %v6661
        %7238 = vst [vmem:[%s306 + $0x7f0] sm:$0xff] %v6662
        %7239 = vst [vmem:[%s306 + $0x7f8] sm:$0xff] %v6663
        %7240 = vst [vmem:[%s306 + $0x800] sm:$0xff] %v6664
        %7241 = vst [vmem:[%s306 + $0x808] sm:$0xff] %v6665
        %7242 = vst [vmem:[%s306 + $0x810] sm:$0xff] %v6666
        %7243 = vst [vmem:[%s306 + $0x818] sm:$0xff] %v6667
        %7244 = vst [vmem:[%s306 + $0x820] sm:$0xff] %v6668
        %7245 = vst [vmem:[%s306 + $0x828] sm:$0xff] %v6669
        %7246 = vst [vmem:[%s306 + $0x830] sm:$0xff] %v6670
        %7247 = vst [vmem:[%s306 + $0x838] sm:$0xff] %v6671
        %7248 = vst [vmem:[%s306 + $0x840] sm:$0xff] %v6672
        %7249 = vst [vmem:[%s306 + $0x848] sm:$0xff] %v6673
        %7250 = vst [vmem:[%s306 + $0x850] sm:$0xff] %v6674
        %7251 = vst [vmem:[%s306 + $0x858] sm:$0xff] %v6675
        %7252 = vst [vmem:[%s306 + $0x860] sm:$0xff] %v6676
        %7253 = vst [vmem:[%s306 + $0x868] sm:$0xff] %v6677
        %7254 = vst [vmem:[%s306 + $0x870] sm:$0xff] %v6678
        %7255 = vst [vmem:[%s306 + $0x878] sm:$0xff] %v6679
        %7256 = vst [vmem:[%s306 + $0x880] sm:$0xff] %v6680
        %7257 = vst [vmem:[%s306 + $0x888] sm:$0xff] %v6681
        %7258 = vst [vmem:[%s306 + $0x890] sm:$0xff] %v6682
        %7259 = vst [vmem:[%s306 + $0x898] sm:$0xff] %v6683
        %7260 = vst [vmem:[%s306 + $0x8a0] sm:$0xff] %v6684
        %7261 = vst [vmem:[%s306 + $0x8a8] sm:$0xff] %v6685
        %7262 = vst [vmem:[%s306 + $0x8b0] sm:$0xff] %v6686
        %7263 = vst [vmem:[%s306 + $0x8b8] sm:$0xff] %v6687
        %7264 = vst [vmem:[%s306 + $0x8c0] sm:$0xff] %v6688
        %7265 = vst [vmem:[%s306 + $0x8c8] sm:$0xff] %v6689
        %7266 = vst [vmem:[%s306 + $0x8d0] sm:$0xff] %v6690
        %7267 = vst [vmem:[%s306 + $0x8d8] sm:$0xff] %v6691
        %7268 = vst [vmem:[%s306 + $0x8e0] sm:$0xff] %v6692
        %7269 = vst [vmem:[%s306 + $0x8e8] sm:$0xff] %v6693
        %7270 = vst [vmem:[%s306 + $0x8f0] sm:$0xff] %v6694
        %7271 = vst [vmem:[%s306 + $0x8f8] sm:$0xff] %v6695
        %7272 = vst [vmem:[%s306 + $0x900] sm:$0xff] %v6696
        %7273 = vst [vmem:[%s306 + $0x908] sm:$0xff] %v6697
        %7274 = vst [vmem:[%s306 + $0x910] sm:$0xff] %v6698
        %7275 = vst [vmem:[%s306 + $0x918] sm:$0xff] %v6699
        %7276 = vst [vmem:[%s306 + $0x920] sm:$0xff] %v6700
        %7277 = vst [vmem:[%s306 + $0x928] sm:$0xff] %v6701
        %7278 = vst [vmem:[%s306 + $0x930] sm:$0xff] %v6702
        %7279 = vst [vmem:[%s306 + $0x938] sm:$0xff] %v6703
        %7280 = vst [vmem:[%s306 + $0x940] sm:$0xff] %v6704
        %7281 = vst [vmem:[%s306 + $0x948] sm:$0xff] %v6705
        %7282 = vst [vmem:[%s306 + $0x950] sm:$0xff] %v6706
        %7283 = vst [vmem:[%s306 + $0x958] sm:$0xff] %v6707
        %7284 = vst [vmem:[%s306 + $0x960] sm:$0xff] %v6708
        %7285 = vst [vmem:[%s306 + $0x968] sm:$0xff] %v6709
        %7286 = vst [vmem:[%s306 + $0x970] sm:$0xff] %v6710
        %7287 = vst [vmem:[%s306 + $0x978] sm:$0xff] %v6711
        %7288 = vst [vmem:[%s306 + $0x980] sm:$0xff] %v6712
        %7289 = vst [vmem:[%s306 + $0x988] sm:$0xff] %v6713
        %7290 = vst [vmem:[%s306 + $0x990] sm:$0xff] %v6714
        %7291 = vst [vmem:[%s306 + $0x998] sm:$0xff] %v6715
        %7292 = vst [vmem:[%s306 + $0x9a0] sm:$0xff] %v6716
        %7293 = vst [vmem:[%s306 + $0x9a8] sm:$0xff] %v6717
        %7294 = vst [vmem:[%s306 + $0x9b0] sm:$0xff] %v6718
        %7295 = vst [vmem:[%s306 + $0x9b8] sm:$0xff] %v6719
        %7296 = vst [vmem:[%s306 + $0x9c0] sm:$0xff] %v6720
        %7297 = vst [vmem:[%s306 + $0x9c8] sm:$0xff] %v6721
        %7298 = vst [vmem:[%s306 + $0x9d0] sm:$0xff] %v6722
        %7299 = vst [vmem:[%s306 + $0x9d8] sm:$0xff] %v6723
        %7300 = vst [vmem:[%s306 + $0x9e0] sm:$0xff] %v6724
        %7301 = vst [vmem:[%s306 + $0x9e8] sm:$0xff] %v6725
        %7302 = vst [vmem:[%s306 + $0x9f0] sm:$0xff] %v6726
        %7303 = vst [vmem:[%s306 + $0x9f8] sm:$0xff] %v6727
        %7304 = vst [vmem:[%s306 + $0xa00] sm:$0xff] %v6728
        %7305 = vst [vmem:[%s306 + $0xa08] sm:$0xff] %v6729
        %7306 = vst [vmem:[%s306 + $0xa10] sm:$0xff] %v6730
        %7307 = vst [vmem:[%s306 + $0xa18] sm:$0xff] %v6731
        %7308 = vst [vmem:[%s306 + $0xa20] sm:$0xff] %v6732
        %7309 = vst [vmem:[%s306 + $0xa28] sm:$0xff] %v6733
        %7310 = vst [vmem:[%s306 + $0xa30] sm:$0xff] %v6734
        %7311 = vst [vmem:[%s306 + $0xa38] sm:$0xff] %v6735
        %7312 = vst [vmem:[%s306 + $0xa40] sm:$0xff] %v6736
        %7313 = vst [vmem:[%s306 + $0xa48] sm:$0xff] %v6737
        %7314 = vst [vmem:[%s306 + $0xa50] sm:$0xff] %v6738
        %7315 = vst [vmem:[%s306 + $0xa58] sm:$0xff] %v6739
        %7316 = vst [vmem:[%s306 + $0xa60] sm:$0xff] %v6740
        %7317 = vst [vmem:[%s306 + $0xa68] sm:$0xff] %v6741
        %7318 = vst [vmem:[%s306 + $0xa70] sm:$0xff] %v6742
        %7319 = vst [vmem:[%s306 + $0xa78] sm:$0xff] %v6743
        %7320 = vst [vmem:[%s306 + $0xa80] sm:$0xff] %v6744
        %7321 = vst [vmem:[%s306 + $0xa88] sm:$0xff] %v6745
        %7322 = vst [vmem:[%s306 + $0xa90] sm:$0xff] %v6746
        %7323 = vst [vmem:[%s306 + $0xa98] sm:$0xff] %v6747
        %7324 = vst [vmem:[%s306 + $0xaa0] sm:$0xff] %v6748
        %7325 = vst [vmem:[%s306 + $0xaa8] sm:$0xff] %v6749
        %7326 = vst [vmem:[%s306 + $0xab0] sm:$0xff] %v6750
        %7327 = vst [vmem:[%s306 + $0xab8] sm:$0xff] %v6751
        %7328 = vst [vmem:[%s306 + $0xac0] sm:$0xff] %v6752
        %7329 = vst [vmem:[%s306 + $0xac8] sm:$0xff] %v6753
        %7330 = vst [vmem:[%s306 + $0xad0] sm:$0xff] %v6754
        %7331 = vst [vmem:[%s306 + $0xad8] sm:$0xff] %v6755
        %7332 = vst [vmem:[%s306 + $0xae0] sm:$0xff] %v6756
        %7333 = vst [vmem:[%s306 + $0xae8] sm:$0xff] %v6757
        %7334 = vst [vmem:[%s306 + $0xaf0] sm:$0xff] %v6758
        %7335 = vst [vmem:[%s306 + $0xaf8] sm:$0xff] %v6759
        %7336 = vst [vmem:[%s306 + $0xb00] sm:$0xff] %v6760
        %7337 = vst [vmem:[%s306 + $0xb08] sm:$0xff] %v6761
        %7338 = vst [vmem:[%s306 + $0xb10] sm:$0xff] %v6762
        %7339 = vst [vmem:[%s306 + $0xb18] sm:$0xff] %v6763
        %7340 = vst [vmem:[%s306 + $0xb20] sm:$0xff] %v6764
        %7341 = vst [vmem:[%s306 + $0xb28] sm:$0xff] %v6765
        %7342 = vst [vmem:[%s306 + $0xb30] sm:$0xff] %v6766
        %7343 = vst [vmem:[%s306 + $0xb38] sm:$0xff] %v6767
        %7344 = vst [vmem:[%s306 + $0xb40] sm:$0xff] %v6768
        %7345 = vst [vmem:[%s306 + $0xb48] sm:$0xff] %v6769
        %7346 = vst [vmem:[%s306 + $0xb50] sm:$0xff] %v6770
        %7347 = vst [vmem:[%s306 + $0xb58] sm:$0xff] %v6771
        %7348 = vst [vmem:[%s306 + $0xb60] sm:$0xff] %v6772
        %7349 = vst [vmem:[%s306 + $0xb68] sm:$0xff] %v6773
        %7350 = vst [vmem:[%s306 + $0xb70] sm:$0xff] %v6774
        %7351 = vst [vmem:[%s306 + $0xb78] sm:$0xff] %v6775
        %7352 = vst [vmem:[%s306 + $0xb80] sm:$0xff] %v6776
        %7353 = vst [vmem:[%s306 + $0xb88] sm:$0xff] %v6777
        %7354 = vst [vmem:[%s306 + $0xb90] sm:$0xff] %v6778
        %7355 = vst [vmem:[%s306 + $0xb98] sm:$0xff] %v6779
        %7356 = vst [vmem:[%s306 + $0xba0] sm:$0xff] %v6780
        %7357 = vst [vmem:[%s306 + $0xba8] sm:$0xff] %v6781
        %7358 = vst [vmem:[%s306 + $0xbb0] sm:$0xff] %v6782
        %7359 = vst [vmem:[%s306 + $0xbb8] sm:$0xff] %v6783
        %7360 = vst [vmem:[%s306 + $0xbc0] sm:$0xff] %v6784
        %7361 = vst [vmem:[%s306 + $0xbc8] sm:$0xff] %v6785
        %7362 = vst [vmem:[%s306 + $0xbd0] sm:$0xff] %v6786
        %7363 = vst [vmem:[%s306 + $0xbd8] sm:$0xff] %v6787
        %7364 = vst [vmem:[%s306 + $0xbe0] sm:$0xff] %v6788
        %7365 = vst [vmem:[%s306 + $0xbe8] sm:$0xff] %v6789
        %7366 = vst [vmem:[%s306 + $0xbf0] sm:$0xff] %v6790
        %7367 = vst [vmem:[%s306 + $0xbf8] sm:$0xff] %v6791
        %7368 = vst [vmem:[%s306 + $0xc00] sm:$0xff] %v6792
        %7369 = vst [vmem:[%s306 + $0xc08] sm:$0xff] %v6793
        %7370 = vst [vmem:[%s306 + $0xc10] sm:$0xff] %v6794
        %7371 = vst [vmem:[%s306 + $0xc18] sm:$0xff] %v6795
        %7372 = vst [vmem:[%s306 + $0xc20] sm:$0xff] %v6796
        %7373 = vst [vmem:[%s306 + $0xc28] sm:$0xff] %v6797
        %7374 = vst [vmem:[%s306 + $0xc30] sm:$0xff] %v6798
        %7375 = vst [vmem:[%s306 + $0xc38] sm:$0xff] %v6799
        %7376 = vst [vmem:[%s306 + $0xc40] sm:$0xff] %v6800
        %7377 = vst [vmem:[%s306 + $0xc48] sm:$0xff] %v6801
        %7378 = vst [vmem:[%s306 + $0xc50] sm:$0xff] %v6802
        %7379 = vst [vmem:[%s306 + $0xc58] sm:$0xff] %v6803
        %7380 = vst [vmem:[%s306 + $0xc60] sm:$0xff] %v6804
        %7381 = vst [vmem:[%s306 + $0xc68] sm:$0xff] %v6805
        %7382 = vst [vmem:[%s306 + $0xc70] sm:$0xff] %v6806
        %7383 = vst [vmem:[%s306 + $0xc78] sm:$0xff] %v6807
        %7384 = vst [vmem:[%s306 + $0xc80] sm:$0xff] %v6808
        %7385 = vst [vmem:[%s306 + $0xc88] sm:$0xff] %v6809
        %7386 = vst [vmem:[%s306 + $0xc90] sm:$0xff] %v6810
        %7387 = vst [vmem:[%s306 + $0xc98] sm:$0xff] %v6811
        %7388 = vst [vmem:[%s306 + $0xca0] sm:$0xff] %v6812
        %7389 = vst [vmem:[%s306 + $0xca8] sm:$0xff] %v6813
        %7390 = vst [vmem:[%s306 + $0xcb0] sm:$0xff] %v6814
        %7391 = vst [vmem:[%s306 + $0xcb8] sm:$0xff] %v6815
        %7392 = vst [vmem:[%s306 + $0xcc0] sm:$0xff] %v6816
        %7393 = vst [vmem:[%s306 + $0xcc8] sm:$0xff] %v6817
        %7394 = vst [vmem:[%s306 + $0xcd0] sm:$0xff] %v6818
        %7395 = vst [vmem:[%s306 + $0xcd8] sm:$0xff] %v6819
        %7396 = vst [vmem:[%s306 + $0xce0] sm:$0xff] %v6820
        %7397 = vst [vmem:[%s306 + $0xce8] sm:$0xff] %v6821
        %7398 = vst [vmem:[%s306 + $0xcf0] sm:$0xff] %v6822
        %7399 = vst [vmem:[%s306 + $0xcf8] sm:$0xff] %v6823
        %7400 = vst [vmem:[%s306 + $0xd00] sm:$0xff] %v6824
        %7401 = vst [vmem:[%s306 + $0xd08] sm:$0xff] %v6825
        %7402 = vst [vmem:[%s306 + $0xd10] sm:$0xff] %v6826
        %7403 = vst [vmem:[%s306 + $0xd18] sm:$0xff] %v6827
        %7404 = vst [vmem:[%s306 + $0xd20] sm:$0xff] %v6828
        %7405 = vst [vmem:[%s306 + $0xd28] sm:$0xff] %v6829
        %7406 = vst [vmem:[%s306 + $0xd30] sm:$0xff] %v6830
        %7407 = vst [vmem:[%s306 + $0xd38] sm:$0xff] %v6831
        %7408 = vst [vmem:[%s306 + $0xd40] sm:$0xff] %v6832
        %7409 = vst [vmem:[%s306 + $0xd48] sm:$0xff] %v6833
        %7410 = vst [vmem:[%s306 + $0xd50] sm:$0xff] %v6834
        %7411 = vst [vmem:[%s306 + $0xd58] sm:$0xff] %v6835
        %7412 = vst [vmem:[%s306 + $0xd60] sm:$0xff] %v6836
        %7413 = vst [vmem:[%s306 + $0xd68] sm:$0xff] %v6837
        %7414 = vst [vmem:[%s306 + $0xd70] sm:$0xff] %v6838
        %7415 = vst [vmem:[%s306 + $0xd78] sm:$0xff] %v6839
        %7416 = vst [vmem:[%s306 + $0xd80] sm:$0xff] %v6840
        %7417 = vst [vmem:[%s306 + $0xd88] sm:$0xff] %v6841
        %7418 = vst [vmem:[%s306 + $0xd90] sm:$0xff] %v6842
        %7419 = vst [vmem:[%s306 + $0xd98] sm:$0xff] %v6843
        %7420 = vst [vmem:[%s306 + $0xda0] sm:$0xff] %v6844
        %7421 = vst [vmem:[%s306 + $0xda8] sm:$0xff] %v6845
        %7422 = vst [vmem:[%s306 + $0xdb0] sm:$0xff] %v6846
        %7423 = vst [vmem:[%s306 + $0xdb8] sm:$0xff] %v6847
        %7424 = vst [vmem:[%s306 + $0xdc0] sm:$0xff] %v6848
        %7425 = vst [vmem:[%s306 + $0xdc8] sm:$0xff] %v6849
        %7426 = vst [vmem:[%s306 + $0xdd0] sm:$0xff] %v6850
        %7427 = vst [vmem:[%s306 + $0xdd8] sm:$0xff] %v6851
        %7428 = vst [vmem:[%s306 + $0xde0] sm:$0xff] %v6852
        %7429 = vst [vmem:[%s306 + $0xde8] sm:$0xff] %v6853
        %7430 = vst [vmem:[%s306 + $0xdf0] sm:$0xff] %v6854
        %7431 = vst [vmem:[%s306 + $0xdf8] sm:$0xff] %v6855
        %7432 = vst [vmem:[%s306 + $0xe00] sm:$0xff] %v6856
        %7433 = vst [vmem:[%s306 + $0xe08] sm:$0xff] %v6857
        %7434 = vst [vmem:[%s306 + $0xe10] sm:$0xff] %v6858
        %7435 = vst [vmem:[%s306 + $0xe18] sm:$0xff] %v6859
        %7436 = vst [vmem:[%s306 + $0xe20] sm:$0xff] %v6860
        %7437 = vst [vmem:[%s306 + $0xe28] sm:$0xff] %v6861
        %7438 = vst [vmem:[%s306 + $0xe30] sm:$0xff] %v6862
        %7439 = vst [vmem:[%s306 + $0xe38] sm:$0xff] %v6863
        %7440 = vst [vmem:[%s306 + $0xe40] sm:$0xff] %v6864
        %7441 = vst [vmem:[%s306 + $0xe48] sm:$0xff] %v6865
        %7442 = vst [vmem:[%s306 + $0xe50] sm:$0xff] %v6866
        %7443 = vst [vmem:[%s306 + $0xe58] sm:$0xff] %v6867
        %7444 = vst [vmem:[%s306 + $0xe60] sm:$0xff] %v6868
        %7445 = vst [vmem:[%s306 + $0xe68] sm:$0xff] %v6869
        %7446 = vst [vmem:[%s306 + $0xe70] sm:$0xff] %v6870
        %7447 = vst [vmem:[%s306 + $0xe78] sm:$0xff] %v6871
        %7448 = vst [vmem:[%s306 + $0xe80] sm:$0xff] %v6872
        %7449 = vst [vmem:[%s306 + $0xe88] sm:$0xff] %v6873
        %7450 = vst [vmem:[%s306 + $0xe90] sm:$0xff] %v6874
        %7451 = vst [vmem:[%s306 + $0xe98] sm:$0xff] %v6875
        %7452 = vst [vmem:[%s306 + $0xea0] sm:$0xff] %v6876
        %7453 = vst [vmem:[%s306 + $0xea8] sm:$0xff] %v6877
        %7454 = vst [vmem:[%s306 + $0xeb0] sm:$0xff] %v6878
        %7455 = vst [vmem:[%s306 + $0xeb8] sm:$0xff] %v6879
        %7456 = vst [vmem:[%s306 + $0xec0] sm:$0xff] %v6880
        %7457 = vst [vmem:[%s306 + $0xec8] sm:$0xff] %v6881
        %7458 = vst [vmem:[%s306 + $0xed0] sm:$0xff] %v6882
        %7459 = vst [vmem:[%s306 + $0xed8] sm:$0xff] %v6883
        %7460 = vst [vmem:[%s306 + $0xee0] sm:$0xff] %v6884
        %7461 = vst [vmem:[%s306 + $0xee8] sm:$0xff] %v6885
        %7462 = vst [vmem:[%s306 + $0xef0] sm:$0xff] %v6886
        %7463 = vst [vmem:[%s306 + $0xef8] sm:$0xff] %v6887
        %7464 = vst [vmem:[%s306 + $0xf00] sm:$0xff] %v6888
        %7465 = vst [vmem:[%s306 + $0xf08] sm:$0xff] %v6889
        %7466 = vst [vmem:[%s306 + $0xf10] sm:$0xff] %v6890
        %7467 = vst [vmem:[%s306 + $0xf18] sm:$0xff] %v6891
        %7468 = vst [vmem:[%s306 + $0xf20] sm:$0xff] %v6892
        %7469 = vst [vmem:[%s306 + $0xf28] sm:$0xff] %v6893
        %7470 = vst [vmem:[%s306 + $0xf30] sm:$0xff] %v6894
        %7471 = vst [vmem:[%s306 + $0xf38] sm:$0xff] %v6895
        %7472 = vst [vmem:[%s306 + $0xf40] sm:$0xff] %v6896
        %7473 = vst [vmem:[%s306 + $0xf48] sm:$0xff] %v6897
        %7474 = vst [vmem:[%s306 + $0xf50] sm:$0xff] %v6898
        %7475 = vst [vmem:[%s306 + $0xf58] sm:$0xff] %v6899
        %7476 = vst [vmem:[%s306 + $0xf60] sm:$0xff] %v6900
        %7477 = vst [vmem:[%s306 + $0xf68] sm:$0xff] %v6901
        %7478 = vst [vmem:[%s306 + $0xf70] sm:$0xff] %v6902
        %7479 = vst [vmem:[%s306 + $0xf78] sm:$0xff] %v6903
        %7480 = vst [vmem:[%s306 + $0xf80] sm:$0xff] %v6904
        %7481 = vst [vmem:[%s306 + $0xf88] sm:$0xff] %v6905
        %7482 = vst [vmem:[%s306 + $0xf90] sm:$0xff] %v6906
        %7483 = vst [vmem:[%s306 + $0xf98] sm:$0xff] %v6907
        %7484 = vst [vmem:[%s306 + $0xfa0] sm:$0xff] %v6908
        %7485 = vst [vmem:[%s306 + $0xfa8] sm:$0xff] %v6909
        %7486 = vst [vmem:[%s306 + $0xfb0] sm:$0xff] %v6910
        %7487 = vst [vmem:[%s306 + $0xfb8] sm:$0xff] %v6911
        %7488 = vst [vmem:[%s306 + $0xfc0] sm:$0xff] %v6912
        %7489 = vst [vmem:[%s306 + $0xfc8] sm:$0xff] %v6913
        %7490 = vst [vmem:[%s306 + $0xfd0] sm:$0xff] %v6914
        %7491 = vst [vmem:[%s306 + $0xfd8] sm:$0xff] %v6915
        %7492 = vst [vmem:[%s306 + $0xfe0] sm:$0xff] %v6916
        %7493 = vst [vmem:[%s306 + $0xfe8] sm:$0xff] %v6917
        %7494 = vst [vmem:[%s306 + $0xff0] sm:$0xff] %v6918
        %7495 = vst [vmem:[%s306 + $0xff8] sm:$0xff] %v6919
        %7496 = vst [vmem:[%s306 + $0x1000] sm:$0xff] %v6920
        %7497 = vst [vmem:[%s306 + $0x1008] sm:$0xff] %v6921
        %7498 = vst [vmem:[%s306 + $0x1010] sm:$0xff] %v6922
        %7499 = vst [vmem:[%s306 + $0x1018] sm:$0xff] %v6923
        %7500 = vst [vmem:[%s306 + $0x1020] sm:$0xff] %v6924
        %7501 = vst [vmem:[%s306 + $0x1028] sm:$0xff] %v6925
        %7502 = vst [vmem:[%s306 + $0x1030] sm:$0xff] %v6926
        %7503 = vst [vmem:[%s306 + $0x1038] sm:$0xff] %v6927
        %7504 = vst [vmem:[%s306 + $0x1040] sm:$0xff] %v6928
        %7505 = vst [vmem:[%s306 + $0x1048] sm:$0xff] %v6929
        %7506 = vst [vmem:[%s306 + $0x1050] sm:$0xff] %v6930
        %7507 = vst [vmem:[%s306 + $0x1058] sm:$0xff] %v6931
        %7508 = vst [vmem:[%s306 + $0x1060] sm:$0xff] %v6932
        %7509 = vst [vmem:[%s306 + $0x1068] sm:$0xff] %v6933
        %7510 = vst [vmem:[%s306 + $0x1070] sm:$0xff] %v6934
        %7511 = vst [vmem:[%s306 + $0x1078] sm:$0xff] %v6935
        %7512 = vst [vmem:[%s306 + $0x1080] sm:$0xff] %v6936
        %7513 = vst [vmem:[%s306 + $0x1088] sm:$0xff] %v6937
        %7514 = vst [vmem:[%s306 + $0x1090] sm:$0xff] %v6938
        %7515 = vst [vmem:[%s306 + $0x1098] sm:$0xff] %v6939
        %7516 = vst [vmem:[%s306 + $0x10a0] sm:$0xff] %v6940
        %7517 = vst [vmem:[%s306 + $0x10a8] sm:$0xff] %v6941
        %7518 = vst [vmem:[%s306 + $0x10b0] sm:$0xff] %v6942
        %7519 = vst [vmem:[%s306 + $0x10b8] sm:$0xff] %v6943
        %7520 = vst [vmem:[%s306 + $0x10c0] sm:$0xff] %v6944
        %7521 = vst [vmem:[%s306 + $0x10c8] sm:$0xff] %v6945
        %7522 = vst [vmem:[%s306 + $0x10d0] sm:$0xff] %v6946
        %7523 = vst [vmem:[%s306 + $0x10d8] sm:$0xff] %v6947
        %7524 = vst [vmem:[%s306 + $0x10e0] sm:$0xff] %v6948
        %7525 = vst [vmem:[%s306 + $0x10e8] sm:$0xff] %v6949
        %7526 = vst [vmem:[%s306 + $0x10f0] sm:$0xff] %v6950
        %7527 = vst [vmem:[%s306 + $0x10f8] sm:$0xff] %v6951
        %7528 = vst [vmem:[%s306 + $0x1100] sm:$0xff] %v6952
        %7529 = vst [vmem:[%s306 + $0x1108] sm:$0xff] %v6953
        %7530 = vst [vmem:[%s306 + $0x1110] sm:$0xff] %v6954
        %7531 = vst [vmem:[%s306 + $0x1118] sm:$0xff] %v6955
        %7532 = vst [vmem:[%s306 + $0x1120] sm:$0xff] %v6956
        %7533 = vst [vmem:[%s306 + $0x1128] sm:$0xff] %v6957
        %7534 = vst [vmem:[%s306 + $0x1130] sm:$0xff] %v6958
        %7535 = vst [vmem:[%s306 + $0x1138] sm:$0xff] %v6959
        %7536 = vst [vmem:[%s306 + $0x1140] sm:$0xff] %v6960
        %7537 = vst [vmem:[%s306 + $0x1148] sm:$0xff] %v6961
        %7538 = vst [vmem:[%s306 + $0x1150] sm:$0xff] %v6962
        %7539 = vst [vmem:[%s306 + $0x1158] sm:$0xff] %v6963
        %7540 = vst [vmem:[%s306 + $0x1160] sm:$0xff] %v6964
        %7541 = vst [vmem:[%s306 + $0x1168] sm:$0xff] %v6965
        %7542 = vst [vmem:[%s306 + $0x1170] sm:$0xff] %v6966
        %7543 = vst [vmem:[%s306 + $0x1178] sm:$0xff] %v6967
        %7544 = vst [vmem:[%s306 + $0x1180] sm:$0xff] %v6968
        %7545 = vst [vmem:[%s306 + $0x1188] sm:$0xff] %v6969
        %7546 = vst [vmem:[%s306 + $0x1190] sm:$0xff] %v6970
        %7547 = vst [vmem:[%s306 + $0x1198] sm:$0xff] %v6971
        %7548 = vst [vmem:[%s306 + $0x11a0] sm:$0xff] %v6972
        %7549 = vst [vmem:[%s306 + $0x11a8] sm:$0xff] %v6973
        %7550 = vst [vmem:[%s306 + $0x11b0] sm:$0xff] %v6974
        %7551 = vst [vmem:[%s306 + $0x11b8] sm:$0xff] %v6975
        %7552 = vst [vmem:[%s306 + $0x11c0] sm:$0xff] %v6976
        %7553 = vst [vmem:[%s306 + $0x11c8] sm:$0xff] %v6977
        %7554 = vst [vmem:[%s306 + $0x11d0] sm:$0xff] %v6978
        %7555 = vst [vmem:[%s306 + $0x11d8] sm:$0xff] %v6979
        %7556 = vst [vmem:[%s306 + $0x11e0] sm:$0xff] %v6980
        %7557 = vst [vmem:[%s306 + $0x11e8] sm:$0xff] %v6981
        %7558 = vst [vmem:[%s306 + $0x11f0] sm:$0xff] %v6982
        %7559 = vst [vmem:[%s306 + $0x11f8] sm:$0xff] %v6983
        %s7560 = sand.u32 %s145, 1
        %s7561 = scalar_lea.sflag [#allocation4], %s7560
        %s7562 = sand.u32 %s145, 1
        %s7563 = smul.addr %s7562, 4608
        %s7564 = scalar_lea.vmem [#allocation10], %s7563
        // Predicated region
        $region53: #{_concat_conv1x1_pallas.1} parent=35 // pred_check
          %p7565 = pneg %p155
        $region54: #{_concat_conv1x1_pallas.1} parent=35 // pred_check_branch
          %7567 = sbr.rel (%p7565) target = $region56
        $region55: #{_concat_conv1x1_pallas.1} parent=35 // pred_region
          %s7568 = smul.u32 18, %s30
          %s7570 = ssub.s32 73728, 73728
          %7571 = vsyncadd %s7561, %s7570
          %s7572 = smul.addr %s29, 576
          %s7573 = sadd.s32 %s7568, %s7572
          %s7574 = smul.addr %s7573, 128
          %s7575 = scalar_lea.hbm %s4, %s7574
          %s7576 = sshll.u32 %s7564, 4
          %s7577 = int_to_ptr.vmem [resolvable:$true] %s7576
          %7582 = dma.vmem_to_hbm [thread:$0]  %s7577, 73728, %s7575, %s7561, 2304, 2304, 144
        $region56: #{_concat_conv1x1_pallas.1} parent=35 // pred_fallthru
          _
      $region36: #{_concat_conv1x1_pallas.1} parent=5 // pred_fallthru
        _
      %p7583 = scmp.le.s32.totalorder 2, %s20
      // Predicated region
      $region57: #{_concat_conv1x1_pallas.1} parent=5 // pred_check
        %p7584 = pneg %p7583
      $region58: #{_concat_conv1x1_pallas.1} parent=5 // pred_check_branch
        %7586 = sbr.rel (%p7584) target = $region60
      $region59: #{_concat_conv1x1_pallas.1} parent=5 // pred_region
        %s7587 = ssub.s32 %s20, 2
        // Predicated region
        $region61: #{_concat_conv1x1_pallas.1} parent=59 // pred_check
          %p7588 = pneg %p161
        $region62: #{_concat_conv1x1_pallas.1} parent=59 // pred_check_branch
          %7590 = sbr.rel (%p7588) target = $region64
        $region63: #{_concat_conv1x1_pallas.1} parent=59 // pred_region
          %s7591 = sand.u32 %s146, 1
          %s7592 = scalar_lea.sflag [#allocation4], %s7591
          %s7593 = sand.u32 %s146, 1
          %s7594 = smul.addr %s7593, 4608
          %s7595 = scalar_lea.vmem [#allocation10], %s7594
          %7596 = dma.done %s7592, 73728
        $region64: #{_concat_conv1x1_pallas.1} parent=59 // pred_fallthru
          _
      $region60: #{_concat_conv1x1_pallas.1} parent=5 // pred_fallthru
        _
    $region6: #{_concat_conv1x1_pallas.1} parent=1 // loop_footer
      %s24 = sadd.s32 1, %s20
    $region7: #{_concat_conv1x1_pallas.1} parent=1 // loop_footer_branch
      %19 = sbr.rel target = $region3
    $region8: #{_concat_conv1x1_pallas.1} parent=1 // loop_exit
      _
    %7597 = vsyncpa [#allocation3], 1
    %s7598 = scalar_lea.sflag [#allocation3], 1
    %7599 = vsyncpa %s7598, 1
    %7600 = vsyncpa [#allocation6], 1
    %s7601 = scalar_lea.sflag [#allocation6], 1
    %7602 = vsyncpa %s7601, 1
    %7603 = vsyncpa [#allocation9], 1
    %7604 = vsyncpa [#allocation4], 1
    %s7605 = scalar_lea.sflag [#allocation4], 1
    %7606 = vsyncpa %s7605, 1

</llo_original>
